<compile_context>
chip_gen: v7x
topology: tpu7x:2x2x1
jax: 0.10.0
libtpu: 0.0.40
codegen_flags: <defaults>
</compile_context>

<pallas_src>
import jax
import jax.numpy as jnp
from jax.experimental import pallas as pl
from jax.experimental.pallas import tpu as pltpu

HIDDEN = 100          # nn.LSTM(..., 100, ...)
HP = 128              # hidden padded to one full lane tile
NUM_LAYERS = 2        # nn.LSTM(..., ..., 2, ...)
INPUT_SIZE = 6400     # nn.LSTM(6400, ...)
NDIR = 2              # bidirectional


# ---------------------------------------------------------------------------
# Kernel 1: merged input projection  gates = x_tm @ [W_f | W_b] + bias
#   a: (M, K) bf16, w: (K, N) bf16, bias: (1, N) f32  ->  (M, N) f32
#   grid = (M tiles, N tiles, K tiles); K (reduction) is last, accumulate
#   directly into the resident output block.
# ---------------------------------------------------------------------------
def _proj_kernel(a_ref, w_ref, b_ref, o_ref):
    k = pl.program_id(2)

    @pl.when(k == 0)
    def _():
        o_ref[...] = jnp.broadcast_to(b_ref[...], o_ref.shape)

    o_ref[...] += jnp.dot(a_ref[...], w_ref[...],
                          preferred_element_type=jnp.float32)


def _pick_tk(K):
    for tk in (3200, 1600, 1024, 512, 256, 128):
        if K % tk == 0:
            return tk
    return K


def _pick_tm(M):
    for tm in (512, 256, 128, 64, 32, 16, 8):
        if M % tm == 0:
            return tm
    return M          # full extent is always legal even if not a multiple of 8


def input_projection(a_bf16, w_bf16, bias_f32, *, tn=512):
    M, K = a_bf16.shape
    K2, N = w_bf16.shape
    assert K == K2 and N % tn == 0
    tk = _pick_tk(K)
    tm = _pick_tm(M)
    grid = (M // tm, N // tn, K // tk)
    return pl.pallas_call(
        _proj_kernel,
        out_shape=jax.ShapeDtypeStruct((M, N), jnp.float32),
        grid_spec=pltpu.PrefetchScalarGridSpec(
            num_scalar_prefetch=0,
            grid=grid,
            in_specs=[
                pl.BlockSpec((tm, tk), lambda m, n, k: (m, k)),
                pl.BlockSpec((tk, tn), lambda m, n, k: (k, n)),
                pl.BlockSpec((1, tn), lambda m, n, k: (0, n)),
            ],
            out_specs=pl.BlockSpec((tm, tn), lambda m, n, k: (m, n)),
        ),
        compiler_params=pltpu.CompilerParams(
            dimension_semantics=("parallel", "parallel", "arbitrary")),
    )(a_bf16, w_bf16, bias_f32.reshape(1, N))


# ---------------------------------------------------------------------------
# Kernel 2: full bi-directional LSTM recurrence for one layer.
#   grid = (2,) over direction ("parallel").  Whole time loop inside the
#   kernel; backward direction reads/writes time index T-1-s (no flips).
# ---------------------------------------------------------------------------
def _bilstm_recurrence_kernel(gx_ref, whh_ref, out_ref):
    # gx_ref : (T, B, 4*HP) f32 - precomputed input gates for this direction
    # whh_ref: (1, HP, 4*HP) f32 - W_hh^T (padded) for this direction
    # out_ref: (T, B, HP)   f32 - hidden states for this direction
    d = pl.program_id(0)                      # 0 = forward, 1 = backward
    T, B, _ = gx_ref.shape
    whh = whh_ref[0]                          # (HP, 4*HP), loaded once

    def step(s, carry):
        h, c = carry
        t = jnp.where(d == 0, s, T - 1 - s)   # reversed time for backward dir
        gates = gx_ref[t] + jnp.dot(h, whh, preferred_element_type=jnp.float32)
        i = jax.nn.sigmoid(gates[:, 0 * HP:1 * HP])   # PyTorch order: i, f, g, o
        f = jax.nn.sigmoid(gates[:, 1 * HP:2 * HP])
        g = jnp.tanh(gates[:, 2 * HP:3 * HP])
        o = jax.nn.sigmoid(gates[:, 3 * HP:4 * HP])
        c_new = f * c + i * g
        h_new = o * jnp.tanh(c_new)
        out_ref[t] = h_new
        return h_new, c_new

    init = (jnp.zeros((B, HP), jnp.float32), jnp.zeros((B, HP), jnp.float32))
    # Fully unroll short sequences (gives the LLO scheduler full visibility);
    # partially unroll long ones to keep compile time / code size bounded.
    unroll = True if T <= 32 else 8
    jax.lax.fori_loop(0, T, step, init, unroll=unroll)


def bilstm_recurrence(gates_tm, whh_stack):
    T, B, _ = gates_tm.shape
    return pl.pallas_call(
        _bilstm_recurrence_kernel,
        out_shape=jax.ShapeDtypeStruct((T, B, NDIR * HP), jnp.float32),
        grid_spec=pltpu.PrefetchScalarGridSpec(
            num_scalar_prefetch=0,
            grid=(NDIR,),
            in_specs=[
                pl.BlockSpec((T, B, 4 * HP), lambda d: (0, 0, d)),
                pl.BlockSpec((1, HP, 4 * HP), lambda d: (d, 0, 0)),
            ],
            out_specs=pl.BlockSpec((T, B, HP), lambda d: (0, 0, d)),
        ),
        compiler_params=pltpu.CompilerParams(
            dimension_semantics=("parallel",)),
    )(gates_tm, whh_stack)


# ---------------------------------------------------------------------------
# Forward pass (time-major, padded-hidden pipeline)
# ---------------------------------------------------------------------------
def iwcd_forward(x, prepped_layers):
    B, T, D = x.shape
    h = x.transpose(1, 0, 2).reshape(T * B, D)            # time-major, once
    for (w_cat, b_cat, whh_stack) in prepped_layers:
        gates = input_projection(h.astype(jnp.bfloat16), w_cat, b_cat)
        gates = gates.reshape(T, B, NDIR * 4 * HP)
        h = bilstm_recurrence(gates, whh_stack).reshape(T * B, NDIR * HP)
    y = h.reshape(T, B, NDIR * HP).transpose(1, 0, 2)      # (B, T, 2*HP)
    return jnp.concatenate([y[..., :HIDDEN], y[..., HP:HP + HIDDEN]], axis=-1)


# ---------------------------------------------------------------------------
# Parameter preprocessing: pad H->HP, merge directions, pre-cast to bf16
# ---------------------------------------------------------------------------
def _pad_gate_rows(w):
    # (4*H, K) -> (4*HP, K), zero-padding each gate block's rows
    four_h, K = w.shape
    H = four_h // 4
    w = w.reshape(4, H, K)
    w = jnp.pad(w, ((0, 0), (0, HP - H), (0, 0)))
    return w.reshape(4 * HP, K)


def _pad_dir_cols(w):
    # (R, 2*H) -> (R, 2*HP), zero-padding each direction's input block
    R, two_h = w.shape
    H = two_h // 2
    w = w.reshape(R, 2, H)
    w = jnp.pad(w, ((0, 0), (0, 0), (0, HP - H)))
    return w.reshape(R, 2 * HP)


def _pad_bias(b):
    H = b.shape[0] // 4
    return jnp.pad(b.reshape(4, H), ((0, 0), (0, HP - H))).reshape(4 * HP)


def prep_bilstm_layer(dir_params, pad_input_dirs):
    w_cols, biases, whhs = [], [], []
    for (w_ih, w_hh, b_ih, b_hh) in dir_params:
        w = _pad_gate_rows(w_ih)                        # (4HP, K)
        if pad_input_dirs:
            w = _pad_dir_cols(w)                        # (4HP, 2*HP)
        w_cols.append(w.T)                              # (K_pad, 4HP)
        biases.append(_pad_bias(b_ih + b_hh))           # (4HP,)
        whh = _pad_gate_rows(w_hh)                      # (4HP, H)
        whh = jnp.pad(whh, ((0, 0), (0, HP - HIDDEN)))  # (4HP, HP)
        whhs.append(whh.T)                              # (HP, 4HP)
    w_cat = jnp.concatenate(w_cols, axis=1).astype(jnp.bfloat16)  # (K_pad, 2*4HP)
    b_cat = jnp.concatenate(biases)                               # (2*4HP,)
    whh_stack = jnp.stack(whhs)                                   # (2, HP, 4HP)
    return w_cat, b_cat, whh_stack


def prep_iwcd_params(rnn1_params, rnn2_params):
    prepped = []
    for idx, layer in enumerate(rnn1_params):
        prepped.append(prep_bilstm_layer(layer, pad_input_dirs=(idx > 0)))
    for layer in rnn2_params:
        prepped.append(prep_bilstm_layer(layer, pad_input_dirs=True))
    return prepped


# ---------------------------------------------------------------------------
# Deterministic parameter init (PyTorch-style U(-1/sqrt(H), 1/sqrt(H)))
# ---------------------------------------------------------------------------
def init_bilstm_params(key, input_size, hidden, num_layers):
    bound = 1.0 / float(hidden) ** 0.5
    params = []
    for layer in range(num_layers):
        in_size = input_size if layer == 0 else 2 * hidden
        dir_params = []
        for _direction in range(2):
            key, k1, k2, k3, k4 = jax.random.split(key, 5)
            w_ih = jax.random.uniform(k1, (4 * hidden, in_size), jnp.float32,
                                      -bound, bound)
            w_hh = jax.random.uniform(k2, (4 * hidden, hidden), jnp.float32,
                                      -bound, bound)
            b_ih = jax.random.uniform(k3, (4 * hidden,), jnp.float32,
                                      -bound, bound)
            b_hh = jax.random.uniform(k4, (4 * hidden,), jnp.float32,
                                      -bound, bound)
            dir_params.append((w_ih, w_hh, b_ih, b_hh))
        params.append(tuple(dir_params))
    return params, key


# ---------------------------------------------------------------------------
# Pure-JAX reference (same bf16 quantization points as the kernel pipeline)
# ---------------------------------------------------------------------------
def _ref_lstm_direction(x, w_ih, w_hh, b_ih, b_hh):
    B, T, _ = x.shape
    H = HIDDEN
    xb = x.astype(jnp.bfloat16).astype(jnp.float32)
    wb = w_ih.astype(jnp.bfloat16).astype(jnp.float32)
    gx = jnp.einsum('btd,gd->btg', xb, wb) + (b_ih + b_hh)
    h = jnp.zeros((B, H), jnp.float32)
    c = jnp.zeros((B, H), jnp.float32)
    hs = []
    for t in range(T):
        gates = gx[:, t] + h @ w_hh.T
        i = jax.nn.sigmoid(gates[:, 0 * H:1 * H])
        f = jax.nn.sigmoid(gates[:, 1 * H:2 * H])
        g = jnp.tanh(gates[:, 2 * H:3 * H])
        o = jax.nn.sigmoid(gates[:, 3 * H:4 * H])
        c = f * c + i * g
        h = o * jnp.tanh(c)
        hs.append(h)
    return jnp.stack(hs, axis=1)


def _ref_bilayer(x, layer):
    fwd, bwd = layer
    hf = _ref_lstm_direction(x, *fwd)
    hb = jnp.flip(_ref_lstm_direction(jnp.flip(x, axis=1), *bwd), axis=1)
    return jnp.concatenate([hf, hb], axis=-1)


def iwcd_reference(x, rnn1_params, rnn2_params):
    for layer in rnn1_params:
        x = _ref_bilayer(x, layer)
    for layer in rnn2_params:
        x = _ref_bilayer(x, layer)
    return x


if __name__ == "__main__":
    key = jax.random.PRNGKey(0)
    key, xkey = jax.random.split(key)

    B, T = 2, 8
    x = jax.random.normal(xkey, (B, T, INPUT_SIZE), jnp.float32)

    rnn1_params, key = init_bilstm_params(key, INPUT_SIZE, HIDDEN, NUM_LAYERS)
    rnn2_params, key = init_bilstm_params(key, 2 * HIDDEN, HIDDEN, NUM_LAYERS)
    prepped = prep_iwcd_params(rnn1_params, rnn2_params)

    fwd = jax.jit(iwcd_forward)
    out = jax.block_until_ready(fwd(x, prepped))

    assert out.shape == (B, T, 2 * HIDDEN), out.shape
    assert out.dtype == jnp.float32
    assert bool(jnp.all(jnp.isfinite(out)))

    ref = jax.block_until_ready(
        jax.jit(iwcd_reference)(x, rnn1_params, rnn2_params))
    assert bool(jnp.allclose(out, ref, atol=3e-2, rtol=0.0)), \
        float(jnp.max(jnp.abs(out - ref)))

    print("KERNEL_OK")
</pallas_src>

<mosaic_0001>
module attributes {stable_mosaic.version = 11 : i64} {
  func.func @_proj_kernel(%arg0: i32, %arg1: i32, %arg2: i32, %arg3: memref<16x3200xbf16, #tpu.memory_space<vmem>>, %arg4: memref<3200x512xbf16, #tpu.memory_space<vmem>>, %arg5: memref<1x512xf32, #tpu.memory_space<vmem>>, %arg6: memref<16x512xf32, #tpu.memory_space<vmem>>) attributes {dimension_semantics = [#tpu.dimension_semantics<parallel>, #tpu.dimension_semantics<parallel>, #tpu.dimension_semantics<arbitrary>], iteration_bounds = array<i64: 1, 2, 2>, scalar_prefetch = 0 : i64, scratch_operands = 0 : i64, tpu.core_type = #tpu.core_type<tc>, window_params = [{transform_indices = @transform_0, window_bounds = array<i64: 16, 3200>}, {transform_indices = @transform_1, window_bounds = array<i64: 3200, 512>}, {transform_indices = @transform_2, window_bounds = array<i64: 1, 512>}, {transform_indices = @transform_3, window_bounds = array<i64: 16, 512>}]} {
    %c0_i32 = arith.constant 0 : i32
    %0 = arith.cmpi eq, %arg2, %c0_i32 : i32
    %1 = arith.extui %0 : i1 to i32
    %c0_i32_0 = arith.constant 0 : i32
    %2 = arith.cmpi ne, %1, %c0_i32_0 : i32
    scf.if %2 {
      %c0_8 = arith.constant 0 : index
      %c0_9 = arith.constant 0 : index
      %9 = vector.load %arg5[%c0_8, %c0_9] : memref<1x512xf32, #tpu.memory_space<vmem>>, vector<1x512xf32>
      %10 = vector.shape_cast %9 : vector<1x512xf32> to vector<1x512xf32>
      %11 = vector.broadcast %10 : vector<1x512xf32> to vector<16x512xf32>
      %c0_10 = arith.constant 0 : index
      %c0_11 = arith.constant 0 : index
      %12 = vector.load %arg6[%c0_10, %c0_11] : memref<16x512xf32, #tpu.memory_space<vmem>>, vector<16x512xf32>
      tpu.vector_store %arg6[%c0_10, %c0_11], %11 {strides = array<i32>} : memref<16x512xf32, #tpu.memory_space<vmem>>, vector<16x512xf32>,
    } else {
    }
    %c0 = arith.constant 0 : index
    %c0_1 = arith.constant 0 : index
    %3 = vector.load %arg6[%c0, %c0_1] : memref<16x512xf32, #tpu.memory_space<vmem>>, vector<16x512xf32>
    %c0_2 = arith.constant 0 : index
    %c0_3 = arith.constant 0 : index
    %4 = vector.load %arg3[%c0_2, %c0_3] : memref<16x3200xbf16, #tpu.memory_space<vmem>>, vector<16x3200xbf16>
    %c0_4 = arith.constant 0 : index
    %c0_5 = arith.constant 0 : index
    %5 = vector.load %arg4[%c0_4, %c0_5] : memref<3200x512xbf16, #tpu.memory_space<vmem>>, vector<3200x512xbf16>
    %cst = arith.constant dense<0.000000e+00> : vector<16x512xf32>
    %6 = tpu.matmul %4, %5, %cst {dimension_numbers = #tpu.dot_dimension_numbers<[1], [0], [0], [1], [0, 0, 1, 1], [], []>} : vector<16x3200xbf16>, vector<3200x512xbf16>, vector<16x512xf32> -> vector<16x512xf32>
    %7 = arith.addf %3, %6 : vector<16x512xf32>
    %c0_6 = arith.constant 0 : index
    %c0_7 = arith.constant 0 : index
    %8 = vector.load %arg6[%c0_6, %c0_7] : memref<16x512xf32, #tpu.memory_space<vmem>>, vector<16x512xf32>
    tpu.vector_store %arg6[%c0_6, %c0_7], %7 {strides = array<i32>} : memref<16x512xf32, #tpu.memory_space<vmem>>, vector<16x512xf32>,
    return
  }
  func.func @transform_0(%arg0: i32, %arg1: i32, %arg2: i32) -> (i32, i32) {
    %c0_i32 = arith.constant 0 : i32
    return %arg0, %arg2 : i32, i32
  }
  func.func @transform_1(%arg0: i32, %arg1: i32, %arg2: i32) -> (i32, i32) {
    %c0_i32 = arith.constant 0 : i32
    return %arg2, %arg1 : i32, i32
  }
  func.func @transform_2(%arg0: i32, %arg1: i32, %arg2: i32) -> (i32, i32) {
    %c0_i32 = arith.constant 0 : i32
    %c0_i32_0 = arith.constant 0 : i32
    return %c0_i32, %arg1 : i32, i32
  }
  func.func @transform_3(%arg0: i32, %arg1: i32, %arg2: i32) -> (i32, i32) {
    %c0_i32 = arith.constant 0 : i32
    return %arg0, %arg1 : i32, i32
  }
}

module attributes {stable_mosaic.version = 11 : i64} {
  func.func @_bilstm_recurrence_kernel(%arg0: i32, %arg1: memref<8x2x512xf32, #tpu.memory_space<vmem>>, %arg2: memref<1x128x512xf32, #tpu.memory_space<vmem>>, %arg3: memref<8x2x128xf32, #tpu.memory_space<vmem>>) attributes {dimension_semantics = [#tpu.dimension_semantics<parallel>], iteration_bounds = array<i64: 2>, scalar_prefetch = 0 : i64, scratch_operands = 0 : i64, tpu.core_type = #tpu.core_type<tc>, window_params = [{transform_indices = @transform_0, window_bounds = array<i64: 8, 2, 512>}, {transform_indices = @transform_1, window_bounds = array<i64: 1, 128, 512>}, {transform_indices = @transform_2, window_bounds = array<i64: 8, 2, 128>}]} {
    %c0 = arith.constant 0 : index
    %c0_0 = arith.constant 0 : index
    %c0_1 = arith.constant 0 : index
    %0 = vector.load %arg2[%c0, %c0_0, %c0_1] : memref<1x128x512xf32, #tpu.memory_space<vmem>>, vector<1x128x512xf32>
    %1 = vector.shape_cast %0 : vector<1x128x512xf32> to vector<128x512xf32>
    %cst = arith.constant 0.000000e+00 : f32
    %2 = vector.broadcast %cst : f32 to vector<2x128xf32>
    %cst_2 = arith.constant 0.000000e+00 : f32
    %3 = vector.broadcast %cst_2 : f32 to vector<2x128xf32>
    %c0_i32 = arith.constant 0 : i32
    %c0_i32_3 = arith.constant 0 : i32
    %4 = arith.cmpi eq, %arg0, %c0_i32_3 : i32
    %c7_i32 = arith.constant 7 : i32
    %5 = arith.subi %c7_i32, %c0_i32 : i32
    %6 = arith.select %4, %c0_i32, %5 : i32
    %7 = arith.index_cast %6 : i32 to index
    %c0_4 = arith.constant 0 : index
    %c0_5 = arith.constant 0 : index
    %8 = vector.load %arg1[%7, %c0_4, %c0_5] : memref<8x2x512xf32, #tpu.memory_space<vmem>>, vector<1x2x512xf32>
    %9 = vector.shape_cast %8 : vector<1x2x512xf32> to vector<2x512xf32>
    %cst_6 = arith.constant dense<0.000000e+00> : vector<2x512xf32>
    %10 = tpu.matmul %2, %1, %cst_6 {dimension_numbers = #tpu.dot_dimension_numbers<[1], [0], [0], [1], [0, 0, 1, 1], [], []>} : vector<2x128xf32>, vector<128x512xf32>, vector<2x512xf32> -> vector<2x512xf32>
    %11 = arith.addf %9, %10 : vector<2x512xf32>
    %12 = vector.extract_strided_slice %11 {offsets = [0, 0], sizes = [2, 128], strides = [1, 1]} : vector<2x512xf32> to vector<2x128xf32>
    %13 = arith.negf %12 : vector<2x128xf32>
    %14 = math.exp %13 : vector<2x128xf32>
    %cst_7 = arith.constant 1.000000e+00 : f32
    %15 = vector.broadcast %cst_7 : f32 to vector<2x128xf32>
    %16 = arith.addf %15, %14 : vector<2x128xf32>
    %17 = arith.divf %15, %16 : vector<2x128xf32>
    %18 = vector.extract_strided_slice %11 {offsets = [0, 128], sizes = [2, 128], strides = [1, 1]} : vector<2x512xf32> to vector<2x128xf32>
    %19 = arith.negf %18 : vector<2x128xf32>
    %20 = math.exp %19 : vector<2x128xf32>
    %cst_8 = arith.constant 1.000000e+00 : f32
    %21 = vector.broadcast %cst_8 : f32 to vector<2x128xf32>
    %22 = arith.addf %21, %20 : vector<2x128xf32>
    %23 = arith.divf %21, %22 : vector<2x128xf32>
    %24 = vector.extract_strided_slice %11 {offsets = [0, 256], sizes = [2, 128], strides = [1, 1]} : vector<2x512xf32> to vector<2x128xf32>
    %25 = math.tanh %24 : vector<2x128xf32>
    %26 = vector.extract_strided_slice %11 {offsets = [0, 384], sizes = [2, 128], strides = [1, 1]} : vector<2x512xf32> to vector<2x128xf32>
    %27 = arith.negf %26 : vector<2x128xf32>
    %28 = math.exp %27 : vector<2x128xf32>
    %cst_9 = arith.constant 1.000000e+00 : f32
    %29 = vector.broadcast %cst_9 : f32 to vector<2x128xf32>
    %30 = arith.addf %29, %28 : vector<2x128xf32>
    %31 = arith.divf %29, %30 : vector<2x128xf32>
    %32 = arith.mulf %23, %3 : vector<2x128xf32>
    %33 = arith.mulf %17, %25 : vector<2x128xf32>
    %34 = arith.addf %32, %33 : vector<2x128xf32>
    %35 = math.tanh %34 : vector<2x128xf32>
    %36 = arith.mulf %31, %35 : vector<2x128xf32>
    %37 = arith.index_cast %6 : i32 to index
    %c0_10 = arith.constant 0 : index
    %c0_11 = arith.constant 0 : index
    %38 = vector.load %arg3[%37, %c0_10, %c0_11] : memref<8x2x128xf32, #tpu.memory_space<vmem>>, vector<1x2x128xf32>
    %39 = vector.shape_cast %38 : vector<1x2x128xf32> to vector<2x128xf32>
    %40 = vector.shape_cast %36 : vector<2x128xf32> to vector<1x2x128xf32>
    tpu.vector_store %arg3[%37, %c0_10, %c0_11], %40 {strides = array<i32>} : memref<8x2x128xf32, #tpu.memory_space<vmem>>, vector<1x2x128xf32>,
    %c1_i32 = arith.constant 1 : i32
    %c0_i32_12 = arith.constant 0 : i32
    %41 = arith.cmpi eq, %arg0, %c0_i32_12 : i32
    %c7_i32_13 = arith.constant 7 : i32
    %42 = arith.subi %c7_i32_13, %c1_i32 : i32
    %43 = arith.select %41, %c1_i32, %42 : i32
    %44 = arith.index_cast %43 : i32 to index
    %c0_14 = arith.constant 0 : index
    %c0_15 = arith.constant 0 : index
    %45 = vector.load %arg1[%44, %c0_14, %c0_15] : memref<8x2x512xf32, #tpu.memory_space<vmem>>, vector<1x2x512xf32>
    %46 = vector.shape_cast %45 : vector<1x2x512xf32> to vector<2x512xf32>
    %cst_16 = arith.constant dense<0.000000e+00> : vector<2x512xf32>
    %47 = tpu.matmul %36, %1, %cst_16 {dimension_numbers = #tpu.dot_dimension_numbers<[1], [0], [0], [1], [0, 0, 1, 1], [], []>} : vector<2x128xf32>, vector<128x512xf32>, vector<2x512xf32> -> vector<2x512xf32>
    %48 = arith.addf %46, %47 : vector<2x512xf32>
    %49 = vector.extract_strided_slice %48 {offsets = [0, 0], sizes = [2, 128], strides = [1, 1]} : vector<2x512xf32> to vector<2x128xf32>
    %50 = arith.negf %49 : vector<2x128xf32>
    %51 = math.exp %50 : vector<2x128xf32>
    %cst_17 = arith.constant 1.000000e+00 : f32
    %52 = vector.broadcast %cst_17 : f32 to vector<2x128xf32>
    %53 = arith.addf %52, %51 : vector<2x128xf32>
    %54 = arith.divf %52, %53 : vector<2x128xf32>
    %55 = vector.extract_strided_slice %48 {offsets = [0, 128], sizes = [2, 128], strides = [1, 1]} : vector<2x512xf32> to vector<2x128xf32>
    %56 = arith.negf %55 : vector<2x128xf32>
    %57 = math.exp %56 : vector<2x128xf32>
    %cst_18 = arith.constant 1.000000e+00 : f32
    %58 = vector.broadcast %cst_18 : f32 to vector<2x128xf32>
    %59 = arith.addf %58, %57 : vector<2x128xf32>
    %60 = arith.divf %58, %59 : vector<2x128xf32>
    %61 = vector.extract_strided_slice %48 {offsets = [0, 256], sizes = [2, 128], strides = [1, 1]} : vector<2x512xf32> to vector<2x128xf32>
    %62 = math.tanh %61 : vector<2x128xf32>
    %63 = vector.extract_strided_slice %48 {offsets = [0, 384], sizes = [2, 128], strides = [1, 1]} : vector<2x512xf32> to vector<2x128xf32>
    %64 = arith.negf %63 : vector<2x128xf32>
    %65 = math.exp %64 : vector<2x128xf32>
    %cst_19 = arith.constant 1.000000e+00 : f32
    %66 = vector.broadcast %cst_19 : f32 to vector<2x128xf32>
    %67 = arith.addf %66, %65 : vector<2x128xf32>
    %68 = arith.divf %66, %67 : vector<2x128xf32>
    %69 = arith.mulf %60, %34 : vector<2x128xf32>
    %70 = arith.mulf %54, %62 : vector<2x128xf32>
    %71 = arith.addf %69, %70 : vector<2x128xf32>
    %72 = math.tanh %71 : vector<2x128xf32>
    %73 = arith.mulf %68, %72 : vector<2x128xf32>
    %74 = arith.index_cast %43 : i32 to index
    %c0_20 = arith.constant 0 : index
    %c0_21 = arith.constant 0 : index
    %75 = vector.load %arg3[%74, %c0_20, %c0_21] : memref<8x2x128xf32, #tpu.memory_space<vmem>>, vector<1x2x128xf32>
    %76 = vector.shape_cast %75 : vector<1x2x128xf32> to vector<2x128xf32>
    %77 = vector.shape_cast %73 : vector<2x128xf32> to vector<1x2x128xf32>
    tpu.vector_store %arg3[%74, %c0_20, %c0_21], %77 {strides = array<i32>} : memref<8x2x128xf32, #tpu.memory_space<vmem>>, vector<1x2x128xf32>,
    %c2_i32 = arith.constant 2 : i32
    %c0_i32_22 = arith.constant 0 : i32
    %78 = arith.cmpi eq, %arg0, %c0_i32_22 : i32
    %c7_i32_23 = arith.constant 7 : i32
    %79 = arith.subi %c7_i32_23, %c2_i32 : i32
    %80 = arith.select %78, %c2_i32, %79 : i32
    %81 = arith.index_cast %80 : i32 to index
    %c0_24 = arith.constant 0 : index
    %c0_25 = arith.constant 0 : index
    %82 = vector.load %arg1[%81, %c0_24, %c0_25] : memref<8x2x512xf32, #tpu.memory_space<vmem>>, vector<1x2x512xf32>
    %83 = vector.shape_cast %82 : vector<1x2x512xf32> to vector<2x512xf32>
    %cst_26 = arith.constant dense<0.000000e+00> : vector<2x512xf32>
    %84 = tpu.matmul %73, %1, %cst_26 {dimension_numbers = #tpu.dot_dimension_numbers<[1], [0], [0], [1], [0, 0, 1, 1], [], []>} : vector<2x128xf32>, vector<128x512xf32>, vector<2x512xf32> -> vector<2x512xf32>
    %85 = arith.addf %83, %84 : vector<2x512xf32>
    %86 = vector.extract_strided_slice %85 {offsets = [0, 0], sizes = [2, 128], strides = [1, 1]} : vector<2x512xf32> to vector<2x128xf32>
    %87 = arith.negf %86 : vector<2x128xf32>
    %88 = math.exp %87 : vector<2x128xf32>
    %cst_27 = arith.constant 1.000000e+00 : f32
    %89 = vector.broadcast %cst_27 : f32 to vector<2x128xf32>
    %90 = arith.addf %89, %88 : vector<2x128xf32>
    %91 = arith.divf %89, %90 : vector<2x128xf32>
    %92 = vector.extract_strided_slice %85 {offsets = [0, 128], sizes = [2, 128], strides = [1, 1]} : vector<2x512xf32> to vector<2x128xf32>
    %93 = arith.negf %92 : vector<2x128xf32>
    %94 = math.exp %93 : vector<2x128xf32>
    %cst_28 = arith.constant 1.000000e+00 : f32
    %95 = vector.broadcast %cst_28 : f32 to vector<2x128xf32>
    %96 = arith.addf %95, %94 : vector<2x128xf32>
    %97 = arith.divf %95, %96 : vector<2x128xf32>
    %98 = vector.extract_strided_slice %85 {offsets = [0, 256], sizes = [2, 128], strides = [1, 1]} : vector<2x512xf32> to vector<2x128xf32>
    %99 = math.tanh %98 : vector<2x128xf32>
    %100 = vector.extract_strided_slice %85 {offsets = [0, 384], sizes = [2, 128], strides = [1, 1]} : vector<2x512xf32> to vector<2x128xf32>
    %101 = arith.negf %100 : vector<2x128xf32>
    %102 = math.exp %101 : vector<2x128xf32>
    %cst_29 = arith.constant 1.000000e+00 : f32
    %103 = vector.broadcast %cst_29 : f32 to vector<2x128xf32>
    %104 = arith.addf %103, %102 : vector<2x128xf32>
    %105 = arith.divf %103, %104 : vector<2x128xf32>
    %106 = arith.mulf %97, %71 : vector<2x128xf32>
    %107 = arith.mulf %91, %99 : vector<2x128xf32>
    %108 = arith.addf %106, %107 : vector<2x128xf32>
    %109 = math.tanh %108 : vector<2x128xf32>
    %110 = arith.mulf %105, %109 : vector<2x128xf32>
    %111 = arith.index_cast %80 : i32 to index
    %c0_30 = arith.constant 0 : index
    %c0_31 = arith.constant 0 : index
    %112 = vector.load %arg3[%111, %c0_30, %c0_31] : memref<8x2x128xf32, #tpu.memory_space<vmem>>, vector<1x2x128xf32>
    %113 = vector.shape_cast %112 : vector<1x2x128xf32> to vector<2x128xf32>
    %114 = vector.shape_cast %110 : vector<2x128xf32> to vector<1x2x128xf32>
    tpu.vector_store %arg3[%111, %c0_30, %c0_31], %114 {strides = array<i32>} : memref<8x2x128xf32, #tpu.memory_space<vmem>>, vector<1x2x128xf32>,
    %c3_i32 = arith.constant 3 : i32
    %c0_i32_32 = arith.constant 0 : i32
    %115 = arith.cmpi eq, %arg0, %c0_i32_32 : i32
    %c7_i32_33 = arith.constant 7 : i32
    %116 = arith.subi %c7_i32_33, %c3_i32 : i32
    %117 = arith.select %115, %c3_i32, %116 : i32
    %118 = arith.index_cast %117 : i32 to index
    %c0_34 = arith.constant 0 : index
    %c0_35 = arith.constant 0 : index
    %119 = vector.load %arg1[%118, %c0_34, %c0_35] : memref<8x2x512xf32, #tpu.memory_space<vmem>>, vector<1x2x512xf32>
    %120 = vector.shape_cast %119 : vector<1x2x512xf32> to vector<2x512xf32>
    %cst_36 = arith.constant dense<0.000000e+00> : vector<2x512xf32>
    %121 = tpu.matmul %110, %1, %cst_36 {dimension_numbers = #tpu.dot_dimension_numbers<[1], [0], [0], [1], [0, 0, 1, 1], [], []>} : vector<2x128xf32>, vector<128x512xf32>, vector<2x512xf32> -> vector<2x512xf32>
    %122 = arith.addf %120, %121 : vector<2x512xf32>
    %123 = vector.extract_strided_slice %122 {offsets = [0, 0], sizes = [2, 128], strides = [1, 1]} : vector<2x512xf32> to vector<2x128xf32>
    %124 = arith.negf %123 : vector<2x128xf32>
    %125 = math.exp %124 : vector<2x128xf32>
    %cst_37 = arith.constant 1.000000e+00 : f32
    %126 = vector.broadcast %cst_37 : f32 to vector<2x128xf32>
    %127 = arith.addf %126, %125 : vector<2x128xf32>
    %128 = arith.divf %126, %127 : vector<2x128xf32>
    %129 = vector.extract_strided_slice %122 {offsets = [0, 128], sizes = [2, 128], strides = [1, 1]} : vector<2x512xf32> to vector<2x128xf32>
    %130 = arith.negf %129 : vector<2x128xf32>
    %131 = math.exp %130 : vector<2x128xf32>
    %cst_38 = arith.constant 1.000000e+00 : f32
    %132 = vector.broadcast %cst_38 : f32 to vector<2x128xf32>
    %133 = arith.addf %132, %131 : vector<2x128xf32>
    %134 = arith.divf %132, %133 : vector<2x128xf32>
    %135 = vector.extract_strided_slice %122 {offsets = [0, 256], sizes = [2, 128], strides = [1, 1]} : vector<2x512xf32> to vector<2x128xf32>
    %136 = math.tanh %135 : vector<2x128xf32>
    %137 = vector.extract_strided_slice %122 {offsets = [0, 384], sizes = [2, 128], strides = [1, 1]} : vector<2x512xf32> to vector<2x128xf32>
    %138 = arith.negf %137 : vector<2x128xf32>
    %139 = math.exp %138 : vector<2x128xf32>
    %cst_39 = arith.constant 1.000000e+00 : f32
    %140 = vector.broadcast %cst_39 : f32 to vector<2x128xf32>
    %141 = arith.addf %140, %139 : vector<2x128xf32>
    %142 = arith.divf %140, %141 : vector<2x128xf32>
    %143 = arith.mulf %134, %108 : vector<2x128xf32>
    %144 = arith.mulf %128, %136 : vector<2x128xf32>
    %145 = arith.addf %143, %144 : vector<2x128xf32>
    %146 = math.tanh %145 : vector<2x128xf32>
    %147 = arith.mulf %142, %146 : vector<2x128xf32>
    %148 = arith.index_cast %117 : i32 to index
    %c0_40 = arith.constant 0 : index
    %c0_41 = arith.constant 0 : index
    %149 = vector.load %arg3[%148, %c0_40, %c0_41] : memref<8x2x128xf32, #tpu.memory_space<vmem>>, vector<1x2x128xf32>
    %150 = vector.shape_cast %149 : vector<1x2x128xf32> to vector<2x128xf32>
    %151 = vector.shape_cast %147 : vector<2x128xf32> to vector<1x2x128xf32>
    tpu.vector_store %arg3[%148, %c0_40, %c0_41], %151 {strides = array<i32>} : memref<8x2x128xf32, #tpu.memory_space<vmem>>, vector<1x2x128xf32>,
    %c4_i32 = arith.constant 4 : i32
    %c0_i32_42 = arith.constant 0 : i32
    %152 = arith.cmpi eq, %arg0, %c0_i32_42 : i32
    %c7_i32_43 = arith.constant 7 : i32
    %153 = arith.subi %c7_i32_43, %c4_i32 : i32
    %154 = arith.select %152, %c4_i32, %153 : i32
    %155 = arith.index_cast %154 : i32 to index
    %c0_44 = arith.constant 0 : index
    %c0_45 = arith.constant 0 : index
    %156 = vector.load %arg1[%155, %c0_44, %c0_45] : memref<8x2x512xf32, #tpu.memory_space<vmem>>, vector<1x2x512xf32>
    %157 = vector.shape_cast %156 : vector<1x2x512xf32> to vector<2x512xf32>
    %cst_46 = arith.constant dense<0.000000e+00> : vector<2x512xf32>
    %158 = tpu.matmul %147, %1, %cst_46 {dimension_numbers = #tpu.dot_dimension_numbers<[1], [0], [0], [1], [0, 0, 1, 1], [], []>} : vector<2x128xf32>, vector<128x512xf32>, vector<2x512xf32> -> vector<2x512xf32>
    %159 = arith.addf %157, %158 : vector<2x512xf32>
    %160 = vector.extract_strided_slice %159 {offsets = [0, 0], sizes = [2, 128], strides = [1, 1]} : vector<2x512xf32> to vector<2x128xf32>
    %161 = arith.negf %160 : vector<2x128xf32>
    %162 = math.exp %161 : vector<2x128xf32>
    %cst_47 = arith.constant 1.000000e+00 : f32
    %163 = vector.broadcast %cst_47 : f32 to vector<2x128xf32>
    %164 = arith.addf %163, %162 : vector<2x128xf32>
    %165 = arith.divf %163, %164 : vector<2x128xf32>
    %166 = vector.extract_strided_slice %159 {offsets = [0, 128], sizes = [2, 128], strides = [1, 1]} : vector<2x512xf32> to vector<2x128xf32>
    %167 = arith.negf %166 : vector<2x128xf32>
    %168 = math.exp %167 : vector<2x128xf32>
    %cst_48 = arith.constant 1.000000e+00 : f32
    %169 = vector.broadcast %cst_48 : f32 to vector<2x128xf32>
    %170 = arith.addf %169, %168 : vector<2x128xf32>
    %171 = arith.divf %169, %170 : vector<2x128xf32>
    %172 = vector.extract_strided_slice %159 {offsets = [0, 256], sizes = [2, 128], strides = [1, 1]} : vector<2x512xf32> to vector<2x128xf32>
    %173 = math.tanh %172 : vector<2x128xf32>
    %174 = vector.extract_strided_slice %159 {offsets = [0, 384], sizes = [2, 128], strides = [1, 1]} : vector<2x512xf32> to vector<2x128xf32>
    %175 = arith.negf %174 : vector<2x128xf32>
    %176 = math.exp %175 : vector<2x128xf32>
    %cst_49 = arith.constant 1.000000e+00 : f32
    %177 = vector.broadcast %cst_49 : f32 to vector<2x128xf32>
    %178 = arith.addf %177, %176 : vector<2x128xf32>
    %179 = arith.divf %177, %178 : vector<2x128xf32>
    %180 = arith.mulf %171, %145 : vector<2x128xf32>
    %181 = arith.mulf %165, %173 : vector<2x128xf32>
    %182 = arith.addf %180, %181 : vector<2x128xf32>
    %183 = math.tanh %182 : vector<2x128xf32>
    %184 = arith.mulf %179, %183 : vector<2x128xf32>
    %185 = arith.index_cast %154 : i32 to index
    %c0_50 = arith.constant 0 : index
    %c0_51 = arith.constant 0 : index
    %186 = vector.load %arg3[%185, %c0_50, %c0_51] : memref<8x2x128xf32, #tpu.memory_space<vmem>>, vector<1x2x128xf32>
    %187 = vector.shape_cast %186 : vector<1x2x128xf32> to vector<2x128xf32>
    %188 = vector.shape_cast %184 : vector<2x128xf32> to vector<1x2x128xf32>
    tpu.vector_store %arg3[%185, %c0_50, %c0_51], %188 {strides = array<i32>} : memref<8x2x128xf32, #tpu.memory_space<vmem>>, vector<1x2x128xf32>,
    %c5_i32 = arith.constant 5 : i32
    %c0_i32_52 = arith.constant 0 : i32
    %189 = arith.cmpi eq, %arg0, %c0_i32_52 : i32
    %c7_i32_53 = arith.constant 7 : i32
    %190 = arith.subi %c7_i32_53, %c5_i32 : i32
    %191 = arith.select %189, %c5_i32, %190 : i32
    %192 = arith.index_cast %191 : i32 to index
    %c0_54 = arith.constant 0 : index
    %c0_55 = arith.constant 0 : index
    %193 = vector.load %arg1[%192, %c0_54, %c0_55] : memref<8x2x512xf32, #tpu.memory_space<vmem>>, vector<1x2x512xf32>
    %194 = vector.shape_cast %193 : vector<1x2x512xf32> to vector<2x512xf32>
    %cst_56 = arith.constant dense<0.000000e+00> : vector<2x512xf32>
    %195 = tpu.matmul %184, %1, %cst_56 {dimension_numbers = #tpu.dot_dimension_numbers<[1], [0], [0], [1], [0, 0, 1, 1], [], []>} : vector<2x128xf32>, vector<128x512xf32>, vector<2x512xf32> -> vector<2x512xf32>
    %196 = arith.addf %194, %195 : vector<2x512xf32>
    %197 = vector.extract_strided_slice %196 {offsets = [0, 0], sizes = [2, 128], strides = [1, 1]} : vector<2x512xf32> to vector<2x128xf32>
    %198 = arith.negf %197 : vector<2x128xf32>
    %199 = math.exp %198 : vector<2x128xf32>
    %cst_57 = arith.constant 1.000000e+00 : f32
    %200 = vector.broadcast %cst_57 : f32 to vector<2x128xf32>
    %201 = arith.addf %200, %199 : vector<2x128xf32>
    %202 = arith.divf %200, %201 : vector<2x128xf32>
    %203 = vector.extract_strided_slice %196 {offsets = [0, 128], sizes = [2, 128], strides = [1, 1]} : vector<2x512xf32> to vector<2x128xf32>
    %204 = arith.negf %203 : vector<2x128xf32>
    %205 = math.exp %204 : vector<2x128xf32>
    %cst_58 = arith.constant 1.000000e+00 : f32
    %206 = vector.broadcast %cst_58 : f32 to vector<2x128xf32>
    %207 = arith.addf %206, %205 : vector<2x128xf32>
    %208 = arith.divf %206, %207 : vector<2x128xf32>
    %209 = vector.extract_strided_slice %196 {offsets = [0, 256], sizes = [2, 128], strides = [1, 1]} : vector<2x512xf32> to vector<2x128xf32>
    %210 = math.tanh %209 : vector<2x128xf32>
    %211 = vector.extract_strided_slice %196 {offsets = [0, 384], sizes = [2, 128], strides = [1, 1]} : vector<2x512xf32> to vector<2x128xf32>
    %212 = arith.negf %211 : vector<2x128xf32>
    %213 = math.exp %212 : vector<2x128xf32>
    %cst_59 = arith.constant 1.000000e+00 : f32
    %214 = vector.broadcast %cst_59 : f32 to vector<2x128xf32>
    %215 = arith.addf %214, %213 : vector<2x128xf32>
    %216 = arith.divf %214, %215 : vector<2x128xf32>
    %217 = arith.mulf %208, %182 : vector<2x128xf32>
    %218 = arith.mulf %202, %210 : vector<2x128xf32>
    %219 = arith.addf %217, %218 : vector<2x128xf32>
    %220 = math.tanh %219 : vector<2x128xf32>
    %221 = arith.mulf %216, %220 : vector<2x128xf32>
    %222 = arith.index_cast %191 : i32 to index
    %c0_60 = arith.constant 0 : index
    %c0_61 = arith.constant 0 : index
    %223 = vector.load %arg3[%222, %c0_60, %c0_61] : memref<8x2x128xf32, #tpu.memory_space<vmem>>, vector<1x2x128xf32>
    %224 = vector.shape_cast %223 : vector<1x2x128xf32> to vector<2x128xf32>
    %225 = vector.shape_cast %221 : vector<2x128xf32> to vector<1x2x128xf32>
    tpu.vector_store %arg3[%222, %c0_60, %c0_61], %225 {strides = array<i32>} : memref<8x2x128xf32, #tpu.memory_space<vmem>>, vector<1x2x128xf32>,
    %c6_i32 = arith.constant 6 : i32
    %c0_i32_62 = arith.constant 0 : i32
    %226 = arith.cmpi eq, %arg0, %c0_i32_62 : i32
    %c7_i32_63 = arith.constant 7 : i32
    %227 = arith.subi %c7_i32_63, %c6_i32 : i32
    %228 = arith.select %226, %c6_i32, %227 : i32
    %229 = arith.index_cast %228 : i32 to index
    %c0_64 = arith.constant 0 : index
    %c0_65 = arith.constant 0 : index
    %230 = vector.load %arg1[%229, %c0_64, %c0_65] : memref<8x2x512xf32, #tpu.memory_space<vmem>>, vector<1x2x512xf32>
    %231 = vector.shape_cast %230 : vector<1x2x512xf32> to vector<2x512xf32>
    %cst_66 = arith.constant dense<0.000000e+00> : vector<2x512xf32>
    %232 = tpu.matmul %221, %1, %cst_66 {dimension_numbers = #tpu.dot_dimension_numbers<[1], [0], [0], [1], [0, 0, 1, 1], [], []>} : vector<2x128xf32>, vector<128x512xf32>, vector<2x512xf32> -> vector<2x512xf32>
    %233 = arith.addf %231, %232 : vector<2x512xf32>
    %234 = vector.extract_strided_slice %233 {offsets = [0, 0], sizes = [2, 128], strides = [1, 1]} : vector<2x512xf32> to vector<2x128xf32>
    %235 = arith.negf %234 : vector<2x128xf32>
    %236 = math.exp %235 : vector<2x128xf32>
    %cst_67 = arith.constant 1.000000e+00 : f32
    %237 = vector.broadcast %cst_67 : f32 to vector<2x128xf32>
    %238 = arith.addf %237, %236 : vector<2x128xf32>
    %239 = arith.divf %237, %238 : vector<2x128xf32>
    %240 = vector.extract_strided_slice %233 {offsets = [0, 128], sizes = [2, 128], strides = [1, 1]} : vector<2x512xf32> to vector<2x128xf32>
    %241 = arith.negf %240 : vector<2x128xf32>
    %242 = math.exp %241 : vector<2x128xf32>
    %cst_68 = arith.constant 1.000000e+00 : f32
    %243 = vector.broadcast %cst_68 : f32 to vector<2x128xf32>
    %244 = arith.addf %243, %242 : vector<2x128xf32>
    %245 = arith.divf %243, %244 : vector<2x128xf32>
    %246 = vector.extract_strided_slice %233 {offsets = [0, 256], sizes = [2, 128], strides = [1, 1]} : vector<2x512xf32> to vector<2x128xf32>
    %247 = math.tanh %246 : vector<2x128xf32>
    %248 = vector.extract_strided_slice %233 {offsets = [0, 384], sizes = [2, 128], strides = [1, 1]} : vector<2x512xf32> to vector<2x128xf32>
    %249 = arith.negf %248 : vector<2x128xf32>
    %250 = math.exp %249 : vector<2x128xf32>
    %cst_69 = arith.constant 1.000000e+00 : f32
    %251 = vector.broadcast %cst_69 : f32 to vector<2x128xf32>
    %252 = arith.addf %251, %250 : vector<2x128xf32>
    %253 = arith.divf %251, %252 : vector<2x128xf32>
    %254 = arith.mulf %245, %219 : vector<2x128xf32>
    %255 = arith.mulf %239, %247 : vector<2x128xf32>
    %256 = arith.addf %254, %255 : vector<2x128xf32>
    %257 = math.tanh %256 : vector<2x128xf32>
    %258 = arith.mulf %253, %257 : vector<2x128xf32>
    %259 = arith.index_cast %228 : i32 to index
    %c0_70 = arith.constant 0 : index
    %c0_71 = arith.constant 0 : index
    %260 = vector.load %arg3[%259, %c0_70, %c0_71] : memref<8x2x128xf32, #tpu.memory_space<vmem>>, vector<1x2x128xf32>
    %261 = vector.shape_cast %260 : vector<1x2x128xf32> to vector<2x128xf32>
    %262 = vector.shape_cast %258 : vector<2x128xf32> to vector<1x2x128xf32>
    tpu.vector_store %arg3[%259, %c0_70, %c0_71], %262 {strides = array<i32>} : memref<8x2x128xf32, #tpu.memory_space<vmem>>, vector<1x2x128xf32>,
    %c7_i32_72 = arith.constant 7 : i32
    %c0_i32_73 = arith.constant 0 : i32
    %263 = arith.cmpi eq, %arg0, %c0_i32_73 : i32
    %c7_i32_74 = arith.constant 7 : i32
    %264 = arith.subi %c7_i32_74, %c7_i32_72 : i32
    %265 = arith.select %263, %c7_i32_72, %264 : i32
    %266 = arith.index_cast %265 : i32 to index
    %c0_75 = arith.constant 0 : index
    %c0_76 = arith.constant 0 : index
    %267 = vector.load %arg1[%266, %c0_75, %c0_76] : memref<8x2x512xf32, #tpu.memory_space<vmem>>, vector<1x2x512xf32>
    %268 = vector.shape_cast %267 : vector<1x2x512xf32> to vector<2x512xf32>
    %cst_77 = arith.constant dense<0.000000e+00> : vector<2x512xf32>
    %269 = tpu.matmul %258, %1, %cst_77 {dimension_numbers = #tpu.dot_dimension_numbers<[1], [0], [0], [1], [0, 0, 1, 1], [], []>} : vector<2x128xf32>, vector<128x512xf32>, vector<2x512xf32> -> vector<2x512xf32>
    %270 = arith.addf %268, %269 : vector<2x512xf32>
    %271 = vector.extract_strided_slice %270 {offsets = [0, 0], sizes = [2, 128], strides = [1, 1]} : vector<2x512xf32> to vector<2x128xf32>
    %272 = arith.negf %271 : vector<2x128xf32>
    %273 = math.exp %272 : vector<2x128xf32>
    %cst_78 = arith.constant 1.000000e+00 : f32
    %274 = vector.broadcast %cst_78 : f32 to vector<2x128xf32>
    %275 = arith.addf %274, %273 : vector<2x128xf32>
    %276 = arith.divf %274, %275 : vector<2x128xf32>
    %277 = vector.extract_strided_slice %270 {offsets = [0, 128], sizes = [2, 128], strides = [1, 1]} : vector<2x512xf32> to vector<2x128xf32>
    %278 = arith.negf %277 : vector<2x128xf32>
    %279 = math.exp %278 : vector<2x128xf32>
    %cst_79 = arith.constant 1.000000e+00 : f32
    %280 = vector.broadcast %cst_79 : f32 to vector<2x128xf32>
    %281 = arith.addf %280, %279 : vector<2x128xf32>
    %282 = arith.divf %280, %281 : vector<2x128xf32>
    %283 = vector.extract_strided_slice %270 {offsets = [0, 256], sizes = [2, 128], strides = [1, 1]} : vector<2x512xf32> to vector<2x128xf32>
    %284 = math.tanh %283 : vector<2x128xf32>
    %285 = vector.extract_strided_slice %270 {offsets = [0, 384], sizes = [2, 128], strides = [1, 1]} : vector<2x512xf32> to vector<2x128xf32>
    %286 = arith.negf %285 : vector<2x128xf32>
    %287 = math.exp %286 : vector<2x128xf32>
    %cst_80 = arith.constant 1.000000e+00 : f32
    %288 = vector.broadcast %cst_80 : f32 to vector<2x128xf32>
    %289 = arith.addf %288, %287 : vector<2x128xf32>
    %290 = arith.divf %288, %289 : vector<2x128xf32>
    %291 = arith.mulf %282, %256 : vector<2x128xf32>
    %292 = arith.mulf %276, %284 : vector<2x128xf32>
    %293 = arith.addf %291, %292 : vector<2x128xf32>
    %294 = math.tanh %293 : vector<2x128xf32>
    %295 = arith.mulf %290, %294 : vector<2x128xf32>
    %296 = arith.index_cast %265 : i32 to index
    %c0_81 = arith.constant 0 : index
    %c0_82 = arith.constant 0 : index
    %297 = vector.load %arg3[%296, %c0_81, %c0_82] : memref<8x2x128xf32, #tpu.memory_space<vmem>>, vector<1x2x128xf32>
    %298 = vector.shape_cast %297 : vector<1x2x128xf32> to vector<2x128xf32>
    %299 = vector.shape_cast %295 : vector<2x128xf32> to vector<1x2x128xf32>
    tpu.vector_store %arg3[%296, %c0_81, %c0_82], %299 {strides = array<i32>} : memref<8x2x128xf32, #tpu.memory_space<vmem>>, vector<1x2x128xf32>,
    %c8_i32 = arith.constant 8 : i32
    return
  }
  func.func @transform_0(%arg0: i32) -> (i32, i32, i32) {
    %c0_i32 = arith.constant 0 : i32
    %c0_i32_0 = arith.constant 0 : i32
    %c0_i32_1 = arith.constant 0 : i32
    return %c0_i32, %c0_i32_0, %arg0 : i32, i32, i32
  }
  func.func @transform_1(%arg0: i32) -> (i32, i32, i32) {
    %c0_i32 = arith.constant 0 : i32
    %c0_i32_0 = arith.constant 0 : i32
    %c0_i32_1 = arith.constant 0 : i32
    return %arg0, %c0_i32, %c0_i32_0 : i32, i32, i32
  }
  func.func @transform_2(%arg0: i32) -> (i32, i32, i32) {
    %c0_i32 = arith.constant 0 : i32
    %c0_i32_0 = arith.constant 0 : i32
    %c0_i32_1 = arith.constant 0 : i32
    return %c0_i32, %c0_i32_0, %arg0 : i32, i32, i32
  }
}

module attributes {stable_mosaic.version = 11 : i64} {
  func.func @_proj_kernel(%arg0: i32, %arg1: i32, %arg2: i32, %arg3: memref<16x256xbf16, #tpu.memory_space<vmem>>, %arg4: memref<256x512xbf16, #tpu.memory_space<vmem>>, %arg5: memref<1x512xf32, #tpu.memory_space<vmem>>, %arg6: memref<16x512xf32, #tpu.memory_space<vmem>>) attributes {dimension_semantics = [#tpu.dimension_semantics<parallel>, #tpu.dimension_semantics<parallel>, #tpu.dimension_semantics<arbitrary>], iteration_bounds = array<i64: 1, 2, 1>, scalar_prefetch = 0 : i64, scratch_operands = 0 : i64, tpu.core_type = #tpu.core_type<tc>, window_params = [{transform_indices = @transform_0, window_bounds = array<i64: 16, 256>}, {transform_indices = @transform_1, window_bounds = array<i64: 256, 512>}, {transform_indices = @transform_2, window_bounds = array<i64: 1, 512>}, {transform_indices = @transform_3, window_bounds = array<i64: 16, 512>}]} {
    %c0_i32 = arith.constant 0 : i32
    %0 = arith.cmpi eq, %arg2, %c0_i32 : i32
    %1 = arith.extui %0 : i1 to i32
    %c0_i32_0 = arith.constant 0 : i32
    %2 = arith.cmpi ne, %1, %c0_i32_0 : i32
    scf.if %2 {
      %c0_8 = arith.constant 0 : index
      %c0_9 = arith.constant 0 : index
      %9 = vector.load %arg5[%c0_8, %c0_9] : memref<1x512xf32, #tpu.memory_space<vmem>>, vector<1x512xf32>
      %10 = vector.shape_cast %9 : vector<1x512xf32> to vector<1x512xf32>
      %11 = vector.broadcast %10 : vector<1x512xf32> to vector<16x512xf32>
      %c0_10 = arith.constant 0 : index
      %c0_11 = arith.constant 0 : index
      %12 = vector.load %arg6[%c0_10, %c0_11] : memref<16x512xf32, #tpu.memory_space<vmem>>, vector<16x512xf32>
      tpu.vector_store %arg6[%c0_10, %c0_11], %11 {strides = array<i32>} : memref<16x512xf32, #tpu.memory_space<vmem>>, vector<16x512xf32>,
    } else {
    }
    %c0 = arith.constant 0 : index
    %c0_1 = arith.constant 0 : index
    %3 = vector.load %arg6[%c0, %c0_1] : memref<16x512xf32, #tpu.memory_space<vmem>>, vector<16x512xf32>
    %c0_2 = arith.constant 0 : index
    %c0_3 = arith.constant 0 : index
    %4 = vector.load %arg3[%c0_2, %c0_3] : memref<16x256xbf16, #tpu.memory_space<vmem>>, vector<16x256xbf16>
    %c0_4 = arith.constant 0 : index
    %c0_5 = arith.constant 0 : index
    %5 = vector.load %arg4[%c0_4, %c0_5] : memref<256x512xbf16, #tpu.memory_space<vmem>>, vector<256x512xbf16>
    %cst = arith.constant dense<0.000000e+00> : vector<16x512xf32>
    %6 = tpu.matmul %4, %5, %cst {dimension_numbers = #tpu.dot_dimension_numbers<[1], [0], [0], [1], [0, 0, 1, 1], [], []>} : vector<16x256xbf16>, vector<256x512xbf16>, vector<16x512xf32> -> vector<16x512xf32>
    %7 = arith.addf %3, %6 : vector<16x512xf32>
    %c0_6 = arith.constant 0 : index
    %c0_7 = arith.constant 0 : index
    %8 = vector.load %arg6[%c0_6, %c0_7] : memref<16x512xf32, #tpu.memory_space<vmem>>, vector<16x512xf32>
    tpu.vector_store %arg6[%c0_6, %c0_7], %7 {strides = array<i32>} : memref<16x512xf32, #tpu.memory_space<vmem>>, vector<16x512xf32>,
    return
  }
  func.func @transform_0(%arg0: i32, %arg1: i32, %arg2: i32) -> (i32, i32) {
    %c0_i32 = arith.constant 0 : i32
    return %arg0, %arg2 : i32, i32
  }
  func.func @transform_1(%arg0: i32, %arg1: i32, %arg2: i32) -> (i32, i32) {
    %c0_i32 = arith.constant 0 : i32
    return %arg2, %arg1 : i32, i32
  }
  func.func @transform_2(%arg0: i32, %arg1: i32, %arg2: i32) -> (i32, i32) {
    %c0_i32 = arith.constant 0 : i32
    %c0_i32_0 = arith.constant 0 : i32
    return %c0_i32, %arg1 : i32, i32
  }
  func.func @transform_3(%arg0: i32, %arg1: i32, %arg2: i32) -> (i32, i32) {
    %c0_i32 = arith.constant 0 : i32
    return %arg0, %arg1 : i32, i32
  }
}

</mosaic_0001>

<llo_original>
// kernel: iwcd_forward.10
$region0: #{iwcd_forward.10}
  #allocation0 [shape = 'u32[]', space=smem, size = 0x4, offset = 0x4, fixed_abs, tag = 'smem constant byte address 0x4 - core index']
  #allocation1 [shape = 'u32[144,128]{1,0:T(1,128)}', space=vmem, size = 0x12000, scoped, tag = 'internal scratch']
  %s0 = inlined_call_operand.vmem [shape: bf16[16,256], index: 0, kind: input, shape index: {}]
  %s1 = inlined_call_operand.vmem [shape: bf16[256,1024], index: 1, kind: input, shape index: {}]
  %s2 = inlined_call_operand.vmem [shape: f32[1,1024], index: 2, kind: input, shape index: {}]
  %s3 = inlined_call_operand.vmem [shape: f32[16,1024], index: 3, kind: output, shape index: {}]
  %s4 = sld [smem:[#allocation0]]
  $region91: #{iwcd_forward.10} parent=0
    _
  %s6 = ssub.s32 1, %s4
  %s7 = scalar_select 0, %s6, %s4
  $region1: #{iwcd_forward.10} parent=0
    #allocation2 [shape = 'u8[524288]{0}', space=vmem, size = 0x80000, scoped, tag = 'input window, operand 1']
    #allocation3 [shape = 'u8[65536]{0}', space=vmem, size = 0x10000, scoped, tag = 'output window, operand 0']
    loop: start=0, step=1, limit=4
    $region2: #{iwcd_forward.10} parent=1 // loop_pre_header
      _
    $region3: #{iwcd_forward.10} parent=1 // loop_header
      %s9 = sphi 0, %s13
      %p10 = scmp.ge.s32.totalorder %s9, 4
      %s16 = sphi 0, %s35
      %s17 = sphi 0, %s31
      %s18 = sphi 0, %s27
      %s19 = sphi 0, %s16
      %s20 = sphi 0, %s17
      %s21 = sphi 0, %s18
      %s22 = sphi 0, %s19
      %s23 = sphi 0, %s20
      %s24 = sphi 0, %s21
      %s40 = sphi 0, %s42
      %s43 = sphi 0, %s40
      %s44 = sphi 0, %s43
      %s60 = sphi 0, %s44
      %s68 = sphi 0, %s70
      %s71 = sphi 0, %s68
      %s72 = sphi 0, %s71
      %s88 = sphi 0, %s72
      %s94 = sphi 0, %s96
      %s97 = sphi 0, %s94
      %s98 = sphi 0, %s97
      %s114 = sphi 0, %s98
      %s122 = sphi 0, %s124
      %s125 = sphi 0, %s122
      %s126 = sphi 0, %s125
      %s142 = sphi 0, %s126
    $region4: #{iwcd_forward.10} parent=1 // loop_header_branch
      %12 = sbr.rel (%p10) target = $region8
    $region5: #{iwcd_forward.10} parent=1 // loop_body
      %s14 = ssub.s32 %s9, 1
      %s15 = ssub.s32 %s9, 2
      %s25 = sadd.s32 1, %s18
      %p26 = scmp.ge.s32.totalorder %s25, 1
      %s27 = scalar_select %p26, 0, %s25
      %s28 = sadd.s32 1, %s17
      %s29 = scalar_select %p26, %s28, %s17
      %p30 = scmp.ge.s32.totalorder %s29, 2
      %s31 = scalar_select %p30, 0, %s29
      %s32 = sadd.s32 1, %s16
      %s33 = scalar_select %p30, %s32, %s16
      %p34 = scmp.ge.s32.totalorder %s33, 1
      %s35 = scalar_select %p34, 0, %s33
      %s36 = ssub.s32 %s16, %s35
      %s37 = ssub.s32 %s18, %s27
      %s38 = sor.u32 %s36, %s37
      %p39 = scmp.eq.s32.totalorder %s38, 0
      %s41 = sadd.s32 %s40, 1
      %s42 = scalar_select %p39, %s40, %s41
      %p45 = pneg %p39
      %p46 = scmp.eq.s32.totalorder %s9, 1
      %p47 = por %p45, %p46
      %p48 = scmp.ne.s32.totalorder %s40, %s43
      %p49 = scmp.eq.s32.totalorder %s9, 0
      %p50 = por %p48, %p49
      %p51 = scmp.ne.s32.totalorder %s40, %s43
      %p52 = scmp.eq.s32.totalorder %s14, 1
      %p53 = por %p51, %p52
      %p54 = scmp.ne.s32.totalorder %s43, %s44
      %p55 = scmp.eq.s32.totalorder %s14, 0
      %p56 = por %p54, %p55
      %p57 = scmp.ne.s32.totalorder %s43, %s44
      %p58 = scmp.eq.s32.totalorder %s15, 1
      %p59 = por %p57, %p58
      %p61 = scmp.ne.s32.totalorder %s44, %s60
      %p62 = scmp.eq.s32.totalorder %s15, 0
      %p63 = por %p61, %p62
      %s64 = ssub.s32 %s18, %s27
      %s65 = ssub.s32 %s17, %s31
      %s66 = sor.u32 %s64, %s65
      %p67 = scmp.eq.s32.totalorder %s66, 0
      %s69 = sadd.s32 %s68, 1
      %s70 = scalar_select %p67, %s68, %s69
      %p73 = pneg %p67
      %p74 = scmp.eq.s32.totalorder %s9, 1
      %p75 = por %p73, %p74
      %p76 = scmp.ne.s32.totalorder %s68, %s71
      %p77 = scmp.eq.s32.totalorder %s9, 0
      %p78 = por %p76, %p77
      %p79 = scmp.ne.s32.totalorder %s68, %s71
      %p80 = scmp.eq.s32.totalorder %s14, 1
      %p81 = por %p79, %p80
      %p82 = scmp.ne.s32.totalorder %s71, %s72
      %p83 = scmp.eq.s32.totalorder %s14, 0
      %p84 = por %p82, %p83
      %p85 = scmp.ne.s32.totalorder %s71, %s72
      %p86 = scmp.eq.s32.totalorder %s15, 1
      %p87 = por %p85, %p86
      %p89 = scmp.ne.s32.totalorder %s72, %s88
      %p90 = scmp.eq.s32.totalorder %s15, 0
      %p91 = por %p89, %p90
      %s92 = ssub.s32 %s17, %s31
      %p93 = scmp.eq.s32.totalorder %s92, 0
      %s95 = sadd.s32 %s94, 1
      %s96 = scalar_select %p93, %s94, %s95
      %p99 = pneg %p93
      %p100 = scmp.eq.s32.totalorder %s9, 1
      %p101 = por %p99, %p100
      %p102 = scmp.ne.s32.totalorder %s94, %s97
      %p103 = scmp.eq.s32.totalorder %s9, 0
      %p104 = por %p102, %p103
      %p105 = scmp.ne.s32.totalorder %s94, %s97
      %p106 = scmp.eq.s32.totalorder %s14, 1
      %p107 = por %p105, %p106
      %p108 = scmp.ne.s32.totalorder %s97, %s98
      %p109 = scmp.eq.s32.totalorder %s14, 0
      %p110 = por %p108, %p109
      %p111 = scmp.ne.s32.totalorder %s97, %s98
      %p112 = scmp.eq.s32.totalorder %s15, 1
      %p113 = por %p111, %p112
      %p115 = scmp.ne.s32.totalorder %s98, %s114
      %p116 = scmp.eq.s32.totalorder %s15, 0
      %p117 = por %p115, %p116
      %s118 = ssub.s32 %s16, %s35
      %s119 = ssub.s32 %s17, %s31
      %s120 = sor.u32 %s118, %s119
      %p121 = scmp.eq.s32.totalorder %s120, 0
      %s123 = sadd.s32 %s122, 1
      %s124 = scalar_select %p121, %s122, %s123
      %p127 = pneg %p121
      %p128 = scmp.eq.s32.totalorder %s9, 1
      %p129 = por %p127, %p128
      %p130 = scmp.ne.s32.totalorder %s122, %s125
      %p131 = scmp.eq.s32.totalorder %s9, 0
      %p132 = por %p130, %p131
      %p133 = scmp.ne.s32.totalorder %s122, %s125
      %p134 = scmp.eq.s32.totalorder %s14, 1
      %p135 = por %p133, %p134
      %p136 = scmp.ne.s32.totalorder %s125, %s126
      %p137 = scmp.eq.s32.totalorder %s14, 0
      %p138 = por %p136, %p137
      %p139 = scmp.ne.s32.totalorder %s125, %s126
      %p140 = scmp.eq.s32.totalorder %s15, 1
      %p141 = por %p139, %p140
      %p143 = scmp.ne.s32.totalorder %s126, %s142
      %p144 = scmp.eq.s32.totalorder %s15, 0
      %p145 = por %p143, %p144
      %p146 = scmp.le.s32.totalorder 1, %s9
      %p147 = scmp.lt.s32.totalorder %s9, 3
      %p148 = pnand %p146, %p147
      %p149 = pneg %p148
      // Predicated region
      $region9: #{iwcd_forward.10} parent=5 // pred_check
        _
      $region10: #{iwcd_forward.10} parent=5 // pred_check_branch
        %151 = sbr.rel (%p148) target = $region12
      $region11: #{iwcd_forward.10} parent=5 // pred_region
        %s152 = ssub.s32 %s9, 1
        // Predicated region
        $region13: #{iwcd_forward.10} parent=11 // pred_check
          %p153 = pneg %p56
        $region14: #{iwcd_forward.10} parent=11 // pred_check_branch
          %155 = sbr.rel (%p153) target = $region16
        $region15: #{iwcd_forward.10} parent=11 // pred_region
          %s156 = smul.u32 2, %s19
          %s157 = smul.u32 2, %s21
          %p158 = scmp.lt.s32.totalorder %s156, 1
          %s159 = scalar_select %p158, %s156, 1
          %p160 = scmp.lt.s32.totalorder %s157, 1
          %s161 = scalar_select %p160, %s157, 1
          %s162 = smul.addr %s159, 2
          %s163 = sadd.s32 %s161, %s162
          %s164 = smul.addr %s163, 4
          %s165 = scalar_lea.vmem %s0, %s164
          %s166 = smul.u32 2, %s19
          %s167 = smul.u32 2, %s21
        $region16: #{iwcd_forward.10} parent=11 // pred_fallthru
          _
      $region12: #{iwcd_forward.10} parent=5 // pred_fallthru
        _
      %p168 = scmp.lt.s32.totalorder %s9, 2
      // Predicated region
      $region17: #{iwcd_forward.10} parent=5 // pred_check
        %p169 = pneg %p168
      $region18: #{iwcd_forward.10} parent=5 // pred_check_branch
        %171 = sbr.rel (%p169) target = $region20
      $region19: #{iwcd_forward.10} parent=5 // pred_region
        // Predicated region
        $region21: #{iwcd_forward.10} parent=19 // pred_check
          %p172 = pneg %p78
        $region22: #{iwcd_forward.10} parent=19 // pred_check_branch
          %174 = sbr.rel (%p172) target = $region24
        $region23: #{iwcd_forward.10} parent=19 // pred_region
          %s175 = sand.u32 %s68, 1
          %s176 = sand.u32 %s68, 1
          %s177 = smul.addr %s176, 512
          %s178 = scalar_lea.vmem [#allocation2], %s177
          %s179 = smul.u32 32, %s18
          %s180 = smul.u32 4, %s17
          %s181 = smul.addr %s179, 8
          %s182 = sadd.s32 %s180, %s181
          %s183 = smul.addr %s182, 4
          %s184 = scalar_lea.vmem %s1, %s183
          // Predicated region
          $region25: #{iwcd_forward.10} parent=23 // pred_check
            _
          $region26: #{iwcd_forward.10} parent=23 // pred_check_branch
            %186 = sbr.rel (0) target = $region28
          $region27: #{iwcd_forward.10} parent=23 // pred_region
            // Predicated region
            $region29: #{iwcd_forward.10} parent=27 // pred_check
              _
            $region30: #{iwcd_forward.10} parent=27 // pred_check_branch
              %188 = sbr.rel (0) target = $region32
            $region31: #{iwcd_forward.10} parent=27 // pred_region
              loop: start=0, step=1, limit=1
              $region33: #{iwcd_forward.10} parent=31 // loop_pre_header
                _
              $region34: #{iwcd_forward.10} parent=31 // loop_header
                %s190 = sphi 0, %s194
                %p191 = scmp.ge.s32.totalorder %s190, 1
                %s195 = sphi %s184, %s184
                %s196 = sphi %s178, %s178
              $region35: #{iwcd_forward.10} parent=31 // loop_header_branch
                %193 = sbr.rel (%p191) target = $region39
              $region36: #{iwcd_forward.10} parent=31 // loop_body
                %v197 = vld [vmem:[%s195] sm:$0xff]
                %198 = vst [vmem:[%s196] sm:$0xff] %v197
                %v199 = vld [vmem:[%s195 + $0x8] sm:$0xff]
                %200 = vst [vmem:[%s196 + $0x8] sm:$0xff] %v199
                %v201 = vld [vmem:[%s195 + $0x20] sm:$0xff]
                %202 = vst [vmem:[%s196 + $0x10] sm:$0xff] %v201
                %v203 = vld [vmem:[%s195 + $0x28] sm:$0xff]
                %204 = vst [vmem:[%s196 + $0x18] sm:$0xff] %v203
                %v205 = vld [vmem:[%s195 + $0x40] sm:$0xff]
                %206 = vst [vmem:[%s196 + $0x20] sm:$0xff] %v205
                %v207 = vld [vmem:[%s195 + $0x48] sm:$0xff]
                %208 = vst [vmem:[%s196 + $0x28] sm:$0xff] %v207
                %v209 = vld [vmem:[%s195 + $0x60] sm:$0xff]
                %210 = vst [vmem:[%s196 + $0x30] sm:$0xff] %v209
                %v211 = vld [vmem:[%s195 + $0x68] sm:$0xff]
                %212 = vst [vmem:[%s196 + $0x38] sm:$0xff] %v211
                %v213 = vld [vmem:[%s195 + $0x80] sm:$0xff]
                %214 = vst [vmem:[%s196 + $0x40] sm:$0xff] %v213
                %v215 = vld [vmem:[%s195 + $0x88] sm:$0xff]
                %216 = vst [vmem:[%s196 + $0x48] sm:$0xff] %v215
                %v217 = vld [vmem:[%s195 + $0xa0] sm:$0xff]
                %218 = vst [vmem:[%s196 + $0x50] sm:$0xff] %v217
                %v219 = vld [vmem:[%s195 + $0xa8] sm:$0xff]
                %220 = vst [vmem:[%s196 + $0x58] sm:$0xff] %v219
                %v221 = vld [vmem:[%s195 + $0xc0] sm:$0xff]
                %222 = vst [vmem:[%s196 + $0x60] sm:$0xff] %v221
                %v223 = vld [vmem:[%s195 + $0xc8] sm:$0xff]
                %224 = vst [vmem:[%s196 + $0x68] sm:$0xff] %v223
                %v225 = vld [vmem:[%s195 + $0xe0] sm:$0xff]
                %226 = vst [vmem:[%s196 + $0x70] sm:$0xff] %v225
                %v227 = vld [vmem:[%s195 + $0xe8] sm:$0xff]
                %228 = vst [vmem:[%s196 + $0x78] sm:$0xff] %v227
                %v229 = vld [vmem:[%s195 + $0x100] sm:$0xff]
                %230 = vst [vmem:[%s196 + $0x80] sm:$0xff] %v229
                %v231 = vld [vmem:[%s195 + $0x108] sm:$0xff]
                %232 = vst [vmem:[%s196 + $0x88] sm:$0xff] %v231
                %v233 = vld [vmem:[%s195 + $0x120] sm:$0xff]
                %234 = vst [vmem:[%s196 + $0x90] sm:$0xff] %v233
                %v235 = vld [vmem:[%s195 + $0x128] sm:$0xff]
                %236 = vst [vmem:[%s196 + $0x98] sm:$0xff] %v235
                %v237 = vld [vmem:[%s195 + $0x140] sm:$0xff]
                %238 = vst [vmem:[%s196 + $0xa0] sm:$0xff] %v237
                %v239 = vld [vmem:[%s195 + $0x148] sm:$0xff]
                %240 = vst [vmem:[%s196 + $0xa8] sm:$0xff] %v239
                %v241 = vld [vmem:[%s195 + $0x160] sm:$0xff]
                %242 = vst [vmem:[%s196 + $0xb0] sm:$0xff] %v241
                %v243 = vld [vmem:[%s195 + $0x168] sm:$0xff]
                %244 = vst [vmem:[%s196 + $0xb8] sm:$0xff] %v243
                %v245 = vld [vmem:[%s195 + $0x180] sm:$0xff]
                %246 = vst [vmem:[%s196 + $0xc0] sm:$0xff] %v245
                %v247 = vld [vmem:[%s195 + $0x188] sm:$0xff]
                %248 = vst [vmem:[%s196 + $0xc8] sm:$0xff] %v247
                %v249 = vld [vmem:[%s195 + $0x1a0] sm:$0xff]
                %250 = vst [vmem:[%s196 + $0xd0] sm:$0xff] %v249
                %v251 = vld [vmem:[%s195 + $0x1a8] sm:$0xff]
                %252 = vst [vmem:[%s196 + $0xd8] sm:$0xff] %v251
                %v253 = vld [vmem:[%s195 + $0x1c0] sm:$0xff]
                %254 = vst [vmem:[%s196 + $0xe0] sm:$0xff] %v253
                %v255 = vld [vmem:[%s195 + $0x1c8] sm:$0xff]
                %256 = vst [vmem:[%s196 + $0xe8] sm:$0xff] %v255
                %v257 = vld [vmem:[%s195 + $0x1e0] sm:$0xff]
                %258 = vst [vmem:[%s196 + $0xf0] sm:$0xff] %v257
                %v259 = vld [vmem:[%s195 + $0x1e8] sm:$0xff]
                %260 = vst [vmem:[%s196 + $0xf8] sm:$0xff] %v259
                %v261 = vld [vmem:[%s195 + $0x200] sm:$0xff]
                %262 = vst [vmem:[%s196 + $0x100] sm:$0xff] %v261
                %v263 = vld [vmem:[%s195 + $0x208] sm:$0xff]
                %264 = vst [vmem:[%s196 + $0x108] sm:$0xff] %v263
                %v265 = vld [vmem:[%s195 + $0x220] sm:$0xff]
                %266 = vst [vmem:[%s196 + $0x110] sm:$0xff] %v265
                %v267 = vld [vmem:[%s195 + $0x228] sm:$0xff]
                %268 = vst [vmem:[%s196 + $0x118] sm:$0xff] %v267
                %v269 = vld [vmem:[%s195 + $0x240] sm:$0xff]
                %270 = vst [vmem:[%s196 + $0x120] sm:$0xff] %v269
                %v271 = vld [vmem:[%s195 + $0x248] sm:$0xff]
                %272 = vst [vmem:[%s196 + $0x128] sm:$0xff] %v271
                %v273 = vld [vmem:[%s195 + $0x260] sm:$0xff]
                %274 = vst [vmem:[%s196 + $0x130] sm:$0xff] %v273
                %v275 = vld [vmem:[%s195 + $0x268] sm:$0xff]
                %276 = vst [vmem:[%s196 + $0x138] sm:$0xff] %v275
                %v277 = vld [vmem:[%s195 + $0x280] sm:$0xff]
                %278 = vst [vmem:[%s196 + $0x140] sm:$0xff] %v277
                %v279 = vld [vmem:[%s195 + $0x288] sm:$0xff]
                %280 = vst [vmem:[%s196 + $0x148] sm:$0xff] %v279
                %v281 = vld [vmem:[%s195 + $0x2a0] sm:$0xff]
                %282 = vst [vmem:[%s196 + $0x150] sm:$0xff] %v281
                %v283 = vld [vmem:[%s195 + $0x2a8] sm:$0xff]
                %284 = vst [vmem:[%s196 + $0x158] sm:$0xff] %v283
                %v285 = vld [vmem:[%s195 + $0x2c0] sm:$0xff]
                %286 = vst [vmem:[%s196 + $0x160] sm:$0xff] %v285
                %v287 = vld [vmem:[%s195 + $0x2c8] sm:$0xff]
                %288 = vst [vmem:[%s196 + $0x168] sm:$0xff] %v287
                %v289 = vld [vmem:[%s195 + $0x2e0] sm:$0xff]
                %290 = vst [vmem:[%s196 + $0x170] sm:$0xff] %v289
                %v291 = vld [vmem:[%s195 + $0x2e8] sm:$0xff]
                %292 = vst [vmem:[%s196 + $0x178] sm:$0xff] %v291
                %v293 = vld [vmem:[%s195 + $0x300] sm:$0xff]
                %294 = vst [vmem:[%s196 + $0x180] sm:$0xff] %v293
                %v295 = vld [vmem:[%s195 + $0x308] sm:$0xff]
                %296 = vst [vmem:[%s196 + $0x188] sm:$0xff] %v295
                %v297 = vld [vmem:[%s195 + $0x320] sm:$0xff]
                %298 = vst [vmem:[%s196 + $0x190] sm:$0xff] %v297
                %v299 = vld [vmem:[%s195 + $0x328] sm:$0xff]
                %300 = vst [vmem:[%s196 + $0x198] sm:$0xff] %v299
                %v301 = vld [vmem:[%s195 + $0x340] sm:$0xff]
                %302 = vst [vmem:[%s196 + $0x1a0] sm:$0xff] %v301
                %v303 = vld [vmem:[%s195 + $0x348] sm:$0xff]
                %304 = vst [vmem:[%s196 + $0x1a8] sm:$0xff] %v303
                %v305 = vld [vmem:[%s195 + $0x360] sm:$0xff]
                %306 = vst [vmem:[%s196 + $0x1b0] sm:$0xff] %v305
                %v307 = vld [vmem:[%s195 + $0x368] sm:$0xff]
                %308 = vst [vmem:[%s196 + $0x1b8] sm:$0xff] %v307
                %v309 = vld [vmem:[%s195 + $0x380] sm:$0xff]
                %310 = vst [vmem:[%s196 + $0x1c0] sm:$0xff] %v309
                %v311 = vld [vmem:[%s195 + $0x388] sm:$0xff]
                %312 = vst [vmem:[%s196 + $0x1c8] sm:$0xff] %v311
                %v313 = vld [vmem:[%s195 + $0x3a0] sm:$0xff]
                %314 = vst [vmem:[%s196 + $0x1d0] sm:$0xff] %v313
                %v315 = vld [vmem:[%s195 + $0x3a8] sm:$0xff]
                %316 = vst [vmem:[%s196 + $0x1d8] sm:$0xff] %v315
                %v317 = vld [vmem:[%s195 + $0x3c0] sm:$0xff]
                %318 = vst [vmem:[%s196 + $0x1e0] sm:$0xff] %v317
                %v319 = vld [vmem:[%s195 + $0x3c8] sm:$0xff]
                %320 = vst [vmem:[%s196 + $0x1e8] sm:$0xff] %v319
                %v321 = vld [vmem:[%s195 + $0x3e0] sm:$0xff]
                %322 = vst [vmem:[%s196 + $0x1f0] sm:$0xff] %v321
                %v323 = vld [vmem:[%s195 + $0x3e8] sm:$0xff]
                %324 = vst [vmem:[%s196 + $0x1f8] sm:$0xff] %v323
              $region37: #{iwcd_forward.10} parent=31 // loop_footer
                %s194 = sadd.s32 1, %s190
              $region38: #{iwcd_forward.10} parent=31 // loop_footer_branch
                %189 = sbr.rel target = $region34
              $region39: #{iwcd_forward.10} parent=31 // loop_exit
                _
            $region32: #{iwcd_forward.10} parent=27 // pred_fallthru
              _
            // Predicated region
            $region40: #{iwcd_forward.10} parent=27 // pred_check
              _
            $region41: #{iwcd_forward.10} parent=27 // pred_check_branch
              %326 = sbr.rel target = $region43
            $region42: #{iwcd_forward.10} parent=27 // pred_region
              _
            $region43: #{iwcd_forward.10} parent=27 // pred_fallthru
              _
          $region28: #{iwcd_forward.10} parent=23 // pred_fallthru
            _
          %327 = vnop
        $region24: #{iwcd_forward.10} parent=19 // pred_fallthru
          _
        // Predicated region
        $region44: #{iwcd_forward.10} parent=19 // pred_check
          %p328 = pneg %p104
        $region45: #{iwcd_forward.10} parent=19 // pred_check_branch
          %330 = sbr.rel (%p328) target = $region47
        $region46: #{iwcd_forward.10} parent=19 // pred_region
          %s331 = smul.u32 4, %s17
          %p332 = scmp.lt.s32.totalorder %s331, 7
          %s333 = scalar_select %p332, %s331, 7
          %s334 = scalar_lea.vmem %s2, %s333
          %s335 = smul.u32 4, %s17
        $region47: #{iwcd_forward.10} parent=19 // pred_fallthru
          _
      $region20: #{iwcd_forward.10} parent=5 // pred_fallthru
        _
      %p336 = scmp.le.s32.totalorder 1, %s9
      %p337 = scmp.lt.s32.totalorder %s9, 3
      %p338 = pnand %p336, %p337
      %p339 = pneg %p338
      // Predicated region
      $region48: #{iwcd_forward.10} parent=5 // pred_check
        _
      $region49: #{iwcd_forward.10} parent=5 // pred_check_branch
        %341 = sbr.rel (%p338) target = $region51
      $region50: #{iwcd_forward.10} parent=5 // pred_region
        %s342 = ssub.s32 %s9, 1
        %s343 = sand.u32 %s71, 1
        %s344 = sand.u32 %s71, 1
        %s345 = smul.addr %s344, 512
        %s346 = scalar_lea.vmem [#allocation2], %s345
        // Predicated region
        $region52: #{iwcd_forward.10} parent=50 // pred_check
          %p347 = pneg %p84
        $region53: #{iwcd_forward.10} parent=50 // pred_check_branch
          %349 = sbr.rel (%p347) target = $region55
        $region54: #{iwcd_forward.10} parent=50 // pred_region
          _
        $region55: #{iwcd_forward.10} parent=50 // pred_fallthru
          _
        %s350 = smul.u32 2, %s19
        %s351 = smul.u32 2, %s21
        %p352 = scmp.lt.s32.totalorder %s350, 1
        %s353 = scalar_select %p352, %s350, 1
        %p354 = scmp.lt.s32.totalorder %s351, 1
        %s355 = scalar_select %p354, %s351, 1
        %s356 = smul.addr %s353, 2
        %s357 = sadd.s32 %s355, %s356
        %s358 = smul.addr %s357, 4
        %s359 = scalar_lea.vmem %s0, %s358
        %p360 = pneg %p56
        %p361 = pneg %p53
        %s362 = sand.u32 %s71, 1
        %s363 = sand.u32 %s71, 1
        %s364 = smul.addr %s363, 512
        %s365 = scalar_lea.vmem [#allocation2], %s364
        %p366 = pneg %p84
        %p367 = pneg %p81
        %s368 = smul.u32 4, %s20
        %p369 = scmp.lt.s32.totalorder %s368, 7
        %s370 = scalar_select %p369, %s368, 7
        %s371 = scalar_lea.vmem %s2, %s370
        %p372 = pneg %p110
        %p373 = pneg %p107
        %p374 = pneg %p138
        %p375 = pneg %p135
        %s376 = sand.u32 %s125, 1
        %s377 = sand.u32 %s125, 1
        %s378 = smul.addr %s377, 64
        %s379 = scalar_lea.vmem [#allocation3], %s378
        %s380 = smul.u32 2, %s19
        %s381 = smul.u32 2, %s21
        %p382 = scmp.lt.s32.totalorder %s380, 1
        %s383 = scalar_select %p382, %s380, 1
        %p384 = scmp.lt.s32.totalorder %s381, 1
        %s385 = scalar_select %p384, %s381, 1
        %s386 = smul.addr %s383, 2
        %s387 = sadd.s32 %s385, %s386
        %s388 = smul.addr %s387, 4
        %s389 = scalar_lea.vmem %s0, %s388
        %s390 = smul.u32 2, %s19
        %s391 = smul.u32 2, %s21
        %s392 = smul.u32 32, %s21
        %s393 = smul.u32 4, %s20
        %s394 = smul.u32 4, %s20
        %p395 = scmp.lt.s32.totalorder %s394, 7
        %s396 = scalar_select %p395, %s394, 7
        %s397 = scalar_lea.vmem %s2, %s396
        %s398 = smul.u32 4, %s20
        %s399 = smul.u32 2, %s19
        %s400 = smul.u32 4, %s20
        %p401 = scmp.eq.s32.totalorder %s21, 0
        // Predicated region
        $region56: #{iwcd_forward.10} parent=50 // pred_check
          %p402 = pneg %p401
        $region57: #{iwcd_forward.10} parent=50 // pred_check_branch
          %404 = sbr.rel (%p402) target = $region59
        $region58: #{iwcd_forward.10} parent=50 // pred_region
          %v405 = vld [vmem:[%s397] sm:$0xf]
          %v407 = vlaneseq
          %v408 = vshrl.u32 %v407, 7
          %v409 = vsub.s32 0, %v408
          %v410 = vrot.slane %v405, %v409
          %v411 = vlaneseq
          %v412 = vshrl.u32 %v411, 7
          %v413 = vsub.s32 1, %v412
          %v414 = vrot.slane %v405, %v413
          %v415 = vlaneseq
          %v416 = vshrl.u32 %v415, 7
          %v417 = vsub.s32 2, %v416
          %v418 = vrot.slane %v405, %v417
          %v419 = vlaneseq
          %v420 = vshrl.u32 %v419, 7
          %v421 = vsub.s32 3, %v420
          %v422 = vrot.slane %v405, %v421
          %427 = vst [vmem:[%s379] sm:$0xff] %v410
          %428 = vst [vmem:[%s379 + $0x8] sm:$0xff] %v414
          %429 = vst [vmem:[%s379 + $0x10] sm:$0xff] %v418
          %430 = vst [vmem:[%s379 + $0x18] sm:$0xff] %v422
          %431 = vst [vmem:[%s379 + $0x20] sm:$0xff] %v410
          %432 = vst [vmem:[%s379 + $0x28] sm:$0xff] %v414
          %433 = vst [vmem:[%s379 + $0x30] sm:$0xff] %v418
          %434 = vst [vmem:[%s379 + $0x38] sm:$0xff] %v422
        $region59: #{iwcd_forward.10} parent=50 // pred_fallthru
          _
        %v435 = vld [vmem:[%s379] sm:$0xff]
        %v436 = vld [vmem:[%s379 + $0x8] sm:$0xff]
        %v437 = vld [vmem:[%s379 + $0x10] sm:$0xff]
        %v438 = vld [vmem:[%s379 + $0x18] sm:$0xff]
        %v439 = vld [vmem:[%s379 + $0x20] sm:$0xff]
        %v440 = vld [vmem:[%s379 + $0x28] sm:$0xff]
        %v441 = vld [vmem:[%s379 + $0x30] sm:$0xff]
        %v442 = vld [vmem:[%s379 + $0x38] sm:$0xff]
        %v443 = vld [vmem:[%s389] sm:$0xff]
        %v444 = vld [vmem:[%s389 + $0x8] sm:$0xff]
        %v445 = vld [vmem:[%s346] sm:$0xff]
        %v446 = vld [vmem:[%s346 + $0x8] sm:$0xff]
        %v447 = vld [vmem:[%s346 + $0x10] sm:$0xff]
        %v448 = vld [vmem:[%s346 + $0x18] sm:$0xff]
        %v449 = vld [vmem:[%s346 + $0x20] sm:$0xff]
        %v450 = vld [vmem:[%s346 + $0x28] sm:$0xff]
        %v451 = vld [vmem:[%s346 + $0x30] sm:$0xff]
        %v452 = vld [vmem:[%s346 + $0x38] sm:$0xff]
        %v453 = vld [vmem:[%s346 + $0x40] sm:$0xff]
        %v454 = vld [vmem:[%s346 + $0x48] sm:$0xff]
        %v455 = vld [vmem:[%s346 + $0x50] sm:$0xff]
        %v456 = vld [vmem:[%s346 + $0x58] sm:$0xff]
        %v457 = vld [vmem:[%s346 + $0x60] sm:$0xff]
        %v458 = vld [vmem:[%s346 + $0x68] sm:$0xff]
        %v459 = vld [vmem:[%s346 + $0x70] sm:$0xff]
        %v460 = vld [vmem:[%s346 + $0x78] sm:$0xff]
        %v461 = vld [vmem:[%s346 + $0x80] sm:$0xff]
        %v462 = vld [vmem:[%s346 + $0x88] sm:$0xff]
        %v463 = vld [vmem:[%s346 + $0x90] sm:$0xff]
        %v464 = vld [vmem:[%s346 + $0x98] sm:$0xff]
        %v465 = vld [vmem:[%s346 + $0xa0] sm:$0xff]
        %v466 = vld [vmem:[%s346 + $0xa8] sm:$0xff]
        %v467 = vld [vmem:[%s346 + $0xb0] sm:$0xff]
        %v468 = vld [vmem:[%s346 + $0xb8] sm:$0xff]
        %v469 = vld [vmem:[%s346 + $0xc0] sm:$0xff]
        %v470 = vld [vmem:[%s346 + $0xc8] sm:$0xff]
        %v471 = vld [vmem:[%s346 + $0xd0] sm:$0xff]
        %v472 = vld [vmem:[%s346 + $0xd8] sm:$0xff]
        %v473 = vld [vmem:[%s346 + $0xe0] sm:$0xff]
        %v474 = vld [vmem:[%s346 + $0xe8] sm:$0xff]
        %v475 = vld [vmem:[%s346 + $0xf0] sm:$0xff]
        %v476 = vld [vmem:[%s346 + $0xf8] sm:$0xff]
        %v477 = vld [vmem:[%s346 + $0x100] sm:$0xff]
        %v478 = vld [vmem:[%s346 + $0x108] sm:$0xff]
        %v479 = vld [vmem:[%s346 + $0x110] sm:$0xff]
        %v480 = vld [vmem:[%s346 + $0x118] sm:$0xff]
        %v481 = vld [vmem:[%s346 + $0x120] sm:$0xff]
        %v482 = vld [vmem:[%s346 + $0x128] sm:$0xff]
        %v483 = vld [vmem:[%s346 + $0x130] sm:$0xff]
        %v484 = vld [vmem:[%s346 + $0x138] sm:$0xff]
        %v485 = vld [vmem:[%s346 + $0x140] sm:$0xff]
        %v486 = vld [vmem:[%s346 + $0x148] sm:$0xff]
        %v487 = vld [vmem:[%s346 + $0x150] sm:$0xff]
        %v488 = vld [vmem:[%s346 + $0x158] sm:$0xff]
        %v489 = vld [vmem:[%s346 + $0x160] sm:$0xff]
        %v490 = vld [vmem:[%s346 + $0x168] sm:$0xff]
        %v491 = vld [vmem:[%s346 + $0x170] sm:$0xff]
        %v492 = vld [vmem:[%s346 + $0x178] sm:$0xff]
        %v493 = vld [vmem:[%s346 + $0x180] sm:$0xff]
        %v494 = vld [vmem:[%s346 + $0x188] sm:$0xff]
        %v495 = vld [vmem:[%s346 + $0x190] sm:$0xff]
        %v496 = vld [vmem:[%s346 + $0x198] sm:$0xff]
        %v497 = vld [vmem:[%s346 + $0x1a0] sm:$0xff]
        %v498 = vld [vmem:[%s346 + $0x1a8] sm:$0xff]
        %v499 = vld [vmem:[%s346 + $0x1b0] sm:$0xff]
        %v500 = vld [vmem:[%s346 + $0x1b8] sm:$0xff]
        %v501 = vld [vmem:[%s346 + $0x1c0] sm:$0xff]
        %v502 = vld [vmem:[%s346 + $0x1c8] sm:$0xff]
        %v503 = vld [vmem:[%s346 + $0x1d0] sm:$0xff]
        %v504 = vld [vmem:[%s346 + $0x1d8] sm:$0xff]
        %v505 = vld [vmem:[%s346 + $0x1e0] sm:$0xff]
        %v506 = vld [vmem:[%s346 + $0x1e8] sm:$0xff]
        %v507 = vld [vmem:[%s346 + $0x1f0] sm:$0xff]
        %v508 = vld [vmem:[%s346 + $0x1f8] sm:$0xff]
        %v511 = vunpack.c.l.b16 %v443
        %v512 = vunpack.c.h.b16 %v443
        %v513 = vunpack.c.l.b16 %v444
        %v514 = vunpack.c.h.b16 %v444
        %v515 = vpack.c.b16 %v513, %v511
        %v516 = vpack.c.b16 %v514, %v512
        %v583 = vunpack.c.l.b16 %v445
        %v584 = vunpack.c.h.b16 %v445
        %v585 = vunpack.c.l.b16 %v446
        %v586 = vunpack.c.h.b16 %v446
        %v587 = vunpack.c.l.b16 %v447
        %v588 = vunpack.c.h.b16 %v447
        %v589 = vunpack.c.l.b16 %v448
        %v590 = vunpack.c.h.b16 %v448
        %v591 = vunpack.c.l.b16 %v449
        %v592 = vunpack.c.h.b16 %v449
        %v593 = vunpack.c.l.b16 %v450
        %v594 = vunpack.c.h.b16 %v450
        %v595 = vunpack.c.l.b16 %v451
        %v596 = vunpack.c.h.b16 %v451
        %v597 = vunpack.c.l.b16 %v452
        %v598 = vunpack.c.h.b16 %v452
        %v599 = vunpack.c.l.b16 %v453
        %v600 = vunpack.c.h.b16 %v453
        %v601 = vunpack.c.l.b16 %v454
        %v602 = vunpack.c.h.b16 %v454
        %v603 = vunpack.c.l.b16 %v455
        %v604 = vunpack.c.h.b16 %v455
        %v605 = vunpack.c.l.b16 %v456
        %v606 = vunpack.c.h.b16 %v456
        %v607 = vunpack.c.l.b16 %v457
        %v608 = vunpack.c.h.b16 %v457
        %v609 = vunpack.c.l.b16 %v458
        %v610 = vunpack.c.h.b16 %v458
        %v611 = vunpack.c.l.b16 %v459
        %v612 = vunpack.c.h.b16 %v459
        %v613 = vunpack.c.l.b16 %v460
        %v614 = vunpack.c.h.b16 %v460
        %v615 = vunpack.c.l.b16 %v461
        %v616 = vunpack.c.h.b16 %v461
        %v617 = vunpack.c.l.b16 %v462
        %v618 = vunpack.c.h.b16 %v462
        %v619 = vunpack.c.l.b16 %v463
        %v620 = vunpack.c.h.b16 %v463
        %v621 = vunpack.c.l.b16 %v464
        %v622 = vunpack.c.h.b16 %v464
        %v623 = vunpack.c.l.b16 %v465
        %v624 = vunpack.c.h.b16 %v465
        %v625 = vunpack.c.l.b16 %v466
        %v626 = vunpack.c.h.b16 %v466
        %v627 = vunpack.c.l.b16 %v467
        %v628 = vunpack.c.h.b16 %v467
        %v629 = vunpack.c.l.b16 %v468
        %v630 = vunpack.c.h.b16 %v468
        %v631 = vunpack.c.l.b16 %v469
        %v632 = vunpack.c.h.b16 %v469
        %v633 = vunpack.c.l.b16 %v470
        %v634 = vunpack.c.h.b16 %v470
        %v635 = vunpack.c.l.b16 %v471
        %v636 = vunpack.c.h.b16 %v471
        %v637 = vunpack.c.l.b16 %v472
        %v638 = vunpack.c.h.b16 %v472
        %v639 = vunpack.c.l.b16 %v473
        %v640 = vunpack.c.h.b16 %v473
        %v641 = vunpack.c.l.b16 %v474
        %v642 = vunpack.c.h.b16 %v474
        %v643 = vunpack.c.l.b16 %v475
        %v644 = vunpack.c.h.b16 %v475
        %v645 = vunpack.c.l.b16 %v476
        %v646 = vunpack.c.h.b16 %v476
        %v647 = vunpack.c.l.b16 %v477
        %v648 = vunpack.c.h.b16 %v477
        %v649 = vunpack.c.l.b16 %v478
        %v650 = vunpack.c.h.b16 %v478
        %v651 = vunpack.c.l.b16 %v479
        %v652 = vunpack.c.h.b16 %v479
        %v653 = vunpack.c.l.b16 %v480
        %v654 = vunpack.c.h.b16 %v480
        %v655 = vunpack.c.l.b16 %v481
        %v656 = vunpack.c.h.b16 %v481
        %v657 = vunpack.c.l.b16 %v482
        %v658 = vunpack.c.h.b16 %v482
        %v659 = vunpack.c.l.b16 %v483
        %v660 = vunpack.c.h.b16 %v483
        %v661 = vunpack.c.l.b16 %v484
        %v662 = vunpack.c.h.b16 %v484
        %v663 = vunpack.c.l.b16 %v485
        %v664 = vunpack.c.h.b16 %v485
        %v665 = vunpack.c.l.b16 %v486
        %v666 = vunpack.c.h.b16 %v486
        %v667 = vunpack.c.l.b16 %v487
        %v668 = vunpack.c.h.b16 %v487
        %v669 = vunpack.c.l.b16 %v488
        %v670 = vunpack.c.h.b16 %v488
        %v671 = vunpack.c.l.b16 %v489
        %v672 = vunpack.c.h.b16 %v489
        %v673 = vunpack.c.l.b16 %v490
        %v674 = vunpack.c.h.b16 %v490
        %v675 = vunpack.c.l.b16 %v491
        %v676 = vunpack.c.h.b16 %v491
        %v677 = vunpack.c.l.b16 %v492
        %v678 = vunpack.c.h.b16 %v492
        %v679 = vunpack.c.l.b16 %v493
        %v680 = vunpack.c.h.b16 %v493
        %v681 = vunpack.c.l.b16 %v494
        %v682 = vunpack.c.h.b16 %v494
        %v683 = vunpack.c.l.b16 %v495
        %v684 = vunpack.c.h.b16 %v495
        %v685 = vunpack.c.l.b16 %v496
        %v686 = vunpack.c.h.b16 %v496
        %v687 = vunpack.c.l.b16 %v497
        %v688 = vunpack.c.h.b16 %v497
        %v689 = vunpack.c.l.b16 %v498
        %v690 = vunpack.c.h.b16 %v498
        %v691 = vunpack.c.l.b16 %v499
        %v692 = vunpack.c.h.b16 %v499
        %v693 = vunpack.c.l.b16 %v500
        %v694 = vunpack.c.h.b16 %v500
        %v695 = vunpack.c.l.b16 %v501
        %v696 = vunpack.c.h.b16 %v501
        %v697 = vunpack.c.l.b16 %v502
        %v698 = vunpack.c.h.b16 %v502
        %v699 = vunpack.c.l.b16 %v503
        %v700 = vunpack.c.h.b16 %v503
        %v701 = vunpack.c.l.b16 %v504
        %v702 = vunpack.c.h.b16 %v504
        %v703 = vunpack.c.l.b16 %v505
        %v704 = vunpack.c.h.b16 %v505
        %v705 = vunpack.c.l.b16 %v506
        %v706 = vunpack.c.h.b16 %v506
        %v707 = vunpack.c.l.b16 %v507
        %v708 = vunpack.c.h.b16 %v507
        %v709 = vunpack.c.l.b16 %v508
        %v710 = vunpack.c.h.b16 %v508
        %v711 = vpack.c.b16 %v587, %v583
        %v712 = vpack.c.b16 %v588, %v584
        %v713 = vpack.c.b16 %v589, %v585
        %v714 = vpack.c.b16 %v590, %v586
        %v715 = vpack.c.b16 %v595, %v591
        %v716 = vpack.c.b16 %v596, %v592
        %v717 = vpack.c.b16 %v597, %v593
        %v718 = vpack.c.b16 %v598, %v594
        %v719 = vpack.c.b16 %v603, %v599
        %v720 = vpack.c.b16 %v604, %v600
        %v721 = vpack.c.b16 %v605, %v601
        %v722 = vpack.c.b16 %v606, %v602
        %v723 = vpack.c.b16 %v611, %v607
        %v724 = vpack.c.b16 %v612, %v608
        %v725 = vpack.c.b16 %v613, %v609
        %v726 = vpack.c.b16 %v614, %v610
        %v727 = vpack.c.b16 %v619, %v615
        %v728 = vpack.c.b16 %v620, %v616
        %v729 = vpack.c.b16 %v621, %v617
        %v730 = vpack.c.b16 %v622, %v618
        %v731 = vpack.c.b16 %v627, %v623
        %v732 = vpack.c.b16 %v628, %v624
        %v733 = vpack.c.b16 %v629, %v625
        %v734 = vpack.c.b16 %v630, %v626
        %v735 = vpack.c.b16 %v635, %v631
        %v736 = vpack.c.b16 %v636, %v632
        %v737 = vpack.c.b16 %v637, %v633
        %v738 = vpack.c.b16 %v638, %v634
        %v739 = vpack.c.b16 %v643, %v639
        %v740 = vpack.c.b16 %v644, %v640
        %v741 = vpack.c.b16 %v645, %v641
        %v742 = vpack.c.b16 %v646, %v642
        %v743 = vpack.c.b16 %v651, %v647
        %v744 = vpack.c.b16 %v652, %v648
        %v745 = vpack.c.b16 %v653, %v649
        %v746 = vpack.c.b16 %v654, %v650
        %v747 = vpack.c.b16 %v659, %v655
        %v748 = vpack.c.b16 %v660, %v656
        %v749 = vpack.c.b16 %v661, %v657
        %v750 = vpack.c.b16 %v662, %v658
        %v751 = vpack.c.b16 %v667, %v663
        %v752 = vpack.c.b16 %v668, %v664
        %v753 = vpack.c.b16 %v669, %v665
        %v754 = vpack.c.b16 %v670, %v666
        %v755 = vpack.c.b16 %v675, %v671
        %v756 = vpack.c.b16 %v676, %v672
        %v757 = vpack.c.b16 %v677, %v673
        %v758 = vpack.c.b16 %v678, %v674
        %v759 = vpack.c.b16 %v683, %v679
        %v760 = vpack.c.b16 %v684, %v680
        %v761 = vpack.c.b16 %v685, %v681
        %v762 = vpack.c.b16 %v686, %v682
        %v763 = vpack.c.b16 %v691, %v687
        %v764 = vpack.c.b16 %v692, %v688
        %v765 = vpack.c.b16 %v693, %v689
        %v766 = vpack.c.b16 %v694, %v690
        %v767 = vpack.c.b16 %v699, %v695
        %v768 = vpack.c.b16 %v700, %v696
        %v769 = vpack.c.b16 %v701, %v697
        %v770 = vpack.c.b16 %v702, %v698
        %v771 = vpack.c.b16 %v707, %v703
        %v772 = vpack.c.b16 %v708, %v704
        %v773 = vpack.c.b16 %v709, %v705
        %v774 = vpack.c.b16 %v710, %v706
        %839 = vmatprep.subr.bf16.mxu0 %v712
        %840 = vmatpush1.bf16.msra.mxu0 %v711
        %841 = vmatprep.subr.bf16.mxu0 %v716
        %842 = vmatpush1.bf16.msra.mxu0 %v715
        %843 = vmatprep.subr.bf16.mxu0 %v720
        %844 = vmatpush1.bf16.msra.mxu0 %v719
        %845 = vmatprep.subr.bf16.mxu0 %v724
        %846 = vmatpush1.bf16.msra.mxu0 %v723
        %847 = vmatprep.subr.bf16.mxu0 %v728
        %848 = vmatpush1.bf16.msra.mxu0 %v727
        %849 = vmatprep.subr.bf16.mxu0 %v732
        %850 = vmatpush1.bf16.msra.mxu0 %v731
        %851 = vmatprep.subr.bf16.mxu0 %v736
        %852 = vmatpush1.bf16.msra.mxu0 %v735
        %853 = vmatprep.subr.bf16.mxu0 %v740
        %854 = vmatpush1.bf16.msra.mxu0 %v739
        %855 = vmatprep.subr.bf16.mxu0 %v744
        %856 = vmatpush1.bf16.msra.mxu0 %v743
        %857 = vmatprep.subr.bf16.mxu0 %v748
        %858 = vmatpush1.bf16.msra.mxu0 %v747
        %859 = vmatprep.subr.bf16.mxu0 %v752
        %860 = vmatpush1.bf16.msra.mxu0 %v751
        %861 = vmatprep.subr.bf16.mxu0 %v756
        %862 = vmatpush1.bf16.msra.mxu0 %v755
        %863 = vmatprep.subr.bf16.mxu0 %v760
        %864 = vmatpush1.bf16.msra.mxu0 %v759
        %865 = vmatprep.subr.bf16.mxu0 %v764
        %866 = vmatpush1.bf16.msra.mxu0 %v763
        %867 = vmatprep.subr.bf16.mxu0 %v768
        %868 = vmatpush1.bf16.msra.mxu0 %v767
        %869 = vmatprep.subr.bf16.mxu0 %v772
        %870 = vmatpush1.bf16.msra.mxu0 %v771
        %871 = vmatprep.mubr.bf16.mxu0 %v516
        %872 = vmatmul.mubr.bf16.gmra.mrb[0].mxu0 %v515
        %v873 = vpop.f32.mrb[0].mxu0
        %v874 = vadd.f32 0.0, %v873
        %v875 = vpop.f32.mrb[0].mxu0
        %v876 = vadd.f32 0.0, %v875
        %v877 = vpop.f32.mrb[0].mxu0
        %v878 = vadd.f32 0.0, %v877
        %v879 = vpop.f32.mrb[0].mxu0
        %v880 = vadd.f32 0.0, %v879
        %881 = vdwg.mxu0
        %882 = vmatprep.subr.bf16.mxu0 %v714
        %883 = vmatpush1.bf16.msra.mxu0 %v713
        %884 = vmatprep.subr.bf16.mxu0 %v718
        %885 = vmatpush1.bf16.msra.mxu0 %v717
        %886 = vmatprep.subr.bf16.mxu0 %v722
        %887 = vmatpush1.bf16.msra.mxu0 %v721
        %888 = vmatprep.subr.bf16.mxu0 %v726
        %889 = vmatpush1.bf16.msra.mxu0 %v725
        %890 = vmatprep.subr.bf16.mxu0 %v730
        %891 = vmatpush1.bf16.msra.mxu0 %v729
        %892 = vmatprep.subr.bf16.mxu0 %v734
        %893 = vmatpush1.bf16.msra.mxu0 %v733
        %894 = vmatprep.subr.bf16.mxu0 %v738
        %895 = vmatpush1.bf16.msra.mxu0 %v737
        %896 = vmatprep.subr.bf16.mxu0 %v742
        %897 = vmatpush1.bf16.msra.mxu0 %v741
        %898 = vmatprep.subr.bf16.mxu0 %v746
        %899 = vmatpush1.bf16.msra.mxu0 %v745
        %900 = vmatprep.subr.bf16.mxu0 %v750
        %901 = vmatpush1.bf16.msra.mxu0 %v749
        %902 = vmatprep.subr.bf16.mxu0 %v754
        %903 = vmatpush1.bf16.msra.mxu0 %v753
        %904 = vmatprep.subr.bf16.mxu0 %v758
        %905 = vmatpush1.bf16.msra.mxu0 %v757
        %906 = vmatprep.subr.bf16.mxu0 %v762
        %907 = vmatpush1.bf16.msra.mxu0 %v761
        %908 = vmatprep.subr.bf16.mxu0 %v766
        %909 = vmatpush1.bf16.msra.mxu0 %v765
        %910 = vmatprep.subr.bf16.mxu0 %v770
        %911 = vmatpush1.bf16.msra.mxu0 %v769
        %912 = vmatprep.subr.bf16.mxu0 %v774
        %913 = vmatpush1.bf16.msra.mxu0 %v773
        %914 = vmatprep.mubr.bf16.mxu0 %v516
        %915 = vmatmul.mubr.bf16.gmra.mrb[0].mxu0 %v515
        %v916 = vpop.f32.mrb[0].mxu0
        %v917 = vadd.f32 0.0, %v916
        %v918 = vpop.f32.mrb[0].mxu0
        %v919 = vadd.f32 0.0, %v918
        %v920 = vpop.f32.mrb[0].mxu0
        %v921 = vadd.f32 0.0, %v920
        %v922 = vpop.f32.mrb[0].mxu0
        %v923 = vadd.f32 0.0, %v922
        %924 = vdwg.mxu0
        %v925 = vadd.f32 %v435, %v874
        %v926 = vadd.f32 %v436, %v876
        %v927 = vadd.f32 %v437, %v917
        %v928 = vadd.f32 %v438, %v919
        %v929 = vadd.f32 %v439, %v878
        %v930 = vadd.f32 %v440, %v880
        %v931 = vadd.f32 %v441, %v921
        %v932 = vadd.f32 %v442, %v923
        %933 = vst [vmem:[%s379] sm:$0xff] %v925
        %934 = vst [vmem:[%s379 + $0x8] sm:$0xff] %v926
        %935 = vst [vmem:[%s379 + $0x10] sm:$0xff] %v927
        %936 = vst [vmem:[%s379 + $0x18] sm:$0xff] %v928
        %937 = vst [vmem:[%s379 + $0x20] sm:$0xff] %v929
        %938 = vst [vmem:[%s379 + $0x28] sm:$0xff] %v930
        %939 = vst [vmem:[%s379 + $0x30] sm:$0xff] %v931
        %940 = vst [vmem:[%s379 + $0x38] sm:$0xff] %v932
        %s941 = sand.u32 %s125, 1
        %s942 = sand.u32 %s125, 1
        %s943 = smul.addr %s942, 64
        %s944 = scalar_lea.vmem [#allocation3], %s943
        // Predicated region
        $region60: #{iwcd_forward.10} parent=50 // pred_check
          %p945 = pneg %p135
        $region61: #{iwcd_forward.10} parent=50 // pred_check_branch
          %947 = sbr.rel (%p945) target = $region63
        $region62: #{iwcd_forward.10} parent=50 // pred_region
          %s948 = smul.u32 2, %s19
          %s949 = smul.u32 4, %s20
          %s950 = smul.addr %s948, 8
          %s951 = sadd.s32 %s949, %s950
          %s952 = smul.addr %s951, 8
          %s953 = scalar_lea.vmem %s3, %s952
          // Predicated region
          $region64: #{iwcd_forward.10} parent=62 // pred_check
            _
          $region65: #{iwcd_forward.10} parent=62 // pred_check_branch
            %955 = sbr.rel (0) target = $region67
          $region66: #{iwcd_forward.10} parent=62 // pred_region
            // Predicated region
            $region68: #{iwcd_forward.10} parent=66 // pred_check
              _
            $region69: #{iwcd_forward.10} parent=66 // pred_check_branch
              %957 = sbr.rel (0) target = $region71
            $region70: #{iwcd_forward.10} parent=66 // pred_region
              loop: start=0, step=1, limit=1
              $region72: #{iwcd_forward.10} parent=70 // loop_pre_header
                _
              $region73: #{iwcd_forward.10} parent=70 // loop_header
                %s959 = sphi 0, %s963
                %p960 = scmp.ge.s32.totalorder %s959, 1
                %s964 = sphi %s944, %s944
                %s965 = sphi %s953, %s953
              $region74: #{iwcd_forward.10} parent=70 // loop_header_branch
                %962 = sbr.rel (%p960) target = $region78
              $region75: #{iwcd_forward.10} parent=70 // loop_body
                %v966 = vld [vmem:[%s964] sm:$0xff]
                %967 = vst [vmem:[%s965] sm:$0xff] %v966
                %v968 = vld [vmem:[%s964 + $0x8] sm:$0xff]
                %969 = vst [vmem:[%s965 + $0x8] sm:$0xff] %v968
                %v970 = vld [vmem:[%s964 + $0x10] sm:$0xff]
                %971 = vst [vmem:[%s965 + $0x10] sm:$0xff] %v970
                %v972 = vld [vmem:[%s964 + $0x18] sm:$0xff]
                %973 = vst [vmem:[%s965 + $0x18] sm:$0xff] %v972
                %v974 = vld [vmem:[%s964 + $0x20] sm:$0xff]
                %975 = vst [vmem:[%s965 + $0x40] sm:$0xff] %v974
                %v976 = vld [vmem:[%s964 + $0x28] sm:$0xff]
                %977 = vst [vmem:[%s965 + $0x48] sm:$0xff] %v976
                %v978 = vld [vmem:[%s964 + $0x30] sm:$0xff]
                %979 = vst [vmem:[%s965 + $0x50] sm:$0xff] %v978
                %v980 = vld [vmem:[%s964 + $0x38] sm:$0xff]
                %981 = vst [vmem:[%s965 + $0x58] sm:$0xff] %v980
              $region76: #{iwcd_forward.10} parent=70 // loop_footer
                %s963 = sadd.s32 1, %s959
              $region77: #{iwcd_forward.10} parent=70 // loop_footer_branch
                %958 = sbr.rel target = $region73
              $region78: #{iwcd_forward.10} parent=70 // loop_exit
                _
            $region71: #{iwcd_forward.10} parent=66 // pred_fallthru
              _
            // Predicated region
            $region79: #{iwcd_forward.10} parent=66 // pred_check
              _
            $region80: #{iwcd_forward.10} parent=66 // pred_check_branch
              %983 = sbr.rel target = $region82
            $region81: #{iwcd_forward.10} parent=66 // pred_region
              _
            $region82: #{iwcd_forward.10} parent=66 // pred_fallthru
              _
          $region67: #{iwcd_forward.10} parent=62 // pred_fallthru
            _
          %984 = vnop
        $region63: #{iwcd_forward.10} parent=50 // pred_fallthru
          _
      $region51: #{iwcd_forward.10} parent=5 // pred_fallthru
        _
      %p985 = scmp.le.s32.totalorder 2, %s9
      // Predicated region
      $region83: #{iwcd_forward.10} parent=5 // pred_check
        %p986 = pneg %p985
      $region84: #{iwcd_forward.10} parent=5 // pred_check_branch
        %988 = sbr.rel (%p986) target = $region86
      $region85: #{iwcd_forward.10} parent=5 // pred_region
        %s989 = ssub.s32 %s9, 2
        // Predicated region
        $region87: #{iwcd_forward.10} parent=85 // pred_check
          %p990 = pneg %p141
        $region88: #{iwcd_forward.10} parent=85 // pred_check_branch
          %992 = sbr.rel (%p990) target = $region90
        $region89: #{iwcd_forward.10} parent=85 // pred_region
          %s993 = sand.u32 %s126, 1
          %s994 = sand.u32 %s126, 1
          %s995 = smul.addr %s994, 64
          %s996 = scalar_lea.vmem [#allocation3], %s995
        $region90: #{iwcd_forward.10} parent=85 // pred_fallthru
          _
      $region86: #{iwcd_forward.10} parent=5 // pred_fallthru
        _
    $region6: #{iwcd_forward.10} parent=1 // loop_footer
      %s13 = sadd.s32 1, %s9
    $region7: #{iwcd_forward.10} parent=1 // loop_footer_branch
      %8 = sbr.rel target = $region3
    $region8: #{iwcd_forward.10} parent=1 // loop_exit
      _

// kernel: iwcd_forward.9
$region0: #{iwcd_forward.9}
  #allocation0 [shape = 'u32[]', space=smem, size = 0x4, offset = 0x4, fixed_abs, tag = 'smem constant byte address 0x4 - core index']
  #allocation1 [shape = 'u32[144,128]{1,0:T(1,128)}', space=vmem, size = 0x12000, scoped, tag = 'internal scratch']
  %s0 = inlined_call_operand.vmem [shape: f32[8,2,1024], index: 0, kind: input, shape index: {}]
  %s1 = inlined_call_operand.vmem [shape: f32[2,128,512], index: 1, kind: input, shape index: {}]
  %s2 = inlined_call_operand.vmem [shape: f32[8,2,256], index: 2, kind: output, shape index: {}]
  %s3 = sld [smem:[#allocation0]]
  $region116: #{iwcd_forward.9} parent=0
    _
  %s5 = ssub.s32 1, %s3
  %s6 = scalar_select 0, %s5, %s3
  $region1: #{iwcd_forward.9} parent=0
    #allocation2 [shape = 'u8[65536]{0}', space=vmem, size = 0x10000, scoped, tag = 'input window, operand 0']
    #allocation3 [shape = 'u8[16384]{0}', space=vmem, size = 0x4000, scoped, tag = 'output window, operand 0']
    loop: start=0, step=1, limit=4
    $region2: #{iwcd_forward.9} parent=1 // loop_pre_header
      _
    $region3: #{iwcd_forward.9} parent=1 // loop_header
      %s8 = sphi 0, %s12
      %p9 = scmp.ge.s32.totalorder %s8, 4
      %s18 = sphi 0, %s20
      %s21 = sphi 0, %s18
      %s22 = sphi 0, %s21
      %s38 = sphi 0, %s22
      %s44 = sphi 0, %s46
      %s47 = sphi 0, %s44
      %s48 = sphi 0, %s47
      %s64 = sphi 0, %s48
      %s70 = sphi 0, %s72
      %s73 = sphi 0, %s70
      %s74 = sphi 0, %s73
      %s90 = sphi 0, %s74
    $region4: #{iwcd_forward.9} parent=1 // loop_header_branch
      %11 = sbr.rel (%p9) target = $region8
    $region5: #{iwcd_forward.9} parent=1 // loop_body
      %s13 = ssub.s32 %s8, 1
      %s14 = ssub.s32 %s8, 2
      %s15 = sadd.s32 %s8, 1
      %s16 = ssub.s32 %s8, %s15
      %p17 = scmp.eq.s32.totalorder %s16, 0
      %s19 = sadd.s32 %s18, 1
      %s20 = scalar_select %p17, %s18, %s19
      %p23 = pneg %p17
      %p24 = scmp.eq.s32.totalorder %s8, 1
      %p25 = por %p23, %p24
      %p26 = scmp.ne.s32.totalorder %s18, %s21
      %p27 = scmp.eq.s32.totalorder %s8, 0
      %p28 = por %p26, %p27
      %p29 = scmp.ne.s32.totalorder %s18, %s21
      %p30 = scmp.eq.s32.totalorder %s13, 1
      %p31 = por %p29, %p30
      %p32 = scmp.ne.s32.totalorder %s21, %s22
      %p33 = scmp.eq.s32.totalorder %s13, 0
      %p34 = por %p32, %p33
      %p35 = scmp.ne.s32.totalorder %s21, %s22
      %p36 = scmp.eq.s32.totalorder %s14, 1
      %p37 = por %p35, %p36
      %p39 = scmp.ne.s32.totalorder %s22, %s38
      %p40 = scmp.eq.s32.totalorder %s14, 0
      %p41 = por %p39, %p40
      %s42 = ssub.s32 %s8, %s15
      %p43 = scmp.eq.s32.totalorder %s42, 0
      %s45 = sadd.s32 %s44, 1
      %s46 = scalar_select %p43, %s44, %s45
      %p49 = pneg %p43
      %p50 = scmp.eq.s32.totalorder %s8, 1
      %p51 = por %p49, %p50
      %p52 = scmp.ne.s32.totalorder %s44, %s47
      %p53 = scmp.eq.s32.totalorder %s8, 0
      %p54 = por %p52, %p53
      %p55 = scmp.ne.s32.totalorder %s44, %s47
      %p56 = scmp.eq.s32.totalorder %s13, 1
      %p57 = por %p55, %p56
      %p58 = scmp.ne.s32.totalorder %s47, %s48
      %p59 = scmp.eq.s32.totalorder %s13, 0
      %p60 = por %p58, %p59
      %p61 = scmp.ne.s32.totalorder %s47, %s48
      %p62 = scmp.eq.s32.totalorder %s14, 1
      %p63 = por %p61, %p62
      %p65 = scmp.ne.s32.totalorder %s48, %s64
      %p66 = scmp.eq.s32.totalorder %s14, 0
      %p67 = por %p65, %p66
      %s68 = ssub.s32 %s8, %s15
      %p69 = scmp.eq.s32.totalorder %s68, 0
      %s71 = sadd.s32 %s70, 1
      %s72 = scalar_select %p69, %s70, %s71
      %p75 = pneg %p69
      %p76 = scmp.eq.s32.totalorder %s8, 1
      %p77 = por %p75, %p76
      %p78 = scmp.ne.s32.totalorder %s70, %s73
      %p79 = scmp.eq.s32.totalorder %s8, 0
      %p80 = por %p78, %p79
      %p81 = scmp.ne.s32.totalorder %s70, %s73
      %p82 = scmp.eq.s32.totalorder %s13, 1
      %p83 = por %p81, %p82
      %p84 = scmp.ne.s32.totalorder %s73, %s74
      %p85 = scmp.eq.s32.totalorder %s13, 0
      %p86 = por %p84, %p85
      %p87 = scmp.ne.s32.totalorder %s73, %s74
      %p88 = scmp.eq.s32.totalorder %s14, 1
      %p89 = por %p87, %p88
      %p91 = scmp.ne.s32.totalorder %s74, %s90
      %p92 = scmp.eq.s32.totalorder %s14, 0
      %p93 = por %p91, %p92
      %p94 = scmp.le.s32.totalorder 1, %s8
      %p95 = scmp.lt.s32.totalorder %s8, 3
      %p96 = pnand %p94, %p95
      %p97 = pneg %p96
      // Predicated region
      $region9: #{iwcd_forward.9} parent=5 // pred_check
        _
      $region10: #{iwcd_forward.9} parent=5 // pred_check_branch
        %99 = sbr.rel (%p96) target = $region12
      $region11: #{iwcd_forward.9} parent=5 // pred_region
        %s100 = ssub.s32 %s8, 1
      $region12: #{iwcd_forward.9} parent=5 // pred_fallthru
        _
      %p101 = scmp.lt.s32.totalorder %s8, 2
      // Predicated region
      $region13: #{iwcd_forward.9} parent=5 // pred_check
        %p102 = pneg %p101
      $region14: #{iwcd_forward.9} parent=5 // pred_check_branch
        %104 = sbr.rel (%p102) target = $region16
      $region15: #{iwcd_forward.9} parent=5 // pred_region
        // Predicated region
        $region17: #{iwcd_forward.9} parent=15 // pred_check
          %p105 = pneg %p28
        $region18: #{iwcd_forward.9} parent=15 // pred_check_branch
          %107 = sbr.rel (%p105) target = $region20
        $region19: #{iwcd_forward.9} parent=15 // pred_region
          %s108 = sand.u32 %s18, 1
          %s109 = sand.u32 %s18, 1
          %s110 = smul.addr %s109, 64
          %s111 = scalar_lea.vmem [#allocation2], %s110
          %s112 = smul.u32 4, %s8
          %s113 = smul.addr %s112, 2
          %s114 = scalar_lea.vmem %s0, %s113
          // Predicated region
          $region21: #{iwcd_forward.9} parent=19 // pred_check
            _
          $region22: #{iwcd_forward.9} parent=19 // pred_check_branch
            %116 = sbr.rel (0) target = $region24
          $region23: #{iwcd_forward.9} parent=19 // pred_region
            // Predicated region
            $region25: #{iwcd_forward.9} parent=23 // pred_check
              _
            $region26: #{iwcd_forward.9} parent=23 // pred_check_branch
              %118 = sbr.rel (0) target = $region28
            $region27: #{iwcd_forward.9} parent=23 // pred_region
              // Predicated region
              $region40: #{iwcd_forward.9} parent=27 // pred_check
                _
              $region41: #{iwcd_forward.9} parent=27 // pred_check_branch
                %147 = sbr.rel (0) target = $region43
              $region42: #{iwcd_forward.9} parent=27 // pred_region
                loop: start=0, step=1, limit=1
                $region44: #{iwcd_forward.9} parent=42 // loop_pre_header
                  _
                $region45: #{iwcd_forward.9} parent=42 // loop_header
                  %s149 = sphi 0, %s153
                  %p150 = scmp.ge.s32.totalorder %s149, 1
                  %s154 = sphi %s114, %s114
                  %s155 = sphi %s111, %s111
                $region46: #{iwcd_forward.9} parent=42 // loop_header_branch
                  %152 = sbr.rel (%p150) target = $region50
                $region47: #{iwcd_forward.9} parent=42 // loop_body
                  %v156 = vld [vmem:[%s154] sm:$0xff]
                  %157 = vst [vmem:[%s155] sm:$0xff] %v156
                  %v158 = vld [vmem:[%s154 + $0x10] sm:$0xff]
                  %159 = vst [vmem:[%s155 + $0x8] sm:$0xff] %v158
                  %v160 = vld [vmem:[%s154 + $0x20] sm:$0xff]
                  %161 = vst [vmem:[%s155 + $0x10] sm:$0xff] %v160
                  %v162 = vld [vmem:[%s154 + $0x30] sm:$0xff]
                  %163 = vst [vmem:[%s155 + $0x18] sm:$0xff] %v162
                  %v164 = vld [vmem:[%s154 + $0x40] sm:$0xff]
                  %165 = vst [vmem:[%s155 + $0x20] sm:$0xff] %v164
                  %v166 = vld [vmem:[%s154 + $0x50] sm:$0xff]
                  %167 = vst [vmem:[%s155 + $0x28] sm:$0xff] %v166
                  %v168 = vld [vmem:[%s154 + $0x60] sm:$0xff]
                  %169 = vst [vmem:[%s155 + $0x30] sm:$0xff] %v168
                  %v170 = vld [vmem:[%s154 + $0x70] sm:$0xff]
                  %171 = vst [vmem:[%s155 + $0x38] sm:$0xff] %v170
                $region48: #{iwcd_forward.9} parent=42 // loop_footer
                  %s153 = sadd.s32 1, %s149
                $region49: #{iwcd_forward.9} parent=42 // loop_footer_branch
                  %148 = sbr.rel target = $region45
                $region50: #{iwcd_forward.9} parent=42 // loop_exit
                  _
              $region43: #{iwcd_forward.9} parent=27 // pred_fallthru
                _
              // Predicated region
              $region51: #{iwcd_forward.9} parent=27 // pred_check
                _
              $region52: #{iwcd_forward.9} parent=27 // pred_check_branch
                %173 = sbr.rel target = $region54
              $region53: #{iwcd_forward.9} parent=27 // pred_region
                _
              $region54: #{iwcd_forward.9} parent=27 // pred_fallthru
                _
            $region28: #{iwcd_forward.9} parent=23 // pred_fallthru
              _
            // Predicated region
            $region29: #{iwcd_forward.9} parent=23 // pred_check
              _
            $region30: #{iwcd_forward.9} parent=23 // pred_check_branch
              %120 = sbr.rel target = $region32
            $region31: #{iwcd_forward.9} parent=23 // pred_region
              loop: start=0, step=1, limit=1
              $region33: #{iwcd_forward.9} parent=31 // loop_pre_header
                _
              $region34: #{iwcd_forward.9} parent=31 // loop_header
                %s123 = sphi 0, %s127
                %p124 = scmp.ge.s32.totalorder %s123, 1
                %s128 = sphi %s114, %s114
                %s129 = sphi %s111, %s111
              $region35: #{iwcd_forward.9} parent=31 // loop_header_branch
                %126 = sbr.rel (%p124) target = $region39
              $region36: #{iwcd_forward.9} parent=31 // loop_body
                %v130 = vld [vmem:[%s128] sm:$0xff]
                %131 = vst [vmem:[%s129] sm:$0xff] %v130
                %v132 = vld [vmem:[%s128 + $0x10] sm:$0xff]
                %133 = vst [vmem:[%s129 + $0x8] sm:$0xff] %v132
                %v134 = vld [vmem:[%s128 + $0x20] sm:$0xff]
                %135 = vst [vmem:[%s129 + $0x10] sm:$0xff] %v134
                %v136 = vld [vmem:[%s128 + $0x30] sm:$0xff]
                %137 = vst [vmem:[%s129 + $0x18] sm:$0xff] %v136
                %v138 = vld [vmem:[%s128 + $0x40] sm:$0xff]
                %139 = vst [vmem:[%s129 + $0x20] sm:$0xff] %v138
                %v140 = vld [vmem:[%s128 + $0x50] sm:$0xff]
                %141 = vst [vmem:[%s129 + $0x28] sm:$0xff] %v140
                %v142 = vld [vmem:[%s128 + $0x60] sm:$0xff]
                %143 = vst [vmem:[%s129 + $0x30] sm:$0xff] %v142
                %v144 = vld [vmem:[%s128 + $0x70] sm:$0xff]
                %145 = vst [vmem:[%s129 + $0x38] sm:$0xff] %v144
              $region37: #{iwcd_forward.9} parent=31 // loop_footer
                %s127 = sadd.s32 1, %s123
              $region38: #{iwcd_forward.9} parent=31 // loop_footer_branch
                %122 = sbr.rel target = $region34
              $region39: #{iwcd_forward.9} parent=31 // loop_exit
                _
            $region32: #{iwcd_forward.9} parent=23 // pred_fallthru
              _
          $region24: #{iwcd_forward.9} parent=19 // pred_fallthru
            _
          %174 = vnop
        $region20: #{iwcd_forward.9} parent=15 // pred_fallthru
          _
        // Predicated region
        $region55: #{iwcd_forward.9} parent=15 // pred_check
          %p175 = pneg %p54
        $region56: #{iwcd_forward.9} parent=15 // pred_check_branch
          %177 = sbr.rel (%p175) target = $region58
        $region57: #{iwcd_forward.9} parent=15 // pred_region
          %p178 = scmp.lt.s32.totalorder %s8, 1
          %s179 = scalar_select %p178, %s8, 1
          %s180 = smul.addr %s179, 64
          %s181 = smul.addr %s180, 8
          %s182 = scalar_lea.vmem %s1, %s181
        $region58: #{iwcd_forward.9} parent=15 // pred_fallthru
          _
      $region16: #{iwcd_forward.9} parent=5 // pred_fallthru
        _
      %p183 = scmp.le.s32.totalorder 1, %s8
      %p184 = scmp.lt.s32.totalorder %s8, 3
      %p185 = pnand %p183, %p184
      %p186 = pneg %p185
      // Predicated region
      $region59: #{iwcd_forward.9} parent=5 // pred_check
        _
      $region60: #{iwcd_forward.9} parent=5 // pred_check_branch
        %188 = sbr.rel (%p185) target = $region62
      $region61: #{iwcd_forward.9} parent=5 // pred_region
        %s189 = ssub.s32 %s8, 1
        %s190 = sand.u32 %s21, 1
        %s191 = sand.u32 %s21, 1
        %s192 = smul.addr %s191, 64
        %s193 = scalar_lea.vmem [#allocation2], %s192
        // Predicated region
        $region63: #{iwcd_forward.9} parent=61 // pred_check
          %p194 = pneg %p34
        $region64: #{iwcd_forward.9} parent=61 // pred_check_branch
          %196 = sbr.rel (%p194) target = $region66
        $region65: #{iwcd_forward.9} parent=61 // pred_region
          _
        $region66: #{iwcd_forward.9} parent=61 // pred_fallthru
          _
        %s197 = sand.u32 %s21, 1
        %s198 = sand.u32 %s21, 1
        %s199 = smul.addr %s198, 64
        %s200 = scalar_lea.vmem [#allocation2], %s199
        %p201 = pneg %p34
        %p202 = pneg %p31
        %p203 = scmp.lt.s32.totalorder %s13, 1
        %s204 = scalar_select %p203, %s13, 1
        %s205 = smul.addr %s204, 64
        %s206 = smul.addr %s205, 8
        %s207 = scalar_lea.vmem %s1, %s206
        %p208 = pneg %p60
        %p209 = pneg %p57
        %p210 = pneg %p86
        %p211 = pneg %p83
        %s212 = sand.u32 %s73, 1
        %s213 = sand.u32 %s73, 1
        %s214 = smul.addr %s213, 16
        %s215 = scalar_lea.vmem [#allocation3], %s214
        %s216 = smul.u32 4, %s13
        %p217 = scmp.lt.s32.totalorder %s13, 1
        %s218 = scalar_select %p217, %s13, 1
        %s219 = smul.addr %s218, 64
        %s220 = smul.addr %s219, 8
        %s221 = scalar_lea.vmem %s1, %s220
        %v222 = vld [vmem:[%s221] sm:$0xff]
        %v223 = vld [vmem:[%s221 + $0x8] sm:$0xff]
        %v224 = vld [vmem:[%s221 + $0x10] sm:$0xff]
        %v225 = vld [vmem:[%s221 + $0x18] sm:$0xff]
        %v226 = vld [vmem:[%s221 + $0x20] sm:$0xff]
        %v227 = vld [vmem:[%s221 + $0x28] sm:$0xff]
        %v228 = vld [vmem:[%s221 + $0x30] sm:$0xff]
        %v229 = vld [vmem:[%s221 + $0x38] sm:$0xff]
        %v230 = vld [vmem:[%s221 + $0x40] sm:$0xff]
        %v231 = vld [vmem:[%s221 + $0x48] sm:$0xff]
        %v232 = vld [vmem:[%s221 + $0x50] sm:$0xff]
        %v233 = vld [vmem:[%s221 + $0x58] sm:$0xff]
        %v234 = vld [vmem:[%s221 + $0x60] sm:$0xff]
        %v235 = vld [vmem:[%s221 + $0x68] sm:$0xff]
        %v236 = vld [vmem:[%s221 + $0x70] sm:$0xff]
        %v237 = vld [vmem:[%s221 + $0x78] sm:$0xff]
        %v238 = vld [vmem:[%s221 + $0x80] sm:$0xff]
        %v239 = vld [vmem:[%s221 + $0x88] sm:$0xff]
        %v240 = vld [vmem:[%s221 + $0x90] sm:$0xff]
        %v241 = vld [vmem:[%s221 + $0x98] sm:$0xff]
        %v242 = vld [vmem:[%s221 + $0xa0] sm:$0xff]
        %v243 = vld [vmem:[%s221 + $0xa8] sm:$0xff]
        %v244 = vld [vmem:[%s221 + $0xb0] sm:$0xff]
        %v245 = vld [vmem:[%s221 + $0xb8] sm:$0xff]
        %v246 = vld [vmem:[%s221 + $0xc0] sm:$0xff]
        %v247 = vld [vmem:[%s221 + $0xc8] sm:$0xff]
        %v248 = vld [vmem:[%s221 + $0xd0] sm:$0xff]
        %v249 = vld [vmem:[%s221 + $0xd8] sm:$0xff]
        %v250 = vld [vmem:[%s221 + $0xe0] sm:$0xff]
        %v251 = vld [vmem:[%s221 + $0xe8] sm:$0xff]
        %v252 = vld [vmem:[%s221 + $0xf0] sm:$0xff]
        %v253 = vld [vmem:[%s221 + $0xf8] sm:$0xff]
        %v254 = vld [vmem:[%s221 + $0x100] sm:$0xff]
        %v255 = vld [vmem:[%s221 + $0x108] sm:$0xff]
        %v256 = vld [vmem:[%s221 + $0x110] sm:$0xff]
        %v257 = vld [vmem:[%s221 + $0x118] sm:$0xff]
        %v258 = vld [vmem:[%s221 + $0x120] sm:$0xff]
        %v259 = vld [vmem:[%s221 + $0x128] sm:$0xff]
        %v260 = vld [vmem:[%s221 + $0x130] sm:$0xff]
        %v261 = vld [vmem:[%s221 + $0x138] sm:$0xff]
        %v262 = vld [vmem:[%s221 + $0x140] sm:$0xff]
        %v263 = vld [vmem:[%s221 + $0x148] sm:$0xff]
        %v264 = vld [vmem:[%s221 + $0x150] sm:$0xff]
        %v265 = vld [vmem:[%s221 + $0x158] sm:$0xff]
        %v266 = vld [vmem:[%s221 + $0x160] sm:$0xff]
        %v267 = vld [vmem:[%s221 + $0x168] sm:$0xff]
        %v268 = vld [vmem:[%s221 + $0x170] sm:$0xff]
        %v269 = vld [vmem:[%s221 + $0x178] sm:$0xff]
        %v270 = vld [vmem:[%s221 + $0x180] sm:$0xff]
        %v271 = vld [vmem:[%s221 + $0x188] sm:$0xff]
        %v272 = vld [vmem:[%s221 + $0x190] sm:$0xff]
        %v273 = vld [vmem:[%s221 + $0x198] sm:$0xff]
        %v274 = vld [vmem:[%s221 + $0x1a0] sm:$0xff]
        %v275 = vld [vmem:[%s221 + $0x1a8] sm:$0xff]
        %v276 = vld [vmem:[%s221 + $0x1b0] sm:$0xff]
        %v277 = vld [vmem:[%s221 + $0x1b8] sm:$0xff]
        %v278 = vld [vmem:[%s221 + $0x1c0] sm:$0xff]
        %v279 = vld [vmem:[%s221 + $0x1c8] sm:$0xff]
        %v280 = vld [vmem:[%s221 + $0x1d0] sm:$0xff]
        %v281 = vld [vmem:[%s221 + $0x1d8] sm:$0xff]
        %v282 = vld [vmem:[%s221 + $0x1e0] sm:$0xff]
        %v283 = vld [vmem:[%s221 + $0x1e8] sm:$0xff]
        %v284 = vld [vmem:[%s221 + $0x1f0] sm:$0xff]
        %v285 = vld [vmem:[%s221 + $0x1f8] sm:$0xff]
        %p286 = scmp.eq.s32.totalorder %s13, 0
        %s287 = scalar_select %p286, 0, 7
        %s288 = smul.u32 %s287, 4
        %s289 = smul.addr %s288, 2
        %s290 = scalar_lea.vmem %s193, %s289 [#allocation2]
        %v291 = vld [vmem:[%s290] sm:$0xff]
        %292 = vmatprep.subr.mxu0 %v223
        %293 = vmatpush1.msra.mxu0 %v222
        %294 = vmatprep.subr.mxu0 %v227
        %295 = vmatpush1.msra.mxu0 %v226
        %296 = vmatprep.subr.mxu0 %v231
        %297 = vmatpush1.msra.mxu0 %v230
        %298 = vmatprep.subr.mxu0 %v235
        %299 = vmatpush1.msra.mxu0 %v234
        %300 = vmatprep.subr.mxu0 %v239
        %301 = vmatpush1.msra.mxu0 %v238
        %302 = vmatprep.subr.mxu0 %v243
        %303 = vmatpush1.msra.mxu0 %v242
        %304 = vmatprep.subr.mxu0 %v247
        %305 = vmatpush1.msra.mxu0 %v246
        %306 = vmatprep.subr.mxu0 %v251
        %307 = vmatpush1.msra.mxu0 %v250
        %308 = vmatprep.subr.mxu0 %v255
        %309 = vmatpush1.msra.mxu0 %v254
        %310 = vmatprep.subr.mxu0 %v259
        %311 = vmatpush1.msra.mxu0 %v258
        %312 = vmatprep.subr.mxu0 %v263
        %313 = vmatpush1.msra.mxu0 %v262
        %314 = vmatprep.subr.mxu0 %v267
        %315 = vmatpush1.msra.mxu0 %v266
        %316 = vmatprep.subr.mxu0 %v271
        %317 = vmatpush1.msra.mxu0 %v270
        %318 = vmatprep.subr.mxu0 %v275
        %319 = vmatpush1.msra.mxu0 %v274
        %320 = vmatprep.subr.mxu0 %v279
        %321 = vmatpush1.msra.mxu0 %v278
        %322 = vmatprep.subr.mxu0 %v283
        %323 = vmatpush1.msra.mxu0 %v282
        %324 = vmatprep.subr.mxu0 0.0
        %325 = vmatpush1.msra.mxu0 0.0
        %326 = vmatprep.subr.mxu0 0.0
        %327 = vmatpush1.msra.mxu0 0.0
        %328 = vmatprep.subr.mxu0 0.0
        %329 = vmatpush1.msra.mxu0 0.0
        %330 = vmatprep.subr.mxu0 0.0
        %331 = vmatpush1.msra.mxu0 0.0
        %332 = vmatprep.subr.mxu0 0.0
        %333 = vmatpush1.msra.mxu0 0.0
        %334 = vmatprep.subr.mxu0 0.0
        %335 = vmatpush1.msra.mxu0 0.0
        %336 = vmatprep.subr.mxu0 0.0
        %337 = vmatpush1.msra.mxu0 0.0
        %338 = vmatprep.subr.mxu0 0.0
        %339 = vmatpush1.msra.mxu0 0.0
        %340 = vmatprep.subr.mxu0 0.0
        %341 = vmatpush1.msra.mxu0 0.0
        %342 = vmatprep.subr.mxu0 0.0
        %343 = vmatpush1.msra.mxu0 0.0
        %344 = vmatprep.subr.mxu0 0.0
        %345 = vmatpush1.msra.mxu0 0.0
        %346 = vmatprep.subr.mxu0 0.0
        %347 = vmatpush1.msra.mxu0 0.0
        %348 = vmatprep.subr.mxu0 0.0
        %349 = vmatpush1.msra.mxu0 0.0
        %350 = vmatprep.subr.mxu0 0.0
        %351 = vmatpush1.msra.mxu0 0.0
        %352 = vmatprep.subr.mxu0 0.0
        %353 = vmatpush1.msra.mxu0 0.0
        %354 = vmatprep.subr.mxu0 0.0
        %355 = vmatpush1.msra.mxu0 0.0
        %356 = vmatprep.mubr.f32.mxu0 0.0
        %357 = vmatmul.mubr.f32.gmra.mrb[0].mxu0 0.0
        %v358 = vpop.f32.mrb[0].mxu0
        %v359 = vadd.f32 0.0, %v358
        %v360 = vpop.f32.mrb[0].mxu0
        %v361 = vadd.f32 0.0, %v360
        %362 = vdwg.mxu0
        %363 = vmatprep.subr.mxu0 %v225
        %364 = vmatpush1.msra.mxu0 %v224
        %365 = vmatprep.subr.mxu0 %v229
        %366 = vmatpush1.msra.mxu0 %v228
        %367 = vmatprep.subr.mxu0 %v233
        %368 = vmatpush1.msra.mxu0 %v232
        %369 = vmatprep.subr.mxu0 %v237
        %370 = vmatpush1.msra.mxu0 %v236
        %371 = vmatprep.subr.mxu0 %v241
        %372 = vmatpush1.msra.mxu0 %v240
        %373 = vmatprep.subr.mxu0 %v245
        %374 = vmatpush1.msra.mxu0 %v244
        %375 = vmatprep.subr.mxu0 %v249
        %376 = vmatpush1.msra.mxu0 %v248
        %377 = vmatprep.subr.mxu0 %v253
        %378 = vmatpush1.msra.mxu0 %v252
        %379 = vmatprep.subr.mxu0 %v257
        %380 = vmatpush1.msra.mxu0 %v256
        %381 = vmatprep.subr.mxu0 %v261
        %382 = vmatpush1.msra.mxu0 %v260
        %383 = vmatprep.subr.mxu0 %v265
        %384 = vmatpush1.msra.mxu0 %v264
        %385 = vmatprep.subr.mxu0 %v269
        %386 = vmatpush1.msra.mxu0 %v268
        %387 = vmatprep.subr.mxu0 %v273
        %388 = vmatpush1.msra.mxu0 %v272
        %389 = vmatprep.subr.mxu0 %v277
        %390 = vmatpush1.msra.mxu0 %v276
        %391 = vmatprep.subr.mxu0 %v281
        %392 = vmatpush1.msra.mxu0 %v280
        %393 = vmatprep.subr.mxu0 %v285
        %394 = vmatpush1.msra.mxu0 %v284
        %395 = vmatprep.subr.mxu0 0.0
        %396 = vmatpush1.msra.mxu0 0.0
        %397 = vmatprep.subr.mxu0 0.0
        %398 = vmatpush1.msra.mxu0 0.0
        %399 = vmatprep.subr.mxu0 0.0
        %400 = vmatpush1.msra.mxu0 0.0
        %401 = vmatprep.subr.mxu0 0.0
        %402 = vmatpush1.msra.mxu0 0.0
        %403 = vmatprep.subr.mxu0 0.0
        %404 = vmatpush1.msra.mxu0 0.0
        %405 = vmatprep.subr.mxu0 0.0
        %406 = vmatpush1.msra.mxu0 0.0
        %407 = vmatprep.subr.mxu0 0.0
        %408 = vmatpush1.msra.mxu0 0.0
        %409 = vmatprep.subr.mxu0 0.0
        %410 = vmatpush1.msra.mxu0 0.0
        %411 = vmatprep.subr.mxu0 0.0
        %412 = vmatpush1.msra.mxu0 0.0
        %413 = vmatprep.subr.mxu0 0.0
        %414 = vmatpush1.msra.mxu0 0.0
        %415 = vmatprep.subr.mxu0 0.0
        %416 = vmatpush1.msra.mxu0 0.0
        %417 = vmatprep.subr.mxu0 0.0
        %418 = vmatpush1.msra.mxu0 0.0
        %419 = vmatprep.subr.mxu0 0.0
        %420 = vmatpush1.msra.mxu0 0.0
        %421 = vmatprep.subr.mxu0 0.0
        %422 = vmatpush1.msra.mxu0 0.0
        %423 = vmatprep.subr.mxu0 0.0
        %424 = vmatpush1.msra.mxu0 0.0
        %425 = vmatprep.subr.mxu0 0.0
        %426 = vmatpush1.msra.mxu0 0.0
        %427 = vmatprep.mubr.f32.mxu0 0.0
        %428 = vmatmul.mubr.f32.gmra.mrb[0].mxu0 0.0
        %v429 = vpop.f32.mrb[0].mxu0
        %v430 = vadd.f32 0.0, %v429
        %v431 = vpop.f32.mrb[0].mxu0
        %v432 = vadd.f32 0.0, %v431
        %433 = vdwg.mxu0
        %v438 = vcombine.low %v359, %v361
        %v439 = vcombine.low %v430, %v432
        %v441 = vunpack.c.l.s4 1983009808
        %v442 = vunpack.c.0.s8 %v441
        %v443 = vlaneseq
        %v444 = vshrl.u32 %v443, 7
        %v445 = vsub.s32 %v442, %v444
        %v446 = vrot.slane %v438, %v445
        %v448 = vunpack.c.l.s4 1983009808
        %v449 = vunpack.c.0.s8 %v448
        %v450 = vlaneseq
        %v451 = vshrl.u32 %v450, 7
        %v452 = vsub.s32 %v449, %v451
        %v453 = vrot.slane %v439, %v452
        %v454 = vcombine.low %v446, %v453
        %v456 = vadd.f32 %v291, %v454
        %v457 = vxor.u32 %v456, 2147483648
        %v458 = vmul.f32 %v457, 1.442695
        %v459 = vpow.pop %v458
        %v460 = vadd.f32 %v459, 1.0
        %v461 = vrcp.pop %v460
        %v462 = vmul.f32 1.0, %v461
        %v464 = vrot.slane %v456, 2
        %v466 = vxor.u32 %v464, 2147483648
        %v467 = vmul.f32 %v466, 1.442695
        %v468 = vpow.pop %v467
        %v469 = vadd.f32 %v468, 1.0
        %v470 = vrcp.pop %v469
        %v471 = vmul.f32 1.0, %v470
        %v472 = vrot.slane %v456, 4
        %v474 = vtanh.pop %v472
        %v475 = vrot.slane %v456, 6
        %v477 = vxor.u32 %v475, 2147483648
        %v478 = vmul.f32 %v477, 1.442695
        %v479 = vpow.pop %v478
        %v480 = vadd.f32 %v479, 1.0
        %v481 = vrcp.pop %v480
        %v482 = vmul.f32 1.0, %v481
        %v483 = vmul.f32 %v471, 0.0
        %v484 = vmul.f32 %v462, %v474
        %v485 = vadd.f32 %v483, %v484
        %v486 = vtanh.pop %v485
        %v487 = vmul.f32 %v482, %v486
        %s488 = smul.u32 %s287, 2
        %s489 = scalar_lea.vmem %s215, %s488 [#allocation3]
        %490 = vst [vmem:[%s489] sm:$0x3] %v487
        %s491 = scalar_select %p286, 1, 6
        %s492 = smul.u32 %s491, 4
        %s493 = smul.addr %s492, 2
        %s494 = scalar_lea.vmem %s193, %s493 [#allocation2]
        %v495 = vld [vmem:[%s494] sm:$0xff]
        %496 = vmatprep.subr.mxu0 %v223
        %497 = vmatpush1.msra.mxu0 %v222
        %498 = vmatprep.subr.mxu0 %v227
        %499 = vmatpush1.msra.mxu0 %v226
        %500 = vmatprep.subr.mxu0 %v231
        %501 = vmatpush1.msra.mxu0 %v230
        %502 = vmatprep.subr.mxu0 %v235
        %503 = vmatpush1.msra.mxu0 %v234
        %504 = vmatprep.subr.mxu0 %v239
        %505 = vmatpush1.msra.mxu0 %v238
        %506 = vmatprep.subr.mxu0 %v243
        %507 = vmatpush1.msra.mxu0 %v242
        %508 = vmatprep.subr.mxu0 %v247
        %509 = vmatpush1.msra.mxu0 %v246
        %510 = vmatprep.subr.mxu0 %v251
        %511 = vmatpush1.msra.mxu0 %v250
        %512 = vmatprep.subr.mxu0 %v255
        %513 = vmatpush1.msra.mxu0 %v254
        %514 = vmatprep.subr.mxu0 %v259
        %515 = vmatpush1.msra.mxu0 %v258
        %516 = vmatprep.subr.mxu0 %v263
        %517 = vmatpush1.msra.mxu0 %v262
        %518 = vmatprep.subr.mxu0 %v267
        %519 = vmatpush1.msra.mxu0 %v266
        %520 = vmatprep.subr.mxu0 %v271
        %521 = vmatpush1.msra.mxu0 %v270
        %522 = vmatprep.subr.mxu0 %v275
        %523 = vmatpush1.msra.mxu0 %v274
        %524 = vmatprep.subr.mxu0 %v279
        %525 = vmatpush1.msra.mxu0 %v278
        %526 = vmatprep.subr.mxu0 %v283
        %527 = vmatpush1.msra.mxu0 %v282
        %528 = vmatprep.subr.mxu0 0.0
        %529 = vmatpush1.msra.mxu0 0.0
        %530 = vmatprep.subr.mxu0 0.0
        %531 = vmatpush1.msra.mxu0 0.0
        %532 = vmatprep.subr.mxu0 0.0
        %533 = vmatpush1.msra.mxu0 0.0
        %534 = vmatprep.subr.mxu0 0.0
        %535 = vmatpush1.msra.mxu0 0.0
        %536 = vmatprep.subr.mxu0 0.0
        %537 = vmatpush1.msra.mxu0 0.0
        %538 = vmatprep.subr.mxu0 0.0
        %539 = vmatpush1.msra.mxu0 0.0
        %540 = vmatprep.subr.mxu0 0.0
        %541 = vmatpush1.msra.mxu0 0.0
        %542 = vmatprep.subr.mxu0 0.0
        %543 = vmatpush1.msra.mxu0 0.0
        %544 = vmatprep.subr.mxu0 0.0
        %545 = vmatpush1.msra.mxu0 0.0
        %546 = vmatprep.subr.mxu0 0.0
        %547 = vmatpush1.msra.mxu0 0.0
        %548 = vmatprep.subr.mxu0 0.0
        %549 = vmatpush1.msra.mxu0 0.0
        %550 = vmatprep.subr.mxu0 0.0
        %551 = vmatpush1.msra.mxu0 0.0
        %552 = vmatprep.subr.mxu0 0.0
        %553 = vmatpush1.msra.mxu0 0.0
        %554 = vmatprep.subr.mxu0 0.0
        %555 = vmatpush1.msra.mxu0 0.0
        %556 = vmatprep.subr.mxu0 0.0
        %557 = vmatpush1.msra.mxu0 0.0
        %558 = vmatprep.subr.mxu0 0.0
        %559 = vmatpush1.msra.mxu0 0.0
        %560 = vmatprep.mubr.f32.mxu0 0.0
        %561 = vmatmul.mubr.f32.gmra.mrb[0].mxu0 %v487
        %v562 = vpop.f32.mrb[0].mxu0
        %v563 = vadd.f32 0.0, %v562
        %v564 = vpop.f32.mrb[0].mxu0
        %v565 = vadd.f32 0.0, %v564
        %566 = vdwg.mxu0
        %567 = vmatprep.subr.mxu0 %v225
        %568 = vmatpush1.msra.mxu0 %v224
        %569 = vmatprep.subr.mxu0 %v229
        %570 = vmatpush1.msra.mxu0 %v228
        %571 = vmatprep.subr.mxu0 %v233
        %572 = vmatpush1.msra.mxu0 %v232
        %573 = vmatprep.subr.mxu0 %v237
        %574 = vmatpush1.msra.mxu0 %v236
        %575 = vmatprep.subr.mxu0 %v241
        %576 = vmatpush1.msra.mxu0 %v240
        %577 = vmatprep.subr.mxu0 %v245
        %578 = vmatpush1.msra.mxu0 %v244
        %579 = vmatprep.subr.mxu0 %v249
        %580 = vmatpush1.msra.mxu0 %v248
        %581 = vmatprep.subr.mxu0 %v253
        %582 = vmatpush1.msra.mxu0 %v252
        %583 = vmatprep.subr.mxu0 %v257
        %584 = vmatpush1.msra.mxu0 %v256
        %585 = vmatprep.subr.mxu0 %v261
        %586 = vmatpush1.msra.mxu0 %v260
        %587 = vmatprep.subr.mxu0 %v265
        %588 = vmatpush1.msra.mxu0 %v264
        %589 = vmatprep.subr.mxu0 %v269
        %590 = vmatpush1.msra.mxu0 %v268
        %591 = vmatprep.subr.mxu0 %v273
        %592 = vmatpush1.msra.mxu0 %v272
        %593 = vmatprep.subr.mxu0 %v277
        %594 = vmatpush1.msra.mxu0 %v276
        %595 = vmatprep.subr.mxu0 %v281
        %596 = vmatpush1.msra.mxu0 %v280
        %597 = vmatprep.subr.mxu0 %v285
        %598 = vmatpush1.msra.mxu0 %v284
        %599 = vmatprep.subr.mxu0 0.0
        %600 = vmatpush1.msra.mxu0 0.0
        %601 = vmatprep.subr.mxu0 0.0
        %602 = vmatpush1.msra.mxu0 0.0
        %603 = vmatprep.subr.mxu0 0.0
        %604 = vmatpush1.msra.mxu0 0.0
        %605 = vmatprep.subr.mxu0 0.0
        %606 = vmatpush1.msra.mxu0 0.0
        %607 = vmatprep.subr.mxu0 0.0
        %608 = vmatpush1.msra.mxu0 0.0
        %609 = vmatprep.subr.mxu0 0.0
        %610 = vmatpush1.msra.mxu0 0.0
        %611 = vmatprep.subr.mxu0 0.0
        %612 = vmatpush1.msra.mxu0 0.0
        %613 = vmatprep.subr.mxu0 0.0
        %614 = vmatpush1.msra.mxu0 0.0
        %615 = vmatprep.subr.mxu0 0.0
        %616 = vmatpush1.msra.mxu0 0.0
        %617 = vmatprep.subr.mxu0 0.0
        %618 = vmatpush1.msra.mxu0 0.0
        %619 = vmatprep.subr.mxu0 0.0
        %620 = vmatpush1.msra.mxu0 0.0
        %621 = vmatprep.subr.mxu0 0.0
        %622 = vmatpush1.msra.mxu0 0.0
        %623 = vmatprep.subr.mxu0 0.0
        %624 = vmatpush1.msra.mxu0 0.0
        %625 = vmatprep.subr.mxu0 0.0
        %626 = vmatpush1.msra.mxu0 0.0
        %627 = vmatprep.subr.mxu0 0.0
        %628 = vmatpush1.msra.mxu0 0.0
        %629 = vmatprep.subr.mxu0 0.0
        %630 = vmatpush1.msra.mxu0 0.0
        %631 = vmatprep.mubr.f32.mxu0 0.0
        %632 = vmatmul.mubr.f32.gmra.mrb[0].mxu0 %v487
        %v633 = vpop.f32.mrb[0].mxu0
        %v634 = vadd.f32 0.0, %v633
        %v635 = vpop.f32.mrb[0].mxu0
        %v636 = vadd.f32 0.0, %v635
        %637 = vdwg.mxu0
        %v642 = vcombine.low %v563, %v565
        %v643 = vcombine.low %v634, %v636
        %v645 = vunpack.c.l.s4 1983009808
        %v646 = vunpack.c.0.s8 %v645
        %v647 = vlaneseq
        %v648 = vshrl.u32 %v647, 7
        %v649 = vsub.s32 %v646, %v648
        %v650 = vrot.slane %v642, %v649
        %v652 = vunpack.c.l.s4 1983009808
        %v653 = vunpack.c.0.s8 %v652
        %v654 = vlaneseq
        %v655 = vshrl.u32 %v654, 7
        %v656 = vsub.s32 %v653, %v655
        %v657 = vrot.slane %v643, %v656
        %v658 = vcombine.low %v650, %v657
        %v660 = vadd.f32 %v495, %v658
        %v661 = vxor.u32 %v660, 2147483648
        %v662 = vmul.f32 %v661, 1.442695
        %v663 = vpow.pop %v662
        %v664 = vadd.f32 %v663, 1.0
        %v665 = vrcp.pop %v664
        %v666 = vmul.f32 1.0, %v665
        %v668 = vrot.slane %v660, 2
        %v670 = vxor.u32 %v668, 2147483648
        %v671 = vmul.f32 %v670, 1.442695
        %v672 = vpow.pop %v671
        %v673 = vadd.f32 %v672, 1.0
        %v674 = vrcp.pop %v673
        %v675 = vmul.f32 1.0, %v674
        %v676 = vrot.slane %v660, 4
        %v678 = vtanh.pop %v676
        %v679 = vrot.slane %v660, 6
        %v681 = vxor.u32 %v679, 2147483648
        %v682 = vmul.f32 %v681, 1.442695
        %v683 = vpow.pop %v682
        %v684 = vadd.f32 %v683, 1.0
        %v685 = vrcp.pop %v684
        %v686 = vmul.f32 1.0, %v685
        %v687 = vmul.f32 %v675, %v485
        %v688 = vmul.f32 %v666, %v678
        %v689 = vadd.f32 %v687, %v688
        %v690 = vtanh.pop %v689
        %v691 = vmul.f32 %v686, %v690
        %s692 = smul.u32 %s491, 2
        %s693 = scalar_lea.vmem %s215, %s692 [#allocation3]
        %694 = vst [vmem:[%s693] sm:$0x3] %v691
        %s695 = scalar_select %p286, 2, 5
        %s696 = smul.u32 %s695, 4
        %s697 = smul.addr %s696, 2
        %s698 = scalar_lea.vmem %s193, %s697 [#allocation2]
        %v699 = vld [vmem:[%s698] sm:$0xff]
        %700 = vmatprep.subr.mxu0 %v223
        %701 = vmatpush1.msra.mxu0 %v222
        %702 = vmatprep.subr.mxu0 %v227
        %703 = vmatpush1.msra.mxu0 %v226
        %704 = vmatprep.subr.mxu0 %v231
        %705 = vmatpush1.msra.mxu0 %v230
        %706 = vmatprep.subr.mxu0 %v235
        %707 = vmatpush1.msra.mxu0 %v234
        %708 = vmatprep.subr.mxu0 %v239
        %709 = vmatpush1.msra.mxu0 %v238
        %710 = vmatprep.subr.mxu0 %v243
        %711 = vmatpush1.msra.mxu0 %v242
        %712 = vmatprep.subr.mxu0 %v247
        %713 = vmatpush1.msra.mxu0 %v246
        %714 = vmatprep.subr.mxu0 %v251
        %715 = vmatpush1.msra.mxu0 %v250
        %716 = vmatprep.subr.mxu0 %v255
        %717 = vmatpush1.msra.mxu0 %v254
        %718 = vmatprep.subr.mxu0 %v259
        %719 = vmatpush1.msra.mxu0 %v258
        %720 = vmatprep.subr.mxu0 %v263
        %721 = vmatpush1.msra.mxu0 %v262
        %722 = vmatprep.subr.mxu0 %v267
        %723 = vmatpush1.msra.mxu0 %v266
        %724 = vmatprep.subr.mxu0 %v271
        %725 = vmatpush1.msra.mxu0 %v270
        %726 = vmatprep.subr.mxu0 %v275
        %727 = vmatpush1.msra.mxu0 %v274
        %728 = vmatprep.subr.mxu0 %v279
        %729 = vmatpush1.msra.mxu0 %v278
        %730 = vmatprep.subr.mxu0 %v283
        %731 = vmatpush1.msra.mxu0 %v282
        %732 = vmatprep.subr.mxu0 0.0
        %733 = vmatpush1.msra.mxu0 0.0
        %734 = vmatprep.subr.mxu0 0.0
        %735 = vmatpush1.msra.mxu0 0.0
        %736 = vmatprep.subr.mxu0 0.0
        %737 = vmatpush1.msra.mxu0 0.0
        %738 = vmatprep.subr.mxu0 0.0
        %739 = vmatpush1.msra.mxu0 0.0
        %740 = vmatprep.subr.mxu0 0.0
        %741 = vmatpush1.msra.mxu0 0.0
        %742 = vmatprep.subr.mxu0 0.0
        %743 = vmatpush1.msra.mxu0 0.0
        %744 = vmatprep.subr.mxu0 0.0
        %745 = vmatpush1.msra.mxu0 0.0
        %746 = vmatprep.subr.mxu0 0.0
        %747 = vmatpush1.msra.mxu0 0.0
        %748 = vmatprep.subr.mxu0 0.0
        %749 = vmatpush1.msra.mxu0 0.0
        %750 = vmatprep.subr.mxu0 0.0
        %751 = vmatpush1.msra.mxu0 0.0
        %752 = vmatprep.subr.mxu0 0.0
        %753 = vmatpush1.msra.mxu0 0.0
        %754 = vmatprep.subr.mxu0 0.0
        %755 = vmatpush1.msra.mxu0 0.0
        %756 = vmatprep.subr.mxu0 0.0
        %757 = vmatpush1.msra.mxu0 0.0
        %758 = vmatprep.subr.mxu0 0.0
        %759 = vmatpush1.msra.mxu0 0.0
        %760 = vmatprep.subr.mxu0 0.0
        %761 = vmatpush1.msra.mxu0 0.0
        %762 = vmatprep.subr.mxu0 0.0
        %763 = vmatpush1.msra.mxu0 0.0
        %764 = vmatprep.mubr.f32.mxu0 0.0
        %765 = vmatmul.mubr.f32.gmra.mrb[0].mxu0 %v691
        %v766 = vpop.f32.mrb[0].mxu0
        %v767 = vadd.f32 0.0, %v766
        %v768 = vpop.f32.mrb[0].mxu0
        %v769 = vadd.f32 0.0, %v768
        %770 = vdwg.mxu0
        %771 = vmatprep.subr.mxu0 %v225
        %772 = vmatpush1.msra.mxu0 %v224
        %773 = vmatprep.subr.mxu0 %v229
        %774 = vmatpush1.msra.mxu0 %v228
        %775 = vmatprep.subr.mxu0 %v233
        %776 = vmatpush1.msra.mxu0 %v232
        %777 = vmatprep.subr.mxu0 %v237
        %778 = vmatpush1.msra.mxu0 %v236
        %779 = vmatprep.subr.mxu0 %v241
        %780 = vmatpush1.msra.mxu0 %v240
        %781 = vmatprep.subr.mxu0 %v245
        %782 = vmatpush1.msra.mxu0 %v244
        %783 = vmatprep.subr.mxu0 %v249
        %784 = vmatpush1.msra.mxu0 %v248
        %785 = vmatprep.subr.mxu0 %v253
        %786 = vmatpush1.msra.mxu0 %v252
        %787 = vmatprep.subr.mxu0 %v257
        %788 = vmatpush1.msra.mxu0 %v256
        %789 = vmatprep.subr.mxu0 %v261
        %790 = vmatpush1.msra.mxu0 %v260
        %791 = vmatprep.subr.mxu0 %v265
        %792 = vmatpush1.msra.mxu0 %v264
        %793 = vmatprep.subr.mxu0 %v269
        %794 = vmatpush1.msra.mxu0 %v268
        %795 = vmatprep.subr.mxu0 %v273
        %796 = vmatpush1.msra.mxu0 %v272
        %797 = vmatprep.subr.mxu0 %v277
        %798 = vmatpush1.msra.mxu0 %v276
        %799 = vmatprep.subr.mxu0 %v281
        %800 = vmatpush1.msra.mxu0 %v280
        %801 = vmatprep.subr.mxu0 %v285
        %802 = vmatpush1.msra.mxu0 %v284
        %803 = vmatprep.subr.mxu0 0.0
        %804 = vmatpush1.msra.mxu0 0.0
        %805 = vmatprep.subr.mxu0 0.0
        %806 = vmatpush1.msra.mxu0 0.0
        %807 = vmatprep.subr.mxu0 0.0
        %808 = vmatpush1.msra.mxu0 0.0
        %809 = vmatprep.subr.mxu0 0.0
        %810 = vmatpush1.msra.mxu0 0.0
        %811 = vmatprep.subr.mxu0 0.0
        %812 = vmatpush1.msra.mxu0 0.0
        %813 = vmatprep.subr.mxu0 0.0
        %814 = vmatpush1.msra.mxu0 0.0
        %815 = vmatprep.subr.mxu0 0.0
        %816 = vmatpush1.msra.mxu0 0.0
        %817 = vmatprep.subr.mxu0 0.0
        %818 = vmatpush1.msra.mxu0 0.0
        %819 = vmatprep.subr.mxu0 0.0
        %820 = vmatpush1.msra.mxu0 0.0
        %821 = vmatprep.subr.mxu0 0.0
        %822 = vmatpush1.msra.mxu0 0.0
        %823 = vmatprep.subr.mxu0 0.0
        %824 = vmatpush1.msra.mxu0 0.0
        %825 = vmatprep.subr.mxu0 0.0
        %826 = vmatpush1.msra.mxu0 0.0
        %827 = vmatprep.subr.mxu0 0.0
        %828 = vmatpush1.msra.mxu0 0.0
        %829 = vmatprep.subr.mxu0 0.0
        %830 = vmatpush1.msra.mxu0 0.0
        %831 = vmatprep.subr.mxu0 0.0
        %832 = vmatpush1.msra.mxu0 0.0
        %833 = vmatprep.subr.mxu0 0.0
        %834 = vmatpush1.msra.mxu0 0.0
        %835 = vmatprep.mubr.f32.mxu0 0.0
        %836 = vmatmul.mubr.f32.gmra.mrb[0].mxu0 %v691
        %v837 = vpop.f32.mrb[0].mxu0
        %v838 = vadd.f32 0.0, %v837
        %v839 = vpop.f32.mrb[0].mxu0
        %v840 = vadd.f32 0.0, %v839
        %841 = vdwg.mxu0
        %v846 = vcombine.low %v767, %v769
        %v847 = vcombine.low %v838, %v840
        %v849 = vunpack.c.l.s4 1983009808
        %v850 = vunpack.c.0.s8 %v849
        %v851 = vlaneseq
        %v852 = vshrl.u32 %v851, 7
        %v853 = vsub.s32 %v850, %v852
        %v854 = vrot.slane %v846, %v853
        %v856 = vunpack.c.l.s4 1983009808
        %v857 = vunpack.c.0.s8 %v856
        %v858 = vlaneseq
        %v859 = vshrl.u32 %v858, 7
        %v860 = vsub.s32 %v857, %v859
        %v861 = vrot.slane %v847, %v860
        %v862 = vcombine.low %v854, %v861
        %v864 = vadd.f32 %v699, %v862
        %v865 = vxor.u32 %v864, 2147483648
        %v866 = vmul.f32 %v865, 1.442695
        %v867 = vpow.pop %v866
        %v868 = vadd.f32 %v867, 1.0
        %v869 = vrcp.pop %v868
        %v870 = vmul.f32 1.0, %v869
        %v872 = vrot.slane %v864, 2
        %v874 = vxor.u32 %v872, 2147483648
        %v875 = vmul.f32 %v874, 1.442695
        %v876 = vpow.pop %v875
        %v877 = vadd.f32 %v876, 1.0
        %v878 = vrcp.pop %v877
        %v879 = vmul.f32 1.0, %v878
        %v880 = vrot.slane %v864, 4
        %v882 = vtanh.pop %v880
        %v883 = vrot.slane %v864, 6
        %v885 = vxor.u32 %v883, 2147483648
        %v886 = vmul.f32 %v885, 1.442695
        %v887 = vpow.pop %v886
        %v888 = vadd.f32 %v887, 1.0
        %v889 = vrcp.pop %v888
        %v890 = vmul.f32 1.0, %v889
        %v891 = vmul.f32 %v879, %v689
        %v892 = vmul.f32 %v870, %v882
        %v893 = vadd.f32 %v891, %v892
        %v894 = vtanh.pop %v893
        %v895 = vmul.f32 %v890, %v894
        %s896 = smul.u32 %s695, 2
        %s897 = scalar_lea.vmem %s215, %s896 [#allocation3]
        %898 = vst [vmem:[%s897] sm:$0x3] %v895
        %s899 = scalar_select %p286, 3, 4
        %s900 = smul.u32 %s899, 4
        %s901 = smul.addr %s900, 2
        %s902 = scalar_lea.vmem %s193, %s901 [#allocation2]
        %v903 = vld [vmem:[%s902] sm:$0xff]
        %904 = vmatprep.subr.mxu0 %v223
        %905 = vmatpush1.msra.mxu0 %v222
        %906 = vmatprep.subr.mxu0 %v227
        %907 = vmatpush1.msra.mxu0 %v226
        %908 = vmatprep.subr.mxu0 %v231
        %909 = vmatpush1.msra.mxu0 %v230
        %910 = vmatprep.subr.mxu0 %v235
        %911 = vmatpush1.msra.mxu0 %v234
        %912 = vmatprep.subr.mxu0 %v239
        %913 = vmatpush1.msra.mxu0 %v238
        %914 = vmatprep.subr.mxu0 %v243
        %915 = vmatpush1.msra.mxu0 %v242
        %916 = vmatprep.subr.mxu0 %v247
        %917 = vmatpush1.msra.mxu0 %v246
        %918 = vmatprep.subr.mxu0 %v251
        %919 = vmatpush1.msra.mxu0 %v250
        %920 = vmatprep.subr.mxu0 %v255
        %921 = vmatpush1.msra.mxu0 %v254
        %922 = vmatprep.subr.mxu0 %v259
        %923 = vmatpush1.msra.mxu0 %v258
        %924 = vmatprep.subr.mxu0 %v263
        %925 = vmatpush1.msra.mxu0 %v262
        %926 = vmatprep.subr.mxu0 %v267
        %927 = vmatpush1.msra.mxu0 %v266
        %928 = vmatprep.subr.mxu0 %v271
        %929 = vmatpush1.msra.mxu0 %v270
        %930 = vmatprep.subr.mxu0 %v275
        %931 = vmatpush1.msra.mxu0 %v274
        %932 = vmatprep.subr.mxu0 %v279
        %933 = vmatpush1.msra.mxu0 %v278
        %934 = vmatprep.subr.mxu0 %v283
        %935 = vmatpush1.msra.mxu0 %v282
        %936 = vmatprep.subr.mxu0 0.0
        %937 = vmatpush1.msra.mxu0 0.0
        %938 = vmatprep.subr.mxu0 0.0
        %939 = vmatpush1.msra.mxu0 0.0
        %940 = vmatprep.subr.mxu0 0.0
        %941 = vmatpush1.msra.mxu0 0.0
        %942 = vmatprep.subr.mxu0 0.0
        %943 = vmatpush1.msra.mxu0 0.0
        %944 = vmatprep.subr.mxu0 0.0
        %945 = vmatpush1.msra.mxu0 0.0
        %946 = vmatprep.subr.mxu0 0.0
        %947 = vmatpush1.msra.mxu0 0.0
        %948 = vmatprep.subr.mxu0 0.0
        %949 = vmatpush1.msra.mxu0 0.0
        %950 = vmatprep.subr.mxu0 0.0
        %951 = vmatpush1.msra.mxu0 0.0
        %952 = vmatprep.subr.mxu0 0.0
        %953 = vmatpush1.msra.mxu0 0.0
        %954 = vmatprep.subr.mxu0 0.0
        %955 = vmatpush1.msra.mxu0 0.0
        %956 = vmatprep.subr.mxu0 0.0
        %957 = vmatpush1.msra.mxu0 0.0
        %958 = vmatprep.subr.mxu0 0.0
        %959 = vmatpush1.msra.mxu0 0.0
        %960 = vmatprep.subr.mxu0 0.0
        %961 = vmatpush1.msra.mxu0 0.0
        %962 = vmatprep.subr.mxu0 0.0
        %963 = vmatpush1.msra.mxu0 0.0
        %964 = vmatprep.subr.mxu0 0.0
        %965 = vmatpush1.msra.mxu0 0.0
        %966 = vmatprep.subr.mxu0 0.0
        %967 = vmatpush1.msra.mxu0 0.0
        %968 = vmatprep.mubr.f32.mxu0 0.0
        %969 = vmatmul.mubr.f32.gmra.mrb[0].mxu0 %v895
        %v970 = vpop.f32.mrb[0].mxu0
        %v971 = vadd.f32 0.0, %v970
        %v972 = vpop.f32.mrb[0].mxu0
        %v973 = vadd.f32 0.0, %v972
        %974 = vdwg.mxu0
        %975 = vmatprep.subr.mxu0 %v225
        %976 = vmatpush1.msra.mxu0 %v224
        %977 = vmatprep.subr.mxu0 %v229
        %978 = vmatpush1.msra.mxu0 %v228
        %979 = vmatprep.subr.mxu0 %v233
        %980 = vmatpush1.msra.mxu0 %v232
        %981 = vmatprep.subr.mxu0 %v237
        %982 = vmatpush1.msra.mxu0 %v236
        %983 = vmatprep.subr.mxu0 %v241
        %984 = vmatpush1.msra.mxu0 %v240
        %985 = vmatprep.subr.mxu0 %v245
        %986 = vmatpush1.msra.mxu0 %v244
        %987 = vmatprep.subr.mxu0 %v249
        %988 = vmatpush1.msra.mxu0 %v248
        %989 = vmatprep.subr.mxu0 %v253
        %990 = vmatpush1.msra.mxu0 %v252
        %991 = vmatprep.subr.mxu0 %v257
        %992 = vmatpush1.msra.mxu0 %v256
        %993 = vmatprep.subr.mxu0 %v261
        %994 = vmatpush1.msra.mxu0 %v260
        %995 = vmatprep.subr.mxu0 %v265
        %996 = vmatpush1.msra.mxu0 %v264
        %997 = vmatprep.subr.mxu0 %v269
        %998 = vmatpush1.msra.mxu0 %v268
        %999 = vmatprep.subr.mxu0 %v273
        %1000 = vmatpush1.msra.mxu0 %v272
        %1001 = vmatprep.subr.mxu0 %v277
        %1002 = vmatpush1.msra.mxu0 %v276
        %1003 = vmatprep.subr.mxu0 %v281
        %1004 = vmatpush1.msra.mxu0 %v280
        %1005 = vmatprep.subr.mxu0 %v285
        %1006 = vmatpush1.msra.mxu0 %v284
        %1007 = vmatprep.subr.mxu0 0.0
        %1008 = vmatpush1.msra.mxu0 0.0
        %1009 = vmatprep.subr.mxu0 0.0
        %1010 = vmatpush1.msra.mxu0 0.0
        %1011 = vmatprep.subr.mxu0 0.0
        %1012 = vmatpush1.msra.mxu0 0.0
        %1013 = vmatprep.subr.mxu0 0.0
        %1014 = vmatpush1.msra.mxu0 0.0
        %1015 = vmatprep.subr.mxu0 0.0
        %1016 = vmatpush1.msra.mxu0 0.0
        %1017 = vmatprep.subr.mxu0 0.0
        %1018 = vmatpush1.msra.mxu0 0.0
        %1019 = vmatprep.subr.mxu0 0.0
        %1020 = vmatpush1.msra.mxu0 0.0
        %1021 = vmatprep.subr.mxu0 0.0
        %1022 = vmatpush1.msra.mxu0 0.0
        %1023 = vmatprep.subr.mxu0 0.0
        %1024 = vmatpush1.msra.mxu0 0.0
        %1025 = vmatprep.subr.mxu0 0.0
        %1026 = vmatpush1.msra.mxu0 0.0
        %1027 = vmatprep.subr.mxu0 0.0
        %1028 = vmatpush1.msra.mxu0 0.0
        %1029 = vmatprep.subr.mxu0 0.0
        %1030 = vmatpush1.msra.mxu0 0.0
        %1031 = vmatprep.subr.mxu0 0.0
        %1032 = vmatpush1.msra.mxu0 0.0
        %1033 = vmatprep.subr.mxu0 0.0
        %1034 = vmatpush1.msra.mxu0 0.0
        %1035 = vmatprep.subr.mxu0 0.0
        %1036 = vmatpush1.msra.mxu0 0.0
        %1037 = vmatprep.subr.mxu0 0.0
        %1038 = vmatpush1.msra.mxu0 0.0
        %1039 = vmatprep.mubr.f32.mxu0 0.0
        %1040 = vmatmul.mubr.f32.gmra.mrb[0].mxu0 %v895
        %v1041 = vpop.f32.mrb[0].mxu0
        %v1042 = vadd.f32 0.0, %v1041
        %v1043 = vpop.f32.mrb[0].mxu0
        %v1044 = vadd.f32 0.0, %v1043
        %1045 = vdwg.mxu0
        %v1050 = vcombine.low %v971, %v973
        %v1051 = vcombine.low %v1042, %v1044
        %v1053 = vunpack.c.l.s4 1983009808
        %v1054 = vunpack.c.0.s8 %v1053
        %v1055 = vlaneseq
        %v1056 = vshrl.u32 %v1055, 7
        %v1057 = vsub.s32 %v1054, %v1056
        %v1058 = vrot.slane %v1050, %v1057
        %v1060 = vunpack.c.l.s4 1983009808
        %v1061 = vunpack.c.0.s8 %v1060
        %v1062 = vlaneseq
        %v1063 = vshrl.u32 %v1062, 7
        %v1064 = vsub.s32 %v1061, %v1063
        %v1065 = vrot.slane %v1051, %v1064
        %v1066 = vcombine.low %v1058, %v1065
        %v1068 = vadd.f32 %v903, %v1066
        %v1069 = vxor.u32 %v1068, 2147483648
        %v1070 = vmul.f32 %v1069, 1.442695
        %v1071 = vpow.pop %v1070
        %v1072 = vadd.f32 %v1071, 1.0
        %v1073 = vrcp.pop %v1072
        %v1074 = vmul.f32 1.0, %v1073
        %v1076 = vrot.slane %v1068, 2
        %v1078 = vxor.u32 %v1076, 2147483648
        %v1079 = vmul.f32 %v1078, 1.442695
        %v1080 = vpow.pop %v1079
        %v1081 = vadd.f32 %v1080, 1.0
        %v1082 = vrcp.pop %v1081
        %v1083 = vmul.f32 1.0, %v1082
        %v1084 = vrot.slane %v1068, 4
        %v1086 = vtanh.pop %v1084
        %v1087 = vrot.slane %v1068, 6
        %v1089 = vxor.u32 %v1087, 2147483648
        %v1090 = vmul.f32 %v1089, 1.442695
        %v1091 = vpow.pop %v1090
        %v1092 = vadd.f32 %v1091, 1.0
        %v1093 = vrcp.pop %v1092
        %v1094 = vmul.f32 1.0, %v1093
        %v1095 = vmul.f32 %v1083, %v893
        %v1096 = vmul.f32 %v1074, %v1086
        %v1097 = vadd.f32 %v1095, %v1096
        %v1098 = vtanh.pop %v1097
        %v1099 = vmul.f32 %v1094, %v1098
        %s1100 = smul.u32 %s899, 2
        %s1101 = scalar_lea.vmem %s215, %s1100 [#allocation3]
        %1102 = vst [vmem:[%s1101] sm:$0x3] %v1099
        %s1103 = scalar_select %p286, 4, 3
        %s1104 = smul.u32 %s1103, 4
        %s1105 = smul.addr %s1104, 2
        %s1106 = scalar_lea.vmem %s193, %s1105 [#allocation2]
        %v1107 = vld [vmem:[%s1106] sm:$0xff]
        %1108 = vmatprep.subr.mxu0 %v223
        %1109 = vmatpush1.msra.mxu0 %v222
        %1110 = vmatprep.subr.mxu0 %v227
        %1111 = vmatpush1.msra.mxu0 %v226
        %1112 = vmatprep.subr.mxu0 %v231
        %1113 = vmatpush1.msra.mxu0 %v230
        %1114 = vmatprep.subr.mxu0 %v235
        %1115 = vmatpush1.msra.mxu0 %v234
        %1116 = vmatprep.subr.mxu0 %v239
        %1117 = vmatpush1.msra.mxu0 %v238
        %1118 = vmatprep.subr.mxu0 %v243
        %1119 = vmatpush1.msra.mxu0 %v242
        %1120 = vmatprep.subr.mxu0 %v247
        %1121 = vmatpush1.msra.mxu0 %v246
        %1122 = vmatprep.subr.mxu0 %v251
        %1123 = vmatpush1.msra.mxu0 %v250
        %1124 = vmatprep.subr.mxu0 %v255
        %1125 = vmatpush1.msra.mxu0 %v254
        %1126 = vmatprep.subr.mxu0 %v259
        %1127 = vmatpush1.msra.mxu0 %v258
        %1128 = vmatprep.subr.mxu0 %v263
        %1129 = vmatpush1.msra.mxu0 %v262
        %1130 = vmatprep.subr.mxu0 %v267
        %1131 = vmatpush1.msra.mxu0 %v266
        %1132 = vmatprep.subr.mxu0 %v271
        %1133 = vmatpush1.msra.mxu0 %v270
        %1134 = vmatprep.subr.mxu0 %v275
        %1135 = vmatpush1.msra.mxu0 %v274
        %1136 = vmatprep.subr.mxu0 %v279
        %1137 = vmatpush1.msra.mxu0 %v278
        %1138 = vmatprep.subr.mxu0 %v283
        %1139 = vmatpush1.msra.mxu0 %v282
        %1140 = vmatprep.subr.mxu0 0.0
        %1141 = vmatpush1.msra.mxu0 0.0
        %1142 = vmatprep.subr.mxu0 0.0
        %1143 = vmatpush1.msra.mxu0 0.0
        %1144 = vmatprep.subr.mxu0 0.0
        %1145 = vmatpush1.msra.mxu0 0.0
        %1146 = vmatprep.subr.mxu0 0.0
        %1147 = vmatpush1.msra.mxu0 0.0
        %1148 = vmatprep.subr.mxu0 0.0
        %1149 = vmatpush1.msra.mxu0 0.0
        %1150 = vmatprep.subr.mxu0 0.0
        %1151 = vmatpush1.msra.mxu0 0.0
        %1152 = vmatprep.subr.mxu0 0.0
        %1153 = vmatpush1.msra.mxu0 0.0
        %1154 = vmatprep.subr.mxu0 0.0
        %1155 = vmatpush1.msra.mxu0 0.0
        %1156 = vmatprep.subr.mxu0 0.0
        %1157 = vmatpush1.msra.mxu0 0.0
        %1158 = vmatprep.subr.mxu0 0.0
        %1159 = vmatpush1.msra.mxu0 0.0
        %1160 = vmatprep.subr.mxu0 0.0
        %1161 = vmatpush1.msra.mxu0 0.0
        %1162 = vmatprep.subr.mxu0 0.0
        %1163 = vmatpush1.msra.mxu0 0.0
        %1164 = vmatprep.subr.mxu0 0.0
        %1165 = vmatpush1.msra.mxu0 0.0
        %1166 = vmatprep.subr.mxu0 0.0
        %1167 = vmatpush1.msra.mxu0 0.0
        %1168 = vmatprep.subr.mxu0 0.0
        %1169 = vmatpush1.msra.mxu0 0.0
        %1170 = vmatprep.subr.mxu0 0.0
        %1171 = vmatpush1.msra.mxu0 0.0
        %1172 = vmatprep.mubr.f32.mxu0 0.0
        %1173 = vmatmul.mubr.f32.gmra.mrb[0].mxu0 %v1099
        %v1174 = vpop.f32.mrb[0].mxu0
        %v1175 = vadd.f32 0.0, %v1174
        %v1176 = vpop.f32.mrb[0].mxu0
        %v1177 = vadd.f32 0.0, %v1176
        %1178 = vdwg.mxu0
        %1179 = vmatprep.subr.mxu0 %v225
        %1180 = vmatpush1.msra.mxu0 %v224
        %1181 = vmatprep.subr.mxu0 %v229
        %1182 = vmatpush1.msra.mxu0 %v228
        %1183 = vmatprep.subr.mxu0 %v233
        %1184 = vmatpush1.msra.mxu0 %v232
        %1185 = vmatprep.subr.mxu0 %v237
        %1186 = vmatpush1.msra.mxu0 %v236
        %1187 = vmatprep.subr.mxu0 %v241
        %1188 = vmatpush1.msra.mxu0 %v240
        %1189 = vmatprep.subr.mxu0 %v245
        %1190 = vmatpush1.msra.mxu0 %v244
        %1191 = vmatprep.subr.mxu0 %v249
        %1192 = vmatpush1.msra.mxu0 %v248
        %1193 = vmatprep.subr.mxu0 %v253
        %1194 = vmatpush1.msra.mxu0 %v252
        %1195 = vmatprep.subr.mxu0 %v257
        %1196 = vmatpush1.msra.mxu0 %v256
        %1197 = vmatprep.subr.mxu0 %v261
        %1198 = vmatpush1.msra.mxu0 %v260
        %1199 = vmatprep.subr.mxu0 %v265
        %1200 = vmatpush1.msra.mxu0 %v264
        %1201 = vmatprep.subr.mxu0 %v269
        %1202 = vmatpush1.msra.mxu0 %v268
        %1203 = vmatprep.subr.mxu0 %v273
        %1204 = vmatpush1.msra.mxu0 %v272
        %1205 = vmatprep.subr.mxu0 %v277
        %1206 = vmatpush1.msra.mxu0 %v276
        %1207 = vmatprep.subr.mxu0 %v281
        %1208 = vmatpush1.msra.mxu0 %v280
        %1209 = vmatprep.subr.mxu0 %v285
        %1210 = vmatpush1.msra.mxu0 %v284
        %1211 = vmatprep.subr.mxu0 0.0
        %1212 = vmatpush1.msra.mxu0 0.0
        %1213 = vmatprep.subr.mxu0 0.0
        %1214 = vmatpush1.msra.mxu0 0.0
        %1215 = vmatprep.subr.mxu0 0.0
        %1216 = vmatpush1.msra.mxu0 0.0
        %1217 = vmatprep.subr.mxu0 0.0
        %1218 = vmatpush1.msra.mxu0 0.0
        %1219 = vmatprep.subr.mxu0 0.0
        %1220 = vmatpush1.msra.mxu0 0.0
        %1221 = vmatprep.subr.mxu0 0.0
        %1222 = vmatpush1.msra.mxu0 0.0
        %1223 = vmatprep.subr.mxu0 0.0
        %1224 = vmatpush1.msra.mxu0 0.0
        %1225 = vmatprep.subr.mxu0 0.0
        %1226 = vmatpush1.msra.mxu0 0.0
        %1227 = vmatprep.subr.mxu0 0.0
        %1228 = vmatpush1.msra.mxu0 0.0
        %1229 = vmatprep.subr.mxu0 0.0
        %1230 = vmatpush1.msra.mxu0 0.0
        %1231 = vmatprep.subr.mxu0 0.0
        %1232 = vmatpush1.msra.mxu0 0.0
        %1233 = vmatprep.subr.mxu0 0.0
        %1234 = vmatpush1.msra.mxu0 0.0
        %1235 = vmatprep.subr.mxu0 0.0
        %1236 = vmatpush1.msra.mxu0 0.0
        %1237 = vmatprep.subr.mxu0 0.0
        %1238 = vmatpush1.msra.mxu0 0.0
        %1239 = vmatprep.subr.mxu0 0.0
        %1240 = vmatpush1.msra.mxu0 0.0
        %1241 = vmatprep.subr.mxu0 0.0
        %1242 = vmatpush1.msra.mxu0 0.0
        %1243 = vmatprep.mubr.f32.mxu0 0.0
        %1244 = vmatmul.mubr.f32.gmra.mrb[0].mxu0 %v1099
        %v1245 = vpop.f32.mrb[0].mxu0
        %v1246 = vadd.f32 0.0, %v1245
        %v1247 = vpop.f32.mrb[0].mxu0
        %v1248 = vadd.f32 0.0, %v1247
        %1249 = vdwg.mxu0
        %v1254 = vcombine.low %v1175, %v1177
        %v1255 = vcombine.low %v1246, %v1248
        %v1257 = vunpack.c.l.s4 1983009808
        %v1258 = vunpack.c.0.s8 %v1257
        %v1259 = vlaneseq
        %v1260 = vshrl.u32 %v1259, 7
        %v1261 = vsub.s32 %v1258, %v1260
        %v1262 = vrot.slane %v1254, %v1261
        %v1264 = vunpack.c.l.s4 1983009808
        %v1265 = vunpack.c.0.s8 %v1264
        %v1266 = vlaneseq
        %v1267 = vshrl.u32 %v1266, 7
        %v1268 = vsub.s32 %v1265, %v1267
        %v1269 = vrot.slane %v1255, %v1268
        %v1270 = vcombine.low %v1262, %v1269
        %v1272 = vadd.f32 %v1107, %v1270
        %v1273 = vxor.u32 %v1272, 2147483648
        %v1274 = vmul.f32 %v1273, 1.442695
        %v1275 = vpow.pop %v1274
        %v1276 = vadd.f32 %v1275, 1.0
        %v1277 = vrcp.pop %v1276
        %v1278 = vmul.f32 1.0, %v1277
        %v1280 = vrot.slane %v1272, 2
        %v1282 = vxor.u32 %v1280, 2147483648
        %v1283 = vmul.f32 %v1282, 1.442695
        %v1284 = vpow.pop %v1283
        %v1285 = vadd.f32 %v1284, 1.0
        %v1286 = vrcp.pop %v1285
        %v1287 = vmul.f32 1.0, %v1286
        %v1288 = vrot.slane %v1272, 4
        %v1290 = vtanh.pop %v1288
        %v1291 = vrot.slane %v1272, 6
        %v1293 = vxor.u32 %v1291, 2147483648
        %v1294 = vmul.f32 %v1293, 1.442695
        %v1295 = vpow.pop %v1294
        %v1296 = vadd.f32 %v1295, 1.0
        %v1297 = vrcp.pop %v1296
        %v1298 = vmul.f32 1.0, %v1297
        %v1299 = vmul.f32 %v1287, %v1097
        %v1300 = vmul.f32 %v1278, %v1290
        %v1301 = vadd.f32 %v1299, %v1300
        %v1302 = vtanh.pop %v1301
        %v1303 = vmul.f32 %v1298, %v1302
        %s1304 = smul.u32 %s1103, 2
        %s1305 = scalar_lea.vmem %s215, %s1304 [#allocation3]
        %1306 = vst [vmem:[%s1305] sm:$0x3] %v1303
        %s1307 = scalar_select %p286, 5, 2
        %s1308 = smul.u32 %s1307, 4
        %s1309 = smul.addr %s1308, 2
        %s1310 = scalar_lea.vmem %s193, %s1309 [#allocation2]
        %v1311 = vld [vmem:[%s1310] sm:$0xff]
        %1312 = vmatprep.subr.mxu0 %v223
        %1313 = vmatpush1.msra.mxu0 %v222
        %1314 = vmatprep.subr.mxu0 %v227
        %1315 = vmatpush1.msra.mxu0 %v226
        %1316 = vmatprep.subr.mxu0 %v231
        %1317 = vmatpush1.msra.mxu0 %v230
        %1318 = vmatprep.subr.mxu0 %v235
        %1319 = vmatpush1.msra.mxu0 %v234
        %1320 = vmatprep.subr.mxu0 %v239
        %1321 = vmatpush1.msra.mxu0 %v238
        %1322 = vmatprep.subr.mxu0 %v243
        %1323 = vmatpush1.msra.mxu0 %v242
        %1324 = vmatprep.subr.mxu0 %v247
        %1325 = vmatpush1.msra.mxu0 %v246
        %1326 = vmatprep.subr.mxu0 %v251
        %1327 = vmatpush1.msra.mxu0 %v250
        %1328 = vmatprep.subr.mxu0 %v255
        %1329 = vmatpush1.msra.mxu0 %v254
        %1330 = vmatprep.subr.mxu0 %v259
        %1331 = vmatpush1.msra.mxu0 %v258
        %1332 = vmatprep.subr.mxu0 %v263
        %1333 = vmatpush1.msra.mxu0 %v262
        %1334 = vmatprep.subr.mxu0 %v267
        %1335 = vmatpush1.msra.mxu0 %v266
        %1336 = vmatprep.subr.mxu0 %v271
        %1337 = vmatpush1.msra.mxu0 %v270
        %1338 = vmatprep.subr.mxu0 %v275
        %1339 = vmatpush1.msra.mxu0 %v274
        %1340 = vmatprep.subr.mxu0 %v279
        %1341 = vmatpush1.msra.mxu0 %v278
        %1342 = vmatprep.subr.mxu0 %v283
        %1343 = vmatpush1.msra.mxu0 %v282
        %1344 = vmatprep.subr.mxu0 0.0
        %1345 = vmatpush1.msra.mxu0 0.0
        %1346 = vmatprep.subr.mxu0 0.0
        %1347 = vmatpush1.msra.mxu0 0.0
        %1348 = vmatprep.subr.mxu0 0.0
        %1349 = vmatpush1.msra.mxu0 0.0
        %1350 = vmatprep.subr.mxu0 0.0
        %1351 = vmatpush1.msra.mxu0 0.0
        %1352 = vmatprep.subr.mxu0 0.0
        %1353 = vmatpush1.msra.mxu0 0.0
        %1354 = vmatprep.subr.mxu0 0.0
        %1355 = vmatpush1.msra.mxu0 0.0
        %1356 = vmatprep.subr.mxu0 0.0
        %1357 = vmatpush1.msra.mxu0 0.0
        %1358 = vmatprep.subr.mxu0 0.0
        %1359 = vmatpush1.msra.mxu0 0.0
        %1360 = vmatprep.subr.mxu0 0.0
        %1361 = vmatpush1.msra.mxu0 0.0
        %1362 = vmatprep.subr.mxu0 0.0
        %1363 = vmatpush1.msra.mxu0 0.0
        %1364 = vmatprep.subr.mxu0 0.0
        %1365 = vmatpush1.msra.mxu0 0.0
        %1366 = vmatprep.subr.mxu0 0.0
        %1367 = vmatpush1.msra.mxu0 0.0
        %1368 = vmatprep.subr.mxu0 0.0
        %1369 = vmatpush1.msra.mxu0 0.0
        %1370 = vmatprep.subr.mxu0 0.0
        %1371 = vmatpush1.msra.mxu0 0.0
        %1372 = vmatprep.subr.mxu0 0.0
        %1373 = vmatpush1.msra.mxu0 0.0
        %1374 = vmatprep.subr.mxu0 0.0
        %1375 = vmatpush1.msra.mxu0 0.0
        %1376 = vmatprep.mubr.f32.mxu0 0.0
        %1377 = vmatmul.mubr.f32.gmra.mrb[0].mxu0 %v1303
        %v1378 = vpop.f32.mrb[0].mxu0
        %v1379 = vadd.f32 0.0, %v1378
        %v1380 = vpop.f32.mrb[0].mxu0
        %v1381 = vadd.f32 0.0, %v1380
        %1382 = vdwg.mxu0
        %1383 = vmatprep.subr.mxu0 %v225
        %1384 = vmatpush1.msra.mxu0 %v224
        %1385 = vmatprep.subr.mxu0 %v229
        %1386 = vmatpush1.msra.mxu0 %v228
        %1387 = vmatprep.subr.mxu0 %v233
        %1388 = vmatpush1.msra.mxu0 %v232
        %1389 = vmatprep.subr.mxu0 %v237
        %1390 = vmatpush1.msra.mxu0 %v236
        %1391 = vmatprep.subr.mxu0 %v241
        %1392 = vmatpush1.msra.mxu0 %v240
        %1393 = vmatprep.subr.mxu0 %v245
        %1394 = vmatpush1.msra.mxu0 %v244
        %1395 = vmatprep.subr.mxu0 %v249
        %1396 = vmatpush1.msra.mxu0 %v248
        %1397 = vmatprep.subr.mxu0 %v253
        %1398 = vmatpush1.msra.mxu0 %v252
        %1399 = vmatprep.subr.mxu0 %v257
        %1400 = vmatpush1.msra.mxu0 %v256
        %1401 = vmatprep.subr.mxu0 %v261
        %1402 = vmatpush1.msra.mxu0 %v260
        %1403 = vmatprep.subr.mxu0 %v265
        %1404 = vmatpush1.msra.mxu0 %v264
        %1405 = vmatprep.subr.mxu0 %v269
        %1406 = vmatpush1.msra.mxu0 %v268
        %1407 = vmatprep.subr.mxu0 %v273
        %1408 = vmatpush1.msra.mxu0 %v272
        %1409 = vmatprep.subr.mxu0 %v277
        %1410 = vmatpush1.msra.mxu0 %v276
        %1411 = vmatprep.subr.mxu0 %v281
        %1412 = vmatpush1.msra.mxu0 %v280
        %1413 = vmatprep.subr.mxu0 %v285
        %1414 = vmatpush1.msra.mxu0 %v284
        %1415 = vmatprep.subr.mxu0 0.0
        %1416 = vmatpush1.msra.mxu0 0.0
        %1417 = vmatprep.subr.mxu0 0.0
        %1418 = vmatpush1.msra.mxu0 0.0
        %1419 = vmatprep.subr.mxu0 0.0
        %1420 = vmatpush1.msra.mxu0 0.0
        %1421 = vmatprep.subr.mxu0 0.0
        %1422 = vmatpush1.msra.mxu0 0.0
        %1423 = vmatprep.subr.mxu0 0.0
        %1424 = vmatpush1.msra.mxu0 0.0
        %1425 = vmatprep.subr.mxu0 0.0
        %1426 = vmatpush1.msra.mxu0 0.0
        %1427 = vmatprep.subr.mxu0 0.0
        %1428 = vmatpush1.msra.mxu0 0.0
        %1429 = vmatprep.subr.mxu0 0.0
        %1430 = vmatpush1.msra.mxu0 0.0
        %1431 = vmatprep.subr.mxu0 0.0
        %1432 = vmatpush1.msra.mxu0 0.0
        %1433 = vmatprep.subr.mxu0 0.0
        %1434 = vmatpush1.msra.mxu0 0.0
        %1435 = vmatprep.subr.mxu0 0.0
        %1436 = vmatpush1.msra.mxu0 0.0
        %1437 = vmatprep.subr.mxu0 0.0
        %1438 = vmatpush1.msra.mxu0 0.0
        %1439 = vmatprep.subr.mxu0 0.0
        %1440 = vmatpush1.msra.mxu0 0.0
        %1441 = vmatprep.subr.mxu0 0.0
        %1442 = vmatpush1.msra.mxu0 0.0
        %1443 = vmatprep.subr.mxu0 0.0
        %1444 = vmatpush1.msra.mxu0 0.0
        %1445 = vmatprep.subr.mxu0 0.0
        %1446 = vmatpush1.msra.mxu0 0.0
        %1447 = vmatprep.mubr.f32.mxu0 0.0
        %1448 = vmatmul.mubr.f32.gmra.mrb[0].mxu0 %v1303
        %v1449 = vpop.f32.mrb[0].mxu0
        %v1450 = vadd.f32 0.0, %v1449
        %v1451 = vpop.f32.mrb[0].mxu0
        %v1452 = vadd.f32 0.0, %v1451
        %1453 = vdwg.mxu0
        %v1458 = vcombine.low %v1379, %v1381
        %v1459 = vcombine.low %v1450, %v1452
        %v1461 = vunpack.c.l.s4 1983009808
        %v1462 = vunpack.c.0.s8 %v1461
        %v1463 = vlaneseq
        %v1464 = vshrl.u32 %v1463, 7
        %v1465 = vsub.s32 %v1462, %v1464
        %v1466 = vrot.slane %v1458, %v1465
        %v1468 = vunpack.c.l.s4 1983009808
        %v1469 = vunpack.c.0.s8 %v1468
        %v1470 = vlaneseq
        %v1471 = vshrl.u32 %v1470, 7
        %v1472 = vsub.s32 %v1469, %v1471
        %v1473 = vrot.slane %v1459, %v1472
        %v1474 = vcombine.low %v1466, %v1473
        %v1476 = vadd.f32 %v1311, %v1474
        %v1477 = vxor.u32 %v1476, 2147483648
        %v1478 = vmul.f32 %v1477, 1.442695
        %v1479 = vpow.pop %v1478
        %v1480 = vadd.f32 %v1479, 1.0
        %v1481 = vrcp.pop %v1480
        %v1482 = vmul.f32 1.0, %v1481
        %v1484 = vrot.slane %v1476, 2
        %v1486 = vxor.u32 %v1484, 2147483648
        %v1487 = vmul.f32 %v1486, 1.442695
        %v1488 = vpow.pop %v1487
        %v1489 = vadd.f32 %v1488, 1.0
        %v1490 = vrcp.pop %v1489
        %v1491 = vmul.f32 1.0, %v1490
        %v1492 = vrot.slane %v1476, 4
        %v1494 = vtanh.pop %v1492
        %v1495 = vrot.slane %v1476, 6
        %v1497 = vxor.u32 %v1495, 2147483648
        %v1498 = vmul.f32 %v1497, 1.442695
        %v1499 = vpow.pop %v1498
        %v1500 = vadd.f32 %v1499, 1.0
        %v1501 = vrcp.pop %v1500
        %v1502 = vmul.f32 1.0, %v1501
        %v1503 = vmul.f32 %v1491, %v1301
        %v1504 = vmul.f32 %v1482, %v1494
        %v1505 = vadd.f32 %v1503, %v1504
        %v1506 = vtanh.pop %v1505
        %v1507 = vmul.f32 %v1502, %v1506
        %s1508 = smul.u32 %s1307, 2
        %s1509 = scalar_lea.vmem %s215, %s1508 [#allocation3]
        %1510 = vst [vmem:[%s1509] sm:$0x3] %v1507
        %s1511 = scalar_select %p286, 6, 1
        %s1512 = smul.u32 %s1511, 4
        %s1513 = smul.addr %s1512, 2
        %s1514 = scalar_lea.vmem %s193, %s1513 [#allocation2]
        %v1515 = vld [vmem:[%s1514] sm:$0xff]
        %1516 = vmatprep.subr.mxu0 %v223
        %1517 = vmatpush1.msra.mxu0 %v222
        %1518 = vmatprep.subr.mxu0 %v227
        %1519 = vmatpush1.msra.mxu0 %v226
        %1520 = vmatprep.subr.mxu0 %v231
        %1521 = vmatpush1.msra.mxu0 %v230
        %1522 = vmatprep.subr.mxu0 %v235
        %1523 = vmatpush1.msra.mxu0 %v234
        %1524 = vmatprep.subr.mxu0 %v239
        %1525 = vmatpush1.msra.mxu0 %v238
        %1526 = vmatprep.subr.mxu0 %v243
        %1527 = vmatpush1.msra.mxu0 %v242
        %1528 = vmatprep.subr.mxu0 %v247
        %1529 = vmatpush1.msra.mxu0 %v246
        %1530 = vmatprep.subr.mxu0 %v251
        %1531 = vmatpush1.msra.mxu0 %v250
        %1532 = vmatprep.subr.mxu0 %v255
        %1533 = vmatpush1.msra.mxu0 %v254
        %1534 = vmatprep.subr.mxu0 %v259
        %1535 = vmatpush1.msra.mxu0 %v258
        %1536 = vmatprep.subr.mxu0 %v263
        %1537 = vmatpush1.msra.mxu0 %v262
        %1538 = vmatprep.subr.mxu0 %v267
        %1539 = vmatpush1.msra.mxu0 %v266
        %1540 = vmatprep.subr.mxu0 %v271
        %1541 = vmatpush1.msra.mxu0 %v270
        %1542 = vmatprep.subr.mxu0 %v275
        %1543 = vmatpush1.msra.mxu0 %v274
        %1544 = vmatprep.subr.mxu0 %v279
        %1545 = vmatpush1.msra.mxu0 %v278
        %1546 = vmatprep.subr.mxu0 %v283
        %1547 = vmatpush1.msra.mxu0 %v282
        %1548 = vmatprep.subr.mxu0 0.0
        %1549 = vmatpush1.msra.mxu0 0.0
        %1550 = vmatprep.subr.mxu0 0.0
        %1551 = vmatpush1.msra.mxu0 0.0
        %1552 = vmatprep.subr.mxu0 0.0
        %1553 = vmatpush1.msra.mxu0 0.0
        %1554 = vmatprep.subr.mxu0 0.0
        %1555 = vmatpush1.msra.mxu0 0.0
        %1556 = vmatprep.subr.mxu0 0.0
        %1557 = vmatpush1.msra.mxu0 0.0
        %1558 = vmatprep.subr.mxu0 0.0
        %1559 = vmatpush1.msra.mxu0 0.0
        %1560 = vmatprep.subr.mxu0 0.0
        %1561 = vmatpush1.msra.mxu0 0.0
        %1562 = vmatprep.subr.mxu0 0.0
        %1563 = vmatpush1.msra.mxu0 0.0
        %1564 = vmatprep.subr.mxu0 0.0
        %1565 = vmatpush1.msra.mxu0 0.0
        %1566 = vmatprep.subr.mxu0 0.0
        %1567 = vmatpush1.msra.mxu0 0.0
        %1568 = vmatprep.subr.mxu0 0.0
        %1569 = vmatpush1.msra.mxu0 0.0
        %1570 = vmatprep.subr.mxu0 0.0
        %1571 = vmatpush1.msra.mxu0 0.0
        %1572 = vmatprep.subr.mxu0 0.0
        %1573 = vmatpush1.msra.mxu0 0.0
        %1574 = vmatprep.subr.mxu0 0.0
        %1575 = vmatpush1.msra.mxu0 0.0
        %1576 = vmatprep.subr.mxu0 0.0
        %1577 = vmatpush1.msra.mxu0 0.0
        %1578 = vmatprep.subr.mxu0 0.0
        %1579 = vmatpush1.msra.mxu0 0.0
        %1580 = vmatprep.mubr.f32.mxu0 0.0
        %1581 = vmatmul.mubr.f32.gmra.mrb[0].mxu0 %v1507
        %v1582 = vpop.f32.mrb[0].mxu0
        %v1583 = vadd.f32 0.0, %v1582
        %v1584 = vpop.f32.mrb[0].mxu0
        %v1585 = vadd.f32 0.0, %v1584
        %1586 = vdwg.mxu0
        %1587 = vmatprep.subr.mxu0 %v225
        %1588 = vmatpush1.msra.mxu0 %v224
        %1589 = vmatprep.subr.mxu0 %v229
        %1590 = vmatpush1.msra.mxu0 %v228
        %1591 = vmatprep.subr.mxu0 %v233
        %1592 = vmatpush1.msra.mxu0 %v232
        %1593 = vmatprep.subr.mxu0 %v237
        %1594 = vmatpush1.msra.mxu0 %v236
        %1595 = vmatprep.subr.mxu0 %v241
        %1596 = vmatpush1.msra.mxu0 %v240
        %1597 = vmatprep.subr.mxu0 %v245
        %1598 = vmatpush1.msra.mxu0 %v244
        %1599 = vmatprep.subr.mxu0 %v249
        %1600 = vmatpush1.msra.mxu0 %v248
        %1601 = vmatprep.subr.mxu0 %v253
        %1602 = vmatpush1.msra.mxu0 %v252
        %1603 = vmatprep.subr.mxu0 %v257
        %1604 = vmatpush1.msra.mxu0 %v256
        %1605 = vmatprep.subr.mxu0 %v261
        %1606 = vmatpush1.msra.mxu0 %v260
        %1607 = vmatprep.subr.mxu0 %v265
        %1608 = vmatpush1.msra.mxu0 %v264
        %1609 = vmatprep.subr.mxu0 %v269
        %1610 = vmatpush1.msra.mxu0 %v268
        %1611 = vmatprep.subr.mxu0 %v273
        %1612 = vmatpush1.msra.mxu0 %v272
        %1613 = vmatprep.subr.mxu0 %v277
        %1614 = vmatpush1.msra.mxu0 %v276
        %1615 = vmatprep.subr.mxu0 %v281
        %1616 = vmatpush1.msra.mxu0 %v280
        %1617 = vmatprep.subr.mxu0 %v285
        %1618 = vmatpush1.msra.mxu0 %v284
        %1619 = vmatprep.subr.mxu0 0.0
        %1620 = vmatpush1.msra.mxu0 0.0
        %1621 = vmatprep.subr.mxu0 0.0
        %1622 = vmatpush1.msra.mxu0 0.0
        %1623 = vmatprep.subr.mxu0 0.0
        %1624 = vmatpush1.msra.mxu0 0.0
        %1625 = vmatprep.subr.mxu0 0.0
        %1626 = vmatpush1.msra.mxu0 0.0
        %1627 = vmatprep.subr.mxu0 0.0
        %1628 = vmatpush1.msra.mxu0 0.0
        %1629 = vmatprep.subr.mxu0 0.0
        %1630 = vmatpush1.msra.mxu0 0.0
        %1631 = vmatprep.subr.mxu0 0.0
        %1632 = vmatpush1.msra.mxu0 0.0
        %1633 = vmatprep.subr.mxu0 0.0
        %1634 = vmatpush1.msra.mxu0 0.0
        %1635 = vmatprep.subr.mxu0 0.0
        %1636 = vmatpush1.msra.mxu0 0.0
        %1637 = vmatprep.subr.mxu0 0.0
        %1638 = vmatpush1.msra.mxu0 0.0
        %1639 = vmatprep.subr.mxu0 0.0
        %1640 = vmatpush1.msra.mxu0 0.0
        %1641 = vmatprep.subr.mxu0 0.0
        %1642 = vmatpush1.msra.mxu0 0.0
        %1643 = vmatprep.subr.mxu0 0.0
        %1644 = vmatpush1.msra.mxu0 0.0
        %1645 = vmatprep.subr.mxu0 0.0
        %1646 = vmatpush1.msra.mxu0 0.0
        %1647 = vmatprep.subr.mxu0 0.0
        %1648 = vmatpush1.msra.mxu0 0.0
        %1649 = vmatprep.subr.mxu0 0.0
        %1650 = vmatpush1.msra.mxu0 0.0
        %1651 = vmatprep.mubr.f32.mxu0 0.0
        %1652 = vmatmul.mubr.f32.gmra.mrb[0].mxu0 %v1507
        %v1653 = vpop.f32.mrb[0].mxu0
        %v1654 = vadd.f32 0.0, %v1653
        %v1655 = vpop.f32.mrb[0].mxu0
        %v1656 = vadd.f32 0.0, %v1655
        %1657 = vdwg.mxu0
        %v1662 = vcombine.low %v1583, %v1585
        %v1663 = vcombine.low %v1654, %v1656
        %v1665 = vunpack.c.l.s4 1983009808
        %v1666 = vunpack.c.0.s8 %v1665
        %v1667 = vlaneseq
        %v1668 = vshrl.u32 %v1667, 7
        %v1669 = vsub.s32 %v1666, %v1668
        %v1670 = vrot.slane %v1662, %v1669
        %v1672 = vunpack.c.l.s4 1983009808
        %v1673 = vunpack.c.0.s8 %v1672
        %v1674 = vlaneseq
        %v1675 = vshrl.u32 %v1674, 7
        %v1676 = vsub.s32 %v1673, %v1675
        %v1677 = vrot.slane %v1663, %v1676
        %v1678 = vcombine.low %v1670, %v1677
        %v1680 = vadd.f32 %v1515, %v1678
        %v1681 = vxor.u32 %v1680, 2147483648
        %v1682 = vmul.f32 %v1681, 1.442695
        %v1683 = vpow.pop %v1682
        %v1684 = vadd.f32 %v1683, 1.0
        %v1685 = vrcp.pop %v1684
        %v1686 = vmul.f32 1.0, %v1685
        %v1688 = vrot.slane %v1680, 2
        %v1690 = vxor.u32 %v1688, 2147483648
        %v1691 = vmul.f32 %v1690, 1.442695
        %v1692 = vpow.pop %v1691
        %v1693 = vadd.f32 %v1692, 1.0
        %v1694 = vrcp.pop %v1693
        %v1695 = vmul.f32 1.0, %v1694
        %v1696 = vrot.slane %v1680, 4
        %v1698 = vtanh.pop %v1696
        %v1699 = vrot.slane %v1680, 6
        %v1701 = vxor.u32 %v1699, 2147483648
        %v1702 = vmul.f32 %v1701, 1.442695
        %v1703 = vpow.pop %v1702
        %v1704 = vadd.f32 %v1703, 1.0
        %v1705 = vrcp.pop %v1704
        %v1706 = vmul.f32 1.0, %v1705
        %v1707 = vmul.f32 %v1695, %v1505
        %v1708 = vmul.f32 %v1686, %v1698
        %v1709 = vadd.f32 %v1707, %v1708
        %v1710 = vtanh.pop %v1709
        %v1711 = vmul.f32 %v1706, %v1710
        %s1712 = smul.u32 %s1511, 2
        %s1713 = scalar_lea.vmem %s215, %s1712 [#allocation3]
        %1714 = vst [vmem:[%s1713] sm:$0x3] %v1711
        %s1715 = scalar_select %p286, 7, 0
        %s1716 = smul.u32 %s1715, 4
        %s1717 = smul.addr %s1716, 2
        %s1718 = scalar_lea.vmem %s193, %s1717 [#allocation2]
        %v1719 = vld [vmem:[%s1718] sm:$0xff]
        %1720 = vmatprep.subr.mxu0 %v223
        %1721 = vmatpush1.msra.mxu0 %v222
        %1722 = vmatprep.subr.mxu0 %v227
        %1723 = vmatpush1.msra.mxu0 %v226
        %1724 = vmatprep.subr.mxu0 %v231
        %1725 = vmatpush1.msra.mxu0 %v230
        %1726 = vmatprep.subr.mxu0 %v235
        %1727 = vmatpush1.msra.mxu0 %v234
        %1728 = vmatprep.subr.mxu0 %v239
        %1729 = vmatpush1.msra.mxu0 %v238
        %1730 = vmatprep.subr.mxu0 %v243
        %1731 = vmatpush1.msra.mxu0 %v242
        %1732 = vmatprep.subr.mxu0 %v247
        %1733 = vmatpush1.msra.mxu0 %v246
        %1734 = vmatprep.subr.mxu0 %v251
        %1735 = vmatpush1.msra.mxu0 %v250
        %1736 = vmatprep.subr.mxu0 %v255
        %1737 = vmatpush1.msra.mxu0 %v254
        %1738 = vmatprep.subr.mxu0 %v259
        %1739 = vmatpush1.msra.mxu0 %v258
        %1740 = vmatprep.subr.mxu0 %v263
        %1741 = vmatpush1.msra.mxu0 %v262
        %1742 = vmatprep.subr.mxu0 %v267
        %1743 = vmatpush1.msra.mxu0 %v266
        %1744 = vmatprep.subr.mxu0 %v271
        %1745 = vmatpush1.msra.mxu0 %v270
        %1746 = vmatprep.subr.mxu0 %v275
        %1747 = vmatpush1.msra.mxu0 %v274
        %1748 = vmatprep.subr.mxu0 %v279
        %1749 = vmatpush1.msra.mxu0 %v278
        %1750 = vmatprep.subr.mxu0 %v283
        %1751 = vmatpush1.msra.mxu0 %v282
        %1752 = vmatprep.subr.mxu0 0.0
        %1753 = vmatpush1.msra.mxu0 0.0
        %1754 = vmatprep.subr.mxu0 0.0
        %1755 = vmatpush1.msra.mxu0 0.0
        %1756 = vmatprep.subr.mxu0 0.0
        %1757 = vmatpush1.msra.mxu0 0.0
        %1758 = vmatprep.subr.mxu0 0.0
        %1759 = vmatpush1.msra.mxu0 0.0
        %1760 = vmatprep.subr.mxu0 0.0
        %1761 = vmatpush1.msra.mxu0 0.0
        %1762 = vmatprep.subr.mxu0 0.0
        %1763 = vmatpush1.msra.mxu0 0.0
        %1764 = vmatprep.subr.mxu0 0.0
        %1765 = vmatpush1.msra.mxu0 0.0
        %1766 = vmatprep.subr.mxu0 0.0
        %1767 = vmatpush1.msra.mxu0 0.0
        %1768 = vmatprep.subr.mxu0 0.0
        %1769 = vmatpush1.msra.mxu0 0.0
        %1770 = vmatprep.subr.mxu0 0.0
        %1771 = vmatpush1.msra.mxu0 0.0
        %1772 = vmatprep.subr.mxu0 0.0
        %1773 = vmatpush1.msra.mxu0 0.0
        %1774 = vmatprep.subr.mxu0 0.0
        %1775 = vmatpush1.msra.mxu0 0.0
        %1776 = vmatprep.subr.mxu0 0.0
        %1777 = vmatpush1.msra.mxu0 0.0
        %1778 = vmatprep.subr.mxu0 0.0
        %1779 = vmatpush1.msra.mxu0 0.0
        %1780 = vmatprep.subr.mxu0 0.0
        %1781 = vmatpush1.msra.mxu0 0.0
        %1782 = vmatprep.subr.mxu0 0.0
        %1783 = vmatpush1.msra.mxu0 0.0
        %1784 = vmatprep.mubr.f32.mxu0 0.0
        %1785 = vmatmul.mubr.f32.gmra.mrb[0].mxu0 %v1711
        %v1786 = vpop.f32.mrb[0].mxu0
        %v1787 = vadd.f32 0.0, %v1786
        %v1788 = vpop.f32.mrb[0].mxu0
        %v1789 = vadd.f32 0.0, %v1788
        %1790 = vdwg.mxu0
        %1791 = vmatprep.subr.mxu0 %v225
        %1792 = vmatpush1.msra.mxu0 %v224
        %1793 = vmatprep.subr.mxu0 %v229
        %1794 = vmatpush1.msra.mxu0 %v228
        %1795 = vmatprep.subr.mxu0 %v233
        %1796 = vmatpush1.msra.mxu0 %v232
        %1797 = vmatprep.subr.mxu0 %v237
        %1798 = vmatpush1.msra.mxu0 %v236
        %1799 = vmatprep.subr.mxu0 %v241
        %1800 = vmatpush1.msra.mxu0 %v240
        %1801 = vmatprep.subr.mxu0 %v245
        %1802 = vmatpush1.msra.mxu0 %v244
        %1803 = vmatprep.subr.mxu0 %v249
        %1804 = vmatpush1.msra.mxu0 %v248
        %1805 = vmatprep.subr.mxu0 %v253
        %1806 = vmatpush1.msra.mxu0 %v252
        %1807 = vmatprep.subr.mxu0 %v257
        %1808 = vmatpush1.msra.mxu0 %v256
        %1809 = vmatprep.subr.mxu0 %v261
        %1810 = vmatpush1.msra.mxu0 %v260
        %1811 = vmatprep.subr.mxu0 %v265
        %1812 = vmatpush1.msra.mxu0 %v264
        %1813 = vmatprep.subr.mxu0 %v269
        %1814 = vmatpush1.msra.mxu0 %v268
        %1815 = vmatprep.subr.mxu0 %v273
        %1816 = vmatpush1.msra.mxu0 %v272
        %1817 = vmatprep.subr.mxu0 %v277
        %1818 = vmatpush1.msra.mxu0 %v276
        %1819 = vmatprep.subr.mxu0 %v281
        %1820 = vmatpush1.msra.mxu0 %v280
        %1821 = vmatprep.subr.mxu0 %v285
        %1822 = vmatpush1.msra.mxu0 %v284
        %1823 = vmatprep.subr.mxu0 0.0
        %1824 = vmatpush1.msra.mxu0 0.0
        %1825 = vmatprep.subr.mxu0 0.0
        %1826 = vmatpush1.msra.mxu0 0.0
        %1827 = vmatprep.subr.mxu0 0.0
        %1828 = vmatpush1.msra.mxu0 0.0
        %1829 = vmatprep.subr.mxu0 0.0
        %1830 = vmatpush1.msra.mxu0 0.0
        %1831 = vmatprep.subr.mxu0 0.0
        %1832 = vmatpush1.msra.mxu0 0.0
        %1833 = vmatprep.subr.mxu0 0.0
        %1834 = vmatpush1.msra.mxu0 0.0
        %1835 = vmatprep.subr.mxu0 0.0
        %1836 = vmatpush1.msra.mxu0 0.0
        %1837 = vmatprep.subr.mxu0 0.0
        %1838 = vmatpush1.msra.mxu0 0.0
        %1839 = vmatprep.subr.mxu0 0.0
        %1840 = vmatpush1.msra.mxu0 0.0
        %1841 = vmatprep.subr.mxu0 0.0
        %1842 = vmatpush1.msra.mxu0 0.0
        %1843 = vmatprep.subr.mxu0 0.0
        %1844 = vmatpush1.msra.mxu0 0.0
        %1845 = vmatprep.subr.mxu0 0.0
        %1846 = vmatpush1.msra.mxu0 0.0
        %1847 = vmatprep.subr.mxu0 0.0
        %1848 = vmatpush1.msra.mxu0 0.0
        %1849 = vmatprep.subr.mxu0 0.0
        %1850 = vmatpush1.msra.mxu0 0.0
        %1851 = vmatprep.subr.mxu0 0.0
        %1852 = vmatpush1.msra.mxu0 0.0
        %1853 = vmatprep.subr.mxu0 0.0
        %1854 = vmatpush1.msra.mxu0 0.0
        %1855 = vmatprep.mubr.f32.mxu0 0.0
        %1856 = vmatmul.mubr.f32.gmra.mrb[0].mxu0 %v1711
        %v1857 = vpop.f32.mrb[0].mxu0
        %v1858 = vadd.f32 0.0, %v1857
        %v1859 = vpop.f32.mrb[0].mxu0
        %v1860 = vadd.f32 0.0, %v1859
        %1861 = vdwg.mxu0
        %v1866 = vcombine.low %v1787, %v1789
        %v1867 = vcombine.low %v1858, %v1860
        %v1869 = vunpack.c.l.s4 1983009808
        %v1870 = vunpack.c.0.s8 %v1869
        %v1871 = vlaneseq
        %v1872 = vshrl.u32 %v1871, 7
        %v1873 = vsub.s32 %v1870, %v1872
        %v1874 = vrot.slane %v1866, %v1873
        %v1876 = vunpack.c.l.s4 1983009808
        %v1877 = vunpack.c.0.s8 %v1876
        %v1878 = vlaneseq
        %v1879 = vshrl.u32 %v1878, 7
        %v1880 = vsub.s32 %v1877, %v1879
        %v1881 = vrot.slane %v1867, %v1880
        %v1882 = vcombine.low %v1874, %v1881
        %v1884 = vadd.f32 %v1719, %v1882
        %v1885 = vxor.u32 %v1884, 2147483648
        %v1886 = vmul.f32 %v1885, 1.442695
        %v1887 = vpow.pop %v1886
        %v1888 = vadd.f32 %v1887, 1.0
        %v1889 = vrcp.pop %v1888
        %v1890 = vmul.f32 1.0, %v1889
        %v1892 = vrot.slane %v1884, 2
        %v1894 = vxor.u32 %v1892, 2147483648
        %v1895 = vmul.f32 %v1894, 1.442695
        %v1896 = vpow.pop %v1895
        %v1897 = vadd.f32 %v1896, 1.0
        %v1898 = vrcp.pop %v1897
        %v1899 = vmul.f32 1.0, %v1898
        %v1900 = vrot.slane %v1884, 4
        %v1902 = vtanh.pop %v1900
        %v1903 = vrot.slane %v1884, 6
        %v1905 = vxor.u32 %v1903, 2147483648
        %v1906 = vmul.f32 %v1905, 1.442695
        %v1907 = vpow.pop %v1906
        %v1908 = vadd.f32 %v1907, 1.0
        %v1909 = vrcp.pop %v1908
        %v1910 = vmul.f32 1.0, %v1909
        %v1911 = vmul.f32 %v1899, %v1709
        %v1912 = vmul.f32 %v1890, %v1902
        %v1913 = vadd.f32 %v1911, %v1912
        %v1914 = vtanh.pop %v1913
        %v1915 = vmul.f32 %v1910, %v1914
        %s1916 = smul.u32 %s1715, 2
        %s1917 = scalar_lea.vmem %s215, %s1916 [#allocation3]
        %1918 = vst [vmem:[%s1917] sm:$0x3] %v1915
        %s1919 = sand.u32 %s73, 1
        %s1920 = sand.u32 %s73, 1
        %s1921 = smul.addr %s1920, 16
        %s1922 = scalar_lea.vmem [#allocation3], %s1921
        // Predicated region
        $region67: #{iwcd_forward.9} parent=61 // pred_check
          %p1923 = pneg %p83
        $region68: #{iwcd_forward.9} parent=61 // pred_check_branch
          %1925 = sbr.rel (%p1923) target = $region70
        $region69: #{iwcd_forward.9} parent=61 // pred_region
          %s1926 = smul.addr %s13, 2
          %s1927 = scalar_lea.vmem %s2, %s1926
          // Predicated region
          $region71: #{iwcd_forward.9} parent=69 // pred_check
            _
          $region72: #{iwcd_forward.9} parent=69 // pred_check_branch
            %1929 = sbr.rel (0) target = $region74
          $region73: #{iwcd_forward.9} parent=69 // pred_region
            // Predicated region
            $region75: #{iwcd_forward.9} parent=73 // pred_check
              _
            $region76: #{iwcd_forward.9} parent=73 // pred_check_branch
              %1931 = sbr.rel target = $region78
            $region77: #{iwcd_forward.9} parent=73 // pred_region
              // Predicated region
              $region90: #{iwcd_forward.9} parent=77 // pred_check
                _
              $region91: #{iwcd_forward.9} parent=77 // pred_check_branch
                %1960 = sbr.rel (0) target = $region93
              $region92: #{iwcd_forward.9} parent=77 // pred_region
                loop: start=0, step=1, limit=1
                $region94: #{iwcd_forward.9} parent=92 // loop_pre_header
                  _
                $region95: #{iwcd_forward.9} parent=92 // loop_header
                  %s1962 = sphi 0, %s1966
                  %p1963 = scmp.ge.s32.totalorder %s1962, 1
                  %s1967 = sphi %s1922, %s1922
                  %s1968 = sphi %s1927, %s1927
                $region96: #{iwcd_forward.9} parent=92 // loop_header_branch
                  %1965 = sbr.rel (%p1963) target = $region100
                $region97: #{iwcd_forward.9} parent=92 // loop_body
                  _
                $region98: #{iwcd_forward.9} parent=92 // loop_footer
                  %s1966 = sadd.s32 1, %s1962
                $region99: #{iwcd_forward.9} parent=92 // loop_footer_branch
                  %1961 = sbr.rel target = $region95
                $region100: #{iwcd_forward.9} parent=92 // loop_exit
                  _
                loop: start=0, step=1, limit=1
                $region101: #{iwcd_forward.9} parent=92 // loop_pre_header
                  _
                $region102: #{iwcd_forward.9} parent=92 // loop_header
                  %s1971 = sphi 0, %s1975
                  %p1972 = scmp.ge.s32.totalorder %s1971, 1
                  %s1976 = sphi %s1922, %s1922
                  %s1977 = sphi %s1927, %s1927
                $region103: #{iwcd_forward.9} parent=92 // loop_header_branch
                  %1974 = sbr.rel (%p1972) target = $region107
                $region104: #{iwcd_forward.9} parent=92 // loop_body
                  %v1978 = vld [vmem:[%s1976] sm:$0x3]
                  %1979 = vst [vmem:[%s1977] sm:$0x3] %v1978
                  %v1980 = vld [vmem:[%s1976 + $0x2] sm:$0x3]
                  %1981 = vst [vmem:[%s1977 + $0x4] sm:$0x3] %v1980
                  %v1982 = vld [vmem:[%s1976 + $0x4] sm:$0x3]
                  %1983 = vst [vmem:[%s1977 + $0x8] sm:$0x3] %v1982
                  %v1984 = vld [vmem:[%s1976 + $0x6] sm:$0x3]
                  %1985 = vst [vmem:[%s1977 + $0xc] sm:$0x3] %v1984
                  %v1986 = vld [vmem:[%s1976 + $0x8] sm:$0x3]
                  %1987 = vst [vmem:[%s1977 + $0x10] sm:$0x3] %v1986
                  %v1988 = vld [vmem:[%s1976 + $0xa] sm:$0x3]
                  %1989 = vst [vmem:[%s1977 + $0x14] sm:$0x3] %v1988
                  %v1990 = vld [vmem:[%s1976 + $0xc] sm:$0x3]
                  %1991 = vst [vmem:[%s1977 + $0x18] sm:$0x3] %v1990
                  %v1992 = vld [vmem:[%s1976 + $0xe] sm:$0x3]
                  %1993 = vst [vmem:[%s1977 + $0x1c] sm:$0x3] %v1992
                $region105: #{iwcd_forward.9} parent=92 // loop_footer
                  %s1975 = sadd.s32 1, %s1971
                $region106: #{iwcd_forward.9} parent=92 // loop_footer_branch
                  %1970 = sbr.rel target = $region102
                $region107: #{iwcd_forward.9} parent=92 // loop_exit
                  _
              $region93: #{iwcd_forward.9} parent=77 // pred_fallthru
                _
            $region78: #{iwcd_forward.9} parent=73 // pred_fallthru
              _
            // Predicated region
            $region79: #{iwcd_forward.9} parent=73 // pred_check
              _
            $region80: #{iwcd_forward.9} parent=73 // pred_check_branch
              %1933 = sbr.rel (0) target = $region82
            $region81: #{iwcd_forward.9} parent=73 // pred_region
              loop: start=0, step=1, limit=1
              $region83: #{iwcd_forward.9} parent=81 // loop_pre_header
                _
              $region84: #{iwcd_forward.9} parent=81 // loop_header
                %s1936 = sphi 0, %s1940
                %p1937 = scmp.ge.s32.totalorder %s1936, 1
                %s1941 = sphi %s1922, %s1922
                %s1942 = sphi %s1927, %s1927
              $region85: #{iwcd_forward.9} parent=81 // loop_header_branch
                %1939 = sbr.rel (%p1937) target = $region89
              $region86: #{iwcd_forward.9} parent=81 // loop_body
                %v1943 = vld [vmem:[%s1941] sm:$0x3]
                %1944 = vst [vmem:[%s1942] sm:$0x3] %v1943
                %v1945 = vld [vmem:[%s1941 + $0x2] sm:$0x3]
                %1946 = vst [vmem:[%s1942 + $0x4] sm:$0x3] %v1945
                %v1947 = vld [vmem:[%s1941 + $0x4] sm:$0x3]
                %1948 = vst [vmem:[%s1942 + $0x8] sm:$0x3] %v1947
                %v1949 = vld [vmem:[%s1941 + $0x6] sm:$0x3]
                %1950 = vst [vmem:[%s1942 + $0xc] sm:$0x3] %v1949
                %v1951 = vld [vmem:[%s1941 + $0x8] sm:$0x3]
                %1952 = vst [vmem:[%s1942 + $0x10] sm:$0x3] %v1951
                %v1953 = vld [vmem:[%s1941 + $0xa] sm:$0x3]
                %1954 = vst [vmem:[%s1942 + $0x14] sm:$0x3] %v1953
                %v1955 = vld [vmem:[%s1941 + $0xc] sm:$0x3]
                %1956 = vst [vmem:[%s1942 + $0x18] sm:$0x3] %v1955
                %v1957 = vld [vmem:[%s1941 + $0xe] sm:$0x3]
                %1958 = vst [vmem:[%s1942 + $0x1c] sm:$0x3] %v1957
              $region87: #{iwcd_forward.9} parent=81 // loop_footer
                %s1940 = sadd.s32 1, %s1936
              $region88: #{iwcd_forward.9} parent=81 // loop_footer_branch
                %1935 = sbr.rel target = $region84
              $region89: #{iwcd_forward.9} parent=81 // loop_exit
                _
            $region82: #{iwcd_forward.9} parent=73 // pred_fallthru
              _
          $region74: #{iwcd_forward.9} parent=69 // pred_fallthru
            _
          %1994 = vnop
        $region70: #{iwcd_forward.9} parent=61 // pred_fallthru
          _
      $region62: #{iwcd_forward.9} parent=5 // pred_fallthru
        _
      %p1995 = scmp.le.s32.totalorder 2, %s8
      // Predicated region
      $region108: #{iwcd_forward.9} parent=5 // pred_check
        %p1996 = pneg %p1995
      $region109: #{iwcd_forward.9} parent=5 // pred_check_branch
        %1998 = sbr.rel (%p1996) target = $region111
      $region110: #{iwcd_forward.9} parent=5 // pred_region
        %s1999 = ssub.s32 %s8, 2
        // Predicated region
        $region112: #{iwcd_forward.9} parent=110 // pred_check
          %p2000 = pneg %p89
        $region113: #{iwcd_forward.9} parent=110 // pred_check_branch
          %2002 = sbr.rel (%p2000) target = $region115
        $region114: #{iwcd_forward.9} parent=110 // pred_region
          %s2003 = sand.u32 %s74, 1
          %s2004 = sand.u32 %s74, 1
          %s2005 = smul.addr %s2004, 16
          %s2006 = scalar_lea.vmem [#allocation3], %s2005
        $region115: #{iwcd_forward.9} parent=110 // pred_fallthru
          _
      $region111: #{iwcd_forward.9} parent=5 // pred_fallthru
        _
    $region6: #{iwcd_forward.9} parent=1 // loop_footer
      %s12 = sadd.s32 1, %s8
    $region7: #{iwcd_forward.9} parent=1 // loop_footer_branch
      %7 = sbr.rel target = $region3
    $region8: #{iwcd_forward.9} parent=1 // loop_exit
      _

// kernel: iwcd_forward.8
$region0: #{iwcd_forward.8}
  #allocation0 [shape = 'u32[]', space=smem, size = 0x4, offset = 0x4, fixed_abs, tag = 'smem constant byte address 0x4 - core index']
  #allocation1 [shape = 'u32[144,128]{1,0:T(1,128)}', space=vmem, size = 0x12000, scoped, tag = 'internal scratch']
  %s0 = inlined_call_operand.vmem [shape: bf16[16,6400], index: 0, kind: input, shape index: {}]
  %s1 = inlined_call_operand.hbm [shape: bf16[6400,1024], index: 1, kind: input, shape index: {}]
  %s2 = inlined_call_operand.hbm [shape: f32[1,1024], index: 2, kind: input, shape index: {}]
  %s3 = inlined_call_operand.vmem [shape: f32[16,1024], index: 3, kind: output, shape index: {}]
  %s4 = sld [smem:[#allocation0]]
  $region102: #{iwcd_forward.8} parent=0
    _
  %s6 = ssub.s32 1, %s4
  %s7 = scalar_select 0, %s6, %s4
  $region1: #{iwcd_forward.8} parent=0
    #allocation2 [shape = 'u8[204800]{0}', space=vmem, size = 0x32000, scoped, tag = 'input window, operand 0']
    #allocation3 [shape = 'u8[6553600]{0}', space=vmem, size = 0x640000, scoped, tag = 'input window, operand 1']
    #allocation4 [shape = 's32[2]{0}', space=sflag, size = 0x8, scoped, tag = 'scoped memory for iwcd_forward.8']
    #allocation5 [shape = 'u8[4096]{0}', space=vmem, size = 0x1000, scoped, tag = 'input window, operand 2']
    #allocation6 [shape = 's32[2]{0}', space=sflag, size = 0x8, scoped, tag = 'scoped memory for iwcd_forward.8']
    #allocation7 [shape = 'u8[65536]{0}', space=vmem, size = 0x10000, scoped, tag = 'output window, operand 0']
    %8 = vsyncpa [#allocation4], 0
    %s9 = scalar_lea.sflag [#allocation4], 1
    %10 = vsyncpa %s9, 0
    %11 = vsyncpa [#allocation6], 0
    %s12 = scalar_lea.sflag [#allocation6], 1
    %13 = vsyncpa %s12, 0
    loop: start=0, step=1, limit=6
    $region2: #{iwcd_forward.8} parent=1 // loop_pre_header
      _
    $region3: #{iwcd_forward.8} parent=1 // loop_header
      %s15 = sphi 0, %s19
      %p16 = scmp.ge.s32.totalorder %s15, 6
      %s22 = sphi 0, %s41
      %s23 = sphi 0, %s37
      %s24 = sphi 0, %s33
      %s25 = sphi 0, %s22
      %s26 = sphi 0, %s23
      %s27 = sphi 0, %s24
      %s28 = sphi 0, %s25
      %s29 = sphi 0, %s26
      %s30 = sphi 0, %s27
      %s46 = sphi 0, %s48
      %s49 = sphi 0, %s46
      %s50 = sphi 0, %s49
      %s66 = sphi 0, %s50
      %s74 = sphi 0, %s76
      %s77 = sphi 0, %s74
      %s78 = sphi 0, %s77
      %s94 = sphi 0, %s78
      %s100 = sphi 0, %s102
      %s103 = sphi 0, %s100
      %s104 = sphi 0, %s103
      %s120 = sphi 0, %s104
      %s128 = sphi 0, %s130
      %s131 = sphi 0, %s128
      %s132 = sphi 0, %s131
      %s148 = sphi 0, %s132
    $region4: #{iwcd_forward.8} parent=1 // loop_header_branch
      %18 = sbr.rel (%p16) target = $region8
    $region5: #{iwcd_forward.8} parent=1 // loop_body
      %s20 = ssub.s32 %s15, 1
      %s21 = ssub.s32 %s15, 2
      %s31 = sadd.s32 1, %s24
      %p32 = scmp.ge.s32.totalorder %s31, 2
      %s33 = scalar_select %p32, 0, %s31
      %s34 = sadd.s32 1, %s23
      %s35 = scalar_select %p32, %s34, %s23
      %p36 = scmp.ge.s32.totalorder %s35, 2
      %s37 = scalar_select %p36, 0, %s35
      %s38 = sadd.s32 1, %s22
      %s39 = scalar_select %p36, %s38, %s22
      %p40 = scmp.ge.s32.totalorder %s39, 1
      %s41 = scalar_select %p40, 0, %s39
      %s42 = ssub.s32 %s22, %s41
      %s43 = ssub.s32 %s24, %s33
      %s44 = sor.u32 %s42, %s43
      %p45 = scmp.eq.s32.totalorder %s44, 0
      %s47 = sadd.s32 %s46, 1
      %s48 = scalar_select %p45, %s46, %s47
      %p51 = pneg %p45
      %p52 = scmp.eq.s32.totalorder %s15, 3
      %p53 = por %p51, %p52
      %p54 = scmp.ne.s32.totalorder %s46, %s49
      %p55 = scmp.eq.s32.totalorder %s15, 0
      %p56 = por %p54, %p55
      %p57 = scmp.ne.s32.totalorder %s46, %s49
      %p58 = scmp.eq.s32.totalorder %s20, 3
      %p59 = por %p57, %p58
      %p60 = scmp.ne.s32.totalorder %s49, %s50
      %p61 = scmp.eq.s32.totalorder %s20, 0
      %p62 = por %p60, %p61
      %p63 = scmp.ne.s32.totalorder %s49, %s50
      %p64 = scmp.eq.s32.totalorder %s21, 3
      %p65 = por %p63, %p64
      %p67 = scmp.ne.s32.totalorder %s50, %s66
      %p68 = scmp.eq.s32.totalorder %s21, 0
      %p69 = por %p67, %p68
      %s70 = ssub.s32 %s24, %s33
      %s71 = ssub.s32 %s23, %s37
      %s72 = sor.u32 %s70, %s71
      %p73 = scmp.eq.s32.totalorder %s72, 0
      %s75 = sadd.s32 %s74, 1
      %s76 = scalar_select %p73, %s74, %s75
      %p79 = pneg %p73
      %p80 = scmp.eq.s32.totalorder %s15, 3
      %p81 = por %p79, %p80
      %p82 = scmp.ne.s32.totalorder %s74, %s77
      %p83 = scmp.eq.s32.totalorder %s15, 0
      %p84 = por %p82, %p83
      %p85 = scmp.ne.s32.totalorder %s74, %s77
      %p86 = scmp.eq.s32.totalorder %s20, 3
      %p87 = por %p85, %p86
      %p88 = scmp.ne.s32.totalorder %s77, %s78
      %p89 = scmp.eq.s32.totalorder %s20, 0
      %p90 = por %p88, %p89
      %p91 = scmp.ne.s32.totalorder %s77, %s78
      %p92 = scmp.eq.s32.totalorder %s21, 3
      %p93 = por %p91, %p92
      %p95 = scmp.ne.s32.totalorder %s78, %s94
      %p96 = scmp.eq.s32.totalorder %s21, 0
      %p97 = por %p95, %p96
      %s98 = ssub.s32 %s23, %s37
      %p99 = scmp.eq.s32.totalorder %s98, 0
      %s101 = sadd.s32 %s100, 1
      %s102 = scalar_select %p99, %s100, %s101
      %p105 = pneg %p99
      %p106 = scmp.eq.s32.totalorder %s15, 3
      %p107 = por %p105, %p106
      %p108 = scmp.ne.s32.totalorder %s100, %s103
      %p109 = scmp.eq.s32.totalorder %s15, 0
      %p110 = por %p108, %p109
      %p111 = scmp.ne.s32.totalorder %s100, %s103
      %p112 = scmp.eq.s32.totalorder %s20, 3
      %p113 = por %p111, %p112
      %p114 = scmp.ne.s32.totalorder %s103, %s104
      %p115 = scmp.eq.s32.totalorder %s20, 0
      %p116 = por %p114, %p115
      %p117 = scmp.ne.s32.totalorder %s103, %s104
      %p118 = scmp.eq.s32.totalorder %s21, 3
      %p119 = por %p117, %p118
      %p121 = scmp.ne.s32.totalorder %s104, %s120
      %p122 = scmp.eq.s32.totalorder %s21, 0
      %p123 = por %p121, %p122
      %s124 = ssub.s32 %s22, %s41
      %s125 = ssub.s32 %s23, %s37
      %s126 = sor.u32 %s124, %s125
      %p127 = scmp.eq.s32.totalorder %s126, 0
      %s129 = sadd.s32 %s128, 1
      %s130 = scalar_select %p127, %s128, %s129
      %p133 = pneg %p127
      %p134 = scmp.eq.s32.totalorder %s15, 3
      %p135 = por %p133, %p134
      %p136 = scmp.ne.s32.totalorder %s128, %s131
      %p137 = scmp.eq.s32.totalorder %s15, 0
      %p138 = por %p136, %p137
      %p139 = scmp.ne.s32.totalorder %s128, %s131
      %p140 = scmp.eq.s32.totalorder %s20, 3
      %p141 = por %p139, %p140
      %p142 = scmp.ne.s32.totalorder %s131, %s132
      %p143 = scmp.eq.s32.totalorder %s20, 0
      %p144 = por %p142, %p143
      %p145 = scmp.ne.s32.totalorder %s131, %s132
      %p146 = scmp.eq.s32.totalorder %s21, 3
      %p147 = por %p145, %p146
      %p149 = scmp.ne.s32.totalorder %s132, %s148
      %p150 = scmp.eq.s32.totalorder %s21, 0
      %p151 = por %p149, %p150
      %p152 = scmp.le.s32.totalorder 1, %s15
      %p153 = scmp.lt.s32.totalorder %s15, 5
      %p154 = pnand %p152, %p153
      %p155 = pneg %p154
      // Predicated region
      $region9: #{iwcd_forward.8} parent=5 // pred_check
        _
      $region10: #{iwcd_forward.8} parent=5 // pred_check_branch
        %157 = sbr.rel (%p154) target = $region12
      $region11: #{iwcd_forward.8} parent=5 // pred_region
        %s158 = ssub.s32 %s15, 1
      $region12: #{iwcd_forward.8} parent=5 // pred_fallthru
        _
      %p159 = scmp.lt.s32.totalorder %s15, 4
      // Predicated region
      $region13: #{iwcd_forward.8} parent=5 // pred_check
        %p160 = pneg %p159
      $region14: #{iwcd_forward.8} parent=5 // pred_check_branch
        %162 = sbr.rel (%p160) target = $region16
      $region15: #{iwcd_forward.8} parent=5 // pred_region
        // Predicated region
        $region17: #{iwcd_forward.8} parent=15 // pred_check
          %p163 = pneg %p56
        $region18: #{iwcd_forward.8} parent=15 // pred_check_branch
          %165 = sbr.rel (%p163) target = $region20
        $region19: #{iwcd_forward.8} parent=15 // pred_region
          %s166 = sand.u32 %s46, 1
          %s167 = sand.u32 %s46, 1
          %s168 = smul.addr %s167, 200
          %s169 = scalar_lea.vmem [#allocation2], %s168
          %s170 = smul.u32 2, %s22
          %s171 = smul.u32 25, %s24
          %s172 = smul.addr %s170, 50
          %s173 = sadd.s32 %s171, %s172
          %s174 = smul.addr %s173, 4
          %s175 = scalar_lea.vmem %s0, %s174
          // Predicated region
          $region21: #{iwcd_forward.8} parent=19 // pred_check
            _
          $region22: #{iwcd_forward.8} parent=19 // pred_check_branch
            %177 = sbr.rel (0) target = $region24
          $region23: #{iwcd_forward.8} parent=19 // pred_region
            // Predicated region
            $region25: #{iwcd_forward.8} parent=23 // pred_check
              _
            $region26: #{iwcd_forward.8} parent=23 // pred_check_branch
              %179 = sbr.rel (0) target = $region28
            $region27: #{iwcd_forward.8} parent=23 // pred_region
              %s180 = scalar_lea.vmem %s175, 96
              %s181 = scalar_lea.vmem %s169, 96 [#allocation2]
              loop: start=0, step=1, limit=1
              $region29: #{iwcd_forward.8} parent=27 // loop_pre_header
                _
              $region30: #{iwcd_forward.8} parent=27 // loop_header
                %s183 = sphi 0, %s187
                %p184 = scmp.ge.s32.totalorder %s183, 1
                %s188 = sphi %s175, %s175
                %s189 = sphi %s169, %s169
              $region31: #{iwcd_forward.8} parent=27 // loop_header_branch
                %186 = sbr.rel (%p184) target = $region35
              $region32: #{iwcd_forward.8} parent=27 // loop_body
                %v190 = vld [vmem:[%s188] sm:$0xff]
                %191 = vst [vmem:[%s189] sm:$0xff] %v190
                %v192 = vld [vmem:[%s188 + $0x8] sm:$0xff]
                %193 = vst [vmem:[%s189 + $0x8] sm:$0xff] %v192
                %v194 = vld [vmem:[%s188 + $0x10] sm:$0xff]
                %195 = vst [vmem:[%s189 + $0x10] sm:$0xff] %v194
                %v196 = vld [vmem:[%s188 + $0x18] sm:$0xff]
                %197 = vst [vmem:[%s189 + $0x18] sm:$0xff] %v196
                %v198 = vld [vmem:[%s188 + $0x20] sm:$0xff]
                %199 = vst [vmem:[%s189 + $0x20] sm:$0xff] %v198
                %v200 = vld [vmem:[%s188 + $0x28] sm:$0xff]
                %201 = vst [vmem:[%s189 + $0x28] sm:$0xff] %v200
                %v202 = vld [vmem:[%s188 + $0x30] sm:$0xff]
                %203 = vst [vmem:[%s189 + $0x30] sm:$0xff] %v202
                %v204 = vld [vmem:[%s188 + $0x38] sm:$0xff]
                %205 = vst [vmem:[%s189 + $0x38] sm:$0xff] %v204
                %v206 = vld [vmem:[%s188 + $0x40] sm:$0xff]
                %207 = vst [vmem:[%s189 + $0x40] sm:$0xff] %v206
                %v208 = vld [vmem:[%s188 + $0x48] sm:$0xff]
                %209 = vst [vmem:[%s189 + $0x48] sm:$0xff] %v208
                %v210 = vld [vmem:[%s188 + $0x50] sm:$0xff]
                %211 = vst [vmem:[%s189 + $0x50] sm:$0xff] %v210
                %v212 = vld [vmem:[%s188 + $0x58] sm:$0xff]
                %213 = vst [vmem:[%s189 + $0x58] sm:$0xff] %v212
                %v214 = vld [vmem:[%s188 + $0xc8] sm:$0xff]
                %215 = vst [vmem:[%s189 + $0x64] sm:$0xff] %v214
                %v216 = vld [vmem:[%s188 + $0xd0] sm:$0xff]
                %217 = vst [vmem:[%s189 + $0x6c] sm:$0xff] %v216
                %v218 = vld [vmem:[%s188 + $0xd8] sm:$0xff]
                %219 = vst [vmem:[%s189 + $0x74] sm:$0xff] %v218
                %v220 = vld [vmem:[%s188 + $0xe0] sm:$0xff]
                %221 = vst [vmem:[%s189 + $0x7c] sm:$0xff] %v220
                %v222 = vld [vmem:[%s188 + $0xe8] sm:$0xff]
                %223 = vst [vmem:[%s189 + $0x84] sm:$0xff] %v222
                %v224 = vld [vmem:[%s188 + $0xf0] sm:$0xff]
                %225 = vst [vmem:[%s189 + $0x8c] sm:$0xff] %v224
                %v226 = vld [vmem:[%s188 + $0xf8] sm:$0xff]
                %227 = vst [vmem:[%s189 + $0x94] sm:$0xff] %v226
                %v228 = vld [vmem:[%s188 + $0x100] sm:$0xff]
                %229 = vst [vmem:[%s189 + $0x9c] sm:$0xff] %v228
                %v230 = vld [vmem:[%s188 + $0x108] sm:$0xff]
                %231 = vst [vmem:[%s189 + $0xa4] sm:$0xff] %v230
                %v232 = vld [vmem:[%s188 + $0x110] sm:$0xff]
                %233 = vst [vmem:[%s189 + $0xac] sm:$0xff] %v232
                %v234 = vld [vmem:[%s188 + $0x118] sm:$0xff]
                %235 = vst [vmem:[%s189 + $0xb4] sm:$0xff] %v234
                %v236 = vld [vmem:[%s188 + $0x120] sm:$0xff]
                %237 = vst [vmem:[%s189 + $0xbc] sm:$0xff] %v236
              $region33: #{iwcd_forward.8} parent=27 // loop_footer
                %s187 = sadd.s32 1, %s183
              $region34: #{iwcd_forward.8} parent=27 // loop_footer_branch
                %182 = sbr.rel target = $region30
              $region35: #{iwcd_forward.8} parent=27 // loop_exit
                _
              loop: start=0, step=1, limit=1
              $region36: #{iwcd_forward.8} parent=27 // loop_pre_header
                _
              $region37: #{iwcd_forward.8} parent=27 // loop_header
                %s240 = sphi 0, %s244
                %p241 = scmp.ge.s32.totalorder %s240, 1
                %s245 = sphi %s180, %s180
                %s246 = sphi %s181, %s181
              $region38: #{iwcd_forward.8} parent=27 // loop_header_branch
                %243 = sbr.rel (%p241) target = $region42
              $region39: #{iwcd_forward.8} parent=27 // loop_body
                %v247 = vld [vmem:[%s245] sm:$0xf]
                %248 = vst [vmem:[%s246] sm:$0xf] %v247
                %v249 = vld [vmem:[%s245 + $0xc8] sm:$0xf]
                %250 = vst [vmem:[%s246 + $0x64] sm:$0xf] %v249
              $region40: #{iwcd_forward.8} parent=27 // loop_footer
                %s244 = sadd.s32 1, %s240
              $region41: #{iwcd_forward.8} parent=27 // loop_footer_branch
                %239 = sbr.rel target = $region37
              $region42: #{iwcd_forward.8} parent=27 // loop_exit
                _
            $region28: #{iwcd_forward.8} parent=23 // pred_fallthru
              _
          $region24: #{iwcd_forward.8} parent=19 // pred_fallthru
            _
          %251 = vnop
        $region20: #{iwcd_forward.8} parent=15 // pred_fallthru
          _
        // Predicated region
        $region43: #{iwcd_forward.8} parent=15 // pred_check
          %p252 = pneg %p84
        $region44: #{iwcd_forward.8} parent=15 // pred_check_branch
          %254 = sbr.rel (%p252) target = $region46
        $region45: #{iwcd_forward.8} parent=15 // pred_region
          %s255 = sand.u32 %s74, 1
          %s256 = scalar_lea.sflag [#allocation4], %s255
          %s257 = sand.u32 %s74, 1
          %s258 = smul.addr %s257, 6400
          %s259 = scalar_lea.vmem [#allocation3], %s258
          %s260 = smul.u32 400, %s24
          %s261 = smul.u32 4, %s23
          %s263 = ssub.s32 102400, 102400
          %264 = vsyncadd %s256, %s263
          %s265 = smul.addr %s260, 8
          %s266 = sadd.s32 %s261, %s265
          %s267 = smul.addr %s266, 64
          %s268 = scalar_lea.hbm %s1, %s267
          %s269 = sshll.u32 %s259, 4
          %s270 = int_to_ptr.vmem [resolvable:$true] %s269
          %275 = dma.hbm_to_vmem [thread:$0]  %s268, 102400, %s270, %s256, 512, 256, 16
        $region46: #{iwcd_forward.8} parent=15 // pred_fallthru
          _
        // Predicated region
        $region47: #{iwcd_forward.8} parent=15 // pred_check
          %p276 = pneg %p110
        $region48: #{iwcd_forward.8} parent=15 // pred_check_branch
          %278 = sbr.rel (%p276) target = $region50
        $region49: #{iwcd_forward.8} parent=15 // pred_region
          %s279 = sand.u32 %s100, 1
          %s280 = scalar_lea.sflag [#allocation6], %s279
          %s281 = sand.u32 %s100, 1
          %s282 = smul.addr %s281, 4
          %s283 = scalar_lea.vmem [#allocation5], %s282
          %s284 = smul.u32 4, %s23
          %s286 = ssub.s32 64, 64
          %287 = vsyncadd %s280, %s286
          %s288 = smul.addr %s284, 16
          %s289 = scalar_lea.hbm %s2, %s288
          %s291 = sshll.u32 %s283, 4
          %s292 = int_to_ptr.vmem [resolvable:$true] %s291
          %294 = dma.hbm_to_vmem [thread:$0]  %s289, 64, %s292, %s280
        $region50: #{iwcd_forward.8} parent=15 // pred_fallthru
          _
      $region16: #{iwcd_forward.8} parent=5 // pred_fallthru
        _
      %p295 = scmp.le.s32.totalorder 1, %s15
      %p296 = scmp.lt.s32.totalorder %s15, 5
      %p297 = pnand %p295, %p296
      %p298 = pneg %p297
      // Predicated region
      $region51: #{iwcd_forward.8} parent=5 // pred_check
        _
      $region52: #{iwcd_forward.8} parent=5 // pred_check_branch
        %300 = sbr.rel (%p297) target = $region54
      $region53: #{iwcd_forward.8} parent=5 // pred_region
        %s301 = ssub.s32 %s15, 1
        %s302 = sand.u32 %s49, 1
        %s303 = sand.u32 %s49, 1
        %s304 = smul.addr %s303, 200
        %s305 = scalar_lea.vmem [#allocation2], %s304
        // Predicated region
        $region55: #{iwcd_forward.8} parent=53 // pred_check
          %p306 = pneg %p62
        $region56: #{iwcd_forward.8} parent=53 // pred_check_branch
          %308 = sbr.rel (%p306) target = $region58
        $region57: #{iwcd_forward.8} parent=53 // pred_region
          _
        $region58: #{iwcd_forward.8} parent=53 // pred_fallthru
          _
        %s309 = sand.u32 %s77, 1
        %s310 = scalar_lea.sflag [#allocation4], %s309
        %s311 = sand.u32 %s77, 1
        %s312 = smul.addr %s311, 6400
        %s313 = scalar_lea.vmem [#allocation3], %s312
        // Predicated region
        $region59: #{iwcd_forward.8} parent=53 // pred_check
          %p314 = pneg %p90
        $region60: #{iwcd_forward.8} parent=53 // pred_check_branch
          %316 = sbr.rel (%p314) target = $region62
        $region61: #{iwcd_forward.8} parent=53 // pred_region
          %317 = dma.done %s310, 102400
        $region62: #{iwcd_forward.8} parent=53 // pred_fallthru
          _
        %s318 = sand.u32 %s103, 1
        %s319 = scalar_lea.sflag [#allocation6], %s318
        %s320 = sand.u32 %s103, 1
        %s321 = smul.addr %s320, 4
        %s322 = scalar_lea.vmem [#allocation5], %s321
        // Predicated region
        $region63: #{iwcd_forward.8} parent=53 // pred_check
          %p323 = pneg %p116
        $region64: #{iwcd_forward.8} parent=53 // pred_check_branch
          %325 = sbr.rel (%p323) target = $region66
        $region65: #{iwcd_forward.8} parent=53 // pred_region
          %326 = dma.done %s319, 64
        $region66: #{iwcd_forward.8} parent=53 // pred_fallthru
          _
        %s327 = sand.u32 %s49, 1
        %s328 = sand.u32 %s49, 1
        %s329 = smul.addr %s328, 200
        %s330 = scalar_lea.vmem [#allocation2], %s329
        %p331 = pneg %p62
        %p332 = pneg %p59
        %s333 = sand.u32 %s77, 1
        %s334 = scalar_lea.sflag [#allocation4], %s333
        %s335 = sand.u32 %s77, 1
        %s336 = smul.addr %s335, 6400
        %s337 = scalar_lea.vmem [#allocation3], %s336
        %p338 = pneg %p90
        %p339 = pneg %p87
        %s340 = sand.u32 %s103, 1
        %s341 = scalar_lea.sflag [#allocation6], %s340
        %s342 = sand.u32 %s103, 1
        %s343 = smul.addr %s342, 4
        %s344 = scalar_lea.vmem [#allocation5], %s343
        %p345 = pneg %p116
        %p346 = pneg %p113
        %p347 = pneg %p144
        %p348 = pneg %p141
        %s349 = sand.u32 %s131, 1
        %s350 = sand.u32 %s131, 1
        %s351 = smul.addr %s350, 64
        %s352 = scalar_lea.vmem [#allocation7], %s351
        %s353 = smul.u32 2, %s25
        %s354 = smul.u32 25, %s27
        %s355 = smul.u32 400, %s27
        %s356 = smul.u32 4, %s26
        %s357 = smul.u32 4, %s26
        %s358 = smul.u32 2, %s25
        %s359 = smul.u32 4, %s26
        %p361 = scmp.eq.s32.totalorder %s27, 0
        // Predicated region
        $region67: #{iwcd_forward.8} parent=53 // pred_check
          %p362 = pneg %p361
        $region68: #{iwcd_forward.8} parent=53 // pred_check_branch
          %364 = sbr.rel (%p362) target = $region70
        $region69: #{iwcd_forward.8} parent=53 // pred_region
          %v365 = vld [vmem:[%s322] sm:$0xf]
          %v367 = vlaneseq
          %v368 = vshrl.u32 %v367, 7
          %v369 = vsub.s32 0, %v368
          %v370 = vrot.slane %v365, %v369
          %v371 = vlaneseq
          %v372 = vshrl.u32 %v371, 7
          %v373 = vsub.s32 1, %v372
          %v374 = vrot.slane %v365, %v373
          %v375 = vlaneseq
          %v376 = vshrl.u32 %v375, 7
          %v377 = vsub.s32 2, %v376
          %v378 = vrot.slane %v365, %v377
          %v379 = vlaneseq
          %v380 = vshrl.u32 %v379, 7
          %v381 = vsub.s32 3, %v380
          %v382 = vrot.slane %v365, %v381
          %387 = vst [vmem:[%s352] sm:$0xff] %v370
          %388 = vst [vmem:[%s352 + $0x8] sm:$0xff] %v374
          %389 = vst [vmem:[%s352 + $0x10] sm:$0xff] %v378
          %390 = vst [vmem:[%s352 + $0x18] sm:$0xff] %v382
          %391 = vst [vmem:[%s352 + $0x20] sm:$0xff] %v370
          %392 = vst [vmem:[%s352 + $0x28] sm:$0xff] %v374
          %393 = vst [vmem:[%s352 + $0x30] sm:$0xff] %v378
          %394 = vst [vmem:[%s352 + $0x38] sm:$0xff] %v382
        $region70: #{iwcd_forward.8} parent=53 // pred_fallthru
          _
        %v395 = vld [vmem:[%s352] sm:$0xff]
        %v396 = vld [vmem:[%s352 + $0x8] sm:$0xff]
        %v397 = vld [vmem:[%s352 + $0x10] sm:$0xff]
        %v398 = vld [vmem:[%s352 + $0x18] sm:$0xff]
        %v399 = vld [vmem:[%s352 + $0x20] sm:$0xff]
        %v400 = vld [vmem:[%s352 + $0x28] sm:$0xff]
        %v401 = vld [vmem:[%s352 + $0x30] sm:$0xff]
        %v402 = vld [vmem:[%s352 + $0x38] sm:$0xff]
        %v403 = vld [vmem:[%s305] sm:$0xff]
        %v404 = vld [vmem:[%s305 + $0x8] sm:$0xff]
        %v405 = vld [vmem:[%s305 + $0x10] sm:$0xff]
        %v406 = vld [vmem:[%s305 + $0x18] sm:$0xff]
        %v407 = vld [vmem:[%s305 + $0x20] sm:$0xff]
        %v408 = vld [vmem:[%s305 + $0x28] sm:$0xff]
        %v409 = vld [vmem:[%s305 + $0x30] sm:$0xff]
        %v410 = vld [vmem:[%s305 + $0x38] sm:$0xff]
        %v411 = vld [vmem:[%s305 + $0x40] sm:$0xff]
        %v412 = vld [vmem:[%s305 + $0x48] sm:$0xff]
        %v413 = vld [vmem:[%s305 + $0x50] sm:$0xff]
        %v414 = vld [vmem:[%s305 + $0x58] sm:$0xff]
        %v415 = vld [vmem:[%s305 + $0x60] sm:$0xf]
        %v416 = vld [vmem:[%s305 + $0x64] sm:$0xff]
        %v417 = vld [vmem:[%s305 + $0x6c] sm:$0xff]
        %v418 = vld [vmem:[%s305 + $0x74] sm:$0xff]
        %v419 = vld [vmem:[%s305 + $0x7c] sm:$0xff]
        %v420 = vld [vmem:[%s305 + $0x84] sm:$0xff]
        %v421 = vld [vmem:[%s305 + $0x8c] sm:$0xff]
        %v422 = vld [vmem:[%s305 + $0x94] sm:$0xff]
        %v423 = vld [vmem:[%s305 + $0x9c] sm:$0xff]
        %v424 = vld [vmem:[%s305 + $0xa4] sm:$0xff]
        %v425 = vld [vmem:[%s305 + $0xac] sm:$0xff]
        %v426 = vld [vmem:[%s305 + $0xb4] sm:$0xff]
        %v427 = vld [vmem:[%s305 + $0xbc] sm:$0xff]
        %v428 = vld [vmem:[%s305 + $0xc4] sm:$0xf]
        %v429 = vld [vmem:[%s313] sm:$0xff]
        %v430 = vld [vmem:[%s313 + $0x8] sm:$0xff]
        %v431 = vld [vmem:[%s313 + $0x10] sm:$0xff]
        %v432 = vld [vmem:[%s313 + $0x18] sm:$0xff]
        %v433 = vld [vmem:[%s313 + $0x20] sm:$0xff]
        %v434 = vld [vmem:[%s313 + $0x28] sm:$0xff]
        %v435 = vld [vmem:[%s313 + $0x30] sm:$0xff]
        %v436 = vld [vmem:[%s313 + $0x38] sm:$0xff]
        %v437 = vld [vmem:[%s313 + $0x40] sm:$0xff]
        %v438 = vld [vmem:[%s313 + $0x48] sm:$0xff]
        %v439 = vld [vmem:[%s313 + $0x50] sm:$0xff]
        %v440 = vld [vmem:[%s313 + $0x58] sm:$0xff]
        %v441 = vld [vmem:[%s313 + $0x60] sm:$0xff]
        %v442 = vld [vmem:[%s313 + $0x68] sm:$0xff]
        %v443 = vld [vmem:[%s313 + $0x70] sm:$0xff]
        %v444 = vld [vmem:[%s313 + $0x78] sm:$0xff]
        %v445 = vld [vmem:[%s313 + $0x80] sm:$0xff]
        %v446 = vld [vmem:[%s313 + $0x88] sm:$0xff]
        %v447 = vld [vmem:[%s313 + $0x90] sm:$0xff]
        %v448 = vld [vmem:[%s313 + $0x98] sm:$0xff]
        %v449 = vld [vmem:[%s313 + $0xa0] sm:$0xff]
        %v450 = vld [vmem:[%s313 + $0xa8] sm:$0xff]
        %v451 = vld [vmem:[%s313 + $0xb0] sm:$0xff]
        %v452 = vld [vmem:[%s313 + $0xb8] sm:$0xff]
        %v453 = vld [vmem:[%s313 + $0xc0] sm:$0xff]
        %v454 = vld [vmem:[%s313 + $0xc8] sm:$0xff]
        %v455 = vld [vmem:[%s313 + $0xd0] sm:$0xff]
        %v456 = vld [vmem:[%s313 + $0xd8] sm:$0xff]
        %v457 = vld [vmem:[%s313 + $0xe0] sm:$0xff]
        %v458 = vld [vmem:[%s313 + $0xe8] sm:$0xff]
        %v459 = vld [vmem:[%s313 + $0xf0] sm:$0xff]
        %v460 = vld [vmem:[%s313 + $0xf8] sm:$0xff]
        %v461 = vld [vmem:[%s313 + $0x100] sm:$0xff]
        %v462 = vld [vmem:[%s313 + $0x108] sm:$0xff]
        %v463 = vld [vmem:[%s313 + $0x110] sm:$0xff]
        %v464 = vld [vmem:[%s313 + $0x118] sm:$0xff]
        %v465 = vld [vmem:[%s313 + $0x120] sm:$0xff]
        %v466 = vld [vmem:[%s313 + $0x128] sm:$0xff]
        %v467 = vld [vmem:[%s313 + $0x130] sm:$0xff]
        %v468 = vld [vmem:[%s313 + $0x138] sm:$0xff]
        %v469 = vld [vmem:[%s313 + $0x140] sm:$0xff]
        %v470 = vld [vmem:[%s313 + $0x148] sm:$0xff]
        %v471 = vld [vmem:[%s313 + $0x150] sm:$0xff]
        %v472 = vld [vmem:[%s313 + $0x158] sm:$0xff]
        %v473 = vld [vmem:[%s313 + $0x160] sm:$0xff]
        %v474 = vld [vmem:[%s313 + $0x168] sm:$0xff]
        %v475 = vld [vmem:[%s313 + $0x170] sm:$0xff]
        %v476 = vld [vmem:[%s313 + $0x178] sm:$0xff]
        %v477 = vld [vmem:[%s313 + $0x180] sm:$0xff]
        %v478 = vld [vmem:[%s313 + $0x188] sm:$0xff]
        %v479 = vld [vmem:[%s313 + $0x190] sm:$0xff]
        %v480 = vld [vmem:[%s313 + $0x198] sm:$0xff]
        %v481 = vld [vmem:[%s313 + $0x1a0] sm:$0xff]
        %v482 = vld [vmem:[%s313 + $0x1a8] sm:$0xff]
        %v483 = vld [vmem:[%s313 + $0x1b0] sm:$0xff]
        %v484 = vld [vmem:[%s313 + $0x1b8] sm:$0xff]
        %v485 = vld [vmem:[%s313 + $0x1c0] sm:$0xff]
        %v486 = vld [vmem:[%s313 + $0x1c8] sm:$0xff]
        %v487 = vld [vmem:[%s313 + $0x1d0] sm:$0xff]
        %v488 = vld [vmem:[%s313 + $0x1d8] sm:$0xff]
        %v489 = vld [vmem:[%s313 + $0x1e0] sm:$0xff]
        %v490 = vld [vmem:[%s313 + $0x1e8] sm:$0xff]
        %v491 = vld [vmem:[%s313 + $0x1f0] sm:$0xff]
        %v492 = vld [vmem:[%s313 + $0x1f8] sm:$0xff]
        %v493 = vld [vmem:[%s313 + $0x200] sm:$0xff]
        %v494 = vld [vmem:[%s313 + $0x208] sm:$0xff]
        %v495 = vld [vmem:[%s313 + $0x210] sm:$0xff]
        %v496 = vld [vmem:[%s313 + $0x218] sm:$0xff]
        %v497 = vld [vmem:[%s313 + $0x220] sm:$0xff]
        %v498 = vld [vmem:[%s313 + $0x228] sm:$0xff]
        %v499 = vld [vmem:[%s313 + $0x230] sm:$0xff]
        %v500 = vld [vmem:[%s313 + $0x238] sm:$0xff]
        %v501 = vld [vmem:[%s313 + $0x240] sm:$0xff]
        %v502 = vld [vmem:[%s313 + $0x248] sm:$0xff]
        %v503 = vld [vmem:[%s313 + $0x250] sm:$0xff]
        %v504 = vld [vmem:[%s313 + $0x258] sm:$0xff]
        %v505 = vld [vmem:[%s313 + $0x260] sm:$0xff]
        %v506 = vld [vmem:[%s313 + $0x268] sm:$0xff]
        %v507 = vld [vmem:[%s313 + $0x270] sm:$0xff]
        %v508 = vld [vmem:[%s313 + $0x278] sm:$0xff]
        %v509 = vld [vmem:[%s313 + $0x280] sm:$0xff]
        %v510 = vld [vmem:[%s313 + $0x288] sm:$0xff]
        %v511 = vld [vmem:[%s313 + $0x290] sm:$0xff]
        %v512 = vld [vmem:[%s313 + $0x298] sm:$0xff]
        %v513 = vld [vmem:[%s313 + $0x2a0] sm:$0xff]
        %v514 = vld [vmem:[%s313 + $0x2a8] sm:$0xff]
        %v515 = vld [vmem:[%s313 + $0x2b0] sm:$0xff]
        %v516 = vld [vmem:[%s313 + $0x2b8] sm:$0xff]
        %v517 = vld [vmem:[%s313 + $0x2c0] sm:$0xff]
        %v518 = vld [vmem:[%s313 + $0x2c8] sm:$0xff]
        %v519 = vld [vmem:[%s313 + $0x2d0] sm:$0xff]
        %v520 = vld [vmem:[%s313 + $0x2d8] sm:$0xff]
        %v521 = vld [vmem:[%s313 + $0x2e0] sm:$0xff]
        %v522 = vld [vmem:[%s313 + $0x2e8] sm:$0xff]
        %v523 = vld [vmem:[%s313 + $0x2f0] sm:$0xff]
        %v524 = vld [vmem:[%s313 + $0x2f8] sm:$0xff]
        %v525 = vld [vmem:[%s313 + $0x300] sm:$0xff]
        %v526 = vld [vmem:[%s313 + $0x308] sm:$0xff]
        %v527 = vld [vmem:[%s313 + $0x310] sm:$0xff]
        %v528 = vld [vmem:[%s313 + $0x318] sm:$0xff]
        %v529 = vld [vmem:[%s313 + $0x320] sm:$0xff]
        %v530 = vld [vmem:[%s313 + $0x328] sm:$0xff]
        %v531 = vld [vmem:[%s313 + $0x330] sm:$0xff]
        %v532 = vld [vmem:[%s313 + $0x338] sm:$0xff]
        %v533 = vld [vmem:[%s313 + $0x340] sm:$0xff]
        %v534 = vld [vmem:[%s313 + $0x348] sm:$0xff]
        %v535 = vld [vmem:[%s313 + $0x350] sm:$0xff]
        %v536 = vld [vmem:[%s313 + $0x358] sm:$0xff]
        %v537 = vld [vmem:[%s313 + $0x360] sm:$0xff]
        %v538 = vld [vmem:[%s313 + $0x368] sm:$0xff]
        %v539 = vld [vmem:[%s313 + $0x370] sm:$0xff]
        %v540 = vld [vmem:[%s313 + $0x378] sm:$0xff]
        %v541 = vld [vmem:[%s313 + $0x380] sm:$0xff]
        %v542 = vld [vmem:[%s313 + $0x388] sm:$0xff]
        %v543 = vld [vmem:[%s313 + $0x390] sm:$0xff]
        %v544 = vld [vmem:[%s313 + $0x398] sm:$0xff]
        %v545 = vld [vmem:[%s313 + $0x3a0] sm:$0xff]
        %v546 = vld [vmem:[%s313 + $0x3a8] sm:$0xff]
        %v547 = vld [vmem:[%s313 + $0x3b0] sm:$0xff]
        %v548 = vld [vmem:[%s313 + $0x3b8] sm:$0xff]
        %v549 = vld [vmem:[%s313 + $0x3c0] sm:$0xff]
        %v550 = vld [vmem:[%s313 + $0x3c8] sm:$0xff]
        %v551 = vld [vmem:[%s313 + $0x3d0] sm:$0xff]
        %v552 = vld [vmem:[%s313 + $0x3d8] sm:$0xff]
        %v553 = vld [vmem:[%s313 + $0x3e0] sm:$0xff]
        %v554 = vld [vmem:[%s313 + $0x3e8] sm:$0xff]
        %v555 = vld [vmem:[%s313 + $0x3f0] sm:$0xff]
        %v556 = vld [vmem:[%s313 + $0x3f8] sm:$0xff]
        %v557 = vld [vmem:[%s313 + $0x400] sm:$0xff]
        %v558 = vld [vmem:[%s313 + $0x408] sm:$0xff]
        %v559 = vld [vmem:[%s313 + $0x410] sm:$0xff]
        %v560 = vld [vmem:[%s313 + $0x418] sm:$0xff]
        %v561 = vld [vmem:[%s313 + $0x420] sm:$0xff]
        %v562 = vld [vmem:[%s313 + $0x428] sm:$0xff]
        %v563 = vld [vmem:[%s313 + $0x430] sm:$0xff]
        %v564 = vld [vmem:[%s313 + $0x438] sm:$0xff]
        %v565 = vld [vmem:[%s313 + $0x440] sm:$0xff]
        %v566 = vld [vmem:[%s313 + $0x448] sm:$0xff]
        %v567 = vld [vmem:[%s313 + $0x450] sm:$0xff]
        %v568 = vld [vmem:[%s313 + $0x458] sm:$0xff]
        %v569 = vld [vmem:[%s313 + $0x460] sm:$0xff]
        %v570 = vld [vmem:[%s313 + $0x468] sm:$0xff]
        %v571 = vld [vmem:[%s313 + $0x470] sm:$0xff]
        %v572 = vld [vmem:[%s313 + $0x478] sm:$0xff]
        %v573 = vld [vmem:[%s313 + $0x480] sm:$0xff]
        %v574 = vld [vmem:[%s313 + $0x488] sm:$0xff]
        %v575 = vld [vmem:[%s313 + $0x490] sm:$0xff]
        %v576 = vld [vmem:[%s313 + $0x498] sm:$0xff]
        %v577 = vld [vmem:[%s313 + $0x4a0] sm:$0xff]
        %v578 = vld [vmem:[%s313 + $0x4a8] sm:$0xff]
        %v579 = vld [vmem:[%s313 + $0x4b0] sm:$0xff]
        %v580 = vld [vmem:[%s313 + $0x4b8] sm:$0xff]
        %v581 = vld [vmem:[%s313 + $0x4c0] sm:$0xff]
        %v582 = vld [vmem:[%s313 + $0x4c8] sm:$0xff]
        %v583 = vld [vmem:[%s313 + $0x4d0] sm:$0xff]
        %v584 = vld [vmem:[%s313 + $0x4d8] sm:$0xff]
        %v585 = vld [vmem:[%s313 + $0x4e0] sm:$0xff]
        %v586 = vld [vmem:[%s313 + $0x4e8] sm:$0xff]
        %v587 = vld [vmem:[%s313 + $0x4f0] sm:$0xff]
        %v588 = vld [vmem:[%s313 + $0x4f8] sm:$0xff]
        %v589 = vld [vmem:[%s313 + $0x500] sm:$0xff]
        %v590 = vld [vmem:[%s313 + $0x508] sm:$0xff]
        %v591 = vld [vmem:[%s313 + $0x510] sm:$0xff]
        %v592 = vld [vmem:[%s313 + $0x518] sm:$0xff]
        %v593 = vld [vmem:[%s313 + $0x520] sm:$0xff]
        %v594 = vld [vmem:[%s313 + $0x528] sm:$0xff]
        %v595 = vld [vmem:[%s313 + $0x530] sm:$0xff]
        %v596 = vld [vmem:[%s313 + $0x538] sm:$0xff]
        %v597 = vld [vmem:[%s313 + $0x540] sm:$0xff]
        %v598 = vld [vmem:[%s313 + $0x548] sm:$0xff]
        %v599 = vld [vmem:[%s313 + $0x550] sm:$0xff]
        %v600 = vld [vmem:[%s313 + $0x558] sm:$0xff]
        %v601 = vld [vmem:[%s313 + $0x560] sm:$0xff]
        %v602 = vld [vmem:[%s313 + $0x568] sm:$0xff]
        %v603 = vld [vmem:[%s313 + $0x570] sm:$0xff]
        %v604 = vld [vmem:[%s313 + $0x578] sm:$0xff]
        %v605 = vld [vmem:[%s313 + $0x580] sm:$0xff]
        %v606 = vld [vmem:[%s313 + $0x588] sm:$0xff]
        %v607 = vld [vmem:[%s313 + $0x590] sm:$0xff]
        %v608 = vld [vmem:[%s313 + $0x598] sm:$0xff]
        %v609 = vld [vmem:[%s313 + $0x5a0] sm:$0xff]
        %v610 = vld [vmem:[%s313 + $0x5a8] sm:$0xff]
        %v611 = vld [vmem:[%s313 + $0x5b0] sm:$0xff]
        %v612 = vld [vmem:[%s313 + $0x5b8] sm:$0xff]
        %v613 = vld [vmem:[%s313 + $0x5c0] sm:$0xff]
        %v614 = vld [vmem:[%s313 + $0x5c8] sm:$0xff]
        %v615 = vld [vmem:[%s313 + $0x5d0] sm:$0xff]
        %v616 = vld [vmem:[%s313 + $0x5d8] sm:$0xff]
        %v617 = vld [vmem:[%s313 + $0x5e0] sm:$0xff]
        %v618 = vld [vmem:[%s313 + $0x5e8] sm:$0xff]
        %v619 = vld [vmem:[%s313 + $0x5f0] sm:$0xff]
        %v620 = vld [vmem:[%s313 + $0x5f8] sm:$0xff]
        %v621 = vld [vmem:[%s313 + $0x600] sm:$0xff]
        %v622 = vld [vmem:[%s313 + $0x608] sm:$0xff]
        %v623 = vld [vmem:[%s313 + $0x610] sm:$0xff]
        %v624 = vld [vmem:[%s313 + $0x618] sm:$0xff]
        %v625 = vld [vmem:[%s313 + $0x620] sm:$0xff]
        %v626 = vld [vmem:[%s313 + $0x628] sm:$0xff]
        %v627 = vld [vmem:[%s313 + $0x630] sm:$0xff]
        %v628 = vld [vmem:[%s313 + $0x638] sm:$0xff]
        %v629 = vld [vmem:[%s313 + $0x640] sm:$0xff]
        %v630 = vld [vmem:[%s313 + $0x648] sm:$0xff]
        %v631 = vld [vmem:[%s313 + $0x650] sm:$0xff]
        %v632 = vld [vmem:[%s313 + $0x658] sm:$0xff]
        %v633 = vld [vmem:[%s313 + $0x660] sm:$0xff]
        %v634 = vld [vmem:[%s313 + $0x668] sm:$0xff]
        %v635 = vld [vmem:[%s313 + $0x670] sm:$0xff]
        %v636 = vld [vmem:[%s313 + $0x678] sm:$0xff]
        %v637 = vld [vmem:[%s313 + $0x680] sm:$0xff]
        %v638 = vld [vmem:[%s313 + $0x688] sm:$0xff]
        %v639 = vld [vmem:[%s313 + $0x690] sm:$0xff]
        %v640 = vld [vmem:[%s313 + $0x698] sm:$0xff]
        %v641 = vld [vmem:[%s313 + $0x6a0] sm:$0xff]
        %v642 = vld [vmem:[%s313 + $0x6a8] sm:$0xff]
        %v643 = vld [vmem:[%s313 + $0x6b0] sm:$0xff]
        %v644 = vld [vmem:[%s313 + $0x6b8] sm:$0xff]
        %v645 = vld [vmem:[%s313 + $0x6c0] sm:$0xff]
        %v646 = vld [vmem:[%s313 + $0x6c8] sm:$0xff]
        %v647 = vld [vmem:[%s313 + $0x6d0] sm:$0xff]
        %v648 = vld [vmem:[%s313 + $0x6d8] sm:$0xff]
        %v649 = vld [vmem:[%s313 + $0x6e0] sm:$0xff]
        %v650 = vld [vmem:[%s313 + $0x6e8] sm:$0xff]
        %v651 = vld [vmem:[%s313 + $0x6f0] sm:$0xff]
        %v652 = vld [vmem:[%s313 + $0x6f8] sm:$0xff]
        %v653 = vld [vmem:[%s313 + $0x700] sm:$0xff]
        %v654 = vld [vmem:[%s313 + $0x708] sm:$0xff]
        %v655 = vld [vmem:[%s313 + $0x710] sm:$0xff]
        %v656 = vld [vmem:[%s313 + $0x718] sm:$0xff]
        %v657 = vld [vmem:[%s313 + $0x720] sm:$0xff]
        %v658 = vld [vmem:[%s313 + $0x728] sm:$0xff]
        %v659 = vld [vmem:[%s313 + $0x730] sm:$0xff]
        %v660 = vld [vmem:[%s313 + $0x738] sm:$0xff]
        %v661 = vld [vmem:[%s313 + $0x740] sm:$0xff]
        %v662 = vld [vmem:[%s313 + $0x748] sm:$0xff]
        %v663 = vld [vmem:[%s313 + $0x750] sm:$0xff]
        %v664 = vld [vmem:[%s313 + $0x758] sm:$0xff]
        %v665 = vld [vmem:[%s313 + $0x760] sm:$0xff]
        %v666 = vld [vmem:[%s313 + $0x768] sm:$0xff]
        %v667 = vld [vmem:[%s313 + $0x770] sm:$0xff]
        %v668 = vld [vmem:[%s313 + $0x778] sm:$0xff]
        %v669 = vld [vmem:[%s313 + $0x780] sm:$0xff]
        %v670 = vld [vmem:[%s313 + $0x788] sm:$0xff]
        %v671 = vld [vmem:[%s313 + $0x790] sm:$0xff]
        %v672 = vld [vmem:[%s313 + $0x798] sm:$0xff]
        %v673 = vld [vmem:[%s313 + $0x7a0] sm:$0xff]
        %v674 = vld [vmem:[%s313 + $0x7a8] sm:$0xff]
        %v675 = vld [vmem:[%s313 + $0x7b0] sm:$0xff]
        %v676 = vld [vmem:[%s313 + $0x7b8] sm:$0xff]
        %v677 = vld [vmem:[%s313 + $0x7c0] sm:$0xff]
        %v678 = vld [vmem:[%s313 + $0x7c8] sm:$0xff]
        %v679 = vld [vmem:[%s313 + $0x7d0] sm:$0xff]
        %v680 = vld [vmem:[%s313 + $0x7d8] sm:$0xff]
        %v681 = vld [vmem:[%s313 + $0x7e0] sm:$0xff]
        %v682 = vld [vmem:[%s313 + $0x7e8] sm:$0xff]
        %v683 = vld [vmem:[%s313 + $0x7f0] sm:$0xff]
        %v684 = vld [vmem:[%s313 + $0x7f8] sm:$0xff]
        %v685 = vld [vmem:[%s313 + $0x800] sm:$0xff]
        %v686 = vld [vmem:[%s313 + $0x808] sm:$0xff]
        %v687 = vld [vmem:[%s313 + $0x810] sm:$0xff]
        %v688 = vld [vmem:[%s313 + $0x818] sm:$0xff]
        %v689 = vld [vmem:[%s313 + $0x820] sm:$0xff]
        %v690 = vld [vmem:[%s313 + $0x828] sm:$0xff]
        %v691 = vld [vmem:[%s313 + $0x830] sm:$0xff]
        %v692 = vld [vmem:[%s313 + $0x838] sm:$0xff]
        %v693 = vld [vmem:[%s313 + $0x840] sm:$0xff]
        %v694 = vld [vmem:[%s313 + $0x848] sm:$0xff]
        %v695 = vld [vmem:[%s313 + $0x850] sm:$0xff]
        %v696 = vld [vmem:[%s313 + $0x858] sm:$0xff]
        %v697 = vld [vmem:[%s313 + $0x860] sm:$0xff]
        %v698 = vld [vmem:[%s313 + $0x868] sm:$0xff]
        %v699 = vld [vmem:[%s313 + $0x870] sm:$0xff]
        %v700 = vld [vmem:[%s313 + $0x878] sm:$0xff]
        %v701 = vld [vmem:[%s313 + $0x880] sm:$0xff]
        %v702 = vld [vmem:[%s313 + $0x888] sm:$0xff]
        %v703 = vld [vmem:[%s313 + $0x890] sm:$0xff]
        %v704 = vld [vmem:[%s313 + $0x898] sm:$0xff]
        %v705 = vld [vmem:[%s313 + $0x8a0] sm:$0xff]
        %v706 = vld [vmem:[%s313 + $0x8a8] sm:$0xff]
        %v707 = vld [vmem:[%s313 + $0x8b0] sm:$0xff]
        %v708 = vld [vmem:[%s313 + $0x8b8] sm:$0xff]
        %v709 = vld [vmem:[%s313 + $0x8c0] sm:$0xff]
        %v710 = vld [vmem:[%s313 + $0x8c8] sm:$0xff]
        %v711 = vld [vmem:[%s313 + $0x8d0] sm:$0xff]
        %v712 = vld [vmem:[%s313 + $0x8d8] sm:$0xff]
        %v713 = vld [vmem:[%s313 + $0x8e0] sm:$0xff]
        %v714 = vld [vmem:[%s313 + $0x8e8] sm:$0xff]
        %v715 = vld [vmem:[%s313 + $0x8f0] sm:$0xff]
        %v716 = vld [vmem:[%s313 + $0x8f8] sm:$0xff]
        %v717 = vld [vmem:[%s313 + $0x900] sm:$0xff]
        %v718 = vld [vmem:[%s313 + $0x908] sm:$0xff]
        %v719 = vld [vmem:[%s313 + $0x910] sm:$0xff]
        %v720 = vld [vmem:[%s313 + $0x918] sm:$0xff]
        %v721 = vld [vmem:[%s313 + $0x920] sm:$0xff]
        %v722 = vld [vmem:[%s313 + $0x928] sm:$0xff]
        %v723 = vld [vmem:[%s313 + $0x930] sm:$0xff]
        %v724 = vld [vmem:[%s313 + $0x938] sm:$0xff]
        %v725 = vld [vmem:[%s313 + $0x940] sm:$0xff]
        %v726 = vld [vmem:[%s313 + $0x948] sm:$0xff]
        %v727 = vld [vmem:[%s313 + $0x950] sm:$0xff]
        %v728 = vld [vmem:[%s313 + $0x958] sm:$0xff]
        %v729 = vld [vmem:[%s313 + $0x960] sm:$0xff]
        %v730 = vld [vmem:[%s313 + $0x968] sm:$0xff]
        %v731 = vld [vmem:[%s313 + $0x970] sm:$0xff]
        %v732 = vld [vmem:[%s313 + $0x978] sm:$0xff]
        %v733 = vld [vmem:[%s313 + $0x980] sm:$0xff]
        %v734 = vld [vmem:[%s313 + $0x988] sm:$0xff]
        %v735 = vld [vmem:[%s313 + $0x990] sm:$0xff]
        %v736 = vld [vmem:[%s313 + $0x998] sm:$0xff]
        %v737 = vld [vmem:[%s313 + $0x9a0] sm:$0xff]
        %v738 = vld [vmem:[%s313 + $0x9a8] sm:$0xff]
        %v739 = vld [vmem:[%s313 + $0x9b0] sm:$0xff]
        %v740 = vld [vmem:[%s313 + $0x9b8] sm:$0xff]
        %v741 = vld [vmem:[%s313 + $0x9c0] sm:$0xff]
        %v742 = vld [vmem:[%s313 + $0x9c8] sm:$0xff]
        %v743 = vld [vmem:[%s313 + $0x9d0] sm:$0xff]
        %v744 = vld [vmem:[%s313 + $0x9d8] sm:$0xff]
        %v745 = vld [vmem:[%s313 + $0x9e0] sm:$0xff]
        %v746 = vld [vmem:[%s313 + $0x9e8] sm:$0xff]
        %v747 = vld [vmem:[%s313 + $0x9f0] sm:$0xff]
        %v748 = vld [vmem:[%s313 + $0x9f8] sm:$0xff]
        %v749 = vld [vmem:[%s313 + $0xa00] sm:$0xff]
        %v750 = vld [vmem:[%s313 + $0xa08] sm:$0xff]
        %v751 = vld [vmem:[%s313 + $0xa10] sm:$0xff]
        %v752 = vld [vmem:[%s313 + $0xa18] sm:$0xff]
        %v753 = vld [vmem:[%s313 + $0xa20] sm:$0xff]
        %v754 = vld [vmem:[%s313 + $0xa28] sm:$0xff]
        %v755 = vld [vmem:[%s313 + $0xa30] sm:$0xff]
        %v756 = vld [vmem:[%s313 + $0xa38] sm:$0xff]
        %v757 = vld [vmem:[%s313 + $0xa40] sm:$0xff]
        %v758 = vld [vmem:[%s313 + $0xa48] sm:$0xff]
        %v759 = vld [vmem:[%s313 + $0xa50] sm:$0xff]
        %v760 = vld [vmem:[%s313 + $0xa58] sm:$0xff]
        %v761 = vld [vmem:[%s313 + $0xa60] sm:$0xff]
        %v762 = vld [vmem:[%s313 + $0xa68] sm:$0xff]
        %v763 = vld [vmem:[%s313 + $0xa70] sm:$0xff]
        %v764 = vld [vmem:[%s313 + $0xa78] sm:$0xff]
        %v765 = vld [vmem:[%s313 + $0xa80] sm:$0xff]
        %v766 = vld [vmem:[%s313 + $0xa88] sm:$0xff]
        %v767 = vld [vmem:[%s313 + $0xa90] sm:$0xff]
        %v768 = vld [vmem:[%s313 + $0xa98] sm:$0xff]
        %v769 = vld [vmem:[%s313 + $0xaa0] sm:$0xff]
        %v770 = vld [vmem:[%s313 + $0xaa8] sm:$0xff]
        %v771 = vld [vmem:[%s313 + $0xab0] sm:$0xff]
        %v772 = vld [vmem:[%s313 + $0xab8] sm:$0xff]
        %v773 = vld [vmem:[%s313 + $0xac0] sm:$0xff]
        %v774 = vld [vmem:[%s313 + $0xac8] sm:$0xff]
        %v775 = vld [vmem:[%s313 + $0xad0] sm:$0xff]
        %v776 = vld [vmem:[%s313 + $0xad8] sm:$0xff]
        %v777 = vld [vmem:[%s313 + $0xae0] sm:$0xff]
        %v778 = vld [vmem:[%s313 + $0xae8] sm:$0xff]
        %v779 = vld [vmem:[%s313 + $0xaf0] sm:$0xff]
        %v780 = vld [vmem:[%s313 + $0xaf8] sm:$0xff]
        %v781 = vld [vmem:[%s313 + $0xb00] sm:$0xff]
        %v782 = vld [vmem:[%s313 + $0xb08] sm:$0xff]
        %v783 = vld [vmem:[%s313 + $0xb10] sm:$0xff]
        %v784 = vld [vmem:[%s313 + $0xb18] sm:$0xff]
        %v785 = vld [vmem:[%s313 + $0xb20] sm:$0xff]
        %v786 = vld [vmem:[%s313 + $0xb28] sm:$0xff]
        %v787 = vld [vmem:[%s313 + $0xb30] sm:$0xff]
        %v788 = vld [vmem:[%s313 + $0xb38] sm:$0xff]
        %v789 = vld [vmem:[%s313 + $0xb40] sm:$0xff]
        %v790 = vld [vmem:[%s313 + $0xb48] sm:$0xff]
        %v791 = vld [vmem:[%s313 + $0xb50] sm:$0xff]
        %v792 = vld [vmem:[%s313 + $0xb58] sm:$0xff]
        %v793 = vld [vmem:[%s313 + $0xb60] sm:$0xff]
        %v794 = vld [vmem:[%s313 + $0xb68] sm:$0xff]
        %v795 = vld [vmem:[%s313 + $0xb70] sm:$0xff]
        %v796 = vld [vmem:[%s313 + $0xb78] sm:$0xff]
        %v797 = vld [vmem:[%s313 + $0xb80] sm:$0xff]
        %v798 = vld [vmem:[%s313 + $0xb88] sm:$0xff]
        %v799 = vld [vmem:[%s313 + $0xb90] sm:$0xff]
        %v800 = vld [vmem:[%s313 + $0xb98] sm:$0xff]
        %v801 = vld [vmem:[%s313 + $0xba0] sm:$0xff]
        %v802 = vld [vmem:[%s313 + $0xba8] sm:$0xff]
        %v803 = vld [vmem:[%s313 + $0xbb0] sm:$0xff]
        %v804 = vld [vmem:[%s313 + $0xbb8] sm:$0xff]
        %v805 = vld [vmem:[%s313 + $0xbc0] sm:$0xff]
        %v806 = vld [vmem:[%s313 + $0xbc8] sm:$0xff]
        %v807 = vld [vmem:[%s313 + $0xbd0] sm:$0xff]
        %v808 = vld [vmem:[%s313 + $0xbd8] sm:$0xff]
        %v809 = vld [vmem:[%s313 + $0xbe0] sm:$0xff]
        %v810 = vld [vmem:[%s313 + $0xbe8] sm:$0xff]
        %v811 = vld [vmem:[%s313 + $0xbf0] sm:$0xff]
        %v812 = vld [vmem:[%s313 + $0xbf8] sm:$0xff]
        %v813 = vld [vmem:[%s313 + $0xc00] sm:$0xff]
        %v814 = vld [vmem:[%s313 + $0xc08] sm:$0xff]
        %v815 = vld [vmem:[%s313 + $0xc10] sm:$0xff]
        %v816 = vld [vmem:[%s313 + $0xc18] sm:$0xff]
        %v817 = vld [vmem:[%s313 + $0xc20] sm:$0xff]
        %v818 = vld [vmem:[%s313 + $0xc28] sm:$0xff]
        %v819 = vld [vmem:[%s313 + $0xc30] sm:$0xff]
        %v820 = vld [vmem:[%s313 + $0xc38] sm:$0xff]
        %v821 = vld [vmem:[%s313 + $0xc40] sm:$0xff]
        %v822 = vld [vmem:[%s313 + $0xc48] sm:$0xff]
        %v823 = vld [vmem:[%s313 + $0xc50] sm:$0xff]
        %v824 = vld [vmem:[%s313 + $0xc58] sm:$0xff]
        %v825 = vld [vmem:[%s313 + $0xc60] sm:$0xff]
        %v826 = vld [vmem:[%s313 + $0xc68] sm:$0xff]
        %v827 = vld [vmem:[%s313 + $0xc70] sm:$0xff]
        %v828 = vld [vmem:[%s313 + $0xc78] sm:$0xff]
        %v829 = vld [vmem:[%s313 + $0xc80] sm:$0xff]
        %v830 = vld [vmem:[%s313 + $0xc88] sm:$0xff]
        %v831 = vld [vmem:[%s313 + $0xc90] sm:$0xff]
        %v832 = vld [vmem:[%s313 + $0xc98] sm:$0xff]
        %v833 = vld [vmem:[%s313 + $0xca0] sm:$0xff]
        %v834 = vld [vmem:[%s313 + $0xca8] sm:$0xff]
        %v835 = vld [vmem:[%s313 + $0xcb0] sm:$0xff]
        %v836 = vld [vmem:[%s313 + $0xcb8] sm:$0xff]
        %v837 = vld [vmem:[%s313 + $0xcc0] sm:$0xff]
        %v838 = vld [vmem:[%s313 + $0xcc8] sm:$0xff]
        %v839 = vld [vmem:[%s313 + $0xcd0] sm:$0xff]
        %v840 = vld [vmem:[%s313 + $0xcd8] sm:$0xff]
        %v841 = vld [vmem:[%s313 + $0xce0] sm:$0xff]
        %v842 = vld [vmem:[%s313 + $0xce8] sm:$0xff]
        %v843 = vld [vmem:[%s313 + $0xcf0] sm:$0xff]
        %v844 = vld [vmem:[%s313 + $0xcf8] sm:$0xff]
        %v845 = vld [vmem:[%s313 + $0xd00] sm:$0xff]
        %v846 = vld [vmem:[%s313 + $0xd08] sm:$0xff]
        %v847 = vld [vmem:[%s313 + $0xd10] sm:$0xff]
        %v848 = vld [vmem:[%s313 + $0xd18] sm:$0xff]
        %v849 = vld [vmem:[%s313 + $0xd20] sm:$0xff]
        %v850 = vld [vmem:[%s313 + $0xd28] sm:$0xff]
        %v851 = vld [vmem:[%s313 + $0xd30] sm:$0xff]
        %v852 = vld [vmem:[%s313 + $0xd38] sm:$0xff]
        %v853 = vld [vmem:[%s313 + $0xd40] sm:$0xff]
        %v854 = vld [vmem:[%s313 + $0xd48] sm:$0xff]
        %v855 = vld [vmem:[%s313 + $0xd50] sm:$0xff]
        %v856 = vld [vmem:[%s313 + $0xd58] sm:$0xff]
        %v857 = vld [vmem:[%s313 + $0xd60] sm:$0xff]
        %v858 = vld [vmem:[%s313 + $0xd68] sm:$0xff]
        %v859 = vld [vmem:[%s313 + $0xd70] sm:$0xff]
        %v860 = vld [vmem:[%s313 + $0xd78] sm:$0xff]
        %v861 = vld [vmem:[%s313 + $0xd80] sm:$0xff]
        %v862 = vld [vmem:[%s313 + $0xd88] sm:$0xff]
        %v863 = vld [vmem:[%s313 + $0xd90] sm:$0xff]
        %v864 = vld [vmem:[%s313 + $0xd98] sm:$0xff]
        %v865 = vld [vmem:[%s313 + $0xda0] sm:$0xff]
        %v866 = vld [vmem:[%s313 + $0xda8] sm:$0xff]
        %v867 = vld [vmem:[%s313 + $0xdb0] sm:$0xff]
        %v868 = vld [vmem:[%s313 + $0xdb8] sm:$0xff]
        %v869 = vld [vmem:[%s313 + $0xdc0] sm:$0xff]
        %v870 = vld [vmem:[%s313 + $0xdc8] sm:$0xff]
        %v871 = vld [vmem:[%s313 + $0xdd0] sm:$0xff]
        %v872 = vld [vmem:[%s313 + $0xdd8] sm:$0xff]
        %v873 = vld [vmem:[%s313 + $0xde0] sm:$0xff]
        %v874 = vld [vmem:[%s313 + $0xde8] sm:$0xff]
        %v875 = vld [vmem:[%s313 + $0xdf0] sm:$0xff]
        %v876 = vld [vmem:[%s313 + $0xdf8] sm:$0xff]
        %v877 = vld [vmem:[%s313 + $0xe00] sm:$0xff]
        %v878 = vld [vmem:[%s313 + $0xe08] sm:$0xff]
        %v879 = vld [vmem:[%s313 + $0xe10] sm:$0xff]
        %v880 = vld [vmem:[%s313 + $0xe18] sm:$0xff]
        %v881 = vld [vmem:[%s313 + $0xe20] sm:$0xff]
        %v882 = vld [vmem:[%s313 + $0xe28] sm:$0xff]
        %v883 = vld [vmem:[%s313 + $0xe30] sm:$0xff]
        %v884 = vld [vmem:[%s313 + $0xe38] sm:$0xff]
        %v885 = vld [vmem:[%s313 + $0xe40] sm:$0xff]
        %v886 = vld [vmem:[%s313 + $0xe48] sm:$0xff]
        %v887 = vld [vmem:[%s313 + $0xe50] sm:$0xff]
        %v888 = vld [vmem:[%s313 + $0xe58] sm:$0xff]
        %v889 = vld [vmem:[%s313 + $0xe60] sm:$0xff]
        %v890 = vld [vmem:[%s313 + $0xe68] sm:$0xff]
        %v891 = vld [vmem:[%s313 + $0xe70] sm:$0xff]
        %v892 = vld [vmem:[%s313 + $0xe78] sm:$0xff]
        %v893 = vld [vmem:[%s313 + $0xe80] sm:$0xff]
        %v894 = vld [vmem:[%s313 + $0xe88] sm:$0xff]
        %v895 = vld [vmem:[%s313 + $0xe90] sm:$0xff]
        %v896 = vld [vmem:[%s313 + $0xe98] sm:$0xff]
        %v897 = vld [vmem:[%s313 + $0xea0] sm:$0xff]
        %v898 = vld [vmem:[%s313 + $0xea8] sm:$0xff]
        %v899 = vld [vmem:[%s313 + $0xeb0] sm:$0xff]
        %v900 = vld [vmem:[%s313 + $0xeb8] sm:$0xff]
        %v901 = vld [vmem:[%s313 + $0xec0] sm:$0xff]
        %v902 = vld [vmem:[%s313 + $0xec8] sm:$0xff]
        %v903 = vld [vmem:[%s313 + $0xed0] sm:$0xff]
        %v904 = vld [vmem:[%s313 + $0xed8] sm:$0xff]
        %v905 = vld [vmem:[%s313 + $0xee0] sm:$0xff]
        %v906 = vld [vmem:[%s313 + $0xee8] sm:$0xff]
        %v907 = vld [vmem:[%s313 + $0xef0] sm:$0xff]
        %v908 = vld [vmem:[%s313 + $0xef8] sm:$0xff]
        %v909 = vld [vmem:[%s313 + $0xf00] sm:$0xff]
        %v910 = vld [vmem:[%s313 + $0xf08] sm:$0xff]
        %v911 = vld [vmem:[%s313 + $0xf10] sm:$0xff]
        %v912 = vld [vmem:[%s313 + $0xf18] sm:$0xff]
        %v913 = vld [vmem:[%s313 + $0xf20] sm:$0xff]
        %v914 = vld [vmem:[%s313 + $0xf28] sm:$0xff]
        %v915 = vld [vmem:[%s313 + $0xf30] sm:$0xff]
        %v916 = vld [vmem:[%s313 + $0xf38] sm:$0xff]
        %v917 = vld [vmem:[%s313 + $0xf40] sm:$0xff]
        %v918 = vld [vmem:[%s313 + $0xf48] sm:$0xff]
        %v919 = vld [vmem:[%s313 + $0xf50] sm:$0xff]
        %v920 = vld [vmem:[%s313 + $0xf58] sm:$0xff]
        %v921 = vld [vmem:[%s313 + $0xf60] sm:$0xff]
        %v922 = vld [vmem:[%s313 + $0xf68] sm:$0xff]
        %v923 = vld [vmem:[%s313 + $0xf70] sm:$0xff]
        %v924 = vld [vmem:[%s313 + $0xf78] sm:$0xff]
        %v925 = vld [vmem:[%s313 + $0xf80] sm:$0xff]
        %v926 = vld [vmem:[%s313 + $0xf88] sm:$0xff]
        %v927 = vld [vmem:[%s313 + $0xf90] sm:$0xff]
        %v928 = vld [vmem:[%s313 + $0xf98] sm:$0xff]
        %v929 = vld [vmem:[%s313 + $0xfa0] sm:$0xff]
        %v930 = vld [vmem:[%s313 + $0xfa8] sm:$0xff]
        %v931 = vld [vmem:[%s313 + $0xfb0] sm:$0xff]
        %v932 = vld [vmem:[%s313 + $0xfb8] sm:$0xff]
        %v933 = vld [vmem:[%s313 + $0xfc0] sm:$0xff]
        %v934 = vld [vmem:[%s313 + $0xfc8] sm:$0xff]
        %v935 = vld [vmem:[%s313 + $0xfd0] sm:$0xff]
        %v936 = vld [vmem:[%s313 + $0xfd8] sm:$0xff]
        %v937 = vld [vmem:[%s313 + $0xfe0] sm:$0xff]
        %v938 = vld [vmem:[%s313 + $0xfe8] sm:$0xff]
        %v939 = vld [vmem:[%s313 + $0xff0] sm:$0xff]
        %v940 = vld [vmem:[%s313 + $0xff8] sm:$0xff]
        %v941 = vld [vmem:[%s313 + $0x1000] sm:$0xff]
        %v942 = vld [vmem:[%s313 + $0x1008] sm:$0xff]
        %v943 = vld [vmem:[%s313 + $0x1010] sm:$0xff]
        %v944 = vld [vmem:[%s313 + $0x1018] sm:$0xff]
        %v945 = vld [vmem:[%s313 + $0x1020] sm:$0xff]
        %v946 = vld [vmem:[%s313 + $0x1028] sm:$0xff]
        %v947 = vld [vmem:[%s313 + $0x1030] sm:$0xff]
        %v948 = vld [vmem:[%s313 + $0x1038] sm:$0xff]
        %v949 = vld [vmem:[%s313 + $0x1040] sm:$0xff]
        %v950 = vld [vmem:[%s313 + $0x1048] sm:$0xff]
        %v951 = vld [vmem:[%s313 + $0x1050] sm:$0xff]
        %v952 = vld [vmem:[%s313 + $0x1058] sm:$0xff]
        %v953 = vld [vmem:[%s313 + $0x1060] sm:$0xff]
        %v954 = vld [vmem:[%s313 + $0x1068] sm:$0xff]
        %v955 = vld [vmem:[%s313 + $0x1070] sm:$0xff]
        %v956 = vld [vmem:[%s313 + $0x1078] sm:$0xff]
        %v957 = vld [vmem:[%s313 + $0x1080] sm:$0xff]
        %v958 = vld [vmem:[%s313 + $0x1088] sm:$0xff]
        %v959 = vld [vmem:[%s313 + $0x1090] sm:$0xff]
        %v960 = vld [vmem:[%s313 + $0x1098] sm:$0xff]
        %v961 = vld [vmem:[%s313 + $0x10a0] sm:$0xff]
        %v962 = vld [vmem:[%s313 + $0x10a8] sm:$0xff]
        %v963 = vld [vmem:[%s313 + $0x10b0] sm:$0xff]
        %v964 = vld [vmem:[%s313 + $0x10b8] sm:$0xff]
        %v965 = vld [vmem:[%s313 + $0x10c0] sm:$0xff]
        %v966 = vld [vmem:[%s313 + $0x10c8] sm:$0xff]
        %v967 = vld [vmem:[%s313 + $0x10d0] sm:$0xff]
        %v968 = vld [vmem:[%s313 + $0x10d8] sm:$0xff]
        %v969 = vld [vmem:[%s313 + $0x10e0] sm:$0xff]
        %v970 = vld [vmem:[%s313 + $0x10e8] sm:$0xff]
        %v971 = vld [vmem:[%s313 + $0x10f0] sm:$0xff]
        %v972 = vld [vmem:[%s313 + $0x10f8] sm:$0xff]
        %v973 = vld [vmem:[%s313 + $0x1100] sm:$0xff]
        %v974 = vld [vmem:[%s313 + $0x1108] sm:$0xff]
        %v975 = vld [vmem:[%s313 + $0x1110] sm:$0xff]
        %v976 = vld [vmem:[%s313 + $0x1118] sm:$0xff]
        %v977 = vld [vmem:[%s313 + $0x1120] sm:$0xff]
        %v978 = vld [vmem:[%s313 + $0x1128] sm:$0xff]
        %v979 = vld [vmem:[%s313 + $0x1130] sm:$0xff]
        %v980 = vld [vmem:[%s313 + $0x1138] sm:$0xff]
        %v981 = vld [vmem:[%s313 + $0x1140] sm:$0xff]
        %v982 = vld [vmem:[%s313 + $0x1148] sm:$0xff]
        %v983 = vld [vmem:[%s313 + $0x1150] sm:$0xff]
        %v984 = vld [vmem:[%s313 + $0x1158] sm:$0xff]
        %v985 = vld [vmem:[%s313 + $0x1160] sm:$0xff]
        %v986 = vld [vmem:[%s313 + $0x1168] sm:$0xff]
        %v987 = vld [vmem:[%s313 + $0x1170] sm:$0xff]
        %v988 = vld [vmem:[%s313 + $0x1178] sm:$0xff]
        %v989 = vld [vmem:[%s313 + $0x1180] sm:$0xff]
        %v990 = vld [vmem:[%s313 + $0x1188] sm:$0xff]
        %v991 = vld [vmem:[%s313 + $0x1190] sm:$0xff]
        %v992 = vld [vmem:[%s313 + $0x1198] sm:$0xff]
        %v993 = vld [vmem:[%s313 + $0x11a0] sm:$0xff]
        %v994 = vld [vmem:[%s313 + $0x11a8] sm:$0xff]
        %v995 = vld [vmem:[%s313 + $0x11b0] sm:$0xff]
        %v996 = vld [vmem:[%s313 + $0x11b8] sm:$0xff]
        %v997 = vld [vmem:[%s313 + $0x11c0] sm:$0xff]
        %v998 = vld [vmem:[%s313 + $0x11c8] sm:$0xff]
        %v999 = vld [vmem:[%s313 + $0x11d0] sm:$0xff]
        %v1000 = vld [vmem:[%s313 + $0x11d8] sm:$0xff]
        %v1001 = vld [vmem:[%s313 + $0x11e0] sm:$0xff]
        %v1002 = vld [vmem:[%s313 + $0x11e8] sm:$0xff]
        %v1003 = vld [vmem:[%s313 + $0x11f0] sm:$0xff]
        %v1004 = vld [vmem:[%s313 + $0x11f8] sm:$0xff]
        %v1005 = vld [vmem:[%s313 + $0x1200] sm:$0xff]
        %v1006 = vld [vmem:[%s313 + $0x1208] sm:$0xff]
        %v1007 = vld [vmem:[%s313 + $0x1210] sm:$0xff]
        %v1008 = vld [vmem:[%s313 + $0x1218] sm:$0xff]
        %v1009 = vld [vmem:[%s313 + $0x1220] sm:$0xff]
        %v1010 = vld [vmem:[%s313 + $0x1228] sm:$0xff]
        %v1011 = vld [vmem:[%s313 + $0x1230] sm:$0xff]
        %v1012 = vld [vmem:[%s313 + $0x1238] sm:$0xff]
        %v1013 = vld [vmem:[%s313 + $0x1240] sm:$0xff]
        %v1014 = vld [vmem:[%s313 + $0x1248] sm:$0xff]
        %v1015 = vld [vmem:[%s313 + $0x1250] sm:$0xff]
        %v1016 = vld [vmem:[%s313 + $0x1258] sm:$0xff]
        %v1017 = vld [vmem:[%s313 + $0x1260] sm:$0xff]
        %v1018 = vld [vmem:[%s313 + $0x1268] sm:$0xff]
        %v1019 = vld [vmem:[%s313 + $0x1270] sm:$0xff]
        %v1020 = vld [vmem:[%s313 + $0x1278] sm:$0xff]
        %v1021 = vld [vmem:[%s313 + $0x1280] sm:$0xff]
        %v1022 = vld [vmem:[%s313 + $0x1288] sm:$0xff]
        %v1023 = vld [vmem:[%s313 + $0x1290] sm:$0xff]
        %v1024 = vld [vmem:[%s313 + $0x1298] sm:$0xff]
        %v1025 = vld [vmem:[%s313 + $0x12a0] sm:$0xff]
        %v1026 = vld [vmem:[%s313 + $0x12a8] sm:$0xff]
        %v1027 = vld [vmem:[%s313 + $0x12b0] sm:$0xff]
        %v1028 = vld [vmem:[%s313 + $0x12b8] sm:$0xff]
        %v1029 = vld [vmem:[%s313 + $0x12c0] sm:$0xff]
        %v1030 = vld [vmem:[%s313 + $0x12c8] sm:$0xff]
        %v1031 = vld [vmem:[%s313 + $0x12d0] sm:$0xff]
        %v1032 = vld [vmem:[%s313 + $0x12d8] sm:$0xff]
        %v1033 = vld [vmem:[%s313 + $0x12e0] sm:$0xff]
        %v1034 = vld [vmem:[%s313 + $0x12e8] sm:$0xff]
        %v1035 = vld [vmem:[%s313 + $0x12f0] sm:$0xff]
        %v1036 = vld [vmem:[%s313 + $0x12f8] sm:$0xff]
        %v1037 = vld [vmem:[%s313 + $0x1300] sm:$0xff]
        %v1038 = vld [vmem:[%s313 + $0x1308] sm:$0xff]
        %v1039 = vld [vmem:[%s313 + $0x1310] sm:$0xff]
        %v1040 = vld [vmem:[%s313 + $0x1318] sm:$0xff]
        %v1041 = vld [vmem:[%s313 + $0x1320] sm:$0xff]
        %v1042 = vld [vmem:[%s313 + $0x1328] sm:$0xff]
        %v1043 = vld [vmem:[%s313 + $0x1330] sm:$0xff]
        %v1044 = vld [vmem:[%s313 + $0x1338] sm:$0xff]
        %v1045 = vld [vmem:[%s313 + $0x1340] sm:$0xff]
        %v1046 = vld [vmem:[%s313 + $0x1348] sm:$0xff]
        %v1047 = vld [vmem:[%s313 + $0x1350] sm:$0xff]
        %v1048 = vld [vmem:[%s313 + $0x1358] sm:$0xff]
        %v1049 = vld [vmem:[%s313 + $0x1360] sm:$0xff]
        %v1050 = vld [vmem:[%s313 + $0x1368] sm:$0xff]
        %v1051 = vld [vmem:[%s313 + $0x1370] sm:$0xff]
        %v1052 = vld [vmem:[%s313 + $0x1378] sm:$0xff]
        %v1053 = vld [vmem:[%s313 + $0x1380] sm:$0xff]
        %v1054 = vld [vmem:[%s313 + $0x1388] sm:$0xff]
        %v1055 = vld [vmem:[%s313 + $0x1390] sm:$0xff]
        %v1056 = vld [vmem:[%s313 + $0x1398] sm:$0xff]
        %v1057 = vld [vmem:[%s313 + $0x13a0] sm:$0xff]
        %v1058 = vld [vmem:[%s313 + $0x13a8] sm:$0xff]
        %v1059 = vld [vmem:[%s313 + $0x13b0] sm:$0xff]
        %v1060 = vld [vmem:[%s313 + $0x13b8] sm:$0xff]
        %v1061 = vld [vmem:[%s313 + $0x13c0] sm:$0xff]
        %v1062 = vld [vmem:[%s313 + $0x13c8] sm:$0xff]
        %v1063 = vld [vmem:[%s313 + $0x13d0] sm:$0xff]
        %v1064 = vld [vmem:[%s313 + $0x13d8] sm:$0xff]
        %v1065 = vld [vmem:[%s313 + $0x13e0] sm:$0xff]
        %v1066 = vld [vmem:[%s313 + $0x13e8] sm:$0xff]
        %v1067 = vld [vmem:[%s313 + $0x13f0] sm:$0xff]
        %v1068 = vld [vmem:[%s313 + $0x13f8] sm:$0xff]
        %v1069 = vld [vmem:[%s313 + $0x1400] sm:$0xff]
        %v1070 = vld [vmem:[%s313 + $0x1408] sm:$0xff]
        %v1071 = vld [vmem:[%s313 + $0x1410] sm:$0xff]
        %v1072 = vld [vmem:[%s313 + $0x1418] sm:$0xff]
        %v1073 = vld [vmem:[%s313 + $0x1420] sm:$0xff]
        %v1074 = vld [vmem:[%s313 + $0x1428] sm:$0xff]
        %v1075 = vld [vmem:[%s313 + $0x1430] sm:$0xff]
        %v1076 = vld [vmem:[%s313 + $0x1438] sm:$0xff]
        %v1077 = vld [vmem:[%s313 + $0x1440] sm:$0xff]
        %v1078 = vld [vmem:[%s313 + $0x1448] sm:$0xff]
        %v1079 = vld [vmem:[%s313 + $0x1450] sm:$0xff]
        %v1080 = vld [vmem:[%s313 + $0x1458] sm:$0xff]
        %v1081 = vld [vmem:[%s313 + $0x1460] sm:$0xff]
        %v1082 = vld [vmem:[%s313 + $0x1468] sm:$0xff]
        %v1083 = vld [vmem:[%s313 + $0x1470] sm:$0xff]
        %v1084 = vld [vmem:[%s313 + $0x1478] sm:$0xff]
        %v1085 = vld [vmem:[%s313 + $0x1480] sm:$0xff]
        %v1086 = vld [vmem:[%s313 + $0x1488] sm:$0xff]
        %v1087 = vld [vmem:[%s313 + $0x1490] sm:$0xff]
        %v1088 = vld [vmem:[%s313 + $0x1498] sm:$0xff]
        %v1089 = vld [vmem:[%s313 + $0x14a0] sm:$0xff]
        %v1090 = vld [vmem:[%s313 + $0x14a8] sm:$0xff]
        %v1091 = vld [vmem:[%s313 + $0x14b0] sm:$0xff]
        %v1092 = vld [vmem:[%s313 + $0x14b8] sm:$0xff]
        %v1093 = vld [vmem:[%s313 + $0x14c0] sm:$0xff]
        %v1094 = vld [vmem:[%s313 + $0x14c8] sm:$0xff]
        %v1095 = vld [vmem:[%s313 + $0x14d0] sm:$0xff]
        %v1096 = vld [vmem:[%s313 + $0x14d8] sm:$0xff]
        %v1097 = vld [vmem:[%s313 + $0x14e0] sm:$0xff]
        %v1098 = vld [vmem:[%s313 + $0x14e8] sm:$0xff]
        %v1099 = vld [vmem:[%s313 + $0x14f0] sm:$0xff]
        %v1100 = vld [vmem:[%s313 + $0x14f8] sm:$0xff]
        %v1101 = vld [vmem:[%s313 + $0x1500] sm:$0xff]
        %v1102 = vld [vmem:[%s313 + $0x1508] sm:$0xff]
        %v1103 = vld [vmem:[%s313 + $0x1510] sm:$0xff]
        %v1104 = vld [vmem:[%s313 + $0x1518] sm:$0xff]
        %v1105 = vld [vmem:[%s313 + $0x1520] sm:$0xff]
        %v1106 = vld [vmem:[%s313 + $0x1528] sm:$0xff]
        %v1107 = vld [vmem:[%s313 + $0x1530] sm:$0xff]
        %v1108 = vld [vmem:[%s313 + $0x1538] sm:$0xff]
        %v1109 = vld [vmem:[%s313 + $0x1540] sm:$0xff]
        %v1110 = vld [vmem:[%s313 + $0x1548] sm:$0xff]
        %v1111 = vld [vmem:[%s313 + $0x1550] sm:$0xff]
        %v1112 = vld [vmem:[%s313 + $0x1558] sm:$0xff]
        %v1113 = vld [vmem:[%s313 + $0x1560] sm:$0xff]
        %v1114 = vld [vmem:[%s313 + $0x1568] sm:$0xff]
        %v1115 = vld [vmem:[%s313 + $0x1570] sm:$0xff]
        %v1116 = vld [vmem:[%s313 + $0x1578] sm:$0xff]
        %v1117 = vld [vmem:[%s313 + $0x1580] sm:$0xff]
        %v1118 = vld [vmem:[%s313 + $0x1588] sm:$0xff]
        %v1119 = vld [vmem:[%s313 + $0x1590] sm:$0xff]
        %v1120 = vld [vmem:[%s313 + $0x1598] sm:$0xff]
        %v1121 = vld [vmem:[%s313 + $0x15a0] sm:$0xff]
        %v1122 = vld [vmem:[%s313 + $0x15a8] sm:$0xff]
        %v1123 = vld [vmem:[%s313 + $0x15b0] sm:$0xff]
        %v1124 = vld [vmem:[%s313 + $0x15b8] sm:$0xff]
        %v1125 = vld [vmem:[%s313 + $0x15c0] sm:$0xff]
        %v1126 = vld [vmem:[%s313 + $0x15c8] sm:$0xff]
        %v1127 = vld [vmem:[%s313 + $0x15d0] sm:$0xff]
        %v1128 = vld [vmem:[%s313 + $0x15d8] sm:$0xff]
        %v1129 = vld [vmem:[%s313 + $0x15e0] sm:$0xff]
        %v1130 = vld [vmem:[%s313 + $0x15e8] sm:$0xff]
        %v1131 = vld [vmem:[%s313 + $0x15f0] sm:$0xff]
        %v1132 = vld [vmem:[%s313 + $0x15f8] sm:$0xff]
        %v1133 = vld [vmem:[%s313 + $0x1600] sm:$0xff]
        %v1134 = vld [vmem:[%s313 + $0x1608] sm:$0xff]
        %v1135 = vld [vmem:[%s313 + $0x1610] sm:$0xff]
        %v1136 = vld [vmem:[%s313 + $0x1618] sm:$0xff]
        %v1137 = vld [vmem:[%s313 + $0x1620] sm:$0xff]
        %v1138 = vld [vmem:[%s313 + $0x1628] sm:$0xff]
        %v1139 = vld [vmem:[%s313 + $0x1630] sm:$0xff]
        %v1140 = vld [vmem:[%s313 + $0x1638] sm:$0xff]
        %v1141 = vld [vmem:[%s313 + $0x1640] sm:$0xff]
        %v1142 = vld [vmem:[%s313 + $0x1648] sm:$0xff]
        %v1143 = vld [vmem:[%s313 + $0x1650] sm:$0xff]
        %v1144 = vld [vmem:[%s313 + $0x1658] sm:$0xff]
        %v1145 = vld [vmem:[%s313 + $0x1660] sm:$0xff]
        %v1146 = vld [vmem:[%s313 + $0x1668] sm:$0xff]
        %v1147 = vld [vmem:[%s313 + $0x1670] sm:$0xff]
        %v1148 = vld [vmem:[%s313 + $0x1678] sm:$0xff]
        %v1149 = vld [vmem:[%s313 + $0x1680] sm:$0xff]
        %v1150 = vld [vmem:[%s313 + $0x1688] sm:$0xff]
        %v1151 = vld [vmem:[%s313 + $0x1690] sm:$0xff]
        %v1152 = vld [vmem:[%s313 + $0x1698] sm:$0xff]
        %v1153 = vld [vmem:[%s313 + $0x16a0] sm:$0xff]
        %v1154 = vld [vmem:[%s313 + $0x16a8] sm:$0xff]
        %v1155 = vld [vmem:[%s313 + $0x16b0] sm:$0xff]
        %v1156 = vld [vmem:[%s313 + $0x16b8] sm:$0xff]
        %v1157 = vld [vmem:[%s313 + $0x16c0] sm:$0xff]
        %v1158 = vld [vmem:[%s313 + $0x16c8] sm:$0xff]
        %v1159 = vld [vmem:[%s313 + $0x16d0] sm:$0xff]
        %v1160 = vld [vmem:[%s313 + $0x16d8] sm:$0xff]
        %v1161 = vld [vmem:[%s313 + $0x16e0] sm:$0xff]
        %v1162 = vld [vmem:[%s313 + $0x16e8] sm:$0xff]
        %v1163 = vld [vmem:[%s313 + $0x16f0] sm:$0xff]
        %v1164 = vld [vmem:[%s313 + $0x16f8] sm:$0xff]
        %v1165 = vld [vmem:[%s313 + $0x1700] sm:$0xff]
        %v1166 = vld [vmem:[%s313 + $0x1708] sm:$0xff]
        %v1167 = vld [vmem:[%s313 + $0x1710] sm:$0xff]
        %v1168 = vld [vmem:[%s313 + $0x1718] sm:$0xff]
        %v1169 = vld [vmem:[%s313 + $0x1720] sm:$0xff]
        %v1170 = vld [vmem:[%s313 + $0x1728] sm:$0xff]
        %v1171 = vld [vmem:[%s313 + $0x1730] sm:$0xff]
        %v1172 = vld [vmem:[%s313 + $0x1738] sm:$0xff]
        %v1173 = vld [vmem:[%s313 + $0x1740] sm:$0xff]
        %v1174 = vld [vmem:[%s313 + $0x1748] sm:$0xff]
        %v1175 = vld [vmem:[%s313 + $0x1750] sm:$0xff]
        %v1176 = vld [vmem:[%s313 + $0x1758] sm:$0xff]
        %v1177 = vld [vmem:[%s313 + $0x1760] sm:$0xff]
        %v1178 = vld [vmem:[%s313 + $0x1768] sm:$0xff]
        %v1179 = vld [vmem:[%s313 + $0x1770] sm:$0xff]
        %v1180 = vld [vmem:[%s313 + $0x1778] sm:$0xff]
        %v1181 = vld [vmem:[%s313 + $0x1780] sm:$0xff]
        %v1182 = vld [vmem:[%s313 + $0x1788] sm:$0xff]
        %v1183 = vld [vmem:[%s313 + $0x1790] sm:$0xff]
        %v1184 = vld [vmem:[%s313 + $0x1798] sm:$0xff]
        %v1185 = vld [vmem:[%s313 + $0x17a0] sm:$0xff]
        %v1186 = vld [vmem:[%s313 + $0x17a8] sm:$0xff]
        %v1187 = vld [vmem:[%s313 + $0x17b0] sm:$0xff]
        %v1188 = vld [vmem:[%s313 + $0x17b8] sm:$0xff]
        %v1189 = vld [vmem:[%s313 + $0x17c0] sm:$0xff]
        %v1190 = vld [vmem:[%s313 + $0x17c8] sm:$0xff]
        %v1191 = vld [vmem:[%s313 + $0x17d0] sm:$0xff]
        %v1192 = vld [vmem:[%s313 + $0x17d8] sm:$0xff]
        %v1193 = vld [vmem:[%s313 + $0x17e0] sm:$0xff]
        %v1194 = vld [vmem:[%s313 + $0x17e8] sm:$0xff]
        %v1195 = vld [vmem:[%s313 + $0x17f0] sm:$0xff]
        %v1196 = vld [vmem:[%s313 + $0x17f8] sm:$0xff]
        %v1197 = vld [vmem:[%s313 + $0x1800] sm:$0xff]
        %v1198 = vld [vmem:[%s313 + $0x1808] sm:$0xff]
        %v1199 = vld [vmem:[%s313 + $0x1810] sm:$0xff]
        %v1200 = vld [vmem:[%s313 + $0x1818] sm:$0xff]
        %v1201 = vld [vmem:[%s313 + $0x1820] sm:$0xff]
        %v1202 = vld [vmem:[%s313 + $0x1828] sm:$0xff]
        %v1203 = vld [vmem:[%s313 + $0x1830] sm:$0xff]
        %v1204 = vld [vmem:[%s313 + $0x1838] sm:$0xff]
        %v1205 = vld [vmem:[%s313 + $0x1840] sm:$0xff]
        %v1206 = vld [vmem:[%s313 + $0x1848] sm:$0xff]
        %v1207 = vld [vmem:[%s313 + $0x1850] sm:$0xff]
        %v1208 = vld [vmem:[%s313 + $0x1858] sm:$0xff]
        %v1209 = vld [vmem:[%s313 + $0x1860] sm:$0xff]
        %v1210 = vld [vmem:[%s313 + $0x1868] sm:$0xff]
        %v1211 = vld [vmem:[%s313 + $0x1870] sm:$0xff]
        %v1212 = vld [vmem:[%s313 + $0x1878] sm:$0xff]
        %v1213 = vld [vmem:[%s313 + $0x1880] sm:$0xff]
        %v1214 = vld [vmem:[%s313 + $0x1888] sm:$0xff]
        %v1215 = vld [vmem:[%s313 + $0x1890] sm:$0xff]
        %v1216 = vld [vmem:[%s313 + $0x1898] sm:$0xff]
        %v1217 = vld [vmem:[%s313 + $0x18a0] sm:$0xff]
        %v1218 = vld [vmem:[%s313 + $0x18a8] sm:$0xff]
        %v1219 = vld [vmem:[%s313 + $0x18b0] sm:$0xff]
        %v1220 = vld [vmem:[%s313 + $0x18b8] sm:$0xff]
        %v1221 = vld [vmem:[%s313 + $0x18c0] sm:$0xff]
        %v1222 = vld [vmem:[%s313 + $0x18c8] sm:$0xff]
        %v1223 = vld [vmem:[%s313 + $0x18d0] sm:$0xff]
        %v1224 = vld [vmem:[%s313 + $0x18d8] sm:$0xff]
        %v1225 = vld [vmem:[%s313 + $0x18e0] sm:$0xff]
        %v1226 = vld [vmem:[%s313 + $0x18e8] sm:$0xff]
        %v1227 = vld [vmem:[%s313 + $0x18f0] sm:$0xff]
        %v1228 = vld [vmem:[%s313 + $0x18f8] sm:$0xff]
        %v1255 = vunpack.c.l.b16 %v403
        %v1256 = vunpack.c.h.b16 %v403
        %v1257 = vunpack.c.l.b16 %v404
        %v1258 = vunpack.c.h.b16 %v404
        %v1259 = vunpack.c.l.b16 %v405
        %v1260 = vunpack.c.h.b16 %v405
        %v1261 = vunpack.c.l.b16 %v406
        %v1262 = vunpack.c.h.b16 %v406
        %v1263 = vunpack.c.l.b16 %v407
        %v1264 = vunpack.c.h.b16 %v407
        %v1265 = vunpack.c.l.b16 %v408
        %v1266 = vunpack.c.h.b16 %v408
        %v1267 = vunpack.c.l.b16 %v409
        %v1268 = vunpack.c.h.b16 %v409
        %v1269 = vunpack.c.l.b16 %v410
        %v1270 = vunpack.c.h.b16 %v410
        %v1271 = vunpack.c.l.b16 %v411
        %v1272 = vunpack.c.h.b16 %v411
        %v1273 = vunpack.c.l.b16 %v412
        %v1274 = vunpack.c.h.b16 %v412
        %v1275 = vunpack.c.l.b16 %v413
        %v1276 = vunpack.c.h.b16 %v413
        %v1277 = vunpack.c.l.b16 %v414
        %v1278 = vunpack.c.h.b16 %v414
        %v1279 = vunpack.c.l.b16 %v415
        %v1280 = vunpack.c.l.b16 %v416
        %v1281 = vunpack.c.h.b16 %v416
        %v1282 = vunpack.c.l.b16 %v417
        %v1283 = vunpack.c.h.b16 %v417
        %v1284 = vunpack.c.l.b16 %v418
        %v1285 = vunpack.c.h.b16 %v418
        %v1286 = vunpack.c.l.b16 %v419
        %v1287 = vunpack.c.h.b16 %v419
        %v1288 = vunpack.c.l.b16 %v420
        %v1289 = vunpack.c.h.b16 %v420
        %v1290 = vunpack.c.l.b16 %v421
        %v1291 = vunpack.c.h.b16 %v421
        %v1292 = vunpack.c.l.b16 %v422
        %v1293 = vunpack.c.h.b16 %v422
        %v1294 = vunpack.c.l.b16 %v423
        %v1295 = vunpack.c.h.b16 %v423
        %v1296 = vunpack.c.l.b16 %v424
        %v1297 = vunpack.c.h.b16 %v424
        %v1298 = vunpack.c.l.b16 %v425
        %v1299 = vunpack.c.h.b16 %v425
        %v1300 = vunpack.c.l.b16 %v426
        %v1301 = vunpack.c.h.b16 %v426
        %v1302 = vunpack.c.l.b16 %v427
        %v1303 = vunpack.c.h.b16 %v427
        %v1304 = vunpack.c.l.b16 %v428
        %v1305 = vpack.c.b16 %v1280, %v1255
        %v1306 = vpack.c.b16 %v1281, %v1256
        %v1307 = vpack.c.b16 %v1282, %v1257
        %v1308 = vpack.c.b16 %v1283, %v1258
        %v1309 = vpack.c.b16 %v1284, %v1259
        %v1310 = vpack.c.b16 %v1285, %v1260
        %v1311 = vpack.c.b16 %v1286, %v1261
        %v1312 = vpack.c.b16 %v1287, %v1262
        %v1313 = vpack.c.b16 %v1288, %v1263
        %v1314 = vpack.c.b16 %v1289, %v1264
        %v1315 = vpack.c.b16 %v1290, %v1265
        %v1316 = vpack.c.b16 %v1291, %v1266
        %v1317 = vpack.c.b16 %v1292, %v1267
        %v1318 = vpack.c.b16 %v1293, %v1268
        %v1319 = vpack.c.b16 %v1294, %v1269
        %v1320 = vpack.c.b16 %v1295, %v1270
        %v1321 = vpack.c.b16 %v1296, %v1271
        %v1322 = vpack.c.b16 %v1297, %v1272
        %v1323 = vpack.c.b16 %v1298, %v1273
        %v1324 = vpack.c.b16 %v1299, %v1274
        %v1325 = vpack.c.b16 %v1300, %v1275
        %v1326 = vpack.c.b16 %v1301, %v1276
        %v1327 = vpack.c.b16 %v1302, %v1277
        %v1328 = vpack.c.b16 %v1303, %v1278
        %v1329 = vpack.c.b16 %v1304, %v1279
        %v2155 = vunpack.c.l.b16 %v429
        %v2156 = vunpack.c.h.b16 %v429
        %v2157 = vunpack.c.l.b16 %v430
        %v2158 = vunpack.c.h.b16 %v430
        %v2159 = vunpack.c.l.b16 %v431
        %v2160 = vunpack.c.h.b16 %v431
        %v2161 = vunpack.c.l.b16 %v432
        %v2162 = vunpack.c.h.b16 %v432
        %v2163 = vunpack.c.l.b16 %v433
        %v2164 = vunpack.c.h.b16 %v433
        %v2165 = vunpack.c.l.b16 %v434
        %v2166 = vunpack.c.h.b16 %v434
        %v2167 = vunpack.c.l.b16 %v435
        %v2168 = vunpack.c.h.b16 %v435
        %v2169 = vunpack.c.l.b16 %v436
        %v2170 = vunpack.c.h.b16 %v436
        %v2171 = vunpack.c.l.b16 %v437
        %v2172 = vunpack.c.h.b16 %v437
        %v2173 = vunpack.c.l.b16 %v438
        %v2174 = vunpack.c.h.b16 %v438
        %v2175 = vunpack.c.l.b16 %v439
        %v2176 = vunpack.c.h.b16 %v439
        %v2177 = vunpack.c.l.b16 %v440
        %v2178 = vunpack.c.h.b16 %v440
        %v2179 = vunpack.c.l.b16 %v441
        %v2180 = vunpack.c.h.b16 %v441
        %v2181 = vunpack.c.l.b16 %v442
        %v2182 = vunpack.c.h.b16 %v442
        %v2183 = vunpack.c.l.b16 %v443
        %v2184 = vunpack.c.h.b16 %v443
        %v2185 = vunpack.c.l.b16 %v444
        %v2186 = vunpack.c.h.b16 %v444
        %v2187 = vunpack.c.l.b16 %v445
        %v2188 = vunpack.c.h.b16 %v445
        %v2189 = vunpack.c.l.b16 %v446
        %v2190 = vunpack.c.h.b16 %v446
        %v2191 = vunpack.c.l.b16 %v447
        %v2192 = vunpack.c.h.b16 %v447
        %v2193 = vunpack.c.l.b16 %v448
        %v2194 = vunpack.c.h.b16 %v448
        %v2195 = vunpack.c.l.b16 %v449
        %v2196 = vunpack.c.h.b16 %v449
        %v2197 = vunpack.c.l.b16 %v450
        %v2198 = vunpack.c.h.b16 %v450
        %v2199 = vunpack.c.l.b16 %v451
        %v2200 = vunpack.c.h.b16 %v451
        %v2201 = vunpack.c.l.b16 %v452
        %v2202 = vunpack.c.h.b16 %v452
        %v2203 = vunpack.c.l.b16 %v453
        %v2204 = vunpack.c.h.b16 %v453
        %v2205 = vunpack.c.l.b16 %v454
        %v2206 = vunpack.c.h.b16 %v454
        %v2207 = vunpack.c.l.b16 %v455
        %v2208 = vunpack.c.h.b16 %v455
        %v2209 = vunpack.c.l.b16 %v456
        %v2210 = vunpack.c.h.b16 %v456
        %v2211 = vunpack.c.l.b16 %v457
        %v2212 = vunpack.c.h.b16 %v457
        %v2213 = vunpack.c.l.b16 %v458
        %v2214 = vunpack.c.h.b16 %v458
        %v2215 = vunpack.c.l.b16 %v459
        %v2216 = vunpack.c.h.b16 %v459
        %v2217 = vunpack.c.l.b16 %v460
        %v2218 = vunpack.c.h.b16 %v460
        %v2219 = vunpack.c.l.b16 %v461
        %v2220 = vunpack.c.h.b16 %v461
        %v2221 = vunpack.c.l.b16 %v462
        %v2222 = vunpack.c.h.b16 %v462
        %v2223 = vunpack.c.l.b16 %v463
        %v2224 = vunpack.c.h.b16 %v463
        %v2225 = vunpack.c.l.b16 %v464
        %v2226 = vunpack.c.h.b16 %v464
        %v2227 = vunpack.c.l.b16 %v465
        %v2228 = vunpack.c.h.b16 %v465
        %v2229 = vunpack.c.l.b16 %v466
        %v2230 = vunpack.c.h.b16 %v466
        %v2231 = vunpack.c.l.b16 %v467
        %v2232 = vunpack.c.h.b16 %v467
        %v2233 = vunpack.c.l.b16 %v468
        %v2234 = vunpack.c.h.b16 %v468
        %v2235 = vunpack.c.l.b16 %v469
        %v2236 = vunpack.c.h.b16 %v469
        %v2237 = vunpack.c.l.b16 %v470
        %v2238 = vunpack.c.h.b16 %v470
        %v2239 = vunpack.c.l.b16 %v471
        %v2240 = vunpack.c.h.b16 %v471
        %v2241 = vunpack.c.l.b16 %v472
        %v2242 = vunpack.c.h.b16 %v472
        %v2243 = vunpack.c.l.b16 %v473
        %v2244 = vunpack.c.h.b16 %v473
        %v2245 = vunpack.c.l.b16 %v474
        %v2246 = vunpack.c.h.b16 %v474
        %v2247 = vunpack.c.l.b16 %v475
        %v2248 = vunpack.c.h.b16 %v475
        %v2249 = vunpack.c.l.b16 %v476
        %v2250 = vunpack.c.h.b16 %v476
        %v2251 = vunpack.c.l.b16 %v477
        %v2252 = vunpack.c.h.b16 %v477
        %v2253 = vunpack.c.l.b16 %v478
        %v2254 = vunpack.c.h.b16 %v478
        %v2255 = vunpack.c.l.b16 %v479
        %v2256 = vunpack.c.h.b16 %v479
        %v2257 = vunpack.c.l.b16 %v480
        %v2258 = vunpack.c.h.b16 %v480
        %v2259 = vunpack.c.l.b16 %v481
        %v2260 = vunpack.c.h.b16 %v481
        %v2261 = vunpack.c.l.b16 %v482
        %v2262 = vunpack.c.h.b16 %v482
        %v2263 = vunpack.c.l.b16 %v483
        %v2264 = vunpack.c.h.b16 %v483
        %v2265 = vunpack.c.l.b16 %v484
        %v2266 = vunpack.c.h.b16 %v484
        %v2267 = vunpack.c.l.b16 %v485
        %v2268 = vunpack.c.h.b16 %v485
        %v2269 = vunpack.c.l.b16 %v486
        %v2270 = vunpack.c.h.b16 %v486
        %v2271 = vunpack.c.l.b16 %v487
        %v2272 = vunpack.c.h.b16 %v487
        %v2273 = vunpack.c.l.b16 %v488
        %v2274 = vunpack.c.h.b16 %v488
        %v2275 = vunpack.c.l.b16 %v489
        %v2276 = vunpack.c.h.b16 %v489
        %v2277 = vunpack.c.l.b16 %v490
        %v2278 = vunpack.c.h.b16 %v490
        %v2279 = vunpack.c.l.b16 %v491
        %v2280 = vunpack.c.h.b16 %v491
        %v2281 = vunpack.c.l.b16 %v492
        %v2282 = vunpack.c.h.b16 %v492
        %v2283 = vunpack.c.l.b16 %v493
        %v2284 = vunpack.c.h.b16 %v493
        %v2285 = vunpack.c.l.b16 %v494
        %v2286 = vunpack.c.h.b16 %v494
        %v2287 = vunpack.c.l.b16 %v495
        %v2288 = vunpack.c.h.b16 %v495
        %v2289 = vunpack.c.l.b16 %v496
        %v2290 = vunpack.c.h.b16 %v496
        %v2291 = vunpack.c.l.b16 %v497
        %v2292 = vunpack.c.h.b16 %v497
        %v2293 = vunpack.c.l.b16 %v498
        %v2294 = vunpack.c.h.b16 %v498
        %v2295 = vunpack.c.l.b16 %v499
        %v2296 = vunpack.c.h.b16 %v499
        %v2297 = vunpack.c.l.b16 %v500
        %v2298 = vunpack.c.h.b16 %v500
        %v2299 = vunpack.c.l.b16 %v501
        %v2300 = vunpack.c.h.b16 %v501
        %v2301 = vunpack.c.l.b16 %v502
        %v2302 = vunpack.c.h.b16 %v502
        %v2303 = vunpack.c.l.b16 %v503
        %v2304 = vunpack.c.h.b16 %v503
        %v2305 = vunpack.c.l.b16 %v504
        %v2306 = vunpack.c.h.b16 %v504
        %v2307 = vunpack.c.l.b16 %v505
        %v2308 = vunpack.c.h.b16 %v505
        %v2309 = vunpack.c.l.b16 %v506
        %v2310 = vunpack.c.h.b16 %v506
        %v2311 = vunpack.c.l.b16 %v507
        %v2312 = vunpack.c.h.b16 %v507
        %v2313 = vunpack.c.l.b16 %v508
        %v2314 = vunpack.c.h.b16 %v508
        %v2315 = vunpack.c.l.b16 %v509
        %v2316 = vunpack.c.h.b16 %v509
        %v2317 = vunpack.c.l.b16 %v510
        %v2318 = vunpack.c.h.b16 %v510
        %v2319 = vunpack.c.l.b16 %v511
        %v2320 = vunpack.c.h.b16 %v511
        %v2321 = vunpack.c.l.b16 %v512
        %v2322 = vunpack.c.h.b16 %v512
        %v2323 = vunpack.c.l.b16 %v513
        %v2324 = vunpack.c.h.b16 %v513
        %v2325 = vunpack.c.l.b16 %v514
        %v2326 = vunpack.c.h.b16 %v514
        %v2327 = vunpack.c.l.b16 %v515
        %v2328 = vunpack.c.h.b16 %v515
        %v2329 = vunpack.c.l.b16 %v516
        %v2330 = vunpack.c.h.b16 %v516
        %v2331 = vunpack.c.l.b16 %v517
        %v2332 = vunpack.c.h.b16 %v517
        %v2333 = vunpack.c.l.b16 %v518
        %v2334 = vunpack.c.h.b16 %v518
        %v2335 = vunpack.c.l.b16 %v519
        %v2336 = vunpack.c.h.b16 %v519
        %v2337 = vunpack.c.l.b16 %v520
        %v2338 = vunpack.c.h.b16 %v520
        %v2339 = vunpack.c.l.b16 %v521
        %v2340 = vunpack.c.h.b16 %v521
        %v2341 = vunpack.c.l.b16 %v522
        %v2342 = vunpack.c.h.b16 %v522
        %v2343 = vunpack.c.l.b16 %v523
        %v2344 = vunpack.c.h.b16 %v523
        %v2345 = vunpack.c.l.b16 %v524
        %v2346 = vunpack.c.h.b16 %v524
        %v2347 = vunpack.c.l.b16 %v525
        %v2348 = vunpack.c.h.b16 %v525
        %v2349 = vunpack.c.l.b16 %v526
        %v2350 = vunpack.c.h.b16 %v526
        %v2351 = vunpack.c.l.b16 %v527
        %v2352 = vunpack.c.h.b16 %v527
        %v2353 = vunpack.c.l.b16 %v528
        %v2354 = vunpack.c.h.b16 %v528
        %v2355 = vunpack.c.l.b16 %v529
        %v2356 = vunpack.c.h.b16 %v529
        %v2357 = vunpack.c.l.b16 %v530
        %v2358 = vunpack.c.h.b16 %v530
        %v2359 = vunpack.c.l.b16 %v531
        %v2360 = vunpack.c.h.b16 %v531
        %v2361 = vunpack.c.l.b16 %v532
        %v2362 = vunpack.c.h.b16 %v532
        %v2363 = vunpack.c.l.b16 %v533
        %v2364 = vunpack.c.h.b16 %v533
        %v2365 = vunpack.c.l.b16 %v534
        %v2366 = vunpack.c.h.b16 %v534
        %v2367 = vunpack.c.l.b16 %v535
        %v2368 = vunpack.c.h.b16 %v535
        %v2369 = vunpack.c.l.b16 %v536
        %v2370 = vunpack.c.h.b16 %v536
        %v2371 = vunpack.c.l.b16 %v537
        %v2372 = vunpack.c.h.b16 %v537
        %v2373 = vunpack.c.l.b16 %v538
        %v2374 = vunpack.c.h.b16 %v538
        %v2375 = vunpack.c.l.b16 %v539
        %v2376 = vunpack.c.h.b16 %v539
        %v2377 = vunpack.c.l.b16 %v540
        %v2378 = vunpack.c.h.b16 %v540
        %v2379 = vunpack.c.l.b16 %v541
        %v2380 = vunpack.c.h.b16 %v541
        %v2381 = vunpack.c.l.b16 %v542
        %v2382 = vunpack.c.h.b16 %v542
        %v2383 = vunpack.c.l.b16 %v543
        %v2384 = vunpack.c.h.b16 %v543
        %v2385 = vunpack.c.l.b16 %v544
        %v2386 = vunpack.c.h.b16 %v544
        %v2387 = vunpack.c.l.b16 %v545
        %v2388 = vunpack.c.h.b16 %v545
        %v2389 = vunpack.c.l.b16 %v546
        %v2390 = vunpack.c.h.b16 %v546
        %v2391 = vunpack.c.l.b16 %v547
        %v2392 = vunpack.c.h.b16 %v547
        %v2393 = vunpack.c.l.b16 %v548
        %v2394 = vunpack.c.h.b16 %v548
        %v2395 = vunpack.c.l.b16 %v549
        %v2396 = vunpack.c.h.b16 %v549
        %v2397 = vunpack.c.l.b16 %v550
        %v2398 = vunpack.c.h.b16 %v550
        %v2399 = vunpack.c.l.b16 %v551
        %v2400 = vunpack.c.h.b16 %v551
        %v2401 = vunpack.c.l.b16 %v552
        %v2402 = vunpack.c.h.b16 %v552
        %v2403 = vunpack.c.l.b16 %v553
        %v2404 = vunpack.c.h.b16 %v553
        %v2405 = vunpack.c.l.b16 %v554
        %v2406 = vunpack.c.h.b16 %v554
        %v2407 = vunpack.c.l.b16 %v555
        %v2408 = vunpack.c.h.b16 %v555
        %v2409 = vunpack.c.l.b16 %v556
        %v2410 = vunpack.c.h.b16 %v556
        %v2411 = vunpack.c.l.b16 %v557
        %v2412 = vunpack.c.h.b16 %v557
        %v2413 = vunpack.c.l.b16 %v558
        %v2414 = vunpack.c.h.b16 %v558
        %v2415 = vunpack.c.l.b16 %v559
        %v2416 = vunpack.c.h.b16 %v559
        %v2417 = vunpack.c.l.b16 %v560
        %v2418 = vunpack.c.h.b16 %v560
        %v2419 = vunpack.c.l.b16 %v561
        %v2420 = vunpack.c.h.b16 %v561
        %v2421 = vunpack.c.l.b16 %v562
        %v2422 = vunpack.c.h.b16 %v562
        %v2423 = vunpack.c.l.b16 %v563
        %v2424 = vunpack.c.h.b16 %v563
        %v2425 = vunpack.c.l.b16 %v564
        %v2426 = vunpack.c.h.b16 %v564
        %v2427 = vunpack.c.l.b16 %v565
        %v2428 = vunpack.c.h.b16 %v565
        %v2429 = vunpack.c.l.b16 %v566
        %v2430 = vunpack.c.h.b16 %v566
        %v2431 = vunpack.c.l.b16 %v567
        %v2432 = vunpack.c.h.b16 %v567
        %v2433 = vunpack.c.l.b16 %v568
        %v2434 = vunpack.c.h.b16 %v568
        %v2435 = vunpack.c.l.b16 %v569
        %v2436 = vunpack.c.h.b16 %v569
        %v2437 = vunpack.c.l.b16 %v570
        %v2438 = vunpack.c.h.b16 %v570
        %v2439 = vunpack.c.l.b16 %v571
        %v2440 = vunpack.c.h.b16 %v571
        %v2441 = vunpack.c.l.b16 %v572
        %v2442 = vunpack.c.h.b16 %v572
        %v2443 = vunpack.c.l.b16 %v573
        %v2444 = vunpack.c.h.b16 %v573
        %v2445 = vunpack.c.l.b16 %v574
        %v2446 = vunpack.c.h.b16 %v574
        %v2447 = vunpack.c.l.b16 %v575
        %v2448 = vunpack.c.h.b16 %v575
        %v2449 = vunpack.c.l.b16 %v576
        %v2450 = vunpack.c.h.b16 %v576
        %v2451 = vunpack.c.l.b16 %v577
        %v2452 = vunpack.c.h.b16 %v577
        %v2453 = vunpack.c.l.b16 %v578
        %v2454 = vunpack.c.h.b16 %v578
        %v2455 = vunpack.c.l.b16 %v579
        %v2456 = vunpack.c.h.b16 %v579
        %v2457 = vunpack.c.l.b16 %v580
        %v2458 = vunpack.c.h.b16 %v580
        %v2459 = vunpack.c.l.b16 %v581
        %v2460 = vunpack.c.h.b16 %v581
        %v2461 = vunpack.c.l.b16 %v582
        %v2462 = vunpack.c.h.b16 %v582
        %v2463 = vunpack.c.l.b16 %v583
        %v2464 = vunpack.c.h.b16 %v583
        %v2465 = vunpack.c.l.b16 %v584
        %v2466 = vunpack.c.h.b16 %v584
        %v2467 = vunpack.c.l.b16 %v585
        %v2468 = vunpack.c.h.b16 %v585
        %v2469 = vunpack.c.l.b16 %v586
        %v2470 = vunpack.c.h.b16 %v586
        %v2471 = vunpack.c.l.b16 %v587
        %v2472 = vunpack.c.h.b16 %v587
        %v2473 = vunpack.c.l.b16 %v588
        %v2474 = vunpack.c.h.b16 %v588
        %v2475 = vunpack.c.l.b16 %v589
        %v2476 = vunpack.c.h.b16 %v589
        %v2477 = vunpack.c.l.b16 %v590
        %v2478 = vunpack.c.h.b16 %v590
        %v2479 = vunpack.c.l.b16 %v591
        %v2480 = vunpack.c.h.b16 %v591
        %v2481 = vunpack.c.l.b16 %v592
        %v2482 = vunpack.c.h.b16 %v592
        %v2483 = vunpack.c.l.b16 %v593
        %v2484 = vunpack.c.h.b16 %v593
        %v2485 = vunpack.c.l.b16 %v594
        %v2486 = vunpack.c.h.b16 %v594
        %v2487 = vunpack.c.l.b16 %v595
        %v2488 = vunpack.c.h.b16 %v595
        %v2489 = vunpack.c.l.b16 %v596
        %v2490 = vunpack.c.h.b16 %v596
        %v2491 = vunpack.c.l.b16 %v597
        %v2492 = vunpack.c.h.b16 %v597
        %v2493 = vunpack.c.l.b16 %v598
        %v2494 = vunpack.c.h.b16 %v598
        %v2495 = vunpack.c.l.b16 %v599
        %v2496 = vunpack.c.h.b16 %v599
        %v2497 = vunpack.c.l.b16 %v600
        %v2498 = vunpack.c.h.b16 %v600
        %v2499 = vunpack.c.l.b16 %v601
        %v2500 = vunpack.c.h.b16 %v601
        %v2501 = vunpack.c.l.b16 %v602
        %v2502 = vunpack.c.h.b16 %v602
        %v2503 = vunpack.c.l.b16 %v603
        %v2504 = vunpack.c.h.b16 %v603
        %v2505 = vunpack.c.l.b16 %v604
        %v2506 = vunpack.c.h.b16 %v604
        %v2507 = vunpack.c.l.b16 %v605
        %v2508 = vunpack.c.h.b16 %v605
        %v2509 = vunpack.c.l.b16 %v606
        %v2510 = vunpack.c.h.b16 %v606
        %v2511 = vunpack.c.l.b16 %v607
        %v2512 = vunpack.c.h.b16 %v607
        %v2513 = vunpack.c.l.b16 %v608
        %v2514 = vunpack.c.h.b16 %v608
        %v2515 = vunpack.c.l.b16 %v609
        %v2516 = vunpack.c.h.b16 %v609
        %v2517 = vunpack.c.l.b16 %v610
        %v2518 = vunpack.c.h.b16 %v610
        %v2519 = vunpack.c.l.b16 %v611
        %v2520 = vunpack.c.h.b16 %v611
        %v2521 = vunpack.c.l.b16 %v612
        %v2522 = vunpack.c.h.b16 %v612
        %v2523 = vunpack.c.l.b16 %v613
        %v2524 = vunpack.c.h.b16 %v613
        %v2525 = vunpack.c.l.b16 %v614
        %v2526 = vunpack.c.h.b16 %v614
        %v2527 = vunpack.c.l.b16 %v615
        %v2528 = vunpack.c.h.b16 %v615
        %v2529 = vunpack.c.l.b16 %v616
        %v2530 = vunpack.c.h.b16 %v616
        %v2531 = vunpack.c.l.b16 %v617
        %v2532 = vunpack.c.h.b16 %v617
        %v2533 = vunpack.c.l.b16 %v618
        %v2534 = vunpack.c.h.b16 %v618
        %v2535 = vunpack.c.l.b16 %v619
        %v2536 = vunpack.c.h.b16 %v619
        %v2537 = vunpack.c.l.b16 %v620
        %v2538 = vunpack.c.h.b16 %v620
        %v2539 = vunpack.c.l.b16 %v621
        %v2540 = vunpack.c.h.b16 %v621
        %v2541 = vunpack.c.l.b16 %v622
        %v2542 = vunpack.c.h.b16 %v622
        %v2543 = vunpack.c.l.b16 %v623
        %v2544 = vunpack.c.h.b16 %v623
        %v2545 = vunpack.c.l.b16 %v624
        %v2546 = vunpack.c.h.b16 %v624
        %v2547 = vunpack.c.l.b16 %v625
        %v2548 = vunpack.c.h.b16 %v625
        %v2549 = vunpack.c.l.b16 %v626
        %v2550 = vunpack.c.h.b16 %v626
        %v2551 = vunpack.c.l.b16 %v627
        %v2552 = vunpack.c.h.b16 %v627
        %v2553 = vunpack.c.l.b16 %v628
        %v2554 = vunpack.c.h.b16 %v628
        %v2555 = vunpack.c.l.b16 %v629
        %v2556 = vunpack.c.h.b16 %v629
        %v2557 = vunpack.c.l.b16 %v630
        %v2558 = vunpack.c.h.b16 %v630
        %v2559 = vunpack.c.l.b16 %v631
        %v2560 = vunpack.c.h.b16 %v631
        %v2561 = vunpack.c.l.b16 %v632
        %v2562 = vunpack.c.h.b16 %v632
        %v2563 = vunpack.c.l.b16 %v633
        %v2564 = vunpack.c.h.b16 %v633
        %v2565 = vunpack.c.l.b16 %v634
        %v2566 = vunpack.c.h.b16 %v634
        %v2567 = vunpack.c.l.b16 %v635
        %v2568 = vunpack.c.h.b16 %v635
        %v2569 = vunpack.c.l.b16 %v636
        %v2570 = vunpack.c.h.b16 %v636
        %v2571 = vunpack.c.l.b16 %v637
        %v2572 = vunpack.c.h.b16 %v637
        %v2573 = vunpack.c.l.b16 %v638
        %v2574 = vunpack.c.h.b16 %v638
        %v2575 = vunpack.c.l.b16 %v639
        %v2576 = vunpack.c.h.b16 %v639
        %v2577 = vunpack.c.l.b16 %v640
        %v2578 = vunpack.c.h.b16 %v640
        %v2579 = vunpack.c.l.b16 %v641
        %v2580 = vunpack.c.h.b16 %v641
        %v2581 = vunpack.c.l.b16 %v642
        %v2582 = vunpack.c.h.b16 %v642
        %v2583 = vunpack.c.l.b16 %v643
        %v2584 = vunpack.c.h.b16 %v643
        %v2585 = vunpack.c.l.b16 %v644
        %v2586 = vunpack.c.h.b16 %v644
        %v2587 = vunpack.c.l.b16 %v645
        %v2588 = vunpack.c.h.b16 %v645
        %v2589 = vunpack.c.l.b16 %v646
        %v2590 = vunpack.c.h.b16 %v646
        %v2591 = vunpack.c.l.b16 %v647
        %v2592 = vunpack.c.h.b16 %v647
        %v2593 = vunpack.c.l.b16 %v648
        %v2594 = vunpack.c.h.b16 %v648
        %v2595 = vunpack.c.l.b16 %v649
        %v2596 = vunpack.c.h.b16 %v649
        %v2597 = vunpack.c.l.b16 %v650
        %v2598 = vunpack.c.h.b16 %v650
        %v2599 = vunpack.c.l.b16 %v651
        %v2600 = vunpack.c.h.b16 %v651
        %v2601 = vunpack.c.l.b16 %v652
        %v2602 = vunpack.c.h.b16 %v652
        %v2603 = vunpack.c.l.b16 %v653
        %v2604 = vunpack.c.h.b16 %v653
        %v2605 = vunpack.c.l.b16 %v654
        %v2606 = vunpack.c.h.b16 %v654
        %v2607 = vunpack.c.l.b16 %v655
        %v2608 = vunpack.c.h.b16 %v655
        %v2609 = vunpack.c.l.b16 %v656
        %v2610 = vunpack.c.h.b16 %v656
        %v2611 = vunpack.c.l.b16 %v657
        %v2612 = vunpack.c.h.b16 %v657
        %v2613 = vunpack.c.l.b16 %v658
        %v2614 = vunpack.c.h.b16 %v658
        %v2615 = vunpack.c.l.b16 %v659
        %v2616 = vunpack.c.h.b16 %v659
        %v2617 = vunpack.c.l.b16 %v660
        %v2618 = vunpack.c.h.b16 %v660
        %v2619 = vunpack.c.l.b16 %v661
        %v2620 = vunpack.c.h.b16 %v661
        %v2621 = vunpack.c.l.b16 %v662
        %v2622 = vunpack.c.h.b16 %v662
        %v2623 = vunpack.c.l.b16 %v663
        %v2624 = vunpack.c.h.b16 %v663
        %v2625 = vunpack.c.l.b16 %v664
        %v2626 = vunpack.c.h.b16 %v664
        %v2627 = vunpack.c.l.b16 %v665
        %v2628 = vunpack.c.h.b16 %v665
        %v2629 = vunpack.c.l.b16 %v666
        %v2630 = vunpack.c.h.b16 %v666
        %v2631 = vunpack.c.l.b16 %v667
        %v2632 = vunpack.c.h.b16 %v667
        %v2633 = vunpack.c.l.b16 %v668
        %v2634 = vunpack.c.h.b16 %v668
        %v2635 = vunpack.c.l.b16 %v669
        %v2636 = vunpack.c.h.b16 %v669
        %v2637 = vunpack.c.l.b16 %v670
        %v2638 = vunpack.c.h.b16 %v670
        %v2639 = vunpack.c.l.b16 %v671
        %v2640 = vunpack.c.h.b16 %v671
        %v2641 = vunpack.c.l.b16 %v672
        %v2642 = vunpack.c.h.b16 %v672
        %v2643 = vunpack.c.l.b16 %v673
        %v2644 = vunpack.c.h.b16 %v673
        %v2645 = vunpack.c.l.b16 %v674
        %v2646 = vunpack.c.h.b16 %v674
        %v2647 = vunpack.c.l.b16 %v675
        %v2648 = vunpack.c.h.b16 %v675
        %v2649 = vunpack.c.l.b16 %v676
        %v2650 = vunpack.c.h.b16 %v676
        %v2651 = vunpack.c.l.b16 %v677
        %v2652 = vunpack.c.h.b16 %v677
        %v2653 = vunpack.c.l.b16 %v678
        %v2654 = vunpack.c.h.b16 %v678
        %v2655 = vunpack.c.l.b16 %v679
        %v2656 = vunpack.c.h.b16 %v679
        %v2657 = vunpack.c.l.b16 %v680
        %v2658 = vunpack.c.h.b16 %v680
        %v2659 = vunpack.c.l.b16 %v681
        %v2660 = vunpack.c.h.b16 %v681
        %v2661 = vunpack.c.l.b16 %v682
        %v2662 = vunpack.c.h.b16 %v682
        %v2663 = vunpack.c.l.b16 %v683
        %v2664 = vunpack.c.h.b16 %v683
        %v2665 = vunpack.c.l.b16 %v684
        %v2666 = vunpack.c.h.b16 %v684
        %v2667 = vunpack.c.l.b16 %v685
        %v2668 = vunpack.c.h.b16 %v685
        %v2669 = vunpack.c.l.b16 %v686
        %v2670 = vunpack.c.h.b16 %v686
        %v2671 = vunpack.c.l.b16 %v687
        %v2672 = vunpack.c.h.b16 %v687
        %v2673 = vunpack.c.l.b16 %v688
        %v2674 = vunpack.c.h.b16 %v688
        %v2675 = vunpack.c.l.b16 %v689
        %v2676 = vunpack.c.h.b16 %v689
        %v2677 = vunpack.c.l.b16 %v690
        %v2678 = vunpack.c.h.b16 %v690
        %v2679 = vunpack.c.l.b16 %v691
        %v2680 = vunpack.c.h.b16 %v691
        %v2681 = vunpack.c.l.b16 %v692
        %v2682 = vunpack.c.h.b16 %v692
        %v2683 = vunpack.c.l.b16 %v693
        %v2684 = vunpack.c.h.b16 %v693
        %v2685 = vunpack.c.l.b16 %v694
        %v2686 = vunpack.c.h.b16 %v694
        %v2687 = vunpack.c.l.b16 %v695
        %v2688 = vunpack.c.h.b16 %v695
        %v2689 = vunpack.c.l.b16 %v696
        %v2690 = vunpack.c.h.b16 %v696
        %v2691 = vunpack.c.l.b16 %v697
        %v2692 = vunpack.c.h.b16 %v697
        %v2693 = vunpack.c.l.b16 %v698
        %v2694 = vunpack.c.h.b16 %v698
        %v2695 = vunpack.c.l.b16 %v699
        %v2696 = vunpack.c.h.b16 %v699
        %v2697 = vunpack.c.l.b16 %v700
        %v2698 = vunpack.c.h.b16 %v700
        %v2699 = vunpack.c.l.b16 %v701
        %v2700 = vunpack.c.h.b16 %v701
        %v2701 = vunpack.c.l.b16 %v702
        %v2702 = vunpack.c.h.b16 %v702
        %v2703 = vunpack.c.l.b16 %v703
        %v2704 = vunpack.c.h.b16 %v703
        %v2705 = vunpack.c.l.b16 %v704
        %v2706 = vunpack.c.h.b16 %v704
        %v2707 = vunpack.c.l.b16 %v705
        %v2708 = vunpack.c.h.b16 %v705
        %v2709 = vunpack.c.l.b16 %v706
        %v2710 = vunpack.c.h.b16 %v706
        %v2711 = vunpack.c.l.b16 %v707
        %v2712 = vunpack.c.h.b16 %v707
        %v2713 = vunpack.c.l.b16 %v708
        %v2714 = vunpack.c.h.b16 %v708
        %v2715 = vunpack.c.l.b16 %v709
        %v2716 = vunpack.c.h.b16 %v709
        %v2717 = vunpack.c.l.b16 %v710
        %v2718 = vunpack.c.h.b16 %v710
        %v2719 = vunpack.c.l.b16 %v711
        %v2720 = vunpack.c.h.b16 %v711
        %v2721 = vunpack.c.l.b16 %v712
        %v2722 = vunpack.c.h.b16 %v712
        %v2723 = vunpack.c.l.b16 %v713
        %v2724 = vunpack.c.h.b16 %v713
        %v2725 = vunpack.c.l.b16 %v714
        %v2726 = vunpack.c.h.b16 %v714
        %v2727 = vunpack.c.l.b16 %v715
        %v2728 = vunpack.c.h.b16 %v715
        %v2729 = vunpack.c.l.b16 %v716
        %v2730 = vunpack.c.h.b16 %v716
        %v2731 = vunpack.c.l.b16 %v717
        %v2732 = vunpack.c.h.b16 %v717
        %v2733 = vunpack.c.l.b16 %v718
        %v2734 = vunpack.c.h.b16 %v718
        %v2735 = vunpack.c.l.b16 %v719
        %v2736 = vunpack.c.h.b16 %v719
        %v2737 = vunpack.c.l.b16 %v720
        %v2738 = vunpack.c.h.b16 %v720
        %v2739 = vunpack.c.l.b16 %v721
        %v2740 = vunpack.c.h.b16 %v721
        %v2741 = vunpack.c.l.b16 %v722
        %v2742 = vunpack.c.h.b16 %v722
        %v2743 = vunpack.c.l.b16 %v723
        %v2744 = vunpack.c.h.b16 %v723
        %v2745 = vunpack.c.l.b16 %v724
        %v2746 = vunpack.c.h.b16 %v724
        %v2747 = vunpack.c.l.b16 %v725
        %v2748 = vunpack.c.h.b16 %v725
        %v2749 = vunpack.c.l.b16 %v726
        %v2750 = vunpack.c.h.b16 %v726
        %v2751 = vunpack.c.l.b16 %v727
        %v2752 = vunpack.c.h.b16 %v727
        %v2753 = vunpack.c.l.b16 %v728
        %v2754 = vunpack.c.h.b16 %v728
        %v2755 = vunpack.c.l.b16 %v729
        %v2756 = vunpack.c.h.b16 %v729
        %v2757 = vunpack.c.l.b16 %v730
        %v2758 = vunpack.c.h.b16 %v730
        %v2759 = vunpack.c.l.b16 %v731
        %v2760 = vunpack.c.h.b16 %v731
        %v2761 = vunpack.c.l.b16 %v732
        %v2762 = vunpack.c.h.b16 %v732
        %v2763 = vunpack.c.l.b16 %v733
        %v2764 = vunpack.c.h.b16 %v733
        %v2765 = vunpack.c.l.b16 %v734
        %v2766 = vunpack.c.h.b16 %v734
        %v2767 = vunpack.c.l.b16 %v735
        %v2768 = vunpack.c.h.b16 %v735
        %v2769 = vunpack.c.l.b16 %v736
        %v2770 = vunpack.c.h.b16 %v736
        %v2771 = vunpack.c.l.b16 %v737
        %v2772 = vunpack.c.h.b16 %v737
        %v2773 = vunpack.c.l.b16 %v738
        %v2774 = vunpack.c.h.b16 %v738
        %v2775 = vunpack.c.l.b16 %v739
        %v2776 = vunpack.c.h.b16 %v739
        %v2777 = vunpack.c.l.b16 %v740
        %v2778 = vunpack.c.h.b16 %v740
        %v2779 = vunpack.c.l.b16 %v741
        %v2780 = vunpack.c.h.b16 %v741
        %v2781 = vunpack.c.l.b16 %v742
        %v2782 = vunpack.c.h.b16 %v742
        %v2783 = vunpack.c.l.b16 %v743
        %v2784 = vunpack.c.h.b16 %v743
        %v2785 = vunpack.c.l.b16 %v744
        %v2786 = vunpack.c.h.b16 %v744
        %v2787 = vunpack.c.l.b16 %v745
        %v2788 = vunpack.c.h.b16 %v745
        %v2789 = vunpack.c.l.b16 %v746
        %v2790 = vunpack.c.h.b16 %v746
        %v2791 = vunpack.c.l.b16 %v747
        %v2792 = vunpack.c.h.b16 %v747
        %v2793 = vunpack.c.l.b16 %v748
        %v2794 = vunpack.c.h.b16 %v748
        %v2795 = vunpack.c.l.b16 %v749
        %v2796 = vunpack.c.h.b16 %v749
        %v2797 = vunpack.c.l.b16 %v750
        %v2798 = vunpack.c.h.b16 %v750
        %v2799 = vunpack.c.l.b16 %v751
        %v2800 = vunpack.c.h.b16 %v751
        %v2801 = vunpack.c.l.b16 %v752
        %v2802 = vunpack.c.h.b16 %v752
        %v2803 = vunpack.c.l.b16 %v753
        %v2804 = vunpack.c.h.b16 %v753
        %v2805 = vunpack.c.l.b16 %v754
        %v2806 = vunpack.c.h.b16 %v754
        %v2807 = vunpack.c.l.b16 %v755
        %v2808 = vunpack.c.h.b16 %v755
        %v2809 = vunpack.c.l.b16 %v756
        %v2810 = vunpack.c.h.b16 %v756
        %v2811 = vunpack.c.l.b16 %v757
        %v2812 = vunpack.c.h.b16 %v757
        %v2813 = vunpack.c.l.b16 %v758
        %v2814 = vunpack.c.h.b16 %v758
        %v2815 = vunpack.c.l.b16 %v759
        %v2816 = vunpack.c.h.b16 %v759
        %v2817 = vunpack.c.l.b16 %v760
        %v2818 = vunpack.c.h.b16 %v760
        %v2819 = vunpack.c.l.b16 %v761
        %v2820 = vunpack.c.h.b16 %v761
        %v2821 = vunpack.c.l.b16 %v762
        %v2822 = vunpack.c.h.b16 %v762
        %v2823 = vunpack.c.l.b16 %v763
        %v2824 = vunpack.c.h.b16 %v763
        %v2825 = vunpack.c.l.b16 %v764
        %v2826 = vunpack.c.h.b16 %v764
        %v2827 = vunpack.c.l.b16 %v765
        %v2828 = vunpack.c.h.b16 %v765
        %v2829 = vunpack.c.l.b16 %v766
        %v2830 = vunpack.c.h.b16 %v766
        %v2831 = vunpack.c.l.b16 %v767
        %v2832 = vunpack.c.h.b16 %v767
        %v2833 = vunpack.c.l.b16 %v768
        %v2834 = vunpack.c.h.b16 %v768
        %v2835 = vunpack.c.l.b16 %v769
        %v2836 = vunpack.c.h.b16 %v769
        %v2837 = vunpack.c.l.b16 %v770
        %v2838 = vunpack.c.h.b16 %v770
        %v2839 = vunpack.c.l.b16 %v771
        %v2840 = vunpack.c.h.b16 %v771
        %v2841 = vunpack.c.l.b16 %v772
        %v2842 = vunpack.c.h.b16 %v772
        %v2843 = vunpack.c.l.b16 %v773
        %v2844 = vunpack.c.h.b16 %v773
        %v2845 = vunpack.c.l.b16 %v774
        %v2846 = vunpack.c.h.b16 %v774
        %v2847 = vunpack.c.l.b16 %v775
        %v2848 = vunpack.c.h.b16 %v775
        %v2849 = vunpack.c.l.b16 %v776
        %v2850 = vunpack.c.h.b16 %v776
        %v2851 = vunpack.c.l.b16 %v777
        %v2852 = vunpack.c.h.b16 %v777
        %v2853 = vunpack.c.l.b16 %v778
        %v2854 = vunpack.c.h.b16 %v778
        %v2855 = vunpack.c.l.b16 %v779
        %v2856 = vunpack.c.h.b16 %v779
        %v2857 = vunpack.c.l.b16 %v780
        %v2858 = vunpack.c.h.b16 %v780
        %v2859 = vunpack.c.l.b16 %v781
        %v2860 = vunpack.c.h.b16 %v781
        %v2861 = vunpack.c.l.b16 %v782
        %v2862 = vunpack.c.h.b16 %v782
        %v2863 = vunpack.c.l.b16 %v783
        %v2864 = vunpack.c.h.b16 %v783
        %v2865 = vunpack.c.l.b16 %v784
        %v2866 = vunpack.c.h.b16 %v784
        %v2867 = vunpack.c.l.b16 %v785
        %v2868 = vunpack.c.h.b16 %v785
        %v2869 = vunpack.c.l.b16 %v786
        %v2870 = vunpack.c.h.b16 %v786
        %v2871 = vunpack.c.l.b16 %v787
        %v2872 = vunpack.c.h.b16 %v787
        %v2873 = vunpack.c.l.b16 %v788
        %v2874 = vunpack.c.h.b16 %v788
        %v2875 = vunpack.c.l.b16 %v789
        %v2876 = vunpack.c.h.b16 %v789
        %v2877 = vunpack.c.l.b16 %v790
        %v2878 = vunpack.c.h.b16 %v790
        %v2879 = vunpack.c.l.b16 %v791
        %v2880 = vunpack.c.h.b16 %v791
        %v2881 = vunpack.c.l.b16 %v792
        %v2882 = vunpack.c.h.b16 %v792
        %v2883 = vunpack.c.l.b16 %v793
        %v2884 = vunpack.c.h.b16 %v793
        %v2885 = vunpack.c.l.b16 %v794
        %v2886 = vunpack.c.h.b16 %v794
        %v2887 = vunpack.c.l.b16 %v795
        %v2888 = vunpack.c.h.b16 %v795
        %v2889 = vunpack.c.l.b16 %v796
        %v2890 = vunpack.c.h.b16 %v796
        %v2891 = vunpack.c.l.b16 %v797
        %v2892 = vunpack.c.h.b16 %v797
        %v2893 = vunpack.c.l.b16 %v798
        %v2894 = vunpack.c.h.b16 %v798
        %v2895 = vunpack.c.l.b16 %v799
        %v2896 = vunpack.c.h.b16 %v799
        %v2897 = vunpack.c.l.b16 %v800
        %v2898 = vunpack.c.h.b16 %v800
        %v2899 = vunpack.c.l.b16 %v801
        %v2900 = vunpack.c.h.b16 %v801
        %v2901 = vunpack.c.l.b16 %v802
        %v2902 = vunpack.c.h.b16 %v802
        %v2903 = vunpack.c.l.b16 %v803
        %v2904 = vunpack.c.h.b16 %v803
        %v2905 = vunpack.c.l.b16 %v804
        %v2906 = vunpack.c.h.b16 %v804
        %v2907 = vunpack.c.l.b16 %v805
        %v2908 = vunpack.c.h.b16 %v805
        %v2909 = vunpack.c.l.b16 %v806
        %v2910 = vunpack.c.h.b16 %v806
        %v2911 = vunpack.c.l.b16 %v807
        %v2912 = vunpack.c.h.b16 %v807
        %v2913 = vunpack.c.l.b16 %v808
        %v2914 = vunpack.c.h.b16 %v808
        %v2915 = vunpack.c.l.b16 %v809
        %v2916 = vunpack.c.h.b16 %v809
        %v2917 = vunpack.c.l.b16 %v810
        %v2918 = vunpack.c.h.b16 %v810
        %v2919 = vunpack.c.l.b16 %v811
        %v2920 = vunpack.c.h.b16 %v811
        %v2921 = vunpack.c.l.b16 %v812
        %v2922 = vunpack.c.h.b16 %v812
        %v2923 = vunpack.c.l.b16 %v813
        %v2924 = vunpack.c.h.b16 %v813
        %v2925 = vunpack.c.l.b16 %v814
        %v2926 = vunpack.c.h.b16 %v814
        %v2927 = vunpack.c.l.b16 %v815
        %v2928 = vunpack.c.h.b16 %v815
        %v2929 = vunpack.c.l.b16 %v816
        %v2930 = vunpack.c.h.b16 %v816
        %v2931 = vunpack.c.l.b16 %v817
        %v2932 = vunpack.c.h.b16 %v817
        %v2933 = vunpack.c.l.b16 %v818
        %v2934 = vunpack.c.h.b16 %v818
        %v2935 = vunpack.c.l.b16 %v819
        %v2936 = vunpack.c.h.b16 %v819
        %v2937 = vunpack.c.l.b16 %v820
        %v2938 = vunpack.c.h.b16 %v820
        %v2939 = vunpack.c.l.b16 %v821
        %v2940 = vunpack.c.h.b16 %v821
        %v2941 = vunpack.c.l.b16 %v822
        %v2942 = vunpack.c.h.b16 %v822
        %v2943 = vunpack.c.l.b16 %v823
        %v2944 = vunpack.c.h.b16 %v823
        %v2945 = vunpack.c.l.b16 %v824
        %v2946 = vunpack.c.h.b16 %v824
        %v2947 = vunpack.c.l.b16 %v825
        %v2948 = vunpack.c.h.b16 %v825
        %v2949 = vunpack.c.l.b16 %v826
        %v2950 = vunpack.c.h.b16 %v826
        %v2951 = vunpack.c.l.b16 %v827
        %v2952 = vunpack.c.h.b16 %v827
        %v2953 = vunpack.c.l.b16 %v828
        %v2954 = vunpack.c.h.b16 %v828
        %v2955 = vunpack.c.l.b16 %v829
        %v2956 = vunpack.c.h.b16 %v829
        %v2957 = vunpack.c.l.b16 %v830
        %v2958 = vunpack.c.h.b16 %v830
        %v2959 = vunpack.c.l.b16 %v831
        %v2960 = vunpack.c.h.b16 %v831
        %v2961 = vunpack.c.l.b16 %v832
        %v2962 = vunpack.c.h.b16 %v832
        %v2963 = vunpack.c.l.b16 %v833
        %v2964 = vunpack.c.h.b16 %v833
        %v2965 = vunpack.c.l.b16 %v834
        %v2966 = vunpack.c.h.b16 %v834
        %v2967 = vunpack.c.l.b16 %v835
        %v2968 = vunpack.c.h.b16 %v835
        %v2969 = vunpack.c.l.b16 %v836
        %v2970 = vunpack.c.h.b16 %v836
        %v2971 = vunpack.c.l.b16 %v837
        %v2972 = vunpack.c.h.b16 %v837
        %v2973 = vunpack.c.l.b16 %v838
        %v2974 = vunpack.c.h.b16 %v838
        %v2975 = vunpack.c.l.b16 %v839
        %v2976 = vunpack.c.h.b16 %v839
        %v2977 = vunpack.c.l.b16 %v840
        %v2978 = vunpack.c.h.b16 %v840
        %v2979 = vunpack.c.l.b16 %v841
        %v2980 = vunpack.c.h.b16 %v841
        %v2981 = vunpack.c.l.b16 %v842
        %v2982 = vunpack.c.h.b16 %v842
        %v2983 = vunpack.c.l.b16 %v843
        %v2984 = vunpack.c.h.b16 %v843
        %v2985 = vunpack.c.l.b16 %v844
        %v2986 = vunpack.c.h.b16 %v844
        %v2987 = vunpack.c.l.b16 %v845
        %v2988 = vunpack.c.h.b16 %v845
        %v2989 = vunpack.c.l.b16 %v846
        %v2990 = vunpack.c.h.b16 %v846
        %v2991 = vunpack.c.l.b16 %v847
        %v2992 = vunpack.c.h.b16 %v847
        %v2993 = vunpack.c.l.b16 %v848
        %v2994 = vunpack.c.h.b16 %v848
        %v2995 = vunpack.c.l.b16 %v849
        %v2996 = vunpack.c.h.b16 %v849
        %v2997 = vunpack.c.l.b16 %v850
        %v2998 = vunpack.c.h.b16 %v850
        %v2999 = vunpack.c.l.b16 %v851
        %v3000 = vunpack.c.h.b16 %v851
        %v3001 = vunpack.c.l.b16 %v852
        %v3002 = vunpack.c.h.b16 %v852
        %v3003 = vunpack.c.l.b16 %v853
        %v3004 = vunpack.c.h.b16 %v853
        %v3005 = vunpack.c.l.b16 %v854
        %v3006 = vunpack.c.h.b16 %v854
        %v3007 = vunpack.c.l.b16 %v855
        %v3008 = vunpack.c.h.b16 %v855
        %v3009 = vunpack.c.l.b16 %v856
        %v3010 = vunpack.c.h.b16 %v856
        %v3011 = vunpack.c.l.b16 %v857
        %v3012 = vunpack.c.h.b16 %v857
        %v3013 = vunpack.c.l.b16 %v858
        %v3014 = vunpack.c.h.b16 %v858
        %v3015 = vunpack.c.l.b16 %v859
        %v3016 = vunpack.c.h.b16 %v859
        %v3017 = vunpack.c.l.b16 %v860
        %v3018 = vunpack.c.h.b16 %v860
        %v3019 = vunpack.c.l.b16 %v861
        %v3020 = vunpack.c.h.b16 %v861
        %v3021 = vunpack.c.l.b16 %v862
        %v3022 = vunpack.c.h.b16 %v862
        %v3023 = vunpack.c.l.b16 %v863
        %v3024 = vunpack.c.h.b16 %v863
        %v3025 = vunpack.c.l.b16 %v864
        %v3026 = vunpack.c.h.b16 %v864
        %v3027 = vunpack.c.l.b16 %v865
        %v3028 = vunpack.c.h.b16 %v865
        %v3029 = vunpack.c.l.b16 %v866
        %v3030 = vunpack.c.h.b16 %v866
        %v3031 = vunpack.c.l.b16 %v867
        %v3032 = vunpack.c.h.b16 %v867
        %v3033 = vunpack.c.l.b16 %v868
        %v3034 = vunpack.c.h.b16 %v868
        %v3035 = vunpack.c.l.b16 %v869
        %v3036 = vunpack.c.h.b16 %v869
        %v3037 = vunpack.c.l.b16 %v870
        %v3038 = vunpack.c.h.b16 %v870
        %v3039 = vunpack.c.l.b16 %v871
        %v3040 = vunpack.c.h.b16 %v871
        %v3041 = vunpack.c.l.b16 %v872
        %v3042 = vunpack.c.h.b16 %v872
        %v3043 = vunpack.c.l.b16 %v873
        %v3044 = vunpack.c.h.b16 %v873
        %v3045 = vunpack.c.l.b16 %v874
        %v3046 = vunpack.c.h.b16 %v874
        %v3047 = vunpack.c.l.b16 %v875
        %v3048 = vunpack.c.h.b16 %v875
        %v3049 = vunpack.c.l.b16 %v876
        %v3050 = vunpack.c.h.b16 %v876
        %v3051 = vunpack.c.l.b16 %v877
        %v3052 = vunpack.c.h.b16 %v877
        %v3053 = vunpack.c.l.b16 %v878
        %v3054 = vunpack.c.h.b16 %v878
        %v3055 = vunpack.c.l.b16 %v879
        %v3056 = vunpack.c.h.b16 %v879
        %v3057 = vunpack.c.l.b16 %v880
        %v3058 = vunpack.c.h.b16 %v880
        %v3059 = vunpack.c.l.b16 %v881
        %v3060 = vunpack.c.h.b16 %v881
        %v3061 = vunpack.c.l.b16 %v882
        %v3062 = vunpack.c.h.b16 %v882
        %v3063 = vunpack.c.l.b16 %v883
        %v3064 = vunpack.c.h.b16 %v883
        %v3065 = vunpack.c.l.b16 %v884
        %v3066 = vunpack.c.h.b16 %v884
        %v3067 = vunpack.c.l.b16 %v885
        %v3068 = vunpack.c.h.b16 %v885
        %v3069 = vunpack.c.l.b16 %v886
        %v3070 = vunpack.c.h.b16 %v886
        %v3071 = vunpack.c.l.b16 %v887
        %v3072 = vunpack.c.h.b16 %v887
        %v3073 = vunpack.c.l.b16 %v888
        %v3074 = vunpack.c.h.b16 %v888
        %v3075 = vunpack.c.l.b16 %v889
        %v3076 = vunpack.c.h.b16 %v889
        %v3077 = vunpack.c.l.b16 %v890
        %v3078 = vunpack.c.h.b16 %v890
        %v3079 = vunpack.c.l.b16 %v891
        %v3080 = vunpack.c.h.b16 %v891
        %v3081 = vunpack.c.l.b16 %v892
        %v3082 = vunpack.c.h.b16 %v892
        %v3083 = vunpack.c.l.b16 %v893
        %v3084 = vunpack.c.h.b16 %v893
        %v3085 = vunpack.c.l.b16 %v894
        %v3086 = vunpack.c.h.b16 %v894
        %v3087 = vunpack.c.l.b16 %v895
        %v3088 = vunpack.c.h.b16 %v895
        %v3089 = vunpack.c.l.b16 %v896
        %v3090 = vunpack.c.h.b16 %v896
        %v3091 = vunpack.c.l.b16 %v897
        %v3092 = vunpack.c.h.b16 %v897
        %v3093 = vunpack.c.l.b16 %v898
        %v3094 = vunpack.c.h.b16 %v898
        %v3095 = vunpack.c.l.b16 %v899
        %v3096 = vunpack.c.h.b16 %v899
        %v3097 = vunpack.c.l.b16 %v900
        %v3098 = vunpack.c.h.b16 %v900
        %v3099 = vunpack.c.l.b16 %v901
        %v3100 = vunpack.c.h.b16 %v901
        %v3101 = vunpack.c.l.b16 %v902
        %v3102 = vunpack.c.h.b16 %v902
        %v3103 = vunpack.c.l.b16 %v903
        %v3104 = vunpack.c.h.b16 %v903
        %v3105 = vunpack.c.l.b16 %v904
        %v3106 = vunpack.c.h.b16 %v904
        %v3107 = vunpack.c.l.b16 %v905
        %v3108 = vunpack.c.h.b16 %v905
        %v3109 = vunpack.c.l.b16 %v906
        %v3110 = vunpack.c.h.b16 %v906
        %v3111 = vunpack.c.l.b16 %v907
        %v3112 = vunpack.c.h.b16 %v907
        %v3113 = vunpack.c.l.b16 %v908
        %v3114 = vunpack.c.h.b16 %v908
        %v3115 = vunpack.c.l.b16 %v909
        %v3116 = vunpack.c.h.b16 %v909
        %v3117 = vunpack.c.l.b16 %v910
        %v3118 = vunpack.c.h.b16 %v910
        %v3119 = vunpack.c.l.b16 %v911
        %v3120 = vunpack.c.h.b16 %v911
        %v3121 = vunpack.c.l.b16 %v912
        %v3122 = vunpack.c.h.b16 %v912
        %v3123 = vunpack.c.l.b16 %v913
        %v3124 = vunpack.c.h.b16 %v913
        %v3125 = vunpack.c.l.b16 %v914
        %v3126 = vunpack.c.h.b16 %v914
        %v3127 = vunpack.c.l.b16 %v915
        %v3128 = vunpack.c.h.b16 %v915
        %v3129 = vunpack.c.l.b16 %v916
        %v3130 = vunpack.c.h.b16 %v916
        %v3131 = vunpack.c.l.b16 %v917
        %v3132 = vunpack.c.h.b16 %v917
        %v3133 = vunpack.c.l.b16 %v918
        %v3134 = vunpack.c.h.b16 %v918
        %v3135 = vunpack.c.l.b16 %v919
        %v3136 = vunpack.c.h.b16 %v919
        %v3137 = vunpack.c.l.b16 %v920
        %v3138 = vunpack.c.h.b16 %v920
        %v3139 = vunpack.c.l.b16 %v921
        %v3140 = vunpack.c.h.b16 %v921
        %v3141 = vunpack.c.l.b16 %v922
        %v3142 = vunpack.c.h.b16 %v922
        %v3143 = vunpack.c.l.b16 %v923
        %v3144 = vunpack.c.h.b16 %v923
        %v3145 = vunpack.c.l.b16 %v924
        %v3146 = vunpack.c.h.b16 %v924
        %v3147 = vunpack.c.l.b16 %v925
        %v3148 = vunpack.c.h.b16 %v925
        %v3149 = vunpack.c.l.b16 %v926
        %v3150 = vunpack.c.h.b16 %v926
        %v3151 = vunpack.c.l.b16 %v927
        %v3152 = vunpack.c.h.b16 %v927
        %v3153 = vunpack.c.l.b16 %v928
        %v3154 = vunpack.c.h.b16 %v928
        %v3155 = vunpack.c.l.b16 %v929
        %v3156 = vunpack.c.h.b16 %v929
        %v3157 = vunpack.c.l.b16 %v930
        %v3158 = vunpack.c.h.b16 %v930
        %v3159 = vunpack.c.l.b16 %v931
        %v3160 = vunpack.c.h.b16 %v931
        %v3161 = vunpack.c.l.b16 %v932
        %v3162 = vunpack.c.h.b16 %v932
        %v3163 = vunpack.c.l.b16 %v933
        %v3164 = vunpack.c.h.b16 %v933
        %v3165 = vunpack.c.l.b16 %v934
        %v3166 = vunpack.c.h.b16 %v934
        %v3167 = vunpack.c.l.b16 %v935
        %v3168 = vunpack.c.h.b16 %v935
        %v3169 = vunpack.c.l.b16 %v936
        %v3170 = vunpack.c.h.b16 %v936
        %v3171 = vunpack.c.l.b16 %v937
        %v3172 = vunpack.c.h.b16 %v937
        %v3173 = vunpack.c.l.b16 %v938
        %v3174 = vunpack.c.h.b16 %v938
        %v3175 = vunpack.c.l.b16 %v939
        %v3176 = vunpack.c.h.b16 %v939
        %v3177 = vunpack.c.l.b16 %v940
        %v3178 = vunpack.c.h.b16 %v940
        %v3179 = vunpack.c.l.b16 %v941
        %v3180 = vunpack.c.h.b16 %v941
        %v3181 = vunpack.c.l.b16 %v942
        %v3182 = vunpack.c.h.b16 %v942
        %v3183 = vunpack.c.l.b16 %v943
        %v3184 = vunpack.c.h.b16 %v943
        %v3185 = vunpack.c.l.b16 %v944
        %v3186 = vunpack.c.h.b16 %v944
        %v3187 = vunpack.c.l.b16 %v945
        %v3188 = vunpack.c.h.b16 %v945
        %v3189 = vunpack.c.l.b16 %v946
        %v3190 = vunpack.c.h.b16 %v946
        %v3191 = vunpack.c.l.b16 %v947
        %v3192 = vunpack.c.h.b16 %v947
        %v3193 = vunpack.c.l.b16 %v948
        %v3194 = vunpack.c.h.b16 %v948
        %v3195 = vunpack.c.l.b16 %v949
        %v3196 = vunpack.c.h.b16 %v949
        %v3197 = vunpack.c.l.b16 %v950
        %v3198 = vunpack.c.h.b16 %v950
        %v3199 = vunpack.c.l.b16 %v951
        %v3200 = vunpack.c.h.b16 %v951
        %v3201 = vunpack.c.l.b16 %v952
        %v3202 = vunpack.c.h.b16 %v952
        %v3203 = vunpack.c.l.b16 %v953
        %v3204 = vunpack.c.h.b16 %v953
        %v3205 = vunpack.c.l.b16 %v954
        %v3206 = vunpack.c.h.b16 %v954
        %v3207 = vunpack.c.l.b16 %v955
        %v3208 = vunpack.c.h.b16 %v955
        %v3209 = vunpack.c.l.b16 %v956
        %v3210 = vunpack.c.h.b16 %v956
        %v3211 = vunpack.c.l.b16 %v957
        %v3212 = vunpack.c.h.b16 %v957
        %v3213 = vunpack.c.l.b16 %v958
        %v3214 = vunpack.c.h.b16 %v958
        %v3215 = vunpack.c.l.b16 %v959
        %v3216 = vunpack.c.h.b16 %v959
        %v3217 = vunpack.c.l.b16 %v960
        %v3218 = vunpack.c.h.b16 %v960
        %v3219 = vunpack.c.l.b16 %v961
        %v3220 = vunpack.c.h.b16 %v961
        %v3221 = vunpack.c.l.b16 %v962
        %v3222 = vunpack.c.h.b16 %v962
        %v3223 = vunpack.c.l.b16 %v963
        %v3224 = vunpack.c.h.b16 %v963
        %v3225 = vunpack.c.l.b16 %v964
        %v3226 = vunpack.c.h.b16 %v964
        %v3227 = vunpack.c.l.b16 %v965
        %v3228 = vunpack.c.h.b16 %v965
        %v3229 = vunpack.c.l.b16 %v966
        %v3230 = vunpack.c.h.b16 %v966
        %v3231 = vunpack.c.l.b16 %v967
        %v3232 = vunpack.c.h.b16 %v967
        %v3233 = vunpack.c.l.b16 %v968
        %v3234 = vunpack.c.h.b16 %v968
        %v3235 = vunpack.c.l.b16 %v969
        %v3236 = vunpack.c.h.b16 %v969
        %v3237 = vunpack.c.l.b16 %v970
        %v3238 = vunpack.c.h.b16 %v970
        %v3239 = vunpack.c.l.b16 %v971
        %v3240 = vunpack.c.h.b16 %v971
        %v3241 = vunpack.c.l.b16 %v972
        %v3242 = vunpack.c.h.b16 %v972
        %v3243 = vunpack.c.l.b16 %v973
        %v3244 = vunpack.c.h.b16 %v973
        %v3245 = vunpack.c.l.b16 %v974
        %v3246 = vunpack.c.h.b16 %v974
        %v3247 = vunpack.c.l.b16 %v975
        %v3248 = vunpack.c.h.b16 %v975
        %v3249 = vunpack.c.l.b16 %v976
        %v3250 = vunpack.c.h.b16 %v976
        %v3251 = vunpack.c.l.b16 %v977
        %v3252 = vunpack.c.h.b16 %v977
        %v3253 = vunpack.c.l.b16 %v978
        %v3254 = vunpack.c.h.b16 %v978
        %v3255 = vunpack.c.l.b16 %v979
        %v3256 = vunpack.c.h.b16 %v979
        %v3257 = vunpack.c.l.b16 %v980
        %v3258 = vunpack.c.h.b16 %v980
        %v3259 = vunpack.c.l.b16 %v981
        %v3260 = vunpack.c.h.b16 %v981
        %v3261 = vunpack.c.l.b16 %v982
        %v3262 = vunpack.c.h.b16 %v982
        %v3263 = vunpack.c.l.b16 %v983
        %v3264 = vunpack.c.h.b16 %v983
        %v3265 = vunpack.c.l.b16 %v984
        %v3266 = vunpack.c.h.b16 %v984
        %v3267 = vunpack.c.l.b16 %v985
        %v3268 = vunpack.c.h.b16 %v985
        %v3269 = vunpack.c.l.b16 %v986
        %v3270 = vunpack.c.h.b16 %v986
        %v3271 = vunpack.c.l.b16 %v987
        %v3272 = vunpack.c.h.b16 %v987
        %v3273 = vunpack.c.l.b16 %v988
        %v3274 = vunpack.c.h.b16 %v988
        %v3275 = vunpack.c.l.b16 %v989
        %v3276 = vunpack.c.h.b16 %v989
        %v3277 = vunpack.c.l.b16 %v990
        %v3278 = vunpack.c.h.b16 %v990
        %v3279 = vunpack.c.l.b16 %v991
        %v3280 = vunpack.c.h.b16 %v991
        %v3281 = vunpack.c.l.b16 %v992
        %v3282 = vunpack.c.h.b16 %v992
        %v3283 = vunpack.c.l.b16 %v993
        %v3284 = vunpack.c.h.b16 %v993
        %v3285 = vunpack.c.l.b16 %v994
        %v3286 = vunpack.c.h.b16 %v994
        %v3287 = vunpack.c.l.b16 %v995
        %v3288 = vunpack.c.h.b16 %v995
        %v3289 = vunpack.c.l.b16 %v996
        %v3290 = vunpack.c.h.b16 %v996
        %v3291 = vunpack.c.l.b16 %v997
        %v3292 = vunpack.c.h.b16 %v997
        %v3293 = vunpack.c.l.b16 %v998
        %v3294 = vunpack.c.h.b16 %v998
        %v3295 = vunpack.c.l.b16 %v999
        %v3296 = vunpack.c.h.b16 %v999
        %v3297 = vunpack.c.l.b16 %v1000
        %v3298 = vunpack.c.h.b16 %v1000
        %v3299 = vunpack.c.l.b16 %v1001
        %v3300 = vunpack.c.h.b16 %v1001
        %v3301 = vunpack.c.l.b16 %v1002
        %v3302 = vunpack.c.h.b16 %v1002
        %v3303 = vunpack.c.l.b16 %v1003
        %v3304 = vunpack.c.h.b16 %v1003
        %v3305 = vunpack.c.l.b16 %v1004
        %v3306 = vunpack.c.h.b16 %v1004
        %v3307 = vunpack.c.l.b16 %v1005
        %v3308 = vunpack.c.h.b16 %v1005
        %v3309 = vunpack.c.l.b16 %v1006
        %v3310 = vunpack.c.h.b16 %v1006
        %v3311 = vunpack.c.l.b16 %v1007
        %v3312 = vunpack.c.h.b16 %v1007
        %v3313 = vunpack.c.l.b16 %v1008
        %v3314 = vunpack.c.h.b16 %v1008
        %v3315 = vunpack.c.l.b16 %v1009
        %v3316 = vunpack.c.h.b16 %v1009
        %v3317 = vunpack.c.l.b16 %v1010
        %v3318 = vunpack.c.h.b16 %v1010
        %v3319 = vunpack.c.l.b16 %v1011
        %v3320 = vunpack.c.h.b16 %v1011
        %v3321 = vunpack.c.l.b16 %v1012
        %v3322 = vunpack.c.h.b16 %v1012
        %v3323 = vunpack.c.l.b16 %v1013
        %v3324 = vunpack.c.h.b16 %v1013
        %v3325 = vunpack.c.l.b16 %v1014
        %v3326 = vunpack.c.h.b16 %v1014
        %v3327 = vunpack.c.l.b16 %v1015
        %v3328 = vunpack.c.h.b16 %v1015
        %v3329 = vunpack.c.l.b16 %v1016
        %v3330 = vunpack.c.h.b16 %v1016
        %v3331 = vunpack.c.l.b16 %v1017
        %v3332 = vunpack.c.h.b16 %v1017
        %v3333 = vunpack.c.l.b16 %v1018
        %v3334 = vunpack.c.h.b16 %v1018
        %v3335 = vunpack.c.l.b16 %v1019
        %v3336 = vunpack.c.h.b16 %v1019
        %v3337 = vunpack.c.l.b16 %v1020
        %v3338 = vunpack.c.h.b16 %v1020
        %v3339 = vunpack.c.l.b16 %v1021
        %v3340 = vunpack.c.h.b16 %v1021
        %v3341 = vunpack.c.l.b16 %v1022
        %v3342 = vunpack.c.h.b16 %v1022
        %v3343 = vunpack.c.l.b16 %v1023
        %v3344 = vunpack.c.h.b16 %v1023
        %v3345 = vunpack.c.l.b16 %v1024
        %v3346 = vunpack.c.h.b16 %v1024
        %v3347 = vunpack.c.l.b16 %v1025
        %v3348 = vunpack.c.h.b16 %v1025
        %v3349 = vunpack.c.l.b16 %v1026
        %v3350 = vunpack.c.h.b16 %v1026
        %v3351 = vunpack.c.l.b16 %v1027
        %v3352 = vunpack.c.h.b16 %v1027
        %v3353 = vunpack.c.l.b16 %v1028
        %v3354 = vunpack.c.h.b16 %v1028
        %v3355 = vunpack.c.l.b16 %v1029
        %v3356 = vunpack.c.h.b16 %v1029
        %v3357 = vunpack.c.l.b16 %v1030
        %v3358 = vunpack.c.h.b16 %v1030
        %v3359 = vunpack.c.l.b16 %v1031
        %v3360 = vunpack.c.h.b16 %v1031
        %v3361 = vunpack.c.l.b16 %v1032
        %v3362 = vunpack.c.h.b16 %v1032
        %v3363 = vunpack.c.l.b16 %v1033
        %v3364 = vunpack.c.h.b16 %v1033
        %v3365 = vunpack.c.l.b16 %v1034
        %v3366 = vunpack.c.h.b16 %v1034
        %v3367 = vunpack.c.l.b16 %v1035
        %v3368 = vunpack.c.h.b16 %v1035
        %v3369 = vunpack.c.l.b16 %v1036
        %v3370 = vunpack.c.h.b16 %v1036
        %v3371 = vunpack.c.l.b16 %v1037
        %v3372 = vunpack.c.h.b16 %v1037
        %v3373 = vunpack.c.l.b16 %v1038
        %v3374 = vunpack.c.h.b16 %v1038
        %v3375 = vunpack.c.l.b16 %v1039
        %v3376 = vunpack.c.h.b16 %v1039
        %v3377 = vunpack.c.l.b16 %v1040
        %v3378 = vunpack.c.h.b16 %v1040
        %v3379 = vunpack.c.l.b16 %v1041
        %v3380 = vunpack.c.h.b16 %v1041
        %v3381 = vunpack.c.l.b16 %v1042
        %v3382 = vunpack.c.h.b16 %v1042
        %v3383 = vunpack.c.l.b16 %v1043
        %v3384 = vunpack.c.h.b16 %v1043
        %v3385 = vunpack.c.l.b16 %v1044
        %v3386 = vunpack.c.h.b16 %v1044
        %v3387 = vunpack.c.l.b16 %v1045
        %v3388 = vunpack.c.h.b16 %v1045
        %v3389 = vunpack.c.l.b16 %v1046
        %v3390 = vunpack.c.h.b16 %v1046
        %v3391 = vunpack.c.l.b16 %v1047
        %v3392 = vunpack.c.h.b16 %v1047
        %v3393 = vunpack.c.l.b16 %v1048
        %v3394 = vunpack.c.h.b16 %v1048
        %v3395 = vunpack.c.l.b16 %v1049
        %v3396 = vunpack.c.h.b16 %v1049
        %v3397 = vunpack.c.l.b16 %v1050
        %v3398 = vunpack.c.h.b16 %v1050
        %v3399 = vunpack.c.l.b16 %v1051
        %v3400 = vunpack.c.h.b16 %v1051
        %v3401 = vunpack.c.l.b16 %v1052
        %v3402 = vunpack.c.h.b16 %v1052
        %v3403 = vunpack.c.l.b16 %v1053
        %v3404 = vunpack.c.h.b16 %v1053
        %v3405 = vunpack.c.l.b16 %v1054
        %v3406 = vunpack.c.h.b16 %v1054
        %v3407 = vunpack.c.l.b16 %v1055
        %v3408 = vunpack.c.h.b16 %v1055
        %v3409 = vunpack.c.l.b16 %v1056
        %v3410 = vunpack.c.h.b16 %v1056
        %v3411 = vunpack.c.l.b16 %v1057
        %v3412 = vunpack.c.h.b16 %v1057
        %v3413 = vunpack.c.l.b16 %v1058
        %v3414 = vunpack.c.h.b16 %v1058
        %v3415 = vunpack.c.l.b16 %v1059
        %v3416 = vunpack.c.h.b16 %v1059
        %v3417 = vunpack.c.l.b16 %v1060
        %v3418 = vunpack.c.h.b16 %v1060
        %v3419 = vunpack.c.l.b16 %v1061
        %v3420 = vunpack.c.h.b16 %v1061
        %v3421 = vunpack.c.l.b16 %v1062
        %v3422 = vunpack.c.h.b16 %v1062
        %v3423 = vunpack.c.l.b16 %v1063
        %v3424 = vunpack.c.h.b16 %v1063
        %v3425 = vunpack.c.l.b16 %v1064
        %v3426 = vunpack.c.h.b16 %v1064
        %v3427 = vunpack.c.l.b16 %v1065
        %v3428 = vunpack.c.h.b16 %v1065
        %v3429 = vunpack.c.l.b16 %v1066
        %v3430 = vunpack.c.h.b16 %v1066
        %v3431 = vunpack.c.l.b16 %v1067
        %v3432 = vunpack.c.h.b16 %v1067
        %v3433 = vunpack.c.l.b16 %v1068
        %v3434 = vunpack.c.h.b16 %v1068
        %v3435 = vunpack.c.l.b16 %v1069
        %v3436 = vunpack.c.h.b16 %v1069
        %v3437 = vunpack.c.l.b16 %v1070
        %v3438 = vunpack.c.h.b16 %v1070
        %v3439 = vunpack.c.l.b16 %v1071
        %v3440 = vunpack.c.h.b16 %v1071
        %v3441 = vunpack.c.l.b16 %v1072
        %v3442 = vunpack.c.h.b16 %v1072
        %v3443 = vunpack.c.l.b16 %v1073
        %v3444 = vunpack.c.h.b16 %v1073
        %v3445 = vunpack.c.l.b16 %v1074
        %v3446 = vunpack.c.h.b16 %v1074
        %v3447 = vunpack.c.l.b16 %v1075
        %v3448 = vunpack.c.h.b16 %v1075
        %v3449 = vunpack.c.l.b16 %v1076
        %v3450 = vunpack.c.h.b16 %v1076
        %v3451 = vunpack.c.l.b16 %v1077
        %v3452 = vunpack.c.h.b16 %v1077
        %v3453 = vunpack.c.l.b16 %v1078
        %v3454 = vunpack.c.h.b16 %v1078
        %v3455 = vunpack.c.l.b16 %v1079
        %v3456 = vunpack.c.h.b16 %v1079
        %v3457 = vunpack.c.l.b16 %v1080
        %v3458 = vunpack.c.h.b16 %v1080
        %v3459 = vunpack.c.l.b16 %v1081
        %v3460 = vunpack.c.h.b16 %v1081
        %v3461 = vunpack.c.l.b16 %v1082
        %v3462 = vunpack.c.h.b16 %v1082
        %v3463 = vunpack.c.l.b16 %v1083
        %v3464 = vunpack.c.h.b16 %v1083
        %v3465 = vunpack.c.l.b16 %v1084
        %v3466 = vunpack.c.h.b16 %v1084
        %v3467 = vunpack.c.l.b16 %v1085
        %v3468 = vunpack.c.h.b16 %v1085
        %v3469 = vunpack.c.l.b16 %v1086
        %v3470 = vunpack.c.h.b16 %v1086
        %v3471 = vunpack.c.l.b16 %v1087
        %v3472 = vunpack.c.h.b16 %v1087
        %v3473 = vunpack.c.l.b16 %v1088
        %v3474 = vunpack.c.h.b16 %v1088
        %v3475 = vunpack.c.l.b16 %v1089
        %v3476 = vunpack.c.h.b16 %v1089
        %v3477 = vunpack.c.l.b16 %v1090
        %v3478 = vunpack.c.h.b16 %v1090
        %v3479 = vunpack.c.l.b16 %v1091
        %v3480 = vunpack.c.h.b16 %v1091
        %v3481 = vunpack.c.l.b16 %v1092
        %v3482 = vunpack.c.h.b16 %v1092
        %v3483 = vunpack.c.l.b16 %v1093
        %v3484 = vunpack.c.h.b16 %v1093
        %v3485 = vunpack.c.l.b16 %v1094
        %v3486 = vunpack.c.h.b16 %v1094
        %v3487 = vunpack.c.l.b16 %v1095
        %v3488 = vunpack.c.h.b16 %v1095
        %v3489 = vunpack.c.l.b16 %v1096
        %v3490 = vunpack.c.h.b16 %v1096
        %v3491 = vunpack.c.l.b16 %v1097
        %v3492 = vunpack.c.h.b16 %v1097
        %v3493 = vunpack.c.l.b16 %v1098
        %v3494 = vunpack.c.h.b16 %v1098
        %v3495 = vunpack.c.l.b16 %v1099
        %v3496 = vunpack.c.h.b16 %v1099
        %v3497 = vunpack.c.l.b16 %v1100
        %v3498 = vunpack.c.h.b16 %v1100
        %v3499 = vunpack.c.l.b16 %v1101
        %v3500 = vunpack.c.h.b16 %v1101
        %v3501 = vunpack.c.l.b16 %v1102
        %v3502 = vunpack.c.h.b16 %v1102
        %v3503 = vunpack.c.l.b16 %v1103
        %v3504 = vunpack.c.h.b16 %v1103
        %v3505 = vunpack.c.l.b16 %v1104
        %v3506 = vunpack.c.h.b16 %v1104
        %v3507 = vunpack.c.l.b16 %v1105
        %v3508 = vunpack.c.h.b16 %v1105
        %v3509 = vunpack.c.l.b16 %v1106
        %v3510 = vunpack.c.h.b16 %v1106
        %v3511 = vunpack.c.l.b16 %v1107
        %v3512 = vunpack.c.h.b16 %v1107
        %v3513 = vunpack.c.l.b16 %v1108
        %v3514 = vunpack.c.h.b16 %v1108
        %v3515 = vunpack.c.l.b16 %v1109
        %v3516 = vunpack.c.h.b16 %v1109
        %v3517 = vunpack.c.l.b16 %v1110
        %v3518 = vunpack.c.h.b16 %v1110
        %v3519 = vunpack.c.l.b16 %v1111
        %v3520 = vunpack.c.h.b16 %v1111
        %v3521 = vunpack.c.l.b16 %v1112
        %v3522 = vunpack.c.h.b16 %v1112
        %v3523 = vunpack.c.l.b16 %v1113
        %v3524 = vunpack.c.h.b16 %v1113
        %v3525 = vunpack.c.l.b16 %v1114
        %v3526 = vunpack.c.h.b16 %v1114
        %v3527 = vunpack.c.l.b16 %v1115
        %v3528 = vunpack.c.h.b16 %v1115
        %v3529 = vunpack.c.l.b16 %v1116
        %v3530 = vunpack.c.h.b16 %v1116
        %v3531 = vunpack.c.l.b16 %v1117
        %v3532 = vunpack.c.h.b16 %v1117
        %v3533 = vunpack.c.l.b16 %v1118
        %v3534 = vunpack.c.h.b16 %v1118
        %v3535 = vunpack.c.l.b16 %v1119
        %v3536 = vunpack.c.h.b16 %v1119
        %v3537 = vunpack.c.l.b16 %v1120
        %v3538 = vunpack.c.h.b16 %v1120
        %v3539 = vunpack.c.l.b16 %v1121
        %v3540 = vunpack.c.h.b16 %v1121
        %v3541 = vunpack.c.l.b16 %v1122
        %v3542 = vunpack.c.h.b16 %v1122
        %v3543 = vunpack.c.l.b16 %v1123
        %v3544 = vunpack.c.h.b16 %v1123
        %v3545 = vunpack.c.l.b16 %v1124
        %v3546 = vunpack.c.h.b16 %v1124
        %v3547 = vunpack.c.l.b16 %v1125
        %v3548 = vunpack.c.h.b16 %v1125
        %v3549 = vunpack.c.l.b16 %v1126
        %v3550 = vunpack.c.h.b16 %v1126
        %v3551 = vunpack.c.l.b16 %v1127
        %v3552 = vunpack.c.h.b16 %v1127
        %v3553 = vunpack.c.l.b16 %v1128
        %v3554 = vunpack.c.h.b16 %v1128
        %v3555 = vunpack.c.l.b16 %v1129
        %v3556 = vunpack.c.h.b16 %v1129
        %v3557 = vunpack.c.l.b16 %v1130
        %v3558 = vunpack.c.h.b16 %v1130
        %v3559 = vunpack.c.l.b16 %v1131
        %v3560 = vunpack.c.h.b16 %v1131
        %v3561 = vunpack.c.l.b16 %v1132
        %v3562 = vunpack.c.h.b16 %v1132
        %v3563 = vunpack.c.l.b16 %v1133
        %v3564 = vunpack.c.h.b16 %v1133
        %v3565 = vunpack.c.l.b16 %v1134
        %v3566 = vunpack.c.h.b16 %v1134
        %v3567 = vunpack.c.l.b16 %v1135
        %v3568 = vunpack.c.h.b16 %v1135
        %v3569 = vunpack.c.l.b16 %v1136
        %v3570 = vunpack.c.h.b16 %v1136
        %v3571 = vunpack.c.l.b16 %v1137
        %v3572 = vunpack.c.h.b16 %v1137
        %v3573 = vunpack.c.l.b16 %v1138
        %v3574 = vunpack.c.h.b16 %v1138
        %v3575 = vunpack.c.l.b16 %v1139
        %v3576 = vunpack.c.h.b16 %v1139
        %v3577 = vunpack.c.l.b16 %v1140
        %v3578 = vunpack.c.h.b16 %v1140
        %v3579 = vunpack.c.l.b16 %v1141
        %v3580 = vunpack.c.h.b16 %v1141
        %v3581 = vunpack.c.l.b16 %v1142
        %v3582 = vunpack.c.h.b16 %v1142
        %v3583 = vunpack.c.l.b16 %v1143
        %v3584 = vunpack.c.h.b16 %v1143
        %v3585 = vunpack.c.l.b16 %v1144
        %v3586 = vunpack.c.h.b16 %v1144
        %v3587 = vunpack.c.l.b16 %v1145
        %v3588 = vunpack.c.h.b16 %v1145
        %v3589 = vunpack.c.l.b16 %v1146
        %v3590 = vunpack.c.h.b16 %v1146
        %v3591 = vunpack.c.l.b16 %v1147
        %v3592 = vunpack.c.h.b16 %v1147
        %v3593 = vunpack.c.l.b16 %v1148
        %v3594 = vunpack.c.h.b16 %v1148
        %v3595 = vunpack.c.l.b16 %v1149
        %v3596 = vunpack.c.h.b16 %v1149
        %v3597 = vunpack.c.l.b16 %v1150
        %v3598 = vunpack.c.h.b16 %v1150
        %v3599 = vunpack.c.l.b16 %v1151
        %v3600 = vunpack.c.h.b16 %v1151
        %v3601 = vunpack.c.l.b16 %v1152
        %v3602 = vunpack.c.h.b16 %v1152
        %v3603 = vunpack.c.l.b16 %v1153
        %v3604 = vunpack.c.h.b16 %v1153
        %v3605 = vunpack.c.l.b16 %v1154
        %v3606 = vunpack.c.h.b16 %v1154
        %v3607 = vunpack.c.l.b16 %v1155
        %v3608 = vunpack.c.h.b16 %v1155
        %v3609 = vunpack.c.l.b16 %v1156
        %v3610 = vunpack.c.h.b16 %v1156
        %v3611 = vunpack.c.l.b16 %v1157
        %v3612 = vunpack.c.h.b16 %v1157
        %v3613 = vunpack.c.l.b16 %v1158
        %v3614 = vunpack.c.h.b16 %v1158
        %v3615 = vunpack.c.l.b16 %v1159
        %v3616 = vunpack.c.h.b16 %v1159
        %v3617 = vunpack.c.l.b16 %v1160
        %v3618 = vunpack.c.h.b16 %v1160
        %v3619 = vunpack.c.l.b16 %v1161
        %v3620 = vunpack.c.h.b16 %v1161
        %v3621 = vunpack.c.l.b16 %v1162
        %v3622 = vunpack.c.h.b16 %v1162
        %v3623 = vunpack.c.l.b16 %v1163
        %v3624 = vunpack.c.h.b16 %v1163
        %v3625 = vunpack.c.l.b16 %v1164
        %v3626 = vunpack.c.h.b16 %v1164
        %v3627 = vunpack.c.l.b16 %v1165
        %v3628 = vunpack.c.h.b16 %v1165
        %v3629 = vunpack.c.l.b16 %v1166
        %v3630 = vunpack.c.h.b16 %v1166
        %v3631 = vunpack.c.l.b16 %v1167
        %v3632 = vunpack.c.h.b16 %v1167
        %v3633 = vunpack.c.l.b16 %v1168
        %v3634 = vunpack.c.h.b16 %v1168
        %v3635 = vunpack.c.l.b16 %v1169
        %v3636 = vunpack.c.h.b16 %v1169
        %v3637 = vunpack.c.l.b16 %v1170
        %v3638 = vunpack.c.h.b16 %v1170
        %v3639 = vunpack.c.l.b16 %v1171
        %v3640 = vunpack.c.h.b16 %v1171
        %v3641 = vunpack.c.l.b16 %v1172
        %v3642 = vunpack.c.h.b16 %v1172
        %v3643 = vunpack.c.l.b16 %v1173
        %v3644 = vunpack.c.h.b16 %v1173
        %v3645 = vunpack.c.l.b16 %v1174
        %v3646 = vunpack.c.h.b16 %v1174
        %v3647 = vunpack.c.l.b16 %v1175
        %v3648 = vunpack.c.h.b16 %v1175
        %v3649 = vunpack.c.l.b16 %v1176
        %v3650 = vunpack.c.h.b16 %v1176
        %v3651 = vunpack.c.l.b16 %v1177
        %v3652 = vunpack.c.h.b16 %v1177
        %v3653 = vunpack.c.l.b16 %v1178
        %v3654 = vunpack.c.h.b16 %v1178
        %v3655 = vunpack.c.l.b16 %v1179
        %v3656 = vunpack.c.h.b16 %v1179
        %v3657 = vunpack.c.l.b16 %v1180
        %v3658 = vunpack.c.h.b16 %v1180
        %v3659 = vunpack.c.l.b16 %v1181
        %v3660 = vunpack.c.h.b16 %v1181
        %v3661 = vunpack.c.l.b16 %v1182
        %v3662 = vunpack.c.h.b16 %v1182
        %v3663 = vunpack.c.l.b16 %v1183
        %v3664 = vunpack.c.h.b16 %v1183
        %v3665 = vunpack.c.l.b16 %v1184
        %v3666 = vunpack.c.h.b16 %v1184
        %v3667 = vunpack.c.l.b16 %v1185
        %v3668 = vunpack.c.h.b16 %v1185
        %v3669 = vunpack.c.l.b16 %v1186
        %v3670 = vunpack.c.h.b16 %v1186
        %v3671 = vunpack.c.l.b16 %v1187
        %v3672 = vunpack.c.h.b16 %v1187
        %v3673 = vunpack.c.l.b16 %v1188
        %v3674 = vunpack.c.h.b16 %v1188
        %v3675 = vunpack.c.l.b16 %v1189
        %v3676 = vunpack.c.h.b16 %v1189
        %v3677 = vunpack.c.l.b16 %v1190
        %v3678 = vunpack.c.h.b16 %v1190
        %v3679 = vunpack.c.l.b16 %v1191
        %v3680 = vunpack.c.h.b16 %v1191
        %v3681 = vunpack.c.l.b16 %v1192
        %v3682 = vunpack.c.h.b16 %v1192
        %v3683 = vunpack.c.l.b16 %v1193
        %v3684 = vunpack.c.h.b16 %v1193
        %v3685 = vunpack.c.l.b16 %v1194
        %v3686 = vunpack.c.h.b16 %v1194
        %v3687 = vunpack.c.l.b16 %v1195
        %v3688 = vunpack.c.h.b16 %v1195
        %v3689 = vunpack.c.l.b16 %v1196
        %v3690 = vunpack.c.h.b16 %v1196
        %v3691 = vunpack.c.l.b16 %v1197
        %v3692 = vunpack.c.h.b16 %v1197
        %v3693 = vunpack.c.l.b16 %v1198
        %v3694 = vunpack.c.h.b16 %v1198
        %v3695 = vunpack.c.l.b16 %v1199
        %v3696 = vunpack.c.h.b16 %v1199
        %v3697 = vunpack.c.l.b16 %v1200
        %v3698 = vunpack.c.h.b16 %v1200
        %v3699 = vunpack.c.l.b16 %v1201
        %v3700 = vunpack.c.h.b16 %v1201
        %v3701 = vunpack.c.l.b16 %v1202
        %v3702 = vunpack.c.h.b16 %v1202
        %v3703 = vunpack.c.l.b16 %v1203
        %v3704 = vunpack.c.h.b16 %v1203
        %v3705 = vunpack.c.l.b16 %v1204
        %v3706 = vunpack.c.h.b16 %v1204
        %v3707 = vunpack.c.l.b16 %v1205
        %v3708 = vunpack.c.h.b16 %v1205
        %v3709 = vunpack.c.l.b16 %v1206
        %v3710 = vunpack.c.h.b16 %v1206
        %v3711 = vunpack.c.l.b16 %v1207
        %v3712 = vunpack.c.h.b16 %v1207
        %v3713 = vunpack.c.l.b16 %v1208
        %v3714 = vunpack.c.h.b16 %v1208
        %v3715 = vunpack.c.l.b16 %v1209
        %v3716 = vunpack.c.h.b16 %v1209
        %v3717 = vunpack.c.l.b16 %v1210
        %v3718 = vunpack.c.h.b16 %v1210
        %v3719 = vunpack.c.l.b16 %v1211
        %v3720 = vunpack.c.h.b16 %v1211
        %v3721 = vunpack.c.l.b16 %v1212
        %v3722 = vunpack.c.h.b16 %v1212
        %v3723 = vunpack.c.l.b16 %v1213
        %v3724 = vunpack.c.h.b16 %v1213
        %v3725 = vunpack.c.l.b16 %v1214
        %v3726 = vunpack.c.h.b16 %v1214
        %v3727 = vunpack.c.l.b16 %v1215
        %v3728 = vunpack.c.h.b16 %v1215
        %v3729 = vunpack.c.l.b16 %v1216
        %v3730 = vunpack.c.h.b16 %v1216
        %v3731 = vunpack.c.l.b16 %v1217
        %v3732 = vunpack.c.h.b16 %v1217
        %v3733 = vunpack.c.l.b16 %v1218
        %v3734 = vunpack.c.h.b16 %v1218
        %v3735 = vunpack.c.l.b16 %v1219
        %v3736 = vunpack.c.h.b16 %v1219
        %v3737 = vunpack.c.l.b16 %v1220
        %v3738 = vunpack.c.h.b16 %v1220
        %v3739 = vunpack.c.l.b16 %v1221
        %v3740 = vunpack.c.h.b16 %v1221
        %v3741 = vunpack.c.l.b16 %v1222
        %v3742 = vunpack.c.h.b16 %v1222
        %v3743 = vunpack.c.l.b16 %v1223
        %v3744 = vunpack.c.h.b16 %v1223
        %v3745 = vunpack.c.l.b16 %v1224
        %v3746 = vunpack.c.h.b16 %v1224
        %v3747 = vunpack.c.l.b16 %v1225
        %v3748 = vunpack.c.h.b16 %v1225
        %v3749 = vunpack.c.l.b16 %v1226
        %v3750 = vunpack.c.h.b16 %v1226
        %v3751 = vunpack.c.l.b16 %v1227
        %v3752 = vunpack.c.h.b16 %v1227
        %v3753 = vunpack.c.l.b16 %v1228
        %v3754 = vunpack.c.h.b16 %v1228
        %v3755 = vpack.c.b16 %v2159, %v2155
        %v3756 = vpack.c.b16 %v2160, %v2156
        %v3757 = vpack.c.b16 %v2161, %v2157
        %v3758 = vpack.c.b16 %v2162, %v2158
        %v3759 = vpack.c.b16 %v2167, %v2163
        %v3760 = vpack.c.b16 %v2168, %v2164
        %v3761 = vpack.c.b16 %v2169, %v2165
        %v3762 = vpack.c.b16 %v2170, %v2166
        %v3763 = vpack.c.b16 %v2175, %v2171
        %v3764 = vpack.c.b16 %v2176, %v2172
        %v3765 = vpack.c.b16 %v2177, %v2173
        %v3766 = vpack.c.b16 %v2178, %v2174
        %v3767 = vpack.c.b16 %v2183, %v2179
        %v3768 = vpack.c.b16 %v2184, %v2180
        %v3769 = vpack.c.b16 %v2185, %v2181
        %v3770 = vpack.c.b16 %v2186, %v2182
        %v3771 = vpack.c.b16 %v2191, %v2187
        %v3772 = vpack.c.b16 %v2192, %v2188
        %v3773 = vpack.c.b16 %v2193, %v2189
        %v3774 = vpack.c.b16 %v2194, %v2190
        %v3775 = vpack.c.b16 %v2199, %v2195
        %v3776 = vpack.c.b16 %v2200, %v2196
        %v3777 = vpack.c.b16 %v2201, %v2197
        %v3778 = vpack.c.b16 %v2202, %v2198
        %v3779 = vpack.c.b16 %v2207, %v2203
        %v3780 = vpack.c.b16 %v2208, %v2204
        %v3781 = vpack.c.b16 %v2209, %v2205
        %v3782 = vpack.c.b16 %v2210, %v2206
        %v3783 = vpack.c.b16 %v2215, %v2211
        %v3784 = vpack.c.b16 %v2216, %v2212
        %v3785 = vpack.c.b16 %v2217, %v2213
        %v3786 = vpack.c.b16 %v2218, %v2214
        %v3787 = vpack.c.b16 %v2223, %v2219
        %v3788 = vpack.c.b16 %v2224, %v2220
        %v3789 = vpack.c.b16 %v2225, %v2221
        %v3790 = vpack.c.b16 %v2226, %v2222
        %v3791 = vpack.c.b16 %v2231, %v2227
        %v3792 = vpack.c.b16 %v2232, %v2228
        %v3793 = vpack.c.b16 %v2233, %v2229
        %v3794 = vpack.c.b16 %v2234, %v2230
        %v3795 = vpack.c.b16 %v2239, %v2235
        %v3796 = vpack.c.b16 %v2240, %v2236
        %v3797 = vpack.c.b16 %v2241, %v2237
        %v3798 = vpack.c.b16 %v2242, %v2238
        %v3799 = vpack.c.b16 %v2247, %v2243
        %v3800 = vpack.c.b16 %v2248, %v2244
        %v3801 = vpack.c.b16 %v2249, %v2245
        %v3802 = vpack.c.b16 %v2250, %v2246
        %v3803 = vpack.c.b16 %v2255, %v2251
        %v3804 = vpack.c.b16 %v2256, %v2252
        %v3805 = vpack.c.b16 %v2257, %v2253
        %v3806 = vpack.c.b16 %v2258, %v2254
        %v3807 = vpack.c.b16 %v2263, %v2259
        %v3808 = vpack.c.b16 %v2264, %v2260
        %v3809 = vpack.c.b16 %v2265, %v2261
        %v3810 = vpack.c.b16 %v2266, %v2262
        %v3811 = vpack.c.b16 %v2271, %v2267
        %v3812 = vpack.c.b16 %v2272, %v2268
        %v3813 = vpack.c.b16 %v2273, %v2269
        %v3814 = vpack.c.b16 %v2274, %v2270
        %v3815 = vpack.c.b16 %v2279, %v2275
        %v3816 = vpack.c.b16 %v2280, %v2276
        %v3817 = vpack.c.b16 %v2281, %v2277
        %v3818 = vpack.c.b16 %v2282, %v2278
        %v3819 = vpack.c.b16 %v2287, %v2283
        %v3820 = vpack.c.b16 %v2288, %v2284
        %v3821 = vpack.c.b16 %v2289, %v2285
        %v3822 = vpack.c.b16 %v2290, %v2286
        %v3823 = vpack.c.b16 %v2295, %v2291
        %v3824 = vpack.c.b16 %v2296, %v2292
        %v3825 = vpack.c.b16 %v2297, %v2293
        %v3826 = vpack.c.b16 %v2298, %v2294
        %v3827 = vpack.c.b16 %v2303, %v2299
        %v3828 = vpack.c.b16 %v2304, %v2300
        %v3829 = vpack.c.b16 %v2305, %v2301
        %v3830 = vpack.c.b16 %v2306, %v2302
        %v3831 = vpack.c.b16 %v2311, %v2307
        %v3832 = vpack.c.b16 %v2312, %v2308
        %v3833 = vpack.c.b16 %v2313, %v2309
        %v3834 = vpack.c.b16 %v2314, %v2310
        %v3835 = vpack.c.b16 %v2319, %v2315
        %v3836 = vpack.c.b16 %v2320, %v2316
        %v3837 = vpack.c.b16 %v2321, %v2317
        %v3838 = vpack.c.b16 %v2322, %v2318
        %v3839 = vpack.c.b16 %v2327, %v2323
        %v3840 = vpack.c.b16 %v2328, %v2324
        %v3841 = vpack.c.b16 %v2329, %v2325
        %v3842 = vpack.c.b16 %v2330, %v2326
        %v3843 = vpack.c.b16 %v2335, %v2331
        %v3844 = vpack.c.b16 %v2336, %v2332
        %v3845 = vpack.c.b16 %v2337, %v2333
        %v3846 = vpack.c.b16 %v2338, %v2334
        %v3847 = vpack.c.b16 %v2343, %v2339
        %v3848 = vpack.c.b16 %v2344, %v2340
        %v3849 = vpack.c.b16 %v2345, %v2341
        %v3850 = vpack.c.b16 %v2346, %v2342
        %v3851 = vpack.c.b16 %v2351, %v2347
        %v3852 = vpack.c.b16 %v2352, %v2348
        %v3853 = vpack.c.b16 %v2353, %v2349
        %v3854 = vpack.c.b16 %v2354, %v2350
        %v3855 = vpack.c.b16 %v2359, %v2355
        %v3856 = vpack.c.b16 %v2360, %v2356
        %v3857 = vpack.c.b16 %v2361, %v2357
        %v3858 = vpack.c.b16 %v2362, %v2358
        %v3859 = vpack.c.b16 %v2367, %v2363
        %v3860 = vpack.c.b16 %v2368, %v2364
        %v3861 = vpack.c.b16 %v2369, %v2365
        %v3862 = vpack.c.b16 %v2370, %v2366
        %v3863 = vpack.c.b16 %v2375, %v2371
        %v3864 = vpack.c.b16 %v2376, %v2372
        %v3865 = vpack.c.b16 %v2377, %v2373
        %v3866 = vpack.c.b16 %v2378, %v2374
        %v3867 = vpack.c.b16 %v2383, %v2379
        %v3868 = vpack.c.b16 %v2384, %v2380
        %v3869 = vpack.c.b16 %v2385, %v2381
        %v3870 = vpack.c.b16 %v2386, %v2382
        %v3871 = vpack.c.b16 %v2391, %v2387
        %v3872 = vpack.c.b16 %v2392, %v2388
        %v3873 = vpack.c.b16 %v2393, %v2389
        %v3874 = vpack.c.b16 %v2394, %v2390
        %v3875 = vpack.c.b16 %v2399, %v2395
        %v3876 = vpack.c.b16 %v2400, %v2396
        %v3877 = vpack.c.b16 %v2401, %v2397
        %v3878 = vpack.c.b16 %v2402, %v2398
        %v3879 = vpack.c.b16 %v2407, %v2403
        %v3880 = vpack.c.b16 %v2408, %v2404
        %v3881 = vpack.c.b16 %v2409, %v2405
        %v3882 = vpack.c.b16 %v2410, %v2406
        %v3883 = vpack.c.b16 %v2415, %v2411
        %v3884 = vpack.c.b16 %v2416, %v2412
        %v3885 = vpack.c.b16 %v2417, %v2413
        %v3886 = vpack.c.b16 %v2418, %v2414
        %v3887 = vpack.c.b16 %v2423, %v2419
        %v3888 = vpack.c.b16 %v2424, %v2420
        %v3889 = vpack.c.b16 %v2425, %v2421
        %v3890 = vpack.c.b16 %v2426, %v2422
        %v3891 = vpack.c.b16 %v2431, %v2427
        %v3892 = vpack.c.b16 %v2432, %v2428
        %v3893 = vpack.c.b16 %v2433, %v2429
        %v3894 = vpack.c.b16 %v2434, %v2430
        %v3895 = vpack.c.b16 %v2439, %v2435
        %v3896 = vpack.c.b16 %v2440, %v2436
        %v3897 = vpack.c.b16 %v2441, %v2437
        %v3898 = vpack.c.b16 %v2442, %v2438
        %v3899 = vpack.c.b16 %v2447, %v2443
        %v3900 = vpack.c.b16 %v2448, %v2444
        %v3901 = vpack.c.b16 %v2449, %v2445
        %v3902 = vpack.c.b16 %v2450, %v2446
        %v3903 = vpack.c.b16 %v2455, %v2451
        %v3904 = vpack.c.b16 %v2456, %v2452
        %v3905 = vpack.c.b16 %v2457, %v2453
        %v3906 = vpack.c.b16 %v2458, %v2454
        %v3907 = vpack.c.b16 %v2463, %v2459
        %v3908 = vpack.c.b16 %v2464, %v2460
        %v3909 = vpack.c.b16 %v2465, %v2461
        %v3910 = vpack.c.b16 %v2466, %v2462
        %v3911 = vpack.c.b16 %v2471, %v2467
        %v3912 = vpack.c.b16 %v2472, %v2468
        %v3913 = vpack.c.b16 %v2473, %v2469
        %v3914 = vpack.c.b16 %v2474, %v2470
        %v3915 = vpack.c.b16 %v2479, %v2475
        %v3916 = vpack.c.b16 %v2480, %v2476
        %v3917 = vpack.c.b16 %v2481, %v2477
        %v3918 = vpack.c.b16 %v2482, %v2478
        %v3919 = vpack.c.b16 %v2487, %v2483
        %v3920 = vpack.c.b16 %v2488, %v2484
        %v3921 = vpack.c.b16 %v2489, %v2485
        %v3922 = vpack.c.b16 %v2490, %v2486
        %v3923 = vpack.c.b16 %v2495, %v2491
        %v3924 = vpack.c.b16 %v2496, %v2492
        %v3925 = vpack.c.b16 %v2497, %v2493
        %v3926 = vpack.c.b16 %v2498, %v2494
        %v3927 = vpack.c.b16 %v2503, %v2499
        %v3928 = vpack.c.b16 %v2504, %v2500
        %v3929 = vpack.c.b16 %v2505, %v2501
        %v3930 = vpack.c.b16 %v2506, %v2502
        %v3931 = vpack.c.b16 %v2511, %v2507
        %v3932 = vpack.c.b16 %v2512, %v2508
        %v3933 = vpack.c.b16 %v2513, %v2509
        %v3934 = vpack.c.b16 %v2514, %v2510
        %v3935 = vpack.c.b16 %v2519, %v2515
        %v3936 = vpack.c.b16 %v2520, %v2516
        %v3937 = vpack.c.b16 %v2521, %v2517
        %v3938 = vpack.c.b16 %v2522, %v2518
        %v3939 = vpack.c.b16 %v2527, %v2523
        %v3940 = vpack.c.b16 %v2528, %v2524
        %v3941 = vpack.c.b16 %v2529, %v2525
        %v3942 = vpack.c.b16 %v2530, %v2526
        %v3943 = vpack.c.b16 %v2535, %v2531
        %v3944 = vpack.c.b16 %v2536, %v2532
        %v3945 = vpack.c.b16 %v2537, %v2533
        %v3946 = vpack.c.b16 %v2538, %v2534
        %v3947 = vpack.c.b16 %v2543, %v2539
        %v3948 = vpack.c.b16 %v2544, %v2540
        %v3949 = vpack.c.b16 %v2545, %v2541
        %v3950 = vpack.c.b16 %v2546, %v2542
        %v3951 = vpack.c.b16 %v2551, %v2547
        %v3952 = vpack.c.b16 %v2552, %v2548
        %v3953 = vpack.c.b16 %v2553, %v2549
        %v3954 = vpack.c.b16 %v2554, %v2550
        %v3955 = vpack.c.b16 %v2559, %v2555
        %v3956 = vpack.c.b16 %v2560, %v2556
        %v3957 = vpack.c.b16 %v2561, %v2557
        %v3958 = vpack.c.b16 %v2562, %v2558
        %v3959 = vpack.c.b16 %v2567, %v2563
        %v3960 = vpack.c.b16 %v2568, %v2564
        %v3961 = vpack.c.b16 %v2569, %v2565
        %v3962 = vpack.c.b16 %v2570, %v2566
        %v3963 = vpack.c.b16 %v2575, %v2571
        %v3964 = vpack.c.b16 %v2576, %v2572
        %v3965 = vpack.c.b16 %v2577, %v2573
        %v3966 = vpack.c.b16 %v2578, %v2574
        %v3967 = vpack.c.b16 %v2583, %v2579
        %v3968 = vpack.c.b16 %v2584, %v2580
        %v3969 = vpack.c.b16 %v2585, %v2581
        %v3970 = vpack.c.b16 %v2586, %v2582
        %v3971 = vpack.c.b16 %v2591, %v2587
        %v3972 = vpack.c.b16 %v2592, %v2588
        %v3973 = vpack.c.b16 %v2593, %v2589
        %v3974 = vpack.c.b16 %v2594, %v2590
        %v3975 = vpack.c.b16 %v2599, %v2595
        %v3976 = vpack.c.b16 %v2600, %v2596
        %v3977 = vpack.c.b16 %v2601, %v2597
        %v3978 = vpack.c.b16 %v2602, %v2598
        %v3979 = vpack.c.b16 %v2607, %v2603
        %v3980 = vpack.c.b16 %v2608, %v2604
        %v3981 = vpack.c.b16 %v2609, %v2605
        %v3982 = vpack.c.b16 %v2610, %v2606
        %v3983 = vpack.c.b16 %v2615, %v2611
        %v3984 = vpack.c.b16 %v2616, %v2612
        %v3985 = vpack.c.b16 %v2617, %v2613
        %v3986 = vpack.c.b16 %v2618, %v2614
        %v3987 = vpack.c.b16 %v2623, %v2619
        %v3988 = vpack.c.b16 %v2624, %v2620
        %v3989 = vpack.c.b16 %v2625, %v2621
        %v3990 = vpack.c.b16 %v2626, %v2622
        %v3991 = vpack.c.b16 %v2631, %v2627
        %v3992 = vpack.c.b16 %v2632, %v2628
        %v3993 = vpack.c.b16 %v2633, %v2629
        %v3994 = vpack.c.b16 %v2634, %v2630
        %v3995 = vpack.c.b16 %v2639, %v2635
        %v3996 = vpack.c.b16 %v2640, %v2636
        %v3997 = vpack.c.b16 %v2641, %v2637
        %v3998 = vpack.c.b16 %v2642, %v2638
        %v3999 = vpack.c.b16 %v2647, %v2643
        %v4000 = vpack.c.b16 %v2648, %v2644
        %v4001 = vpack.c.b16 %v2649, %v2645
        %v4002 = vpack.c.b16 %v2650, %v2646
        %v4003 = vpack.c.b16 %v2655, %v2651
        %v4004 = vpack.c.b16 %v2656, %v2652
        %v4005 = vpack.c.b16 %v2657, %v2653
        %v4006 = vpack.c.b16 %v2658, %v2654
        %v4007 = vpack.c.b16 %v2663, %v2659
        %v4008 = vpack.c.b16 %v2664, %v2660
        %v4009 = vpack.c.b16 %v2665, %v2661
        %v4010 = vpack.c.b16 %v2666, %v2662
        %v4011 = vpack.c.b16 %v2671, %v2667
        %v4012 = vpack.c.b16 %v2672, %v2668
        %v4013 = vpack.c.b16 %v2673, %v2669
        %v4014 = vpack.c.b16 %v2674, %v2670
        %v4015 = vpack.c.b16 %v2679, %v2675
        %v4016 = vpack.c.b16 %v2680, %v2676
        %v4017 = vpack.c.b16 %v2681, %v2677
        %v4018 = vpack.c.b16 %v2682, %v2678
        %v4019 = vpack.c.b16 %v2687, %v2683
        %v4020 = vpack.c.b16 %v2688, %v2684
        %v4021 = vpack.c.b16 %v2689, %v2685
        %v4022 = vpack.c.b16 %v2690, %v2686
        %v4023 = vpack.c.b16 %v2695, %v2691
        %v4024 = vpack.c.b16 %v2696, %v2692
        %v4025 = vpack.c.b16 %v2697, %v2693
        %v4026 = vpack.c.b16 %v2698, %v2694
        %v4027 = vpack.c.b16 %v2703, %v2699
        %v4028 = vpack.c.b16 %v2704, %v2700
        %v4029 = vpack.c.b16 %v2705, %v2701
        %v4030 = vpack.c.b16 %v2706, %v2702
        %v4031 = vpack.c.b16 %v2711, %v2707
        %v4032 = vpack.c.b16 %v2712, %v2708
        %v4033 = vpack.c.b16 %v2713, %v2709
        %v4034 = vpack.c.b16 %v2714, %v2710
        %v4035 = vpack.c.b16 %v2719, %v2715
        %v4036 = vpack.c.b16 %v2720, %v2716
        %v4037 = vpack.c.b16 %v2721, %v2717
        %v4038 = vpack.c.b16 %v2722, %v2718
        %v4039 = vpack.c.b16 %v2727, %v2723
        %v4040 = vpack.c.b16 %v2728, %v2724
        %v4041 = vpack.c.b16 %v2729, %v2725
        %v4042 = vpack.c.b16 %v2730, %v2726
        %v4043 = vpack.c.b16 %v2735, %v2731
        %v4044 = vpack.c.b16 %v2736, %v2732
        %v4045 = vpack.c.b16 %v2737, %v2733
        %v4046 = vpack.c.b16 %v2738, %v2734
        %v4047 = vpack.c.b16 %v2743, %v2739
        %v4048 = vpack.c.b16 %v2744, %v2740
        %v4049 = vpack.c.b16 %v2745, %v2741
        %v4050 = vpack.c.b16 %v2746, %v2742
        %v4051 = vpack.c.b16 %v2751, %v2747
        %v4052 = vpack.c.b16 %v2752, %v2748
        %v4053 = vpack.c.b16 %v2753, %v2749
        %v4054 = vpack.c.b16 %v2754, %v2750
        %v4055 = vpack.c.b16 %v2759, %v2755
        %v4056 = vpack.c.b16 %v2760, %v2756
        %v4057 = vpack.c.b16 %v2761, %v2757
        %v4058 = vpack.c.b16 %v2762, %v2758
        %v4059 = vpack.c.b16 %v2767, %v2763
        %v4060 = vpack.c.b16 %v2768, %v2764
        %v4061 = vpack.c.b16 %v2769, %v2765
        %v4062 = vpack.c.b16 %v2770, %v2766
        %v4063 = vpack.c.b16 %v2775, %v2771
        %v4064 = vpack.c.b16 %v2776, %v2772
        %v4065 = vpack.c.b16 %v2777, %v2773
        %v4066 = vpack.c.b16 %v2778, %v2774
        %v4067 = vpack.c.b16 %v2783, %v2779
        %v4068 = vpack.c.b16 %v2784, %v2780
        %v4069 = vpack.c.b16 %v2785, %v2781
        %v4070 = vpack.c.b16 %v2786, %v2782
        %v4071 = vpack.c.b16 %v2791, %v2787
        %v4072 = vpack.c.b16 %v2792, %v2788
        %v4073 = vpack.c.b16 %v2793, %v2789
        %v4074 = vpack.c.b16 %v2794, %v2790
        %v4075 = vpack.c.b16 %v2799, %v2795
        %v4076 = vpack.c.b16 %v2800, %v2796
        %v4077 = vpack.c.b16 %v2801, %v2797
        %v4078 = vpack.c.b16 %v2802, %v2798
        %v4079 = vpack.c.b16 %v2807, %v2803
        %v4080 = vpack.c.b16 %v2808, %v2804
        %v4081 = vpack.c.b16 %v2809, %v2805
        %v4082 = vpack.c.b16 %v2810, %v2806
        %v4083 = vpack.c.b16 %v2815, %v2811
        %v4084 = vpack.c.b16 %v2816, %v2812
        %v4085 = vpack.c.b16 %v2817, %v2813
        %v4086 = vpack.c.b16 %v2818, %v2814
        %v4087 = vpack.c.b16 %v2823, %v2819
        %v4088 = vpack.c.b16 %v2824, %v2820
        %v4089 = vpack.c.b16 %v2825, %v2821
        %v4090 = vpack.c.b16 %v2826, %v2822
        %v4091 = vpack.c.b16 %v2831, %v2827
        %v4092 = vpack.c.b16 %v2832, %v2828
        %v4093 = vpack.c.b16 %v2833, %v2829
        %v4094 = vpack.c.b16 %v2834, %v2830
        %v4095 = vpack.c.b16 %v2839, %v2835
        %v4096 = vpack.c.b16 %v2840, %v2836
        %v4097 = vpack.c.b16 %v2841, %v2837
        %v4098 = vpack.c.b16 %v2842, %v2838
        %v4099 = vpack.c.b16 %v2847, %v2843
        %v4100 = vpack.c.b16 %v2848, %v2844
        %v4101 = vpack.c.b16 %v2849, %v2845
        %v4102 = vpack.c.b16 %v2850, %v2846
        %v4103 = vpack.c.b16 %v2855, %v2851
        %v4104 = vpack.c.b16 %v2856, %v2852
        %v4105 = vpack.c.b16 %v2857, %v2853
        %v4106 = vpack.c.b16 %v2858, %v2854
        %v4107 = vpack.c.b16 %v2863, %v2859
        %v4108 = vpack.c.b16 %v2864, %v2860
        %v4109 = vpack.c.b16 %v2865, %v2861
        %v4110 = vpack.c.b16 %v2866, %v2862
        %v4111 = vpack.c.b16 %v2871, %v2867
        %v4112 = vpack.c.b16 %v2872, %v2868
        %v4113 = vpack.c.b16 %v2873, %v2869
        %v4114 = vpack.c.b16 %v2874, %v2870
        %v4115 = vpack.c.b16 %v2879, %v2875
        %v4116 = vpack.c.b16 %v2880, %v2876
        %v4117 = vpack.c.b16 %v2881, %v2877
        %v4118 = vpack.c.b16 %v2882, %v2878
        %v4119 = vpack.c.b16 %v2887, %v2883
        %v4120 = vpack.c.b16 %v2888, %v2884
        %v4121 = vpack.c.b16 %v2889, %v2885
        %v4122 = vpack.c.b16 %v2890, %v2886
        %v4123 = vpack.c.b16 %v2895, %v2891
        %v4124 = vpack.c.b16 %v2896, %v2892
        %v4125 = vpack.c.b16 %v2897, %v2893
        %v4126 = vpack.c.b16 %v2898, %v2894
        %v4127 = vpack.c.b16 %v2903, %v2899
        %v4128 = vpack.c.b16 %v2904, %v2900
        %v4129 = vpack.c.b16 %v2905, %v2901
        %v4130 = vpack.c.b16 %v2906, %v2902
        %v4131 = vpack.c.b16 %v2911, %v2907
        %v4132 = vpack.c.b16 %v2912, %v2908
        %v4133 = vpack.c.b16 %v2913, %v2909
        %v4134 = vpack.c.b16 %v2914, %v2910
        %v4135 = vpack.c.b16 %v2919, %v2915
        %v4136 = vpack.c.b16 %v2920, %v2916
        %v4137 = vpack.c.b16 %v2921, %v2917
        %v4138 = vpack.c.b16 %v2922, %v2918
        %v4139 = vpack.c.b16 %v2927, %v2923
        %v4140 = vpack.c.b16 %v2928, %v2924
        %v4141 = vpack.c.b16 %v2929, %v2925
        %v4142 = vpack.c.b16 %v2930, %v2926
        %v4143 = vpack.c.b16 %v2935, %v2931
        %v4144 = vpack.c.b16 %v2936, %v2932
        %v4145 = vpack.c.b16 %v2937, %v2933
        %v4146 = vpack.c.b16 %v2938, %v2934
        %v4147 = vpack.c.b16 %v2943, %v2939
        %v4148 = vpack.c.b16 %v2944, %v2940
        %v4149 = vpack.c.b16 %v2945, %v2941
        %v4150 = vpack.c.b16 %v2946, %v2942
        %v4151 = vpack.c.b16 %v2951, %v2947
        %v4152 = vpack.c.b16 %v2952, %v2948
        %v4153 = vpack.c.b16 %v2953, %v2949
        %v4154 = vpack.c.b16 %v2954, %v2950
        %v4155 = vpack.c.b16 %v2959, %v2955
        %v4156 = vpack.c.b16 %v2960, %v2956
        %v4157 = vpack.c.b16 %v2961, %v2957
        %v4158 = vpack.c.b16 %v2962, %v2958
        %v4159 = vpack.c.b16 %v2967, %v2963
        %v4160 = vpack.c.b16 %v2968, %v2964
        %v4161 = vpack.c.b16 %v2969, %v2965
        %v4162 = vpack.c.b16 %v2970, %v2966
        %v4163 = vpack.c.b16 %v2975, %v2971
        %v4164 = vpack.c.b16 %v2976, %v2972
        %v4165 = vpack.c.b16 %v2977, %v2973
        %v4166 = vpack.c.b16 %v2978, %v2974
        %v4167 = vpack.c.b16 %v2983, %v2979
        %v4168 = vpack.c.b16 %v2984, %v2980
        %v4169 = vpack.c.b16 %v2985, %v2981
        %v4170 = vpack.c.b16 %v2986, %v2982
        %v4171 = vpack.c.b16 %v2991, %v2987
        %v4172 = vpack.c.b16 %v2992, %v2988
        %v4173 = vpack.c.b16 %v2993, %v2989
        %v4174 = vpack.c.b16 %v2994, %v2990
        %v4175 = vpack.c.b16 %v2999, %v2995
        %v4176 = vpack.c.b16 %v3000, %v2996
        %v4177 = vpack.c.b16 %v3001, %v2997
        %v4178 = vpack.c.b16 %v3002, %v2998
        %v4179 = vpack.c.b16 %v3007, %v3003
        %v4180 = vpack.c.b16 %v3008, %v3004
        %v4181 = vpack.c.b16 %v3009, %v3005
        %v4182 = vpack.c.b16 %v3010, %v3006
        %v4183 = vpack.c.b16 %v3015, %v3011
        %v4184 = vpack.c.b16 %v3016, %v3012
        %v4185 = vpack.c.b16 %v3017, %v3013
        %v4186 = vpack.c.b16 %v3018, %v3014
        %v4187 = vpack.c.b16 %v3023, %v3019
        %v4188 = vpack.c.b16 %v3024, %v3020
        %v4189 = vpack.c.b16 %v3025, %v3021
        %v4190 = vpack.c.b16 %v3026, %v3022
        %v4191 = vpack.c.b16 %v3031, %v3027
        %v4192 = vpack.c.b16 %v3032, %v3028
        %v4193 = vpack.c.b16 %v3033, %v3029
        %v4194 = vpack.c.b16 %v3034, %v3030
        %v4195 = vpack.c.b16 %v3039, %v3035
        %v4196 = vpack.c.b16 %v3040, %v3036
        %v4197 = vpack.c.b16 %v3041, %v3037
        %v4198 = vpack.c.b16 %v3042, %v3038
        %v4199 = vpack.c.b16 %v3047, %v3043
        %v4200 = vpack.c.b16 %v3048, %v3044
        %v4201 = vpack.c.b16 %v3049, %v3045
        %v4202 = vpack.c.b16 %v3050, %v3046
        %v4203 = vpack.c.b16 %v3055, %v3051
        %v4204 = vpack.c.b16 %v3056, %v3052
        %v4205 = vpack.c.b16 %v3057, %v3053
        %v4206 = vpack.c.b16 %v3058, %v3054
        %v4207 = vpack.c.b16 %v3063, %v3059
        %v4208 = vpack.c.b16 %v3064, %v3060
        %v4209 = vpack.c.b16 %v3065, %v3061
        %v4210 = vpack.c.b16 %v3066, %v3062
        %v4211 = vpack.c.b16 %v3071, %v3067
        %v4212 = vpack.c.b16 %v3072, %v3068
        %v4213 = vpack.c.b16 %v3073, %v3069
        %v4214 = vpack.c.b16 %v3074, %v3070
        %v4215 = vpack.c.b16 %v3079, %v3075
        %v4216 = vpack.c.b16 %v3080, %v3076
        %v4217 = vpack.c.b16 %v3081, %v3077
        %v4218 = vpack.c.b16 %v3082, %v3078
        %v4219 = vpack.c.b16 %v3087, %v3083
        %v4220 = vpack.c.b16 %v3088, %v3084
        %v4221 = vpack.c.b16 %v3089, %v3085
        %v4222 = vpack.c.b16 %v3090, %v3086
        %v4223 = vpack.c.b16 %v3095, %v3091
        %v4224 = vpack.c.b16 %v3096, %v3092
        %v4225 = vpack.c.b16 %v3097, %v3093
        %v4226 = vpack.c.b16 %v3098, %v3094
        %v4227 = vpack.c.b16 %v3103, %v3099
        %v4228 = vpack.c.b16 %v3104, %v3100
        %v4229 = vpack.c.b16 %v3105, %v3101
        %v4230 = vpack.c.b16 %v3106, %v3102
        %v4231 = vpack.c.b16 %v3111, %v3107
        %v4232 = vpack.c.b16 %v3112, %v3108
        %v4233 = vpack.c.b16 %v3113, %v3109
        %v4234 = vpack.c.b16 %v3114, %v3110
        %v4235 = vpack.c.b16 %v3119, %v3115
        %v4236 = vpack.c.b16 %v3120, %v3116
        %v4237 = vpack.c.b16 %v3121, %v3117
        %v4238 = vpack.c.b16 %v3122, %v3118
        %v4239 = vpack.c.b16 %v3127, %v3123
        %v4240 = vpack.c.b16 %v3128, %v3124
        %v4241 = vpack.c.b16 %v3129, %v3125
        %v4242 = vpack.c.b16 %v3130, %v3126
        %v4243 = vpack.c.b16 %v3135, %v3131
        %v4244 = vpack.c.b16 %v3136, %v3132
        %v4245 = vpack.c.b16 %v3137, %v3133
        %v4246 = vpack.c.b16 %v3138, %v3134
        %v4247 = vpack.c.b16 %v3143, %v3139
        %v4248 = vpack.c.b16 %v3144, %v3140
        %v4249 = vpack.c.b16 %v3145, %v3141
        %v4250 = vpack.c.b16 %v3146, %v3142
        %v4251 = vpack.c.b16 %v3151, %v3147
        %v4252 = vpack.c.b16 %v3152, %v3148
        %v4253 = vpack.c.b16 %v3153, %v3149
        %v4254 = vpack.c.b16 %v3154, %v3150
        %v4255 = vpack.c.b16 %v3159, %v3155
        %v4256 = vpack.c.b16 %v3160, %v3156
        %v4257 = vpack.c.b16 %v3161, %v3157
        %v4258 = vpack.c.b16 %v3162, %v3158
        %v4259 = vpack.c.b16 %v3167, %v3163
        %v4260 = vpack.c.b16 %v3168, %v3164
        %v4261 = vpack.c.b16 %v3169, %v3165
        %v4262 = vpack.c.b16 %v3170, %v3166
        %v4263 = vpack.c.b16 %v3175, %v3171
        %v4264 = vpack.c.b16 %v3176, %v3172
        %v4265 = vpack.c.b16 %v3177, %v3173
        %v4266 = vpack.c.b16 %v3178, %v3174
        %v4267 = vpack.c.b16 %v3183, %v3179
        %v4268 = vpack.c.b16 %v3184, %v3180
        %v4269 = vpack.c.b16 %v3185, %v3181
        %v4270 = vpack.c.b16 %v3186, %v3182
        %v4271 = vpack.c.b16 %v3191, %v3187
        %v4272 = vpack.c.b16 %v3192, %v3188
        %v4273 = vpack.c.b16 %v3193, %v3189
        %v4274 = vpack.c.b16 %v3194, %v3190
        %v4275 = vpack.c.b16 %v3199, %v3195
        %v4276 = vpack.c.b16 %v3200, %v3196
        %v4277 = vpack.c.b16 %v3201, %v3197
        %v4278 = vpack.c.b16 %v3202, %v3198
        %v4279 = vpack.c.b16 %v3207, %v3203
        %v4280 = vpack.c.b16 %v3208, %v3204
        %v4281 = vpack.c.b16 %v3209, %v3205
        %v4282 = vpack.c.b16 %v3210, %v3206
        %v4283 = vpack.c.b16 %v3215, %v3211
        %v4284 = vpack.c.b16 %v3216, %v3212
        %v4285 = vpack.c.b16 %v3217, %v3213
        %v4286 = vpack.c.b16 %v3218, %v3214
        %v4287 = vpack.c.b16 %v3223, %v3219
        %v4288 = vpack.c.b16 %v3224, %v3220
        %v4289 = vpack.c.b16 %v3225, %v3221
        %v4290 = vpack.c.b16 %v3226, %v3222
        %v4291 = vpack.c.b16 %v3231, %v3227
        %v4292 = vpack.c.b16 %v3232, %v3228
        %v4293 = vpack.c.b16 %v3233, %v3229
        %v4294 = vpack.c.b16 %v3234, %v3230
        %v4295 = vpack.c.b16 %v3239, %v3235
        %v4296 = vpack.c.b16 %v3240, %v3236
        %v4297 = vpack.c.b16 %v3241, %v3237
        %v4298 = vpack.c.b16 %v3242, %v3238
        %v4299 = vpack.c.b16 %v3247, %v3243
        %v4300 = vpack.c.b16 %v3248, %v3244
        %v4301 = vpack.c.b16 %v3249, %v3245
        %v4302 = vpack.c.b16 %v3250, %v3246
        %v4303 = vpack.c.b16 %v3255, %v3251
        %v4304 = vpack.c.b16 %v3256, %v3252
        %v4305 = vpack.c.b16 %v3257, %v3253
        %v4306 = vpack.c.b16 %v3258, %v3254
        %v4307 = vpack.c.b16 %v3263, %v3259
        %v4308 = vpack.c.b16 %v3264, %v3260
        %v4309 = vpack.c.b16 %v3265, %v3261
        %v4310 = vpack.c.b16 %v3266, %v3262
        %v4311 = vpack.c.b16 %v3271, %v3267
        %v4312 = vpack.c.b16 %v3272, %v3268
        %v4313 = vpack.c.b16 %v3273, %v3269
        %v4314 = vpack.c.b16 %v3274, %v3270
        %v4315 = vpack.c.b16 %v3279, %v3275
        %v4316 = vpack.c.b16 %v3280, %v3276
        %v4317 = vpack.c.b16 %v3281, %v3277
        %v4318 = vpack.c.b16 %v3282, %v3278
        %v4319 = vpack.c.b16 %v3287, %v3283
        %v4320 = vpack.c.b16 %v3288, %v3284
        %v4321 = vpack.c.b16 %v3289, %v3285
        %v4322 = vpack.c.b16 %v3290, %v3286
        %v4323 = vpack.c.b16 %v3295, %v3291
        %v4324 = vpack.c.b16 %v3296, %v3292
        %v4325 = vpack.c.b16 %v3297, %v3293
        %v4326 = vpack.c.b16 %v3298, %v3294
        %v4327 = vpack.c.b16 %v3303, %v3299
        %v4328 = vpack.c.b16 %v3304, %v3300
        %v4329 = vpack.c.b16 %v3305, %v3301
        %v4330 = vpack.c.b16 %v3306, %v3302
        %v4331 = vpack.c.b16 %v3311, %v3307
        %v4332 = vpack.c.b16 %v3312, %v3308
        %v4333 = vpack.c.b16 %v3313, %v3309
        %v4334 = vpack.c.b16 %v3314, %v3310
        %v4335 = vpack.c.b16 %v3319, %v3315
        %v4336 = vpack.c.b16 %v3320, %v3316
        %v4337 = vpack.c.b16 %v3321, %v3317
        %v4338 = vpack.c.b16 %v3322, %v3318
        %v4339 = vpack.c.b16 %v3327, %v3323
        %v4340 = vpack.c.b16 %v3328, %v3324
        %v4341 = vpack.c.b16 %v3329, %v3325
        %v4342 = vpack.c.b16 %v3330, %v3326
        %v4343 = vpack.c.b16 %v3335, %v3331
        %v4344 = vpack.c.b16 %v3336, %v3332
        %v4345 = vpack.c.b16 %v3337, %v3333
        %v4346 = vpack.c.b16 %v3338, %v3334
        %v4347 = vpack.c.b16 %v3343, %v3339
        %v4348 = vpack.c.b16 %v3344, %v3340
        %v4349 = vpack.c.b16 %v3345, %v3341
        %v4350 = vpack.c.b16 %v3346, %v3342
        %v4351 = vpack.c.b16 %v3351, %v3347
        %v4352 = vpack.c.b16 %v3352, %v3348
        %v4353 = vpack.c.b16 %v3353, %v3349
        %v4354 = vpack.c.b16 %v3354, %v3350
        %v4355 = vpack.c.b16 %v3359, %v3355
        %v4356 = vpack.c.b16 %v3360, %v3356
        %v4357 = vpack.c.b16 %v3361, %v3357
        %v4358 = vpack.c.b16 %v3362, %v3358
        %v4359 = vpack.c.b16 %v3367, %v3363
        %v4360 = vpack.c.b16 %v3368, %v3364
        %v4361 = vpack.c.b16 %v3369, %v3365
        %v4362 = vpack.c.b16 %v3370, %v3366
        %v4363 = vpack.c.b16 %v3375, %v3371
        %v4364 = vpack.c.b16 %v3376, %v3372
        %v4365 = vpack.c.b16 %v3377, %v3373
        %v4366 = vpack.c.b16 %v3378, %v3374
        %v4367 = vpack.c.b16 %v3383, %v3379
        %v4368 = vpack.c.b16 %v3384, %v3380
        %v4369 = vpack.c.b16 %v3385, %v3381
        %v4370 = vpack.c.b16 %v3386, %v3382
        %v4371 = vpack.c.b16 %v3391, %v3387
        %v4372 = vpack.c.b16 %v3392, %v3388
        %v4373 = vpack.c.b16 %v3393, %v3389
        %v4374 = vpack.c.b16 %v3394, %v3390
        %v4375 = vpack.c.b16 %v3399, %v3395
        %v4376 = vpack.c.b16 %v3400, %v3396
        %v4377 = vpack.c.b16 %v3401, %v3397
        %v4378 = vpack.c.b16 %v3402, %v3398
        %v4379 = vpack.c.b16 %v3407, %v3403
        %v4380 = vpack.c.b16 %v3408, %v3404
        %v4381 = vpack.c.b16 %v3409, %v3405
        %v4382 = vpack.c.b16 %v3410, %v3406
        %v4383 = vpack.c.b16 %v3415, %v3411
        %v4384 = vpack.c.b16 %v3416, %v3412
        %v4385 = vpack.c.b16 %v3417, %v3413
        %v4386 = vpack.c.b16 %v3418, %v3414
        %v4387 = vpack.c.b16 %v3423, %v3419
        %v4388 = vpack.c.b16 %v3424, %v3420
        %v4389 = vpack.c.b16 %v3425, %v3421
        %v4390 = vpack.c.b16 %v3426, %v3422
        %v4391 = vpack.c.b16 %v3431, %v3427
        %v4392 = vpack.c.b16 %v3432, %v3428
        %v4393 = vpack.c.b16 %v3433, %v3429
        %v4394 = vpack.c.b16 %v3434, %v3430
        %v4395 = vpack.c.b16 %v3439, %v3435
        %v4396 = vpack.c.b16 %v3440, %v3436
        %v4397 = vpack.c.b16 %v3441, %v3437
        %v4398 = vpack.c.b16 %v3442, %v3438
        %v4399 = vpack.c.b16 %v3447, %v3443
        %v4400 = vpack.c.b16 %v3448, %v3444
        %v4401 = vpack.c.b16 %v3449, %v3445
        %v4402 = vpack.c.b16 %v3450, %v3446
        %v4403 = vpack.c.b16 %v3455, %v3451
        %v4404 = vpack.c.b16 %v3456, %v3452
        %v4405 = vpack.c.b16 %v3457, %v3453
        %v4406 = vpack.c.b16 %v3458, %v3454
        %v4407 = vpack.c.b16 %v3463, %v3459
        %v4408 = vpack.c.b16 %v3464, %v3460
        %v4409 = vpack.c.b16 %v3465, %v3461
        %v4410 = vpack.c.b16 %v3466, %v3462
        %v4411 = vpack.c.b16 %v3471, %v3467
        %v4412 = vpack.c.b16 %v3472, %v3468
        %v4413 = vpack.c.b16 %v3473, %v3469
        %v4414 = vpack.c.b16 %v3474, %v3470
        %v4415 = vpack.c.b16 %v3479, %v3475
        %v4416 = vpack.c.b16 %v3480, %v3476
        %v4417 = vpack.c.b16 %v3481, %v3477
        %v4418 = vpack.c.b16 %v3482, %v3478
        %v4419 = vpack.c.b16 %v3487, %v3483
        %v4420 = vpack.c.b16 %v3488, %v3484
        %v4421 = vpack.c.b16 %v3489, %v3485
        %v4422 = vpack.c.b16 %v3490, %v3486
        %v4423 = vpack.c.b16 %v3495, %v3491
        %v4424 = vpack.c.b16 %v3496, %v3492
        %v4425 = vpack.c.b16 %v3497, %v3493
        %v4426 = vpack.c.b16 %v3498, %v3494
        %v4427 = vpack.c.b16 %v3503, %v3499
        %v4428 = vpack.c.b16 %v3504, %v3500
        %v4429 = vpack.c.b16 %v3505, %v3501
        %v4430 = vpack.c.b16 %v3506, %v3502
        %v4431 = vpack.c.b16 %v3511, %v3507
        %v4432 = vpack.c.b16 %v3512, %v3508
        %v4433 = vpack.c.b16 %v3513, %v3509
        %v4434 = vpack.c.b16 %v3514, %v3510
        %v4435 = vpack.c.b16 %v3519, %v3515
        %v4436 = vpack.c.b16 %v3520, %v3516
        %v4437 = vpack.c.b16 %v3521, %v3517
        %v4438 = vpack.c.b16 %v3522, %v3518
        %v4439 = vpack.c.b16 %v3527, %v3523
        %v4440 = vpack.c.b16 %v3528, %v3524
        %v4441 = vpack.c.b16 %v3529, %v3525
        %v4442 = vpack.c.b16 %v3530, %v3526
        %v4443 = vpack.c.b16 %v3535, %v3531
        %v4444 = vpack.c.b16 %v3536, %v3532
        %v4445 = vpack.c.b16 %v3537, %v3533
        %v4446 = vpack.c.b16 %v3538, %v3534
        %v4447 = vpack.c.b16 %v3543, %v3539
        %v4448 = vpack.c.b16 %v3544, %v3540
        %v4449 = vpack.c.b16 %v3545, %v3541
        %v4450 = vpack.c.b16 %v3546, %v3542
        %v4451 = vpack.c.b16 %v3551, %v3547
        %v4452 = vpack.c.b16 %v3552, %v3548
        %v4453 = vpack.c.b16 %v3553, %v3549
        %v4454 = vpack.c.b16 %v3554, %v3550
        %v4455 = vpack.c.b16 %v3559, %v3555
        %v4456 = vpack.c.b16 %v3560, %v3556
        %v4457 = vpack.c.b16 %v3561, %v3557
        %v4458 = vpack.c.b16 %v3562, %v3558
        %v4459 = vpack.c.b16 %v3567, %v3563
        %v4460 = vpack.c.b16 %v3568, %v3564
        %v4461 = vpack.c.b16 %v3569, %v3565
        %v4462 = vpack.c.b16 %v3570, %v3566
        %v4463 = vpack.c.b16 %v3575, %v3571
        %v4464 = vpack.c.b16 %v3576, %v3572
        %v4465 = vpack.c.b16 %v3577, %v3573
        %v4466 = vpack.c.b16 %v3578, %v3574
        %v4467 = vpack.c.b16 %v3583, %v3579
        %v4468 = vpack.c.b16 %v3584, %v3580
        %v4469 = vpack.c.b16 %v3585, %v3581
        %v4470 = vpack.c.b16 %v3586, %v3582
        %v4471 = vpack.c.b16 %v3591, %v3587
        %v4472 = vpack.c.b16 %v3592, %v3588
        %v4473 = vpack.c.b16 %v3593, %v3589
        %v4474 = vpack.c.b16 %v3594, %v3590
        %v4475 = vpack.c.b16 %v3599, %v3595
        %v4476 = vpack.c.b16 %v3600, %v3596
        %v4477 = vpack.c.b16 %v3601, %v3597
        %v4478 = vpack.c.b16 %v3602, %v3598
        %v4479 = vpack.c.b16 %v3607, %v3603
        %v4480 = vpack.c.b16 %v3608, %v3604
        %v4481 = vpack.c.b16 %v3609, %v3605
        %v4482 = vpack.c.b16 %v3610, %v3606
        %v4483 = vpack.c.b16 %v3615, %v3611
        %v4484 = vpack.c.b16 %v3616, %v3612
        %v4485 = vpack.c.b16 %v3617, %v3613
        %v4486 = vpack.c.b16 %v3618, %v3614
        %v4487 = vpack.c.b16 %v3623, %v3619
        %v4488 = vpack.c.b16 %v3624, %v3620
        %v4489 = vpack.c.b16 %v3625, %v3621
        %v4490 = vpack.c.b16 %v3626, %v3622
        %v4491 = vpack.c.b16 %v3631, %v3627
        %v4492 = vpack.c.b16 %v3632, %v3628
        %v4493 = vpack.c.b16 %v3633, %v3629
        %v4494 = vpack.c.b16 %v3634, %v3630
        %v4495 = vpack.c.b16 %v3639, %v3635
        %v4496 = vpack.c.b16 %v3640, %v3636
        %v4497 = vpack.c.b16 %v3641, %v3637
        %v4498 = vpack.c.b16 %v3642, %v3638
        %v4499 = vpack.c.b16 %v3647, %v3643
        %v4500 = vpack.c.b16 %v3648, %v3644
        %v4501 = vpack.c.b16 %v3649, %v3645
        %v4502 = vpack.c.b16 %v3650, %v3646
        %v4503 = vpack.c.b16 %v3655, %v3651
        %v4504 = vpack.c.b16 %v3656, %v3652
        %v4505 = vpack.c.b16 %v3657, %v3653
        %v4506 = vpack.c.b16 %v3658, %v3654
        %v4507 = vpack.c.b16 %v3663, %v3659
        %v4508 = vpack.c.b16 %v3664, %v3660
        %v4509 = vpack.c.b16 %v3665, %v3661
        %v4510 = vpack.c.b16 %v3666, %v3662
        %v4511 = vpack.c.b16 %v3671, %v3667
        %v4512 = vpack.c.b16 %v3672, %v3668
        %v4513 = vpack.c.b16 %v3673, %v3669
        %v4514 = vpack.c.b16 %v3674, %v3670
        %v4515 = vpack.c.b16 %v3679, %v3675
        %v4516 = vpack.c.b16 %v3680, %v3676
        %v4517 = vpack.c.b16 %v3681, %v3677
        %v4518 = vpack.c.b16 %v3682, %v3678
        %v4519 = vpack.c.b16 %v3687, %v3683
        %v4520 = vpack.c.b16 %v3688, %v3684
        %v4521 = vpack.c.b16 %v3689, %v3685
        %v4522 = vpack.c.b16 %v3690, %v3686
        %v4523 = vpack.c.b16 %v3695, %v3691
        %v4524 = vpack.c.b16 %v3696, %v3692
        %v4525 = vpack.c.b16 %v3697, %v3693
        %v4526 = vpack.c.b16 %v3698, %v3694
        %v4527 = vpack.c.b16 %v3703, %v3699
        %v4528 = vpack.c.b16 %v3704, %v3700
        %v4529 = vpack.c.b16 %v3705, %v3701
        %v4530 = vpack.c.b16 %v3706, %v3702
        %v4531 = vpack.c.b16 %v3711, %v3707
        %v4532 = vpack.c.b16 %v3712, %v3708
        %v4533 = vpack.c.b16 %v3713, %v3709
        %v4534 = vpack.c.b16 %v3714, %v3710
        %v4535 = vpack.c.b16 %v3719, %v3715
        %v4536 = vpack.c.b16 %v3720, %v3716
        %v4537 = vpack.c.b16 %v3721, %v3717
        %v4538 = vpack.c.b16 %v3722, %v3718
        %v4539 = vpack.c.b16 %v3727, %v3723
        %v4540 = vpack.c.b16 %v3728, %v3724
        %v4541 = vpack.c.b16 %v3729, %v3725
        %v4542 = vpack.c.b16 %v3730, %v3726
        %v4543 = vpack.c.b16 %v3735, %v3731
        %v4544 = vpack.c.b16 %v3736, %v3732
        %v4545 = vpack.c.b16 %v3737, %v3733
        %v4546 = vpack.c.b16 %v3738, %v3734
        %v4547 = vpack.c.b16 %v3743, %v3739
        %v4548 = vpack.c.b16 %v3744, %v3740
        %v4549 = vpack.c.b16 %v3745, %v3741
        %v4550 = vpack.c.b16 %v3746, %v3742
        %v4551 = vpack.c.b16 %v3751, %v3747
        %v4552 = vpack.c.b16 %v3752, %v3748
        %v4553 = vpack.c.b16 %v3753, %v3749
        %v4554 = vpack.c.b16 %v3754, %v3750
        %5355 = vmatprep.subr.bf16.mxu0 %v3756
        %5356 = vmatpush1.bf16.msra.mxu0 %v3755
        %5357 = vmatprep.subr.bf16.mxu0 %v3760
        %5358 = vmatpush1.bf16.msra.mxu0 %v3759
        %5359 = vmatprep.subr.bf16.mxu0 %v3764
        %5360 = vmatpush1.bf16.msra.mxu0 %v3763
        %5361 = vmatprep.subr.bf16.mxu0 %v3768
        %5362 = vmatpush1.bf16.msra.mxu0 %v3767
        %5363 = vmatprep.subr.bf16.mxu0 %v3772
        %5364 = vmatpush1.bf16.msra.mxu0 %v3771
        %5365 = vmatprep.subr.bf16.mxu0 %v3776
        %5366 = vmatpush1.bf16.msra.mxu0 %v3775
        %5367 = vmatprep.subr.bf16.mxu0 %v3780
        %5368 = vmatpush1.bf16.msra.mxu0 %v3779
        %5369 = vmatprep.subr.bf16.mxu0 %v3784
        %5370 = vmatpush1.bf16.msra.mxu0 %v3783
        %5371 = vmatprep.subr.bf16.mxu0 %v3788
        %5372 = vmatpush1.bf16.msra.mxu0 %v3787
        %5373 = vmatprep.subr.bf16.mxu0 %v3792
        %5374 = vmatpush1.bf16.msra.mxu0 %v3791
        %5375 = vmatprep.subr.bf16.mxu0 %v3796
        %5376 = vmatpush1.bf16.msra.mxu0 %v3795
        %5377 = vmatprep.subr.bf16.mxu0 %v3800
        %5378 = vmatpush1.bf16.msra.mxu0 %v3799
        %5379 = vmatprep.subr.bf16.mxu0 %v3804
        %5380 = vmatpush1.bf16.msra.mxu0 %v3803
        %5381 = vmatprep.subr.bf16.mxu0 %v3808
        %5382 = vmatpush1.bf16.msra.mxu0 %v3807
        %5383 = vmatprep.subr.bf16.mxu0 %v3812
        %5384 = vmatpush1.bf16.msra.mxu0 %v3811
        %5385 = vmatprep.subr.bf16.mxu0 %v3816
        %5386 = vmatpush1.bf16.msra.mxu0 %v3815
        %5387 = vmatprep.mubr.bf16.mxu0 %v1306
        %5388 = vmatmul.mubr.bf16.gmra.mrb[0].mxu0 %v1305
        %v5389 = vpop.f32.mrb[0].mxu0
        %v5390 = vadd.f32 0.0, %v5389
        %v5391 = vpop.f32.mrb[0].mxu0
        %v5392 = vadd.f32 0.0, %v5391
        %v5393 = vpop.f32.mrb[0].mxu0
        %v5394 = vadd.f32 0.0, %v5393
        %v5395 = vpop.f32.mrb[0].mxu0
        %v5396 = vadd.f32 0.0, %v5395
        %5397 = vdwg.mxu0
        %5398 = vmatprep.subr.bf16.mxu0 %v3820
        %5399 = vmatpush1.bf16.msra.mxu0 %v3819
        %5400 = vmatprep.subr.bf16.mxu0 %v3824
        %5401 = vmatpush1.bf16.msra.mxu0 %v3823
        %5402 = vmatprep.subr.bf16.mxu0 %v3828
        %5403 = vmatpush1.bf16.msra.mxu0 %v3827
        %5404 = vmatprep.subr.bf16.mxu0 %v3832
        %5405 = vmatpush1.bf16.msra.mxu0 %v3831
        %5406 = vmatprep.subr.bf16.mxu0 %v3836
        %5407 = vmatpush1.bf16.msra.mxu0 %v3835
        %5408 = vmatprep.subr.bf16.mxu0 %v3840
        %5409 = vmatpush1.bf16.msra.mxu0 %v3839
        %5410 = vmatprep.subr.bf16.mxu0 %v3844
        %5411 = vmatpush1.bf16.msra.mxu0 %v3843
        %5412 = vmatprep.subr.bf16.mxu0 %v3848
        %5413 = vmatpush1.bf16.msra.mxu0 %v3847
        %5414 = vmatprep.subr.bf16.mxu0 %v3852
        %5415 = vmatpush1.bf16.msra.mxu0 %v3851
        %5416 = vmatprep.subr.bf16.mxu0 %v3856
        %5417 = vmatpush1.bf16.msra.mxu0 %v3855
        %5418 = vmatprep.subr.bf16.mxu0 %v3860
        %5419 = vmatpush1.bf16.msra.mxu0 %v3859
        %5420 = vmatprep.subr.bf16.mxu0 %v3864
        %5421 = vmatpush1.bf16.msra.mxu0 %v3863
        %5422 = vmatprep.subr.bf16.mxu0 %v3868
        %5423 = vmatpush1.bf16.msra.mxu0 %v3867
        %5424 = vmatprep.subr.bf16.mxu0 %v3872
        %5425 = vmatpush1.bf16.msra.mxu0 %v3871
        %5426 = vmatprep.subr.bf16.mxu0 %v3876
        %5427 = vmatpush1.bf16.msra.mxu0 %v3875
        %5428 = vmatprep.subr.bf16.mxu0 %v3880
        %5429 = vmatpush1.bf16.msra.mxu0 %v3879
        %5430 = vmatprep.mubr.bf16.mxu0 %v1308
        %5431 = vmatmul.mubr.bf16.gmra.mrb[0].mxu0 %v1307
        %v5432 = vpop.f32.mrb[0].mxu0
        %v5433 = vadd.f32 %v5390, %v5432
        %v5434 = vpop.f32.mrb[0].mxu0
        %v5435 = vadd.f32 %v5392, %v5434
        %v5436 = vpop.f32.mrb[0].mxu0
        %v5437 = vadd.f32 %v5394, %v5436
        %v5438 = vpop.f32.mrb[0].mxu0
        %v5439 = vadd.f32 %v5396, %v5438
        %5440 = vdwg.mxu0
        %5441 = vmatprep.subr.bf16.mxu0 %v3884
        %5442 = vmatpush1.bf16.msra.mxu0 %v3883
        %5443 = vmatprep.subr.bf16.mxu0 %v3888
        %5444 = vmatpush1.bf16.msra.mxu0 %v3887
        %5445 = vmatprep.subr.bf16.mxu0 %v3892
        %5446 = vmatpush1.bf16.msra.mxu0 %v3891
        %5447 = vmatprep.subr.bf16.mxu0 %v3896
        %5448 = vmatpush1.bf16.msra.mxu0 %v3895
        %5449 = vmatprep.subr.bf16.mxu0 %v3900
        %5450 = vmatpush1.bf16.msra.mxu0 %v3899
        %5451 = vmatprep.subr.bf16.mxu0 %v3904
        %5452 = vmatpush1.bf16.msra.mxu0 %v3903
        %5453 = vmatprep.subr.bf16.mxu0 %v3908
        %5454 = vmatpush1.bf16.msra.mxu0 %v3907
        %5455 = vmatprep.subr.bf16.mxu0 %v3912
        %5456 = vmatpush1.bf16.msra.mxu0 %v3911
        %5457 = vmatprep.subr.bf16.mxu0 %v3916
        %5458 = vmatpush1.bf16.msra.mxu0 %v3915
        %5459 = vmatprep.subr.bf16.mxu0 %v3920
        %5460 = vmatpush1.bf16.msra.mxu0 %v3919
        %5461 = vmatprep.subr.bf16.mxu0 %v3924
        %5462 = vmatpush1.bf16.msra.mxu0 %v3923
        %5463 = vmatprep.subr.bf16.mxu0 %v3928
        %5464 = vmatpush1.bf16.msra.mxu0 %v3927
        %5465 = vmatprep.subr.bf16.mxu0 %v3932
        %5466 = vmatpush1.bf16.msra.mxu0 %v3931
        %5467 = vmatprep.subr.bf16.mxu0 %v3936
        %5468 = vmatpush1.bf16.msra.mxu0 %v3935
        %5469 = vmatprep.subr.bf16.mxu0 %v3940
        %5470 = vmatpush1.bf16.msra.mxu0 %v3939
        %5471 = vmatprep.subr.bf16.mxu0 %v3944
        %5472 = vmatpush1.bf16.msra.mxu0 %v3943
        %5473 = vmatprep.mubr.bf16.mxu0 %v1310
        %5474 = vmatmul.mubr.bf16.gmra.mrb[0].mxu0 %v1309
        %v5475 = vpop.f32.mrb[0].mxu0
        %v5476 = vadd.f32 %v5433, %v5475
        %v5477 = vpop.f32.mrb[0].mxu0
        %v5478 = vadd.f32 %v5435, %v5477
        %v5479 = vpop.f32.mrb[0].mxu0
        %v5480 = vadd.f32 %v5437, %v5479
        %v5481 = vpop.f32.mrb[0].mxu0
        %v5482 = vadd.f32 %v5439, %v5481
        %5483 = vdwg.mxu0
        %5484 = vmatprep.subr.bf16.mxu0 %v3948
        %5485 = vmatpush1.bf16.msra.mxu0 %v3947
        %5486 = vmatprep.subr.bf16.mxu0 %v3952
        %5487 = vmatpush1.bf16.msra.mxu0 %v3951
        %5488 = vmatprep.subr.bf16.mxu0 %v3956
        %5489 = vmatpush1.bf16.msra.mxu0 %v3955
        %5490 = vmatprep.subr.bf16.mxu0 %v3960
        %5491 = vmatpush1.bf16.msra.mxu0 %v3959
        %5492 = vmatprep.subr.bf16.mxu0 %v3964
        %5493 = vmatpush1.bf16.msra.mxu0 %v3963
        %5494 = vmatprep.subr.bf16.mxu0 %v3968
        %5495 = vmatpush1.bf16.msra.mxu0 %v3967
        %5496 = vmatprep.subr.bf16.mxu0 %v3972
        %5497 = vmatpush1.bf16.msra.mxu0 %v3971
        %5498 = vmatprep.subr.bf16.mxu0 %v3976
        %5499 = vmatpush1.bf16.msra.mxu0 %v3975
        %5500 = vmatprep.subr.bf16.mxu0 %v3980
        %5501 = vmatpush1.bf16.msra.mxu0 %v3979
        %5502 = vmatprep.subr.bf16.mxu0 %v3984
        %5503 = vmatpush1.bf16.msra.mxu0 %v3983
        %5504 = vmatprep.subr.bf16.mxu0 %v3988
        %5505 = vmatpush1.bf16.msra.mxu0 %v3987
        %5506 = vmatprep.subr.bf16.mxu0 %v3992
        %5507 = vmatpush1.bf16.msra.mxu0 %v3991
        %5508 = vmatprep.subr.bf16.mxu0 %v3996
        %5509 = vmatpush1.bf16.msra.mxu0 %v3995
        %5510 = vmatprep.subr.bf16.mxu0 %v4000
        %5511 = vmatpush1.bf16.msra.mxu0 %v3999
        %5512 = vmatprep.subr.bf16.mxu0 %v4004
        %5513 = vmatpush1.bf16.msra.mxu0 %v4003
        %5514 = vmatprep.subr.bf16.mxu0 %v4008
        %5515 = vmatpush1.bf16.msra.mxu0 %v4007
        %5516 = vmatprep.mubr.bf16.mxu0 %v1312
        %5517 = vmatmul.mubr.bf16.gmra.mrb[0].mxu0 %v1311
        %v5518 = vpop.f32.mrb[0].mxu0
        %v5519 = vadd.f32 %v5476, %v5518
        %v5520 = vpop.f32.mrb[0].mxu0
        %v5521 = vadd.f32 %v5478, %v5520
        %v5522 = vpop.f32.mrb[0].mxu0
        %v5523 = vadd.f32 %v5480, %v5522
        %v5524 = vpop.f32.mrb[0].mxu0
        %v5525 = vadd.f32 %v5482, %v5524
        %5526 = vdwg.mxu0
        %5527 = vmatprep.subr.bf16.mxu0 %v4012
        %5528 = vmatpush1.bf16.msra.mxu0 %v4011
        %5529 = vmatprep.subr.bf16.mxu0 %v4016
        %5530 = vmatpush1.bf16.msra.mxu0 %v4015
        %5531 = vmatprep.subr.bf16.mxu0 %v4020
        %5532 = vmatpush1.bf16.msra.mxu0 %v4019
        %5533 = vmatprep.subr.bf16.mxu0 %v4024
        %5534 = vmatpush1.bf16.msra.mxu0 %v4023
        %5535 = vmatprep.subr.bf16.mxu0 %v4028
        %5536 = vmatpush1.bf16.msra.mxu0 %v4027
        %5537 = vmatprep.subr.bf16.mxu0 %v4032
        %5538 = vmatpush1.bf16.msra.mxu0 %v4031
        %5539 = vmatprep.subr.bf16.mxu0 %v4036
        %5540 = vmatpush1.bf16.msra.mxu0 %v4035
        %5541 = vmatprep.subr.bf16.mxu0 %v4040
        %5542 = vmatpush1.bf16.msra.mxu0 %v4039
        %5543 = vmatprep.subr.bf16.mxu0 %v4044
        %5544 = vmatpush1.bf16.msra.mxu0 %v4043
        %5545 = vmatprep.subr.bf16.mxu0 %v4048
        %5546 = vmatpush1.bf16.msra.mxu0 %v4047
        %5547 = vmatprep.subr.bf16.mxu0 %v4052
        %5548 = vmatpush1.bf16.msra.mxu0 %v4051
        %5549 = vmatprep.subr.bf16.mxu0 %v4056
        %5550 = vmatpush1.bf16.msra.mxu0 %v4055
        %5551 = vmatprep.subr.bf16.mxu0 %v4060
        %5552 = vmatpush1.bf16.msra.mxu0 %v4059
        %5553 = vmatprep.subr.bf16.mxu0 %v4064
        %5554 = vmatpush1.bf16.msra.mxu0 %v4063
        %5555 = vmatprep.subr.bf16.mxu0 %v4068
        %5556 = vmatpush1.bf16.msra.mxu0 %v4067
        %5557 = vmatprep.subr.bf16.mxu0 %v4072
        %5558 = vmatpush1.bf16.msra.mxu0 %v4071
        %5559 = vmatprep.mubr.bf16.mxu0 %v1314
        %5560 = vmatmul.mubr.bf16.gmra.mrb[0].mxu0 %v1313
        %v5561 = vpop.f32.mrb[0].mxu0
        %v5562 = vadd.f32 %v5519, %v5561
        %v5563 = vpop.f32.mrb[0].mxu0
        %v5564 = vadd.f32 %v5521, %v5563
        %v5565 = vpop.f32.mrb[0].mxu0
        %v5566 = vadd.f32 %v5523, %v5565
        %v5567 = vpop.f32.mrb[0].mxu0
        %v5568 = vadd.f32 %v5525, %v5567
        %5569 = vdwg.mxu0
        %5570 = vmatprep.subr.bf16.mxu0 %v4076
        %5571 = vmatpush1.bf16.msra.mxu0 %v4075
        %5572 = vmatprep.subr.bf16.mxu0 %v4080
        %5573 = vmatpush1.bf16.msra.mxu0 %v4079
        %5574 = vmatprep.subr.bf16.mxu0 %v4084
        %5575 = vmatpush1.bf16.msra.mxu0 %v4083
        %5576 = vmatprep.subr.bf16.mxu0 %v4088
        %5577 = vmatpush1.bf16.msra.mxu0 %v4087
        %5578 = vmatprep.subr.bf16.mxu0 %v4092
        %5579 = vmatpush1.bf16.msra.mxu0 %v4091
        %5580 = vmatprep.subr.bf16.mxu0 %v4096
        %5581 = vmatpush1.bf16.msra.mxu0 %v4095
        %5582 = vmatprep.subr.bf16.mxu0 %v4100
        %5583 = vmatpush1.bf16.msra.mxu0 %v4099
        %5584 = vmatprep.subr.bf16.mxu0 %v4104
        %5585 = vmatpush1.bf16.msra.mxu0 %v4103
        %5586 = vmatprep.subr.bf16.mxu0 %v4108
        %5587 = vmatpush1.bf16.msra.mxu0 %v4107
        %5588 = vmatprep.subr.bf16.mxu0 %v4112
        %5589 = vmatpush1.bf16.msra.mxu0 %v4111
        %5590 = vmatprep.subr.bf16.mxu0 %v4116
        %5591 = vmatpush1.bf16.msra.mxu0 %v4115
        %5592 = vmatprep.subr.bf16.mxu0 %v4120
        %5593 = vmatpush1.bf16.msra.mxu0 %v4119
        %5594 = vmatprep.subr.bf16.mxu0 %v4124
        %5595 = vmatpush1.bf16.msra.mxu0 %v4123
        %5596 = vmatprep.subr.bf16.mxu0 %v4128
        %5597 = vmatpush1.bf16.msra.mxu0 %v4127
        %5598 = vmatprep.subr.bf16.mxu0 %v4132
        %5599 = vmatpush1.bf16.msra.mxu0 %v4131
        %5600 = vmatprep.subr.bf16.mxu0 %v4136
        %5601 = vmatpush1.bf16.msra.mxu0 %v4135
        %5602 = vmatprep.mubr.bf16.mxu0 %v1316
        %5603 = vmatmul.mubr.bf16.gmra.mrb[0].mxu0 %v1315
        %v5604 = vpop.f32.mrb[0].mxu0
        %v5605 = vadd.f32 %v5562, %v5604
        %v5606 = vpop.f32.mrb[0].mxu0
        %v5607 = vadd.f32 %v5564, %v5606
        %v5608 = vpop.f32.mrb[0].mxu0
        %v5609 = vadd.f32 %v5566, %v5608
        %v5610 = vpop.f32.mrb[0].mxu0
        %v5611 = vadd.f32 %v5568, %v5610
        %5612 = vdwg.mxu0
        %5613 = vmatprep.subr.bf16.mxu0 %v4140
        %5614 = vmatpush1.bf16.msra.mxu0 %v4139
        %5615 = vmatprep.subr.bf16.mxu0 %v4144
        %5616 = vmatpush1.bf16.msra.mxu0 %v4143
        %5617 = vmatprep.subr.bf16.mxu0 %v4148
        %5618 = vmatpush1.bf16.msra.mxu0 %v4147
        %5619 = vmatprep.subr.bf16.mxu0 %v4152
        %5620 = vmatpush1.bf16.msra.mxu0 %v4151
        %5621 = vmatprep.subr.bf16.mxu0 %v4156
        %5622 = vmatpush1.bf16.msra.mxu0 %v4155
        %5623 = vmatprep.subr.bf16.mxu0 %v4160
        %5624 = vmatpush1.bf16.msra.mxu0 %v4159
        %5625 = vmatprep.subr.bf16.mxu0 %v4164
        %5626 = vmatpush1.bf16.msra.mxu0 %v4163
        %5627 = vmatprep.subr.bf16.mxu0 %v4168
        %5628 = vmatpush1.bf16.msra.mxu0 %v4167
        %5629 = vmatprep.subr.bf16.mxu0 %v4172
        %5630 = vmatpush1.bf16.msra.mxu0 %v4171
        %5631 = vmatprep.subr.bf16.mxu0 %v4176
        %5632 = vmatpush1.bf16.msra.mxu0 %v4175
        %5633 = vmatprep.subr.bf16.mxu0 %v4180
        %5634 = vmatpush1.bf16.msra.mxu0 %v4179
        %5635 = vmatprep.subr.bf16.mxu0 %v4184
        %5636 = vmatpush1.bf16.msra.mxu0 %v4183
        %5637 = vmatprep.subr.bf16.mxu0 %v4188
        %5638 = vmatpush1.bf16.msra.mxu0 %v4187
        %5639 = vmatprep.subr.bf16.mxu0 %v4192
        %5640 = vmatpush1.bf16.msra.mxu0 %v4191
        %5641 = vmatprep.subr.bf16.mxu0 %v4196
        %5642 = vmatpush1.bf16.msra.mxu0 %v4195
        %5643 = vmatprep.subr.bf16.mxu0 %v4200
        %5644 = vmatpush1.bf16.msra.mxu0 %v4199
        %5645 = vmatprep.mubr.bf16.mxu0 %v1318
        %5646 = vmatmul.mubr.bf16.gmra.mrb[0].mxu0 %v1317
        %v5647 = vpop.f32.mrb[0].mxu0
        %v5648 = vadd.f32 %v5605, %v5647
        %v5649 = vpop.f32.mrb[0].mxu0
        %v5650 = vadd.f32 %v5607, %v5649
        %v5651 = vpop.f32.mrb[0].mxu0
        %v5652 = vadd.f32 %v5609, %v5651
        %v5653 = vpop.f32.mrb[0].mxu0
        %v5654 = vadd.f32 %v5611, %v5653
        %5655 = vdwg.mxu0
        %5656 = vmatprep.subr.bf16.mxu0 %v4204
        %5657 = vmatpush1.bf16.msra.mxu0 %v4203
        %5658 = vmatprep.subr.bf16.mxu0 %v4208
        %5659 = vmatpush1.bf16.msra.mxu0 %v4207
        %5660 = vmatprep.subr.bf16.mxu0 %v4212
        %5661 = vmatpush1.bf16.msra.mxu0 %v4211
        %5662 = vmatprep.subr.bf16.mxu0 %v4216
        %5663 = vmatpush1.bf16.msra.mxu0 %v4215
        %5664 = vmatprep.subr.bf16.mxu0 %v4220
        %5665 = vmatpush1.bf16.msra.mxu0 %v4219
        %5666 = vmatprep.subr.bf16.mxu0 %v4224
        %5667 = vmatpush1.bf16.msra.mxu0 %v4223
        %5668 = vmatprep.subr.bf16.mxu0 %v4228
        %5669 = vmatpush1.bf16.msra.mxu0 %v4227
        %5670 = vmatprep.subr.bf16.mxu0 %v4232
        %5671 = vmatpush1.bf16.msra.mxu0 %v4231
        %5672 = vmatprep.subr.bf16.mxu0 %v4236
        %5673 = vmatpush1.bf16.msra.mxu0 %v4235
        %5674 = vmatprep.subr.bf16.mxu0 %v4240
        %5675 = vmatpush1.bf16.msra.mxu0 %v4239
        %5676 = vmatprep.subr.bf16.mxu0 %v4244
        %5677 = vmatpush1.bf16.msra.mxu0 %v4243
        %5678 = vmatprep.subr.bf16.mxu0 %v4248
        %5679 = vmatpush1.bf16.msra.mxu0 %v4247
        %5680 = vmatprep.subr.bf16.mxu0 %v4252
        %5681 = vmatpush1.bf16.msra.mxu0 %v4251
        %5682 = vmatprep.subr.bf16.mxu0 %v4256
        %5683 = vmatpush1.bf16.msra.mxu0 %v4255
        %5684 = vmatprep.subr.bf16.mxu0 %v4260
        %5685 = vmatpush1.bf16.msra.mxu0 %v4259
        %5686 = vmatprep.subr.bf16.mxu0 %v4264
        %5687 = vmatpush1.bf16.msra.mxu0 %v4263
        %5688 = vmatprep.mubr.bf16.mxu0 %v1320
        %5689 = vmatmul.mubr.bf16.gmra.mrb[0].mxu0 %v1319
        %v5690 = vpop.f32.mrb[0].mxu0
        %v5691 = vadd.f32 %v5648, %v5690
        %v5692 = vpop.f32.mrb[0].mxu0
        %v5693 = vadd.f32 %v5650, %v5692
        %v5694 = vpop.f32.mrb[0].mxu0
        %v5695 = vadd.f32 %v5652, %v5694
        %v5696 = vpop.f32.mrb[0].mxu0
        %v5697 = vadd.f32 %v5654, %v5696
        %5698 = vdwg.mxu0
        %5699 = vmatprep.subr.bf16.mxu0 %v4268
        %5700 = vmatpush1.bf16.msra.mxu0 %v4267
        %5701 = vmatprep.subr.bf16.mxu0 %v4272
        %5702 = vmatpush1.bf16.msra.mxu0 %v4271
        %5703 = vmatprep.subr.bf16.mxu0 %v4276
        %5704 = vmatpush1.bf16.msra.mxu0 %v4275
        %5705 = vmatprep.subr.bf16.mxu0 %v4280
        %5706 = vmatpush1.bf16.msra.mxu0 %v4279
        %5707 = vmatprep.subr.bf16.mxu0 %v4284
        %5708 = vmatpush1.bf16.msra.mxu0 %v4283
        %5709 = vmatprep.subr.bf16.mxu0 %v4288
        %5710 = vmatpush1.bf16.msra.mxu0 %v4287
        %5711 = vmatprep.subr.bf16.mxu0 %v4292
        %5712 = vmatpush1.bf16.msra.mxu0 %v4291
        %5713 = vmatprep.subr.bf16.mxu0 %v4296
        %5714 = vmatpush1.bf16.msra.mxu0 %v4295
        %5715 = vmatprep.subr.bf16.mxu0 %v4300
        %5716 = vmatpush1.bf16.msra.mxu0 %v4299
        %5717 = vmatprep.subr.bf16.mxu0 %v4304
        %5718 = vmatpush1.bf16.msra.mxu0 %v4303
        %5719 = vmatprep.subr.bf16.mxu0 %v4308
        %5720 = vmatpush1.bf16.msra.mxu0 %v4307
        %5721 = vmatprep.subr.bf16.mxu0 %v4312
        %5722 = vmatpush1.bf16.msra.mxu0 %v4311
        %5723 = vmatprep.subr.bf16.mxu0 %v4316
        %5724 = vmatpush1.bf16.msra.mxu0 %v4315
        %5725 = vmatprep.subr.bf16.mxu0 %v4320
        %5726 = vmatpush1.bf16.msra.mxu0 %v4319
        %5727 = vmatprep.subr.bf16.mxu0 %v4324
        %5728 = vmatpush1.bf16.msra.mxu0 %v4323
        %5729 = vmatprep.subr.bf16.mxu0 %v4328
        %5730 = vmatpush1.bf16.msra.mxu0 %v4327
        %5731 = vmatprep.mubr.bf16.mxu0 %v1322
        %5732 = vmatmul.mubr.bf16.gmra.mrb[0].mxu0 %v1321
        %v5733 = vpop.f32.mrb[0].mxu0
        %v5734 = vadd.f32 %v5691, %v5733
        %v5735 = vpop.f32.mrb[0].mxu0
        %v5736 = vadd.f32 %v5693, %v5735
        %v5737 = vpop.f32.mrb[0].mxu0
        %v5738 = vadd.f32 %v5695, %v5737
        %v5739 = vpop.f32.mrb[0].mxu0
        %v5740 = vadd.f32 %v5697, %v5739
        %5741 = vdwg.mxu0
        %5742 = vmatprep.subr.bf16.mxu0 %v4332
        %5743 = vmatpush1.bf16.msra.mxu0 %v4331
        %5744 = vmatprep.subr.bf16.mxu0 %v4336
        %5745 = vmatpush1.bf16.msra.mxu0 %v4335
        %5746 = vmatprep.subr.bf16.mxu0 %v4340
        %5747 = vmatpush1.bf16.msra.mxu0 %v4339
        %5748 = vmatprep.subr.bf16.mxu0 %v4344
        %5749 = vmatpush1.bf16.msra.mxu0 %v4343
        %5750 = vmatprep.subr.bf16.mxu0 %v4348
        %5751 = vmatpush1.bf16.msra.mxu0 %v4347
        %5752 = vmatprep.subr.bf16.mxu0 %v4352
        %5753 = vmatpush1.bf16.msra.mxu0 %v4351
        %5754 = vmatprep.subr.bf16.mxu0 %v4356
        %5755 = vmatpush1.bf16.msra.mxu0 %v4355
        %5756 = vmatprep.subr.bf16.mxu0 %v4360
        %5757 = vmatpush1.bf16.msra.mxu0 %v4359
        %5758 = vmatprep.subr.bf16.mxu0 %v4364
        %5759 = vmatpush1.bf16.msra.mxu0 %v4363
        %5760 = vmatprep.subr.bf16.mxu0 %v4368
        %5761 = vmatpush1.bf16.msra.mxu0 %v4367
        %5762 = vmatprep.subr.bf16.mxu0 %v4372
        %5763 = vmatpush1.bf16.msra.mxu0 %v4371
        %5764 = vmatprep.subr.bf16.mxu0 %v4376
        %5765 = vmatpush1.bf16.msra.mxu0 %v4375
        %5766 = vmatprep.subr.bf16.mxu0 %v4380
        %5767 = vmatpush1.bf16.msra.mxu0 %v4379
        %5768 = vmatprep.subr.bf16.mxu0 %v4384
        %5769 = vmatpush1.bf16.msra.mxu0 %v4383
        %5770 = vmatprep.subr.bf16.mxu0 %v4388
        %5771 = vmatpush1.bf16.msra.mxu0 %v4387
        %5772 = vmatprep.subr.bf16.mxu0 %v4392
        %5773 = vmatpush1.bf16.msra.mxu0 %v4391
        %5774 = vmatprep.mubr.bf16.mxu0 %v1324
        %5775 = vmatmul.mubr.bf16.gmra.mrb[0].mxu0 %v1323
        %v5776 = vpop.f32.mrb[0].mxu0
        %v5777 = vadd.f32 %v5734, %v5776
        %v5778 = vpop.f32.mrb[0].mxu0
        %v5779 = vadd.f32 %v5736, %v5778
        %v5780 = vpop.f32.mrb[0].mxu0
        %v5781 = vadd.f32 %v5738, %v5780
        %v5782 = vpop.f32.mrb[0].mxu0
        %v5783 = vadd.f32 %v5740, %v5782
        %5784 = vdwg.mxu0
        %5785 = vmatprep.subr.bf16.mxu0 %v4396
        %5786 = vmatpush1.bf16.msra.mxu0 %v4395
        %5787 = vmatprep.subr.bf16.mxu0 %v4400
        %5788 = vmatpush1.bf16.msra.mxu0 %v4399
        %5789 = vmatprep.subr.bf16.mxu0 %v4404
        %5790 = vmatpush1.bf16.msra.mxu0 %v4403
        %5791 = vmatprep.subr.bf16.mxu0 %v4408
        %5792 = vmatpush1.bf16.msra.mxu0 %v4407
        %5793 = vmatprep.subr.bf16.mxu0 %v4412
        %5794 = vmatpush1.bf16.msra.mxu0 %v4411
        %5795 = vmatprep.subr.bf16.mxu0 %v4416
        %5796 = vmatpush1.bf16.msra.mxu0 %v4415
        %5797 = vmatprep.subr.bf16.mxu0 %v4420
        %5798 = vmatpush1.bf16.msra.mxu0 %v4419
        %5799 = vmatprep.subr.bf16.mxu0 %v4424
        %5800 = vmatpush1.bf16.msra.mxu0 %v4423
        %5801 = vmatprep.subr.bf16.mxu0 %v4428
        %5802 = vmatpush1.bf16.msra.mxu0 %v4427
        %5803 = vmatprep.subr.bf16.mxu0 %v4432
        %5804 = vmatpush1.bf16.msra.mxu0 %v4431
        %5805 = vmatprep.subr.bf16.mxu0 %v4436
        %5806 = vmatpush1.bf16.msra.mxu0 %v4435
        %5807 = vmatprep.subr.bf16.mxu0 %v4440
        %5808 = vmatpush1.bf16.msra.mxu0 %v4439
        %5809 = vmatprep.subr.bf16.mxu0 %v4444
        %5810 = vmatpush1.bf16.msra.mxu0 %v4443
        %5811 = vmatprep.subr.bf16.mxu0 %v4448
        %5812 = vmatpush1.bf16.msra.mxu0 %v4447
        %5813 = vmatprep.subr.bf16.mxu0 %v4452
        %5814 = vmatpush1.bf16.msra.mxu0 %v4451
        %5815 = vmatprep.subr.bf16.mxu0 %v4456
        %5816 = vmatpush1.bf16.msra.mxu0 %v4455
        %5817 = vmatprep.mubr.bf16.mxu0 %v1326
        %5818 = vmatmul.mubr.bf16.gmra.mrb[0].mxu0 %v1325
        %v5819 = vpop.f32.mrb[0].mxu0
        %v5820 = vadd.f32 %v5777, %v5819
        %v5821 = vpop.f32.mrb[0].mxu0
        %v5822 = vadd.f32 %v5779, %v5821
        %v5823 = vpop.f32.mrb[0].mxu0
        %v5824 = vadd.f32 %v5781, %v5823
        %v5825 = vpop.f32.mrb[0].mxu0
        %v5826 = vadd.f32 %v5783, %v5825
        %5827 = vdwg.mxu0
        %5828 = vmatprep.subr.bf16.mxu0 %v4460
        %5829 = vmatpush1.bf16.msra.mxu0 %v4459
        %5830 = vmatprep.subr.bf16.mxu0 %v4464
        %5831 = vmatpush1.bf16.msra.mxu0 %v4463
        %5832 = vmatprep.subr.bf16.mxu0 %v4468
        %5833 = vmatpush1.bf16.msra.mxu0 %v4467
        %5834 = vmatprep.subr.bf16.mxu0 %v4472
        %5835 = vmatpush1.bf16.msra.mxu0 %v4471
        %5836 = vmatprep.subr.bf16.mxu0 %v4476
        %5837 = vmatpush1.bf16.msra.mxu0 %v4475
        %5838 = vmatprep.subr.bf16.mxu0 %v4480
        %5839 = vmatpush1.bf16.msra.mxu0 %v4479
        %5840 = vmatprep.subr.bf16.mxu0 %v4484
        %5841 = vmatpush1.bf16.msra.mxu0 %v4483
        %5842 = vmatprep.subr.bf16.mxu0 %v4488
        %5843 = vmatpush1.bf16.msra.mxu0 %v4487
        %5844 = vmatprep.subr.bf16.mxu0 %v4492
        %5845 = vmatpush1.bf16.msra.mxu0 %v4491
        %5846 = vmatprep.subr.bf16.mxu0 %v4496
        %5847 = vmatpush1.bf16.msra.mxu0 %v4495
        %5848 = vmatprep.subr.bf16.mxu0 %v4500
        %5849 = vmatpush1.bf16.msra.mxu0 %v4499
        %5850 = vmatprep.subr.bf16.mxu0 %v4504
        %5851 = vmatpush1.bf16.msra.mxu0 %v4503
        %5852 = vmatprep.subr.bf16.mxu0 %v4508
        %5853 = vmatpush1.bf16.msra.mxu0 %v4507
        %5854 = vmatprep.subr.bf16.mxu0 %v4512
        %5855 = vmatpush1.bf16.msra.mxu0 %v4511
        %5856 = vmatprep.subr.bf16.mxu0 %v4516
        %5857 = vmatpush1.bf16.msra.mxu0 %v4515
        %5858 = vmatprep.subr.bf16.mxu0 %v4520
        %5859 = vmatpush1.bf16.msra.mxu0 %v4519
        %5860 = vmatprep.mubr.bf16.mxu0 %v1328
        %5861 = vmatmul.mubr.bf16.gmra.mrb[0].mxu0 %v1327
        %v5862 = vpop.f32.mrb[0].mxu0
        %v5863 = vadd.f32 %v5820, %v5862
        %v5864 = vpop.f32.mrb[0].mxu0
        %v5865 = vadd.f32 %v5822, %v5864
        %v5866 = vpop.f32.mrb[0].mxu0
        %v5867 = vadd.f32 %v5824, %v5866
        %v5868 = vpop.f32.mrb[0].mxu0
        %v5869 = vadd.f32 %v5826, %v5868
        %5870 = vdwg.mxu0
        %5871 = vmatprep.subr.bf16.mxu0 %v4524
        %5872 = vmatpush1.bf16.msra.mxu0 %v4523
        %5873 = vmatprep.subr.bf16.mxu0 %v4528
        %5874 = vmatpush1.bf16.msra.mxu0 %v4527
        %5875 = vmatprep.subr.bf16.mxu0 %v4532
        %5876 = vmatpush1.bf16.msra.mxu0 %v4531
        %5877 = vmatprep.subr.bf16.mxu0 %v4536
        %5878 = vmatpush1.bf16.msra.mxu0 %v4535
        %5879 = vmatprep.subr.bf16.mxu0 %v4540
        %5880 = vmatpush1.bf16.msra.mxu0 %v4539
        %5881 = vmatprep.subr.bf16.mxu0 %v4544
        %5882 = vmatpush1.bf16.msra.mxu0 %v4543
        %5883 = vmatprep.subr.bf16.mxu0 %v4548
        %5884 = vmatpush1.bf16.msra.mxu0 %v4547
        %5885 = vmatprep.subr.bf16.mxu0 %v4552
        %5886 = vmatpush1.bf16.msra.mxu0 %v4551
        %5887 = vmatprep.subr.bf16.mxu0 0
        %5888 = vmatpush1.bf16.msra.mxu0 0
        %5889 = vmatprep.subr.bf16.mxu0 0
        %5890 = vmatpush1.bf16.msra.mxu0 0
        %5891 = vmatprep.subr.bf16.mxu0 0
        %5892 = vmatpush1.bf16.msra.mxu0 0
        %5893 = vmatprep.subr.bf16.mxu0 0
        %5894 = vmatpush1.bf16.msra.mxu0 0
        %5895 = vmatprep.subr.bf16.mxu0 0
        %5896 = vmatpush1.bf16.msra.mxu0 0
        %5897 = vmatprep.subr.bf16.mxu0 0
        %5898 = vmatpush1.bf16.msra.mxu0 0
        %5899 = vmatprep.subr.bf16.mxu0 0
        %5900 = vmatpush1.bf16.msra.mxu0 0
        %5901 = vmatprep.subr.bf16.mxu0 0
        %5902 = vmatpush1.bf16.msra.mxu0 0
        %5903 = vmatprep.mubr.bf16.mxu0 0
        %5904 = vmatmul.mubr.bf16.gmra.mrb[0].mxu0 %v1329
        %v5905 = vpop.f32.mrb[0].mxu0
        %v5906 = vadd.f32 %v5863, %v5905
        %v5907 = vpop.f32.mrb[0].mxu0
        %v5908 = vadd.f32 %v5865, %v5907
        %v5909 = vpop.f32.mrb[0].mxu0
        %v5910 = vadd.f32 %v5867, %v5909
        %v5911 = vpop.f32.mrb[0].mxu0
        %v5912 = vadd.f32 %v5869, %v5911
        %5913 = vdwg.mxu0
        %5914 = vmatprep.subr.bf16.mxu0 %v3758
        %5915 = vmatpush1.bf16.msra.mxu0 %v3757
        %5916 = vmatprep.subr.bf16.mxu0 %v3762
        %5917 = vmatpush1.bf16.msra.mxu0 %v3761
        %5918 = vmatprep.subr.bf16.mxu0 %v3766
        %5919 = vmatpush1.bf16.msra.mxu0 %v3765
        %5920 = vmatprep.subr.bf16.mxu0 %v3770
        %5921 = vmatpush1.bf16.msra.mxu0 %v3769
        %5922 = vmatprep.subr.bf16.mxu0 %v3774
        %5923 = vmatpush1.bf16.msra.mxu0 %v3773
        %5924 = vmatprep.subr.bf16.mxu0 %v3778
        %5925 = vmatpush1.bf16.msra.mxu0 %v3777
        %5926 = vmatprep.subr.bf16.mxu0 %v3782
        %5927 = vmatpush1.bf16.msra.mxu0 %v3781
        %5928 = vmatprep.subr.bf16.mxu0 %v3786
        %5929 = vmatpush1.bf16.msra.mxu0 %v3785
        %5930 = vmatprep.subr.bf16.mxu0 %v3790
        %5931 = vmatpush1.bf16.msra.mxu0 %v3789
        %5932 = vmatprep.subr.bf16.mxu0 %v3794
        %5933 = vmatpush1.bf16.msra.mxu0 %v3793
        %5934 = vmatprep.subr.bf16.mxu0 %v3798
        %5935 = vmatpush1.bf16.msra.mxu0 %v3797
        %5936 = vmatprep.subr.bf16.mxu0 %v3802
        %5937 = vmatpush1.bf16.msra.mxu0 %v3801
        %5938 = vmatprep.subr.bf16.mxu0 %v3806
        %5939 = vmatpush1.bf16.msra.mxu0 %v3805
        %5940 = vmatprep.subr.bf16.mxu0 %v3810
        %5941 = vmatpush1.bf16.msra.mxu0 %v3809
        %5942 = vmatprep.subr.bf16.mxu0 %v3814
        %5943 = vmatpush1.bf16.msra.mxu0 %v3813
        %5944 = vmatprep.subr.bf16.mxu0 %v3818
        %5945 = vmatpush1.bf16.msra.mxu0 %v3817
        %5946 = vmatprep.mubr.bf16.mxu0 %v1306
        %5947 = vmatmul.mubr.bf16.gmra.mrb[0].mxu0 %v1305
        %v5948 = vpop.f32.mrb[0].mxu0
        %v5949 = vadd.f32 0.0, %v5948
        %v5950 = vpop.f32.mrb[0].mxu0
        %v5951 = vadd.f32 0.0, %v5950
        %v5952 = vpop.f32.mrb[0].mxu0
        %v5953 = vadd.f32 0.0, %v5952
        %v5954 = vpop.f32.mrb[0].mxu0
        %v5955 = vadd.f32 0.0, %v5954
        %5956 = vdwg.mxu0
        %5957 = vmatprep.subr.bf16.mxu0 %v3822
        %5958 = vmatpush1.bf16.msra.mxu0 %v3821
        %5959 = vmatprep.subr.bf16.mxu0 %v3826
        %5960 = vmatpush1.bf16.msra.mxu0 %v3825
        %5961 = vmatprep.subr.bf16.mxu0 %v3830
        %5962 = vmatpush1.bf16.msra.mxu0 %v3829
        %5963 = vmatprep.subr.bf16.mxu0 %v3834
        %5964 = vmatpush1.bf16.msra.mxu0 %v3833
        %5965 = vmatprep.subr.bf16.mxu0 %v3838
        %5966 = vmatpush1.bf16.msra.mxu0 %v3837
        %5967 = vmatprep.subr.bf16.mxu0 %v3842
        %5968 = vmatpush1.bf16.msra.mxu0 %v3841
        %5969 = vmatprep.subr.bf16.mxu0 %v3846
        %5970 = vmatpush1.bf16.msra.mxu0 %v3845
        %5971 = vmatprep.subr.bf16.mxu0 %v3850
        %5972 = vmatpush1.bf16.msra.mxu0 %v3849
        %5973 = vmatprep.subr.bf16.mxu0 %v3854
        %5974 = vmatpush1.bf16.msra.mxu0 %v3853
        %5975 = vmatprep.subr.bf16.mxu0 %v3858
        %5976 = vmatpush1.bf16.msra.mxu0 %v3857
        %5977 = vmatprep.subr.bf16.mxu0 %v3862
        %5978 = vmatpush1.bf16.msra.mxu0 %v3861
        %5979 = vmatprep.subr.bf16.mxu0 %v3866
        %5980 = vmatpush1.bf16.msra.mxu0 %v3865
        %5981 = vmatprep.subr.bf16.mxu0 %v3870
        %5982 = vmatpush1.bf16.msra.mxu0 %v3869
        %5983 = vmatprep.subr.bf16.mxu0 %v3874
        %5984 = vmatpush1.bf16.msra.mxu0 %v3873
        %5985 = vmatprep.subr.bf16.mxu0 %v3878
        %5986 = vmatpush1.bf16.msra.mxu0 %v3877
        %5987 = vmatprep.subr.bf16.mxu0 %v3882
        %5988 = vmatpush1.bf16.msra.mxu0 %v3881
        %5989 = vmatprep.mubr.bf16.mxu0 %v1308
        %5990 = vmatmul.mubr.bf16.gmra.mrb[0].mxu0 %v1307
        %v5991 = vpop.f32.mrb[0].mxu0
        %v5992 = vadd.f32 %v5949, %v5991
        %v5993 = vpop.f32.mrb[0].mxu0
        %v5994 = vadd.f32 %v5951, %v5993
        %v5995 = vpop.f32.mrb[0].mxu0
        %v5996 = vadd.f32 %v5953, %v5995
        %v5997 = vpop.f32.mrb[0].mxu0
        %v5998 = vadd.f32 %v5955, %v5997
        %5999 = vdwg.mxu0
        %6000 = vmatprep.subr.bf16.mxu0 %v3886
        %6001 = vmatpush1.bf16.msra.mxu0 %v3885
        %6002 = vmatprep.subr.bf16.mxu0 %v3890
        %6003 = vmatpush1.bf16.msra.mxu0 %v3889
        %6004 = vmatprep.subr.bf16.mxu0 %v3894
        %6005 = vmatpush1.bf16.msra.mxu0 %v3893
        %6006 = vmatprep.subr.bf16.mxu0 %v3898
        %6007 = vmatpush1.bf16.msra.mxu0 %v3897
        %6008 = vmatprep.subr.bf16.mxu0 %v3902
        %6009 = vmatpush1.bf16.msra.mxu0 %v3901
        %6010 = vmatprep.subr.bf16.mxu0 %v3906
        %6011 = vmatpush1.bf16.msra.mxu0 %v3905
        %6012 = vmatprep.subr.bf16.mxu0 %v3910
        %6013 = vmatpush1.bf16.msra.mxu0 %v3909
        %6014 = vmatprep.subr.bf16.mxu0 %v3914
        %6015 = vmatpush1.bf16.msra.mxu0 %v3913
        %6016 = vmatprep.subr.bf16.mxu0 %v3918
        %6017 = vmatpush1.bf16.msra.mxu0 %v3917
        %6018 = vmatprep.subr.bf16.mxu0 %v3922
        %6019 = vmatpush1.bf16.msra.mxu0 %v3921
        %6020 = vmatprep.subr.bf16.mxu0 %v3926
        %6021 = vmatpush1.bf16.msra.mxu0 %v3925
        %6022 = vmatprep.subr.bf16.mxu0 %v3930
        %6023 = vmatpush1.bf16.msra.mxu0 %v3929
        %6024 = vmatprep.subr.bf16.mxu0 %v3934
        %6025 = vmatpush1.bf16.msra.mxu0 %v3933
        %6026 = vmatprep.subr.bf16.mxu0 %v3938
        %6027 = vmatpush1.bf16.msra.mxu0 %v3937
        %6028 = vmatprep.subr.bf16.mxu0 %v3942
        %6029 = vmatpush1.bf16.msra.mxu0 %v3941
        %6030 = vmatprep.subr.bf16.mxu0 %v3946
        %6031 = vmatpush1.bf16.msra.mxu0 %v3945
        %6032 = vmatprep.mubr.bf16.mxu0 %v1310
        %6033 = vmatmul.mubr.bf16.gmra.mrb[0].mxu0 %v1309
        %v6034 = vpop.f32.mrb[0].mxu0
        %v6035 = vadd.f32 %v5992, %v6034
        %v6036 = vpop.f32.mrb[0].mxu0
        %v6037 = vadd.f32 %v5994, %v6036
        %v6038 = vpop.f32.mrb[0].mxu0
        %v6039 = vadd.f32 %v5996, %v6038
        %v6040 = vpop.f32.mrb[0].mxu0
        %v6041 = vadd.f32 %v5998, %v6040
        %6042 = vdwg.mxu0
        %6043 = vmatprep.subr.bf16.mxu0 %v3950
        %6044 = vmatpush1.bf16.msra.mxu0 %v3949
        %6045 = vmatprep.subr.bf16.mxu0 %v3954
        %6046 = vmatpush1.bf16.msra.mxu0 %v3953
        %6047 = vmatprep.subr.bf16.mxu0 %v3958
        %6048 = vmatpush1.bf16.msra.mxu0 %v3957
        %6049 = vmatprep.subr.bf16.mxu0 %v3962
        %6050 = vmatpush1.bf16.msra.mxu0 %v3961
        %6051 = vmatprep.subr.bf16.mxu0 %v3966
        %6052 = vmatpush1.bf16.msra.mxu0 %v3965
        %6053 = vmatprep.subr.bf16.mxu0 %v3970
        %6054 = vmatpush1.bf16.msra.mxu0 %v3969
        %6055 = vmatprep.subr.bf16.mxu0 %v3974
        %6056 = vmatpush1.bf16.msra.mxu0 %v3973
        %6057 = vmatprep.subr.bf16.mxu0 %v3978
        %6058 = vmatpush1.bf16.msra.mxu0 %v3977
        %6059 = vmatprep.subr.bf16.mxu0 %v3982
        %6060 = vmatpush1.bf16.msra.mxu0 %v3981
        %6061 = vmatprep.subr.bf16.mxu0 %v3986
        %6062 = vmatpush1.bf16.msra.mxu0 %v3985
        %6063 = vmatprep.subr.bf16.mxu0 %v3990
        %6064 = vmatpush1.bf16.msra.mxu0 %v3989
        %6065 = vmatprep.subr.bf16.mxu0 %v3994
        %6066 = vmatpush1.bf16.msra.mxu0 %v3993
        %6067 = vmatprep.subr.bf16.mxu0 %v3998
        %6068 = vmatpush1.bf16.msra.mxu0 %v3997
        %6069 = vmatprep.subr.bf16.mxu0 %v4002
        %6070 = vmatpush1.bf16.msra.mxu0 %v4001
        %6071 = vmatprep.subr.bf16.mxu0 %v4006
        %6072 = vmatpush1.bf16.msra.mxu0 %v4005
        %6073 = vmatprep.subr.bf16.mxu0 %v4010
        %6074 = vmatpush1.bf16.msra.mxu0 %v4009
        %6075 = vmatprep.mubr.bf16.mxu0 %v1312
        %6076 = vmatmul.mubr.bf16.gmra.mrb[0].mxu0 %v1311
        %v6077 = vpop.f32.mrb[0].mxu0
        %v6078 = vadd.f32 %v6035, %v6077
        %v6079 = vpop.f32.mrb[0].mxu0
        %v6080 = vadd.f32 %v6037, %v6079
        %v6081 = vpop.f32.mrb[0].mxu0
        %v6082 = vadd.f32 %v6039, %v6081
        %v6083 = vpop.f32.mrb[0].mxu0
        %v6084 = vadd.f32 %v6041, %v6083
        %6085 = vdwg.mxu0
        %6086 = vmatprep.subr.bf16.mxu0 %v4014
        %6087 = vmatpush1.bf16.msra.mxu0 %v4013
        %6088 = vmatprep.subr.bf16.mxu0 %v4018
        %6089 = vmatpush1.bf16.msra.mxu0 %v4017
        %6090 = vmatprep.subr.bf16.mxu0 %v4022
        %6091 = vmatpush1.bf16.msra.mxu0 %v4021
        %6092 = vmatprep.subr.bf16.mxu0 %v4026
        %6093 = vmatpush1.bf16.msra.mxu0 %v4025
        %6094 = vmatprep.subr.bf16.mxu0 %v4030
        %6095 = vmatpush1.bf16.msra.mxu0 %v4029
        %6096 = vmatprep.subr.bf16.mxu0 %v4034
        %6097 = vmatpush1.bf16.msra.mxu0 %v4033
        %6098 = vmatprep.subr.bf16.mxu0 %v4038
        %6099 = vmatpush1.bf16.msra.mxu0 %v4037
        %6100 = vmatprep.subr.bf16.mxu0 %v4042
        %6101 = vmatpush1.bf16.msra.mxu0 %v4041
        %6102 = vmatprep.subr.bf16.mxu0 %v4046
        %6103 = vmatpush1.bf16.msra.mxu0 %v4045
        %6104 = vmatprep.subr.bf16.mxu0 %v4050
        %6105 = vmatpush1.bf16.msra.mxu0 %v4049
        %6106 = vmatprep.subr.bf16.mxu0 %v4054
        %6107 = vmatpush1.bf16.msra.mxu0 %v4053
        %6108 = vmatprep.subr.bf16.mxu0 %v4058
        %6109 = vmatpush1.bf16.msra.mxu0 %v4057
        %6110 = vmatprep.subr.bf16.mxu0 %v4062
        %6111 = vmatpush1.bf16.msra.mxu0 %v4061
        %6112 = vmatprep.subr.bf16.mxu0 %v4066
        %6113 = vmatpush1.bf16.msra.mxu0 %v4065
        %6114 = vmatprep.subr.bf16.mxu0 %v4070
        %6115 = vmatpush1.bf16.msra.mxu0 %v4069
        %6116 = vmatprep.subr.bf16.mxu0 %v4074
        %6117 = vmatpush1.bf16.msra.mxu0 %v4073
        %6118 = vmatprep.mubr.bf16.mxu0 %v1314
        %6119 = vmatmul.mubr.bf16.gmra.mrb[0].mxu0 %v1313
        %v6120 = vpop.f32.mrb[0].mxu0
        %v6121 = vadd.f32 %v6078, %v6120
        %v6122 = vpop.f32.mrb[0].mxu0
        %v6123 = vadd.f32 %v6080, %v6122
        %v6124 = vpop.f32.mrb[0].mxu0
        %v6125 = vadd.f32 %v6082, %v6124
        %v6126 = vpop.f32.mrb[0].mxu0
        %v6127 = vadd.f32 %v6084, %v6126
        %6128 = vdwg.mxu0
        %6129 = vmatprep.subr.bf16.mxu0 %v4078
        %6130 = vmatpush1.bf16.msra.mxu0 %v4077
        %6131 = vmatprep.subr.bf16.mxu0 %v4082
        %6132 = vmatpush1.bf16.msra.mxu0 %v4081
        %6133 = vmatprep.subr.bf16.mxu0 %v4086
        %6134 = vmatpush1.bf16.msra.mxu0 %v4085
        %6135 = vmatprep.subr.bf16.mxu0 %v4090
        %6136 = vmatpush1.bf16.msra.mxu0 %v4089
        %6137 = vmatprep.subr.bf16.mxu0 %v4094
        %6138 = vmatpush1.bf16.msra.mxu0 %v4093
        %6139 = vmatprep.subr.bf16.mxu0 %v4098
        %6140 = vmatpush1.bf16.msra.mxu0 %v4097
        %6141 = vmatprep.subr.bf16.mxu0 %v4102
        %6142 = vmatpush1.bf16.msra.mxu0 %v4101
        %6143 = vmatprep.subr.bf16.mxu0 %v4106
        %6144 = vmatpush1.bf16.msra.mxu0 %v4105
        %6145 = vmatprep.subr.bf16.mxu0 %v4110
        %6146 = vmatpush1.bf16.msra.mxu0 %v4109
        %6147 = vmatprep.subr.bf16.mxu0 %v4114
        %6148 = vmatpush1.bf16.msra.mxu0 %v4113
        %6149 = vmatprep.subr.bf16.mxu0 %v4118
        %6150 = vmatpush1.bf16.msra.mxu0 %v4117
        %6151 = vmatprep.subr.bf16.mxu0 %v4122
        %6152 = vmatpush1.bf16.msra.mxu0 %v4121
        %6153 = vmatprep.subr.bf16.mxu0 %v4126
        %6154 = vmatpush1.bf16.msra.mxu0 %v4125
        %6155 = vmatprep.subr.bf16.mxu0 %v4130
        %6156 = vmatpush1.bf16.msra.mxu0 %v4129
        %6157 = vmatprep.subr.bf16.mxu0 %v4134
        %6158 = vmatpush1.bf16.msra.mxu0 %v4133
        %6159 = vmatprep.subr.bf16.mxu0 %v4138
        %6160 = vmatpush1.bf16.msra.mxu0 %v4137
        %6161 = vmatprep.mubr.bf16.mxu0 %v1316
        %6162 = vmatmul.mubr.bf16.gmra.mrb[0].mxu0 %v1315
        %v6163 = vpop.f32.mrb[0].mxu0
        %v6164 = vadd.f32 %v6121, %v6163
        %v6165 = vpop.f32.mrb[0].mxu0
        %v6166 = vadd.f32 %v6123, %v6165
        %v6167 = vpop.f32.mrb[0].mxu0
        %v6168 = vadd.f32 %v6125, %v6167
        %v6169 = vpop.f32.mrb[0].mxu0
        %v6170 = vadd.f32 %v6127, %v6169
        %6171 = vdwg.mxu0
        %6172 = vmatprep.subr.bf16.mxu0 %v4142
        %6173 = vmatpush1.bf16.msra.mxu0 %v4141
        %6174 = vmatprep.subr.bf16.mxu0 %v4146
        %6175 = vmatpush1.bf16.msra.mxu0 %v4145
        %6176 = vmatprep.subr.bf16.mxu0 %v4150
        %6177 = vmatpush1.bf16.msra.mxu0 %v4149
        %6178 = vmatprep.subr.bf16.mxu0 %v4154
        %6179 = vmatpush1.bf16.msra.mxu0 %v4153
        %6180 = vmatprep.subr.bf16.mxu0 %v4158
        %6181 = vmatpush1.bf16.msra.mxu0 %v4157
        %6182 = vmatprep.subr.bf16.mxu0 %v4162
        %6183 = vmatpush1.bf16.msra.mxu0 %v4161
        %6184 = vmatprep.subr.bf16.mxu0 %v4166
        %6185 = vmatpush1.bf16.msra.mxu0 %v4165
        %6186 = vmatprep.subr.bf16.mxu0 %v4170
        %6187 = vmatpush1.bf16.msra.mxu0 %v4169
        %6188 = vmatprep.subr.bf16.mxu0 %v4174
        %6189 = vmatpush1.bf16.msra.mxu0 %v4173
        %6190 = vmatprep.subr.bf16.mxu0 %v4178
        %6191 = vmatpush1.bf16.msra.mxu0 %v4177
        %6192 = vmatprep.subr.bf16.mxu0 %v4182
        %6193 = vmatpush1.bf16.msra.mxu0 %v4181
        %6194 = vmatprep.subr.bf16.mxu0 %v4186
        %6195 = vmatpush1.bf16.msra.mxu0 %v4185
        %6196 = vmatprep.subr.bf16.mxu0 %v4190
        %6197 = vmatpush1.bf16.msra.mxu0 %v4189
        %6198 = vmatprep.subr.bf16.mxu0 %v4194
        %6199 = vmatpush1.bf16.msra.mxu0 %v4193
        %6200 = vmatprep.subr.bf16.mxu0 %v4198
        %6201 = vmatpush1.bf16.msra.mxu0 %v4197
        %6202 = vmatprep.subr.bf16.mxu0 %v4202
        %6203 = vmatpush1.bf16.msra.mxu0 %v4201
        %6204 = vmatprep.mubr.bf16.mxu0 %v1318
        %6205 = vmatmul.mubr.bf16.gmra.mrb[0].mxu0 %v1317
        %v6206 = vpop.f32.mrb[0].mxu0
        %v6207 = vadd.f32 %v6164, %v6206
        %v6208 = vpop.f32.mrb[0].mxu0
        %v6209 = vadd.f32 %v6166, %v6208
        %v6210 = vpop.f32.mrb[0].mxu0
        %v6211 = vadd.f32 %v6168, %v6210
        %v6212 = vpop.f32.mrb[0].mxu0
        %v6213 = vadd.f32 %v6170, %v6212
        %6214 = vdwg.mxu0
        %6215 = vmatprep.subr.bf16.mxu0 %v4206
        %6216 = vmatpush1.bf16.msra.mxu0 %v4205
        %6217 = vmatprep.subr.bf16.mxu0 %v4210
        %6218 = vmatpush1.bf16.msra.mxu0 %v4209
        %6219 = vmatprep.subr.bf16.mxu0 %v4214
        %6220 = vmatpush1.bf16.msra.mxu0 %v4213
        %6221 = vmatprep.subr.bf16.mxu0 %v4218
        %6222 = vmatpush1.bf16.msra.mxu0 %v4217
        %6223 = vmatprep.subr.bf16.mxu0 %v4222
        %6224 = vmatpush1.bf16.msra.mxu0 %v4221
        %6225 = vmatprep.subr.bf16.mxu0 %v4226
        %6226 = vmatpush1.bf16.msra.mxu0 %v4225
        %6227 = vmatprep.subr.bf16.mxu0 %v4230
        %6228 = vmatpush1.bf16.msra.mxu0 %v4229
        %6229 = vmatprep.subr.bf16.mxu0 %v4234
        %6230 = vmatpush1.bf16.msra.mxu0 %v4233
        %6231 = vmatprep.subr.bf16.mxu0 %v4238
        %6232 = vmatpush1.bf16.msra.mxu0 %v4237
        %6233 = vmatprep.subr.bf16.mxu0 %v4242
        %6234 = vmatpush1.bf16.msra.mxu0 %v4241
        %6235 = vmatprep.subr.bf16.mxu0 %v4246
        %6236 = vmatpush1.bf16.msra.mxu0 %v4245
        %6237 = vmatprep.subr.bf16.mxu0 %v4250
        %6238 = vmatpush1.bf16.msra.mxu0 %v4249
        %6239 = vmatprep.subr.bf16.mxu0 %v4254
        %6240 = vmatpush1.bf16.msra.mxu0 %v4253
        %6241 = vmatprep.subr.bf16.mxu0 %v4258
        %6242 = vmatpush1.bf16.msra.mxu0 %v4257
        %6243 = vmatprep.subr.bf16.mxu0 %v4262
        %6244 = vmatpush1.bf16.msra.mxu0 %v4261
        %6245 = vmatprep.subr.bf16.mxu0 %v4266
        %6246 = vmatpush1.bf16.msra.mxu0 %v4265
        %6247 = vmatprep.mubr.bf16.mxu0 %v1320
        %6248 = vmatmul.mubr.bf16.gmra.mrb[0].mxu0 %v1319
        %v6249 = vpop.f32.mrb[0].mxu0
        %v6250 = vadd.f32 %v6207, %v6249
        %v6251 = vpop.f32.mrb[0].mxu0
        %v6252 = vadd.f32 %v6209, %v6251
        %v6253 = vpop.f32.mrb[0].mxu0
        %v6254 = vadd.f32 %v6211, %v6253
        %v6255 = vpop.f32.mrb[0].mxu0
        %v6256 = vadd.f32 %v6213, %v6255
        %6257 = vdwg.mxu0
        %6258 = vmatprep.subr.bf16.mxu0 %v4270
        %6259 = vmatpush1.bf16.msra.mxu0 %v4269
        %6260 = vmatprep.subr.bf16.mxu0 %v4274
        %6261 = vmatpush1.bf16.msra.mxu0 %v4273
        %6262 = vmatprep.subr.bf16.mxu0 %v4278
        %6263 = vmatpush1.bf16.msra.mxu0 %v4277
        %6264 = vmatprep.subr.bf16.mxu0 %v4282
        %6265 = vmatpush1.bf16.msra.mxu0 %v4281
        %6266 = vmatprep.subr.bf16.mxu0 %v4286
        %6267 = vmatpush1.bf16.msra.mxu0 %v4285
        %6268 = vmatprep.subr.bf16.mxu0 %v4290
        %6269 = vmatpush1.bf16.msra.mxu0 %v4289
        %6270 = vmatprep.subr.bf16.mxu0 %v4294
        %6271 = vmatpush1.bf16.msra.mxu0 %v4293
        %6272 = vmatprep.subr.bf16.mxu0 %v4298
        %6273 = vmatpush1.bf16.msra.mxu0 %v4297
        %6274 = vmatprep.subr.bf16.mxu0 %v4302
        %6275 = vmatpush1.bf16.msra.mxu0 %v4301
        %6276 = vmatprep.subr.bf16.mxu0 %v4306
        %6277 = vmatpush1.bf16.msra.mxu0 %v4305
        %6278 = vmatprep.subr.bf16.mxu0 %v4310
        %6279 = vmatpush1.bf16.msra.mxu0 %v4309
        %6280 = vmatprep.subr.bf16.mxu0 %v4314
        %6281 = vmatpush1.bf16.msra.mxu0 %v4313
        %6282 = vmatprep.subr.bf16.mxu0 %v4318
        %6283 = vmatpush1.bf16.msra.mxu0 %v4317
        %6284 = vmatprep.subr.bf16.mxu0 %v4322
        %6285 = vmatpush1.bf16.msra.mxu0 %v4321
        %6286 = vmatprep.subr.bf16.mxu0 %v4326
        %6287 = vmatpush1.bf16.msra.mxu0 %v4325
        %6288 = vmatprep.subr.bf16.mxu0 %v4330
        %6289 = vmatpush1.bf16.msra.mxu0 %v4329
        %6290 = vmatprep.mubr.bf16.mxu0 %v1322
        %6291 = vmatmul.mubr.bf16.gmra.mrb[0].mxu0 %v1321
        %v6292 = vpop.f32.mrb[0].mxu0
        %v6293 = vadd.f32 %v6250, %v6292
        %v6294 = vpop.f32.mrb[0].mxu0
        %v6295 = vadd.f32 %v6252, %v6294
        %v6296 = vpop.f32.mrb[0].mxu0
        %v6297 = vadd.f32 %v6254, %v6296
        %v6298 = vpop.f32.mrb[0].mxu0
        %v6299 = vadd.f32 %v6256, %v6298
        %6300 = vdwg.mxu0
        %6301 = vmatprep.subr.bf16.mxu0 %v4334
        %6302 = vmatpush1.bf16.msra.mxu0 %v4333
        %6303 = vmatprep.subr.bf16.mxu0 %v4338
        %6304 = vmatpush1.bf16.msra.mxu0 %v4337
        %6305 = vmatprep.subr.bf16.mxu0 %v4342
        %6306 = vmatpush1.bf16.msra.mxu0 %v4341
        %6307 = vmatprep.subr.bf16.mxu0 %v4346
        %6308 = vmatpush1.bf16.msra.mxu0 %v4345
        %6309 = vmatprep.subr.bf16.mxu0 %v4350
        %6310 = vmatpush1.bf16.msra.mxu0 %v4349
        %6311 = vmatprep.subr.bf16.mxu0 %v4354
        %6312 = vmatpush1.bf16.msra.mxu0 %v4353
        %6313 = vmatprep.subr.bf16.mxu0 %v4358
        %6314 = vmatpush1.bf16.msra.mxu0 %v4357
        %6315 = vmatprep.subr.bf16.mxu0 %v4362
        %6316 = vmatpush1.bf16.msra.mxu0 %v4361
        %6317 = vmatprep.subr.bf16.mxu0 %v4366
        %6318 = vmatpush1.bf16.msra.mxu0 %v4365
        %6319 = vmatprep.subr.bf16.mxu0 %v4370
        %6320 = vmatpush1.bf16.msra.mxu0 %v4369
        %6321 = vmatprep.subr.bf16.mxu0 %v4374
        %6322 = vmatpush1.bf16.msra.mxu0 %v4373
        %6323 = vmatprep.subr.bf16.mxu0 %v4378
        %6324 = vmatpush1.bf16.msra.mxu0 %v4377
        %6325 = vmatprep.subr.bf16.mxu0 %v4382
        %6326 = vmatpush1.bf16.msra.mxu0 %v4381
        %6327 = vmatprep.subr.bf16.mxu0 %v4386
        %6328 = vmatpush1.bf16.msra.mxu0 %v4385
        %6329 = vmatprep.subr.bf16.mxu0 %v4390
        %6330 = vmatpush1.bf16.msra.mxu0 %v4389
        %6331 = vmatprep.subr.bf16.mxu0 %v4394
        %6332 = vmatpush1.bf16.msra.mxu0 %v4393
        %6333 = vmatprep.mubr.bf16.mxu0 %v1324
        %6334 = vmatmul.mubr.bf16.gmra.mrb[0].mxu0 %v1323
        %v6335 = vpop.f32.mrb[0].mxu0
        %v6336 = vadd.f32 %v6293, %v6335
        %v6337 = vpop.f32.mrb[0].mxu0
        %v6338 = vadd.f32 %v6295, %v6337
        %v6339 = vpop.f32.mrb[0].mxu0
        %v6340 = vadd.f32 %v6297, %v6339
        %v6341 = vpop.f32.mrb[0].mxu0
        %v6342 = vadd.f32 %v6299, %v6341
        %6343 = vdwg.mxu0
        %6344 = vmatprep.subr.bf16.mxu0 %v4398
        %6345 = vmatpush1.bf16.msra.mxu0 %v4397
        %6346 = vmatprep.subr.bf16.mxu0 %v4402
        %6347 = vmatpush1.bf16.msra.mxu0 %v4401
        %6348 = vmatprep.subr.bf16.mxu0 %v4406
        %6349 = vmatpush1.bf16.msra.mxu0 %v4405
        %6350 = vmatprep.subr.bf16.mxu0 %v4410
        %6351 = vmatpush1.bf16.msra.mxu0 %v4409
        %6352 = vmatprep.subr.bf16.mxu0 %v4414
        %6353 = vmatpush1.bf16.msra.mxu0 %v4413
        %6354 = vmatprep.subr.bf16.mxu0 %v4418
        %6355 = vmatpush1.bf16.msra.mxu0 %v4417
        %6356 = vmatprep.subr.bf16.mxu0 %v4422
        %6357 = vmatpush1.bf16.msra.mxu0 %v4421
        %6358 = vmatprep.subr.bf16.mxu0 %v4426
        %6359 = vmatpush1.bf16.msra.mxu0 %v4425
        %6360 = vmatprep.subr.bf16.mxu0 %v4430
        %6361 = vmatpush1.bf16.msra.mxu0 %v4429
        %6362 = vmatprep.subr.bf16.mxu0 %v4434
        %6363 = vmatpush1.bf16.msra.mxu0 %v4433
        %6364 = vmatprep.subr.bf16.mxu0 %v4438
        %6365 = vmatpush1.bf16.msra.mxu0 %v4437
        %6366 = vmatprep.subr.bf16.mxu0 %v4442
        %6367 = vmatpush1.bf16.msra.mxu0 %v4441
        %6368 = vmatprep.subr.bf16.mxu0 %v4446
        %6369 = vmatpush1.bf16.msra.mxu0 %v4445
        %6370 = vmatprep.subr.bf16.mxu0 %v4450
        %6371 = vmatpush1.bf16.msra.mxu0 %v4449
        %6372 = vmatprep.subr.bf16.mxu0 %v4454
        %6373 = vmatpush1.bf16.msra.mxu0 %v4453
        %6374 = vmatprep.subr.bf16.mxu0 %v4458
        %6375 = vmatpush1.bf16.msra.mxu0 %v4457
        %6376 = vmatprep.mubr.bf16.mxu0 %v1326
        %6377 = vmatmul.mubr.bf16.gmra.mrb[0].mxu0 %v1325
        %v6378 = vpop.f32.mrb[0].mxu0
        %v6379 = vadd.f32 %v6336, %v6378
        %v6380 = vpop.f32.mrb[0].mxu0
        %v6381 = vadd.f32 %v6338, %v6380
        %v6382 = vpop.f32.mrb[0].mxu0
        %v6383 = vadd.f32 %v6340, %v6382
        %v6384 = vpop.f32.mrb[0].mxu0
        %v6385 = vadd.f32 %v6342, %v6384
        %6386 = vdwg.mxu0
        %6387 = vmatprep.subr.bf16.mxu0 %v4462
        %6388 = vmatpush1.bf16.msra.mxu0 %v4461
        %6389 = vmatprep.subr.bf16.mxu0 %v4466
        %6390 = vmatpush1.bf16.msra.mxu0 %v4465
        %6391 = vmatprep.subr.bf16.mxu0 %v4470
        %6392 = vmatpush1.bf16.msra.mxu0 %v4469
        %6393 = vmatprep.subr.bf16.mxu0 %v4474
        %6394 = vmatpush1.bf16.msra.mxu0 %v4473
        %6395 = vmatprep.subr.bf16.mxu0 %v4478
        %6396 = vmatpush1.bf16.msra.mxu0 %v4477
        %6397 = vmatprep.subr.bf16.mxu0 %v4482
        %6398 = vmatpush1.bf16.msra.mxu0 %v4481
        %6399 = vmatprep.subr.bf16.mxu0 %v4486
        %6400 = vmatpush1.bf16.msra.mxu0 %v4485
        %6401 = vmatprep.subr.bf16.mxu0 %v4490
        %6402 = vmatpush1.bf16.msra.mxu0 %v4489
        %6403 = vmatprep.subr.bf16.mxu0 %v4494
        %6404 = vmatpush1.bf16.msra.mxu0 %v4493
        %6405 = vmatprep.subr.bf16.mxu0 %v4498
        %6406 = vmatpush1.bf16.msra.mxu0 %v4497
        %6407 = vmatprep.subr.bf16.mxu0 %v4502
        %6408 = vmatpush1.bf16.msra.mxu0 %v4501
        %6409 = vmatprep.subr.bf16.mxu0 %v4506
        %6410 = vmatpush1.bf16.msra.mxu0 %v4505
        %6411 = vmatprep.subr.bf16.mxu0 %v4510
        %6412 = vmatpush1.bf16.msra.mxu0 %v4509
        %6413 = vmatprep.subr.bf16.mxu0 %v4514
        %6414 = vmatpush1.bf16.msra.mxu0 %v4513
        %6415 = vmatprep.subr.bf16.mxu0 %v4518
        %6416 = vmatpush1.bf16.msra.mxu0 %v4517
        %6417 = vmatprep.subr.bf16.mxu0 %v4522
        %6418 = vmatpush1.bf16.msra.mxu0 %v4521
        %6419 = vmatprep.mubr.bf16.mxu0 %v1328
        %6420 = vmatmul.mubr.bf16.gmra.mrb[0].mxu0 %v1327
        %v6421 = vpop.f32.mrb[0].mxu0
        %v6422 = vadd.f32 %v6379, %v6421
        %v6423 = vpop.f32.mrb[0].mxu0
        %v6424 = vadd.f32 %v6381, %v6423
        %v6425 = vpop.f32.mrb[0].mxu0
        %v6426 = vadd.f32 %v6383, %v6425
        %v6427 = vpop.f32.mrb[0].mxu0
        %v6428 = vadd.f32 %v6385, %v6427
        %6429 = vdwg.mxu0
        %6430 = vmatprep.subr.bf16.mxu0 %v4526
        %6431 = vmatpush1.bf16.msra.mxu0 %v4525
        %6432 = vmatprep.subr.bf16.mxu0 %v4530
        %6433 = vmatpush1.bf16.msra.mxu0 %v4529
        %6434 = vmatprep.subr.bf16.mxu0 %v4534
        %6435 = vmatpush1.bf16.msra.mxu0 %v4533
        %6436 = vmatprep.subr.bf16.mxu0 %v4538
        %6437 = vmatpush1.bf16.msra.mxu0 %v4537
        %6438 = vmatprep.subr.bf16.mxu0 %v4542
        %6439 = vmatpush1.bf16.msra.mxu0 %v4541
        %6440 = vmatprep.subr.bf16.mxu0 %v4546
        %6441 = vmatpush1.bf16.msra.mxu0 %v4545
        %6442 = vmatprep.subr.bf16.mxu0 %v4550
        %6443 = vmatpush1.bf16.msra.mxu0 %v4549
        %6444 = vmatprep.subr.bf16.mxu0 %v4554
        %6445 = vmatpush1.bf16.msra.mxu0 %v4553
        %6446 = vmatprep.subr.bf16.mxu0 0
        %6447 = vmatpush1.bf16.msra.mxu0 0
        %6448 = vmatprep.subr.bf16.mxu0 0
        %6449 = vmatpush1.bf16.msra.mxu0 0
        %6450 = vmatprep.subr.bf16.mxu0 0
        %6451 = vmatpush1.bf16.msra.mxu0 0
        %6452 = vmatprep.subr.bf16.mxu0 0
        %6453 = vmatpush1.bf16.msra.mxu0 0
        %6454 = vmatprep.subr.bf16.mxu0 0
        %6455 = vmatpush1.bf16.msra.mxu0 0
        %6456 = vmatprep.subr.bf16.mxu0 0
        %6457 = vmatpush1.bf16.msra.mxu0 0
        %6458 = vmatprep.subr.bf16.mxu0 0
        %6459 = vmatpush1.bf16.msra.mxu0 0
        %6460 = vmatprep.subr.bf16.mxu0 0
        %6461 = vmatpush1.bf16.msra.mxu0 0
        %6462 = vmatprep.mubr.bf16.mxu0 0
        %6463 = vmatmul.mubr.bf16.gmra.mrb[0].mxu0 %v1329
        %v6464 = vpop.f32.mrb[0].mxu0
        %v6465 = vadd.f32 %v6422, %v6464
        %v6466 = vpop.f32.mrb[0].mxu0
        %v6467 = vadd.f32 %v6424, %v6466
        %v6468 = vpop.f32.mrb[0].mxu0
        %v6469 = vadd.f32 %v6426, %v6468
        %v6470 = vpop.f32.mrb[0].mxu0
        %v6471 = vadd.f32 %v6428, %v6470
        %6472 = vdwg.mxu0
        %v6473 = vadd.f32 %v395, %v5906
        %v6474 = vadd.f32 %v396, %v5908
        %v6475 = vadd.f32 %v397, %v6465
        %v6476 = vadd.f32 %v398, %v6467
        %v6477 = vadd.f32 %v399, %v5910
        %v6478 = vadd.f32 %v400, %v5912
        %v6479 = vadd.f32 %v401, %v6469
        %v6480 = vadd.f32 %v402, %v6471
        %6481 = vst [vmem:[%s352] sm:$0xff] %v6473
        %6482 = vst [vmem:[%s352 + $0x8] sm:$0xff] %v6474
        %6483 = vst [vmem:[%s352 + $0x10] sm:$0xff] %v6475
        %6484 = vst [vmem:[%s352 + $0x18] sm:$0xff] %v6476
        %6485 = vst [vmem:[%s352 + $0x20] sm:$0xff] %v6477
        %6486 = vst [vmem:[%s352 + $0x28] sm:$0xff] %v6478
        %6487 = vst [vmem:[%s352 + $0x30] sm:$0xff] %v6479
        %6488 = vst [vmem:[%s352 + $0x38] sm:$0xff] %v6480
        %s6489 = sand.u32 %s131, 1
        %s6490 = sand.u32 %s131, 1
        %s6491 = smul.addr %s6490, 64
        %s6492 = scalar_lea.vmem [#allocation7], %s6491
        // Predicated region
        $region71: #{iwcd_forward.8} parent=53 // pred_check
          %p6493 = pneg %p141
        $region72: #{iwcd_forward.8} parent=53 // pred_check_branch
          %6495 = sbr.rel (%p6493) target = $region74
        $region73: #{iwcd_forward.8} parent=53 // pred_region
          %s6496 = smul.u32 2, %s25
          %s6497 = smul.u32 4, %s26
          %s6498 = smul.addr %s6496, 8
          %s6499 = sadd.s32 %s6497, %s6498
          %s6500 = smul.addr %s6499, 8
          %s6501 = scalar_lea.vmem %s3, %s6500
          // Predicated region
          $region75: #{iwcd_forward.8} parent=73 // pred_check
            _
          $region76: #{iwcd_forward.8} parent=73 // pred_check_branch
            %6503 = sbr.rel (0) target = $region78
          $region77: #{iwcd_forward.8} parent=73 // pred_region
            // Predicated region
            $region79: #{iwcd_forward.8} parent=77 // pred_check
              _
            $region80: #{iwcd_forward.8} parent=77 // pred_check_branch
              %6505 = sbr.rel (0) target = $region82
            $region81: #{iwcd_forward.8} parent=77 // pred_region
              loop: start=0, step=1, limit=1
              $region83: #{iwcd_forward.8} parent=81 // loop_pre_header
                _
              $region84: #{iwcd_forward.8} parent=81 // loop_header
                %s6507 = sphi 0, %s6511
                %p6508 = scmp.ge.s32.totalorder %s6507, 1
                %s6512 = sphi %s6492, %s6492
                %s6513 = sphi %s6501, %s6501
              $region85: #{iwcd_forward.8} parent=81 // loop_header_branch
                %6510 = sbr.rel (%p6508) target = $region89
              $region86: #{iwcd_forward.8} parent=81 // loop_body
                %v6514 = vld [vmem:[%s6512] sm:$0xff]
                %6515 = vst [vmem:[%s6513] sm:$0xff] %v6514
                %v6516 = vld [vmem:[%s6512 + $0x8] sm:$0xff]
                %6517 = vst [vmem:[%s6513 + $0x8] sm:$0xff] %v6516
                %v6518 = vld [vmem:[%s6512 + $0x10] sm:$0xff]
                %6519 = vst [vmem:[%s6513 + $0x10] sm:$0xff] %v6518
                %v6520 = vld [vmem:[%s6512 + $0x18] sm:$0xff]
                %6521 = vst [vmem:[%s6513 + $0x18] sm:$0xff] %v6520
                %v6522 = vld [vmem:[%s6512 + $0x20] sm:$0xff]
                %6523 = vst [vmem:[%s6513 + $0x40] sm:$0xff] %v6522
                %v6524 = vld [vmem:[%s6512 + $0x28] sm:$0xff]
                %6525 = vst [vmem:[%s6513 + $0x48] sm:$0xff] %v6524
                %v6526 = vld [vmem:[%s6512 + $0x30] sm:$0xff]
                %6527 = vst [vmem:[%s6513 + $0x50] sm:$0xff] %v6526
                %v6528 = vld [vmem:[%s6512 + $0x38] sm:$0xff]
                %6529 = vst [vmem:[%s6513 + $0x58] sm:$0xff] %v6528
              $region87: #{iwcd_forward.8} parent=81 // loop_footer
                %s6511 = sadd.s32 1, %s6507
              $region88: #{iwcd_forward.8} parent=81 // loop_footer_branch
                %6506 = sbr.rel target = $region84
              $region89: #{iwcd_forward.8} parent=81 // loop_exit
                _
            $region82: #{iwcd_forward.8} parent=77 // pred_fallthru
              _
            // Predicated region
            $region90: #{iwcd_forward.8} parent=77 // pred_check
              _
            $region91: #{iwcd_forward.8} parent=77 // pred_check_branch
              %6531 = sbr.rel target = $region93
            $region92: #{iwcd_forward.8} parent=77 // pred_region
              _
            $region93: #{iwcd_forward.8} parent=77 // pred_fallthru
              _
          $region78: #{iwcd_forward.8} parent=73 // pred_fallthru
            _
          %6532 = vnop
        $region74: #{iwcd_forward.8} parent=53 // pred_fallthru
          _
      $region54: #{iwcd_forward.8} parent=5 // pred_fallthru
        _
      %p6533 = scmp.le.s32.totalorder 2, %s15
      // Predicated region
      $region94: #{iwcd_forward.8} parent=5 // pred_check
        %p6534 = pneg %p6533
      $region95: #{iwcd_forward.8} parent=5 // pred_check_branch
        %6536 = sbr.rel (%p6534) target = $region97
      $region96: #{iwcd_forward.8} parent=5 // pred_region
        %s6537 = ssub.s32 %s15, 2
        // Predicated region
        $region98: #{iwcd_forward.8} parent=96 // pred_check
          %p6538 = pneg %p147
        $region99: #{iwcd_forward.8} parent=96 // pred_check_branch
          %6540 = sbr.rel (%p6538) target = $region101
        $region100: #{iwcd_forward.8} parent=96 // pred_region
          %s6541 = sand.u32 %s132, 1
          %s6542 = sand.u32 %s132, 1
          %s6543 = smul.addr %s6542, 64
          %s6544 = scalar_lea.vmem [#allocation7], %s6543
        $region101: #{iwcd_forward.8} parent=96 // pred_fallthru
          _
      $region97: #{iwcd_forward.8} parent=5 // pred_fallthru
        _
    $region6: #{iwcd_forward.8} parent=1 // loop_footer
      %s19 = sadd.s32 1, %s15
    $region7: #{iwcd_forward.8} parent=1 // loop_footer_branch
      %14 = sbr.rel target = $region3
    $region8: #{iwcd_forward.8} parent=1 // loop_exit
      _
    %6545 = vsyncpa [#allocation4], 1
    %s6546 = scalar_lea.sflag [#allocation4], 1
    %6547 = vsyncpa %s6546, 1
    %6548 = vsyncpa [#allocation6], 1
    %s6549 = scalar_lea.sflag [#allocation6], 1
    %6550 = vsyncpa %s6549, 1

</llo_original>
